<compile_context>
chip_gen: v7x
topology: tpu7x:2x2x1
jax: 0.10.0
libtpu: 0.0.40
codegen_flags: <defaults>
</compile_context>

<pallas_src>
import functools

import jax
import jax.numpy as jnp
from jax.experimental import pallas as pl
from jax.experimental.pallas import tpu as pltpu


# ----------------------------------------------------------------------------
# Fused Pallas kernel: full reverse-sampling loop, whole batch, one invocation.
# ----------------------------------------------------------------------------
def _diffusion_kernel(c1_ref, c2_ref, x_ref, w1_ref, b1_ref, w2_ref, b2_ref,
                      masks_ref, o_ref, *, H, W, num_steps):
    C, NHW = x_ref.shape
    Ch = w1_ref.shape[1]

    # Static flat offsets of the 9 taps of a 3x3 SAME conv in (C, N*H*W) layout.
    offs = [(dy - 1) * W + (dx - 1) for dy in range(3) for dx in range(3)]

    # ---- Loop-invariants, hoisted out of the timestep loop ------------------
    w1_taps = [w1_ref[k] for k in range(9)]            # each (Ch, C)
    w2_taps = [w2_ref[k] for k in range(9)]            # each (C, Ch)
    b1 = jnp.broadcast_to(b1_ref[...], (Ch, NHW))      # pre-broadcast biases
    b2 = jnp.broadcast_to(b2_ref[...], (C, NHW))
    masks = masks_ref[...]                             # (9, NHW) validity masks
    mask_taps = [jnp.broadcast_to(masks[k:k + 1, :], (C, NHW)) for k in range(9)]

    def shifted(a, k):
        off = offs[k]
        if off == 0:                                   # center tap: no roll
            return a
        return pltpu.roll(a, shift=(-off) % NHW, axis=1)

    def denoiser(x):
        # conv1 (C -> Ch): 9 accumulating matmuls, mask applied to the small
        # (C, NHW) input tap.
        h = b1
        for k in range(9):
            tap = shifted(x, k)
            if k != 4:                                 # center mask is all-ones
                tap = tap * mask_taps[k]
            h = h + jnp.dot(w1_taps[k], tap, preferred_element_type=jnp.float32)
        h = h * jax.nn.sigmoid(h)                      # SiLU (EUP)
        # conv2 (Ch -> C): mask applied to the small (C, NHW) output; masking
        # is per-column so it commutes with the channel contraction.
        eps = b2
        for k in range(9):
            r = jnp.dot(w2_taps[k], shifted(h, k),
                        preferred_element_type=jnp.float32)
            if k != 4:
                r = r * mask_taps[k]
            eps = eps + r
        return eps

    def step(i, x):
        t = num_steps - 1 - i                          # t = num_steps-1 .. 1
        eps = denoiser(x)
        # TODO(synk): diffuser is unspecified in the reference; the stochastic
        # DDPM posterior noise term for t > 1 is omitted (deterministic mean).
        return c1_ref[t] * (x - c2_ref[t] * eps)

    o_ref[...] = jax.lax.fori_loop(0, num_steps - 1, step, x_ref[...],
                                   unroll=True)


# ----------------------------------------------------------------------------
# Wrapper
# ----------------------------------------------------------------------------
@functools.partial(jax.jit, static_argnames=("num_steps",))
def diffusion_forward(x_t_nchw, num_steps, params, betas):
    """Equivalent of Diffusion.forward(x_t, num_steps).  Input/output NCHW."""
    N, C, H, W = x_t_nchw.shape
    HW, NHW = H * W, N * H * W
    Ch = params["w1"].shape[0]

    # Per-timestep reverse-step coefficients (SMEM tables indexed by t).
    alphas = 1.0 - betas
    alpha_bars = jnp.cumprod(alphas)
    c1s = (1.0 / jnp.sqrt(alphas)).astype(jnp.float32)
    c2s = (betas / jnp.sqrt(1.0 - alpha_bars)).astype(jnp.float32)

    # Per-tap validity masks for the flat (C, N*HW) layout.  They zero every
    # position whose source pixel falls outside its image, which also kills
    # the row / image-boundary wrap of the cyclic lane roll.
    ys = jnp.arange(HW, dtype=jnp.int32) // W
    xs = jnp.arange(HW, dtype=jnp.int32) % W
    m = []
    for dy in range(3):
        for dx in range(3):
            ok = jnp.ones((HW,), dtype=bool)
            if dy == 0:
                ok &= ys != 0
            if dy == 2:
                ok &= ys != H - 1
            if dx == 0:
                ok &= xs != 0
            if dx == 2:
                ok &= xs != W - 1
            m.append(ok)
    masks = jnp.tile(jnp.stack(m).astype(jnp.float32), (1, N))     # (9, N*HW)

    # Weights as per-tap (Cout, Cin) slabs; stored layout column = k*Cin + cin.
    w1 = params["w1"].reshape(Ch, 9, C).transpose(1, 0, 2).astype(jnp.float32)
    w2 = params["w2"].reshape(C, 9, Ch).transpose(1, 0, 2).astype(jnp.float32)
    b1 = params["b1"].astype(jnp.float32)                          # (Ch, 1)
    b2 = params["b2"].astype(jnp.float32)                          # (C, 1)

    # Batch folded into the lane axis: (N,C,H,W) -> (C, N*H*W)  (lane-dense).
    x_flat = jnp.transpose(x_t_nchw, (1, 0, 2, 3)).reshape(C, NHW)
    x_flat = x_flat.astype(jnp.float32)

    kernel = functools.partial(_diffusion_kernel, H=H, W=W, num_steps=num_steps)
    vmem = pl.BlockSpec(memory_space=pltpu.MemorySpace.VMEM)
    smem = pl.BlockSpec(memory_space=pltpu.MemorySpace.SMEM)

    out = pl.pallas_call(
        kernel,
        out_shape=jax.ShapeDtypeStruct((C, NHW), jnp.float32),
        in_specs=[smem, smem, vmem, vmem, vmem, vmem, vmem, vmem],
        out_specs=vmem,
    )(c1s, c2s, x_flat, w1, b1, w2, b2, masks)

    return out.reshape(C, N, H, W).transpose(1, 0, 2, 3)


# ----------------------------------------------------------------------------
# Pure-JAX reference (for verification)
# ----------------------------------------------------------------------------
def _ref_forward(x_t_nchw, num_steps, params, betas):
    alphas = 1.0 - betas
    alpha_bars = jnp.cumprod(alphas)
    N, C, H, W = x_t_nchw.shape
    Ch = params["w1"].shape[0]
    x = jnp.transpose(x_t_nchw, (0, 2, 3, 1)).astype(jnp.float32)   # NHWC
    # (Cout, 9*Cin) with k = dy*3 + dx  ->  HWIO
    w1 = params["w1"].reshape(Ch, 3, 3, C).transpose(1, 2, 3, 0)
    w2 = params["w2"].reshape(C, 3, 3, Ch).transpose(1, 2, 3, 0)
    b1 = params["b1"][:, 0]
    b2 = params["b2"][:, 0]
    dn = ("NHWC", "HWIO", "NHWC")
    for t in range(num_steps - 1, 0, -1):
        h = jax.lax.conv_general_dilated(x, w1, (1, 1), "SAME",
                                         dimension_numbers=dn) + b1
        h = h * jax.nn.sigmoid(h)
        eps = jax.lax.conv_general_dilated(h, w2, (1, 1), "SAME",
                                           dimension_numbers=dn) + b2
        c1 = 1.0 / jnp.sqrt(alphas[t])
        c2 = betas[t] / jnp.sqrt(1.0 - alpha_bars[t])
        x = c1 * (x - c2 * eps)
    return jnp.transpose(x, (0, 3, 1, 2))


# ----------------------------------------------------------------------------
if __name__ == "__main__":
    N, C, H, W = 2, 4, 16, 16   # small shapes consistent with the NCHW denoiser
    Ch = 32                     # denoiser hidden channels
    num_steps = 4

    key = jax.random.PRNGKey(0)
    k_x, k_w1, k_b1, k_w2, k_b2 = jax.random.split(key, 5)

    # deterministic synthetic parameters; weights stored as (Cout, 9*Cin),
    # column index = (dy*3 + dx)*Cin + cin ; biases as (Cout, 1)
    params = {
        "w1": (0.1 * jax.random.normal(k_w1, (Ch, 9 * C))).astype(jnp.float32),
        "b1": (0.01 * jax.random.normal(k_b1, (Ch, 1))).astype(jnp.float32),
        "w2": (0.1 * jax.random.normal(k_w2, (C, 9 * Ch))).astype(jnp.float32),
        "b2": (0.01 * jax.random.normal(k_b2, (C, 1))).astype(jnp.float32),
    }
    betas = jnp.linspace(1e-4, 2e-2, num_steps).astype(jnp.float32)

    x_t = jax.random.normal(k_x, (N, C, H, W), dtype=jnp.float32)   # NCHW

    out = jax.block_until_ready(diffusion_forward(x_t, num_steps, params, betas))
    ref = jax.block_until_ready(_ref_forward(x_t, num_steps, params, betas))

    assert out.shape == (N, C, H, W)
    assert jnp.allclose(out, ref, atol=1e-3, rtol=1e-3), float(
        jnp.max(jnp.abs(out - ref)))

    print("KERNEL_OK")
</pallas_src>

<mosaic_0001>
module attributes {stable_mosaic.version = 11 : i64} {
  func.func @_diffusion_kernel(%arg0: memref<4xf32, #tpu.memory_space<smem>>, %arg1: memref<4xf32, #tpu.memory_space<smem>>, %arg2: memref<4x512xf32, #tpu.memory_space<vmem>>, %arg3: memref<9x32x4xf32, #tpu.memory_space<vmem>>, %arg4: memref<32x1xf32, #tpu.memory_space<vmem>>, %arg5: memref<9x4x32xf32, #tpu.memory_space<vmem>>, %arg6: memref<4x1xf32, #tpu.memory_space<vmem>>, %arg7: memref<9x512xf32, #tpu.memory_space<vmem>>, %arg8: memref<4x512xf32, #tpu.memory_space<vmem>>) attributes {dimension_semantics = [], scalar_prefetch = 0 : i64, scratch_operands = 0 : i64, tpu.core_type = #tpu.core_type<tc>} {
    %c0 = arith.constant 0 : index
    %c0_0 = arith.constant 0 : index
    %c0_1 = arith.constant 0 : index
    %0 = vector.load %arg3[%c0, %c0_0, %c0_1] : memref<9x32x4xf32, #tpu.memory_space<vmem>>, vector<1x32x4xf32>
    %1 = vector.shape_cast %0 : vector<1x32x4xf32> to vector<32x4xf32>
    %c1 = arith.constant 1 : index
    %c0_2 = arith.constant 0 : index
    %c0_3 = arith.constant 0 : index
    %2 = vector.load %arg3[%c1, %c0_2, %c0_3] : memref<9x32x4xf32, #tpu.memory_space<vmem>>, vector<1x32x4xf32>
    %3 = vector.shape_cast %2 : vector<1x32x4xf32> to vector<32x4xf32>
    %c2 = arith.constant 2 : index
    %c0_4 = arith.constant 0 : index
    %c0_5 = arith.constant 0 : index
    %4 = vector.load %arg3[%c2, %c0_4, %c0_5] : memref<9x32x4xf32, #tpu.memory_space<vmem>>, vector<1x32x4xf32>
    %5 = vector.shape_cast %4 : vector<1x32x4xf32> to vector<32x4xf32>
    %c3 = arith.constant 3 : index
    %c0_6 = arith.constant 0 : index
    %c0_7 = arith.constant 0 : index
    %6 = vector.load %arg3[%c3, %c0_6, %c0_7] : memref<9x32x4xf32, #tpu.memory_space<vmem>>, vector<1x32x4xf32>
    %7 = vector.shape_cast %6 : vector<1x32x4xf32> to vector<32x4xf32>
    %c4 = arith.constant 4 : index
    %c0_8 = arith.constant 0 : index
    %c0_9 = arith.constant 0 : index
    %8 = vector.load %arg3[%c4, %c0_8, %c0_9] : memref<9x32x4xf32, #tpu.memory_space<vmem>>, vector<1x32x4xf32>
    %9 = vector.shape_cast %8 : vector<1x32x4xf32> to vector<32x4xf32>
    %c5 = arith.constant 5 : index
    %c0_10 = arith.constant 0 : index
    %c0_11 = arith.constant 0 : index
    %10 = vector.load %arg3[%c5, %c0_10, %c0_11] : memref<9x32x4xf32, #tpu.memory_space<vmem>>, vector<1x32x4xf32>
    %11 = vector.shape_cast %10 : vector<1x32x4xf32> to vector<32x4xf32>
    %c6 = arith.constant 6 : index
    %c0_12 = arith.constant 0 : index
    %c0_13 = arith.constant 0 : index
    %12 = vector.load %arg3[%c6, %c0_12, %c0_13] : memref<9x32x4xf32, #tpu.memory_space<vmem>>, vector<1x32x4xf32>
    %13 = vector.shape_cast %12 : vector<1x32x4xf32> to vector<32x4xf32>
    %c7 = arith.constant 7 : index
    %c0_14 = arith.constant 0 : index
    %c0_15 = arith.constant 0 : index
    %14 = vector.load %arg3[%c7, %c0_14, %c0_15] : memref<9x32x4xf32, #tpu.memory_space<vmem>>, vector<1x32x4xf32>
    %15 = vector.shape_cast %14 : vector<1x32x4xf32> to vector<32x4xf32>
    %c8 = arith.constant 8 : index
    %c0_16 = arith.constant 0 : index
    %c0_17 = arith.constant 0 : index
    %16 = vector.load %arg3[%c8, %c0_16, %c0_17] : memref<9x32x4xf32, #tpu.memory_space<vmem>>, vector<1x32x4xf32>
    %17 = vector.shape_cast %16 : vector<1x32x4xf32> to vector<32x4xf32>
    %c0_18 = arith.constant 0 : index
    %c0_19 = arith.constant 0 : index
    %c0_20 = arith.constant 0 : index
    %18 = vector.load %arg5[%c0_18, %c0_19, %c0_20] : memref<9x4x32xf32, #tpu.memory_space<vmem>>, vector<1x4x32xf32>
    %19 = vector.shape_cast %18 : vector<1x4x32xf32> to vector<4x32xf32>
    %c1_21 = arith.constant 1 : index
    %c0_22 = arith.constant 0 : index
    %c0_23 = arith.constant 0 : index
    %20 = vector.load %arg5[%c1_21, %c0_22, %c0_23] : memref<9x4x32xf32, #tpu.memory_space<vmem>>, vector<1x4x32xf32>
    %21 = vector.shape_cast %20 : vector<1x4x32xf32> to vector<4x32xf32>
    %c2_24 = arith.constant 2 : index
    %c0_25 = arith.constant 0 : index
    %c0_26 = arith.constant 0 : index
    %22 = vector.load %arg5[%c2_24, %c0_25, %c0_26] : memref<9x4x32xf32, #tpu.memory_space<vmem>>, vector<1x4x32xf32>
    %23 = vector.shape_cast %22 : vector<1x4x32xf32> to vector<4x32xf32>
    %c3_27 = arith.constant 3 : index
    %c0_28 = arith.constant 0 : index
    %c0_29 = arith.constant 0 : index
    %24 = vector.load %arg5[%c3_27, %c0_28, %c0_29] : memref<9x4x32xf32, #tpu.memory_space<vmem>>, vector<1x4x32xf32>
    %25 = vector.shape_cast %24 : vector<1x4x32xf32> to vector<4x32xf32>
    %c4_30 = arith.constant 4 : index
    %c0_31 = arith.constant 0 : index
    %c0_32 = arith.constant 0 : index
    %26 = vector.load %arg5[%c4_30, %c0_31, %c0_32] : memref<9x4x32xf32, #tpu.memory_space<vmem>>, vector<1x4x32xf32>
    %27 = vector.shape_cast %26 : vector<1x4x32xf32> to vector<4x32xf32>
    %c5_33 = arith.constant 5 : index
    %c0_34 = arith.constant 0 : index
    %c0_35 = arith.constant 0 : index
    %28 = vector.load %arg5[%c5_33, %c0_34, %c0_35] : memref<9x4x32xf32, #tpu.memory_space<vmem>>, vector<1x4x32xf32>
    %29 = vector.shape_cast %28 : vector<1x4x32xf32> to vector<4x32xf32>
    %c6_36 = arith.constant 6 : index
    %c0_37 = arith.constant 0 : index
    %c0_38 = arith.constant 0 : index
    %30 = vector.load %arg5[%c6_36, %c0_37, %c0_38] : memref<9x4x32xf32, #tpu.memory_space<vmem>>, vector<1x4x32xf32>
    %31 = vector.shape_cast %30 : vector<1x4x32xf32> to vector<4x32xf32>
    %c7_39 = arith.constant 7 : index
    %c0_40 = arith.constant 0 : index
    %c0_41 = arith.constant 0 : index
    %32 = vector.load %arg5[%c7_39, %c0_40, %c0_41] : memref<9x4x32xf32, #tpu.memory_space<vmem>>, vector<1x4x32xf32>
    %33 = vector.shape_cast %32 : vector<1x4x32xf32> to vector<4x32xf32>
    %c8_42 = arith.constant 8 : index
    %c0_43 = arith.constant 0 : index
    %c0_44 = arith.constant 0 : index
    %34 = vector.load %arg5[%c8_42, %c0_43, %c0_44] : memref<9x4x32xf32, #tpu.memory_space<vmem>>, vector<1x4x32xf32>
    %35 = vector.shape_cast %34 : vector<1x4x32xf32> to vector<4x32xf32>
    %c0_45 = arith.constant 0 : index
    %c0_46 = arith.constant 0 : index
    %36 = vector.load %arg4[%c0_45, %c0_46] : memref<32x1xf32, #tpu.memory_space<vmem>>, vector<32x1xf32>
    %37 = vector.shape_cast %36 : vector<32x1xf32> to vector<32x1xf32>
    %38 = vector.broadcast %37 : vector<32x1xf32> to vector<32x512xf32>
    %c0_47 = arith.constant 0 : index
    %c0_48 = arith.constant 0 : index
    %39 = vector.load %arg6[%c0_47, %c0_48] : memref<4x1xf32, #tpu.memory_space<vmem>>, vector<4x1xf32>
    %40 = vector.shape_cast %39 : vector<4x1xf32> to vector<4x1xf32>
    %41 = vector.broadcast %40 : vector<4x1xf32> to vector<4x512xf32>
    %c0_49 = arith.constant 0 : index
    %c0_50 = arith.constant 0 : index
    %42 = vector.load %arg7[%c0_49, %c0_50] : memref<9x512xf32, #tpu.memory_space<vmem>>, vector<9x512xf32>
    %43 = vector.extract_strided_slice %42 {offsets = [0, 0], sizes = [1, 512], strides = [1, 1]} : vector<9x512xf32> to vector<1x512xf32>
    %44 = vector.shape_cast %43 : vector<1x512xf32> to vector<1x512xf32>
    %45 = vector.broadcast %44 : vector<1x512xf32> to vector<4x512xf32>
    %46 = vector.extract_strided_slice %42 {offsets = [1, 0], sizes = [1, 512], strides = [1, 1]} : vector<9x512xf32> to vector<1x512xf32>
    %47 = vector.shape_cast %46 : vector<1x512xf32> to vector<1x512xf32>
    %48 = vector.broadcast %47 : vector<1x512xf32> to vector<4x512xf32>
    %49 = vector.extract_strided_slice %42 {offsets = [2, 0], sizes = [1, 512], strides = [1, 1]} : vector<9x512xf32> to vector<1x512xf32>
    %50 = vector.shape_cast %49 : vector<1x512xf32> to vector<1x512xf32>
    %51 = vector.broadcast %50 : vector<1x512xf32> to vector<4x512xf32>
    %52 = vector.extract_strided_slice %42 {offsets = [3, 0], sizes = [1, 512], strides = [1, 1]} : vector<9x512xf32> to vector<1x512xf32>
    %53 = vector.shape_cast %52 : vector<1x512xf32> to vector<1x512xf32>
    %54 = vector.broadcast %53 : vector<1x512xf32> to vector<4x512xf32>
    %55 = vector.extract_strided_slice %42 {offsets = [5, 0], sizes = [1, 512], strides = [1, 1]} : vector<9x512xf32> to vector<1x512xf32>
    %56 = vector.shape_cast %55 : vector<1x512xf32> to vector<1x512xf32>
    %57 = vector.broadcast %56 : vector<1x512xf32> to vector<4x512xf32>
    %58 = vector.extract_strided_slice %42 {offsets = [6, 0], sizes = [1, 512], strides = [1, 1]} : vector<9x512xf32> to vector<1x512xf32>
    %59 = vector.shape_cast %58 : vector<1x512xf32> to vector<1x512xf32>
    %60 = vector.broadcast %59 : vector<1x512xf32> to vector<4x512xf32>
    %61 = vector.extract_strided_slice %42 {offsets = [7, 0], sizes = [1, 512], strides = [1, 1]} : vector<9x512xf32> to vector<1x512xf32>
    %62 = vector.shape_cast %61 : vector<1x512xf32> to vector<1x512xf32>
    %63 = vector.broadcast %62 : vector<1x512xf32> to vector<4x512xf32>
    %64 = vector.extract_strided_slice %42 {offsets = [8, 0], sizes = [1, 512], strides = [1, 1]} : vector<9x512xf32> to vector<1x512xf32>
    %65 = vector.shape_cast %64 : vector<1x512xf32> to vector<1x512xf32>
    %66 = vector.broadcast %65 : vector<1x512xf32> to vector<4x512xf32>
    %c0_51 = arith.constant 0 : index
    %c0_52 = arith.constant 0 : index
    %67 = vector.load %arg2[%c0_51, %c0_52] : memref<4x512xf32, #tpu.memory_space<vmem>>, vector<4x512xf32>
    %c0_i32 = arith.constant 0 : i32
    %c3_i32 = arith.constant 3 : i32
    %68 = arith.subi %c3_i32, %c0_i32 : i32
    %c17_i32 = arith.constant 17 : i32
    %69 = tpu.dynamic_rotate %67 by %c17_i32 dim 1 : vector<4x512xf32>, i32 -> vector<4x512xf32>
    %70 = arith.mulf %69, %45 : vector<4x512xf32>
    %cst = arith.constant dense<0.000000e+00> : vector<32x512xf32>
    %71 = tpu.matmul %1, %70, %cst {dimension_numbers = #tpu.dot_dimension_numbers<[1], [0], [0], [1], [0, 0, 1, 1], [], []>} : vector<32x4xf32>, vector<4x512xf32>, vector<32x512xf32> -> vector<32x512xf32>
    %72 = arith.addf %38, %71 : vector<32x512xf32>
    %c16_i32 = arith.constant 16 : i32
    %73 = tpu.dynamic_rotate %67 by %c16_i32 dim 1 : vector<4x512xf32>, i32 -> vector<4x512xf32>
    %74 = arith.mulf %73, %48 : vector<4x512xf32>
    %cst_53 = arith.constant dense<0.000000e+00> : vector<32x512xf32>
    %75 = tpu.matmul %3, %74, %cst_53 {dimension_numbers = #tpu.dot_dimension_numbers<[1], [0], [0], [1], [0, 0, 1, 1], [], []>} : vector<32x4xf32>, vector<4x512xf32>, vector<32x512xf32> -> vector<32x512xf32>
    %76 = arith.addf %72, %75 : vector<32x512xf32>
    %c15_i32 = arith.constant 15 : i32
    %77 = tpu.dynamic_rotate %67 by %c15_i32 dim 1 : vector<4x512xf32>, i32 -> vector<4x512xf32>
    %78 = arith.mulf %77, %51 : vector<4x512xf32>
    %cst_54 = arith.constant dense<0.000000e+00> : vector<32x512xf32>
    %79 = tpu.matmul %5, %78, %cst_54 {dimension_numbers = #tpu.dot_dimension_numbers<[1], [0], [0], [1], [0, 0, 1, 1], [], []>} : vector<32x4xf32>, vector<4x512xf32>, vector<32x512xf32> -> vector<32x512xf32>
    %80 = arith.addf %76, %79 : vector<32x512xf32>
    %c1_i32 = arith.constant 1 : i32
    %81 = tpu.dynamic_rotate %67 by %c1_i32 dim 1 : vector<4x512xf32>, i32 -> vector<4x512xf32>
    %82 = arith.mulf %81, %54 : vector<4x512xf32>
    %cst_55 = arith.constant dense<0.000000e+00> : vector<32x512xf32>
    %83 = tpu.matmul %7, %82, %cst_55 {dimension_numbers = #tpu.dot_dimension_numbers<[1], [0], [0], [1], [0, 0, 1, 1], [], []>} : vector<32x4xf32>, vector<4x512xf32>, vector<32x512xf32> -> vector<32x512xf32>
    %84 = arith.addf %80, %83 : vector<32x512xf32>
    %cst_56 = arith.constant dense<0.000000e+00> : vector<32x512xf32>
    %85 = tpu.matmul %9, %67, %cst_56 {dimension_numbers = #tpu.dot_dimension_numbers<[1], [0], [0], [1], [0, 0, 1, 1], [], []>} : vector<32x4xf32>, vector<4x512xf32>, vector<32x512xf32> -> vector<32x512xf32>
    %86 = arith.addf %84, %85 : vector<32x512xf32>
    %c511_i32 = arith.constant 511 : i32
    %87 = tpu.dynamic_rotate %67 by %c511_i32 dim 1 : vector<4x512xf32>, i32 -> vector<4x512xf32>
    %88 = arith.mulf %87, %57 : vector<4x512xf32>
    %cst_57 = arith.constant dense<0.000000e+00> : vector<32x512xf32>
    %89 = tpu.matmul %11, %88, %cst_57 {dimension_numbers = #tpu.dot_dimension_numbers<[1], [0], [0], [1], [0, 0, 1, 1], [], []>} : vector<32x4xf32>, vector<4x512xf32>, vector<32x512xf32> -> vector<32x512xf32>
    %90 = arith.addf %86, %89 : vector<32x512xf32>
    %c497_i32 = arith.constant 497 : i32
    %91 = tpu.dynamic_rotate %67 by %c497_i32 dim 1 : vector<4x512xf32>, i32 -> vector<4x512xf32>
    %92 = arith.mulf %91, %60 : vector<4x512xf32>
    %cst_58 = arith.constant dense<0.000000e+00> : vector<32x512xf32>
    %93 = tpu.matmul %13, %92, %cst_58 {dimension_numbers = #tpu.dot_dimension_numbers<[1], [0], [0], [1], [0, 0, 1, 1], [], []>} : vector<32x4xf32>, vector<4x512xf32>, vector<32x512xf32> -> vector<32x512xf32>
    %94 = arith.addf %90, %93 : vector<32x512xf32>
    %c496_i32 = arith.constant 496 : i32
    %95 = tpu.dynamic_rotate %67 by %c496_i32 dim 1 : vector<4x512xf32>, i32 -> vector<4x512xf32>
    %96 = arith.mulf %95, %63 : vector<4x512xf32>
    %cst_59 = arith.constant dense<0.000000e+00> : vector<32x512xf32>
    %97 = tpu.matmul %15, %96, %cst_59 {dimension_numbers = #tpu.dot_dimension_numbers<[1], [0], [0], [1], [0, 0, 1, 1], [], []>} : vector<32x4xf32>, vector<4x512xf32>, vector<32x512xf32> -> vector<32x512xf32>
    %98 = arith.addf %94, %97 : vector<32x512xf32>
    %c495_i32 = arith.constant 495 : i32
    %99 = tpu.dynamic_rotate %67 by %c495_i32 dim 1 : vector<4x512xf32>, i32 -> vector<4x512xf32>
    %100 = arith.mulf %99, %66 : vector<4x512xf32>
    %cst_60 = arith.constant dense<0.000000e+00> : vector<32x512xf32>
    %101 = tpu.matmul %17, %100, %cst_60 {dimension_numbers = #tpu.dot_dimension_numbers<[1], [0], [0], [1], [0, 0, 1, 1], [], []>} : vector<32x4xf32>, vector<4x512xf32>, vector<32x512xf32> -> vector<32x512xf32>
    %102 = arith.addf %98, %101 : vector<32x512xf32>
    %103 = arith.negf %102 : vector<32x512xf32>
    %104 = math.exp %103 : vector<32x512xf32>
    %cst_61 = arith.constant 1.000000e+00 : f32
    %105 = vector.broadcast %cst_61 : f32 to vector<32x512xf32>
    %106 = arith.addf %105, %104 : vector<32x512xf32>
    %107 = arith.divf %105, %106 : vector<32x512xf32>
    %108 = arith.mulf %102, %107 : vector<32x512xf32>
    %c17_i32_62 = arith.constant 17 : i32
    %109 = tpu.dynamic_rotate %108 by %c17_i32_62 dim 1 : vector<32x512xf32>, i32 -> vector<32x512xf32>
    %cst_63 = arith.constant dense<0.000000e+00> : vector<4x512xf32>
    %110 = tpu.matmul %19, %109, %cst_63 {dimension_numbers = #tpu.dot_dimension_numbers<[1], [0], [0], [1], [0, 0, 1, 1], [], []>} : vector<4x32xf32>, vector<32x512xf32>, vector<4x512xf32> -> vector<4x512xf32>
    %111 = arith.mulf %110, %45 : vector<4x512xf32>
    %112 = arith.addf %41, %111 : vector<4x512xf32>
    %c16_i32_64 = arith.constant 16 : i32
    %113 = tpu.dynamic_rotate %108 by %c16_i32_64 dim 1 : vector<32x512xf32>, i32 -> vector<32x512xf32>
    %cst_65 = arith.constant dense<0.000000e+00> : vector<4x512xf32>
    %114 = tpu.matmul %21, %113, %cst_65 {dimension_numbers = #tpu.dot_dimension_numbers<[1], [0], [0], [1], [0, 0, 1, 1], [], []>} : vector<4x32xf32>, vector<32x512xf32>, vector<4x512xf32> -> vector<4x512xf32>
    %115 = arith.mulf %114, %48 : vector<4x512xf32>
    %116 = arith.addf %112, %115 : vector<4x512xf32>
    %c15_i32_66 = arith.constant 15 : i32
    %117 = tpu.dynamic_rotate %108 by %c15_i32_66 dim 1 : vector<32x512xf32>, i32 -> vector<32x512xf32>
    %cst_67 = arith.constant dense<0.000000e+00> : vector<4x512xf32>
    %118 = tpu.matmul %23, %117, %cst_67 {dimension_numbers = #tpu.dot_dimension_numbers<[1], [0], [0], [1], [0, 0, 1, 1], [], []>} : vector<4x32xf32>, vector<32x512xf32>, vector<4x512xf32> -> vector<4x512xf32>
    %119 = arith.mulf %118, %51 : vector<4x512xf32>
    %120 = arith.addf %116, %119 : vector<4x512xf32>
    %c1_i32_68 = arith.constant 1 : i32
    %121 = tpu.dynamic_rotate %108 by %c1_i32_68 dim 1 : vector<32x512xf32>, i32 -> vector<32x512xf32>
    %cst_69 = arith.constant dense<0.000000e+00> : vector<4x512xf32>
    %122 = tpu.matmul %25, %121, %cst_69 {dimension_numbers = #tpu.dot_dimension_numbers<[1], [0], [0], [1], [0, 0, 1, 1], [], []>} : vector<4x32xf32>, vector<32x512xf32>, vector<4x512xf32> -> vector<4x512xf32>
    %123 = arith.mulf %122, %54 : vector<4x512xf32>
    %124 = arith.addf %120, %123 : vector<4x512xf32>
    %cst_70 = arith.constant dense<0.000000e+00> : vector<4x512xf32>
    %125 = tpu.matmul %27, %108, %cst_70 {dimension_numbers = #tpu.dot_dimension_numbers<[1], [0], [0], [1], [0, 0, 1, 1], [], []>} : vector<4x32xf32>, vector<32x512xf32>, vector<4x512xf32> -> vector<4x512xf32>
    %126 = arith.addf %124, %125 : vector<4x512xf32>
    %c511_i32_71 = arith.constant 511 : i32
    %127 = tpu.dynamic_rotate %108 by %c511_i32_71 dim 1 : vector<32x512xf32>, i32 -> vector<32x512xf32>
    %cst_72 = arith.constant dense<0.000000e+00> : vector<4x512xf32>
    %128 = tpu.matmul %29, %127, %cst_72 {dimension_numbers = #tpu.dot_dimension_numbers<[1], [0], [0], [1], [0, 0, 1, 1], [], []>} : vector<4x32xf32>, vector<32x512xf32>, vector<4x512xf32> -> vector<4x512xf32>
    %129 = arith.mulf %128, %57 : vector<4x512xf32>
    %130 = arith.addf %126, %129 : vector<4x512xf32>
    %c497_i32_73 = arith.constant 497 : i32
    %131 = tpu.dynamic_rotate %108 by %c497_i32_73 dim 1 : vector<32x512xf32>, i32 -> vector<32x512xf32>
    %cst_74 = arith.constant dense<0.000000e+00> : vector<4x512xf32>
    %132 = tpu.matmul %31, %131, %cst_74 {dimension_numbers = #tpu.dot_dimension_numbers<[1], [0], [0], [1], [0, 0, 1, 1], [], []>} : vector<4x32xf32>, vector<32x512xf32>, vector<4x512xf32> -> vector<4x512xf32>
    %133 = arith.mulf %132, %60 : vector<4x512xf32>
    %134 = arith.addf %130, %133 : vector<4x512xf32>
    %c496_i32_75 = arith.constant 496 : i32
    %135 = tpu.dynamic_rotate %108 by %c496_i32_75 dim 1 : vector<32x512xf32>, i32 -> vector<32x512xf32>
    %cst_76 = arith.constant dense<0.000000e+00> : vector<4x512xf32>
    %136 = tpu.matmul %33, %135, %cst_76 {dimension_numbers = #tpu.dot_dimension_numbers<[1], [0], [0], [1], [0, 0, 1, 1], [], []>} : vector<4x32xf32>, vector<32x512xf32>, vector<4x512xf32> -> vector<4x512xf32>
    %137 = arith.mulf %136, %63 : vector<4x512xf32>
    %138 = arith.addf %134, %137 : vector<4x512xf32>
    %c495_i32_77 = arith.constant 495 : i32
    %139 = tpu.dynamic_rotate %108 by %c495_i32_77 dim 1 : vector<32x512xf32>, i32 -> vector<32x512xf32>
    %cst_78 = arith.constant dense<0.000000e+00> : vector<4x512xf32>
    %140 = tpu.matmul %35, %139, %cst_78 {dimension_numbers = #tpu.dot_dimension_numbers<[1], [0], [0], [1], [0, 0, 1, 1], [], []>} : vector<4x32xf32>, vector<32x512xf32>, vector<4x512xf32> -> vector<4x512xf32>
    %141 = arith.mulf %140, %66 : vector<4x512xf32>
    %142 = arith.addf %138, %141 : vector<4x512xf32>
    %143 = arith.index_cast %68 : i32 to index
    %144 = memref.load %arg0[%143] : memref<4xf32, #tpu.memory_space<smem>>
    %145 = arith.index_cast %68 : i32 to index
    %146 = memref.load %arg1[%145] : memref<4xf32, #tpu.memory_space<smem>>
    %147 = vector.broadcast %146 : f32 to vector<4x512xf32>
    %148 = arith.mulf %147, %142 : vector<4x512xf32>
    %149 = arith.subf %67, %148 : vector<4x512xf32>
    %150 = vector.broadcast %144 : f32 to vector<4x512xf32>
    %151 = arith.mulf %150, %149 : vector<4x512xf32>
    %c1_i32_79 = arith.constant 1 : i32
    %c3_i32_80 = arith.constant 3 : i32
    %152 = arith.subi %c3_i32_80, %c1_i32_79 : i32
    %c17_i32_81 = arith.constant 17 : i32
    %153 = tpu.dynamic_rotate %151 by %c17_i32_81 dim 1 : vector<4x512xf32>, i32 -> vector<4x512xf32>
    %154 = arith.mulf %153, %45 : vector<4x512xf32>
    %cst_82 = arith.constant dense<0.000000e+00> : vector<32x512xf32>
    %155 = tpu.matmul %1, %154, %cst_82 {dimension_numbers = #tpu.dot_dimension_numbers<[1], [0], [0], [1], [0, 0, 1, 1], [], []>} : vector<32x4xf32>, vector<4x512xf32>, vector<32x512xf32> -> vector<32x512xf32>
    %156 = arith.addf %38, %155 : vector<32x512xf32>
    %c16_i32_83 = arith.constant 16 : i32
    %157 = tpu.dynamic_rotate %151 by %c16_i32_83 dim 1 : vector<4x512xf32>, i32 -> vector<4x512xf32>
    %158 = arith.mulf %157, %48 : vector<4x512xf32>
    %cst_84 = arith.constant dense<0.000000e+00> : vector<32x512xf32>
    %159 = tpu.matmul %3, %158, %cst_84 {dimension_numbers = #tpu.dot_dimension_numbers<[1], [0], [0], [1], [0, 0, 1, 1], [], []>} : vector<32x4xf32>, vector<4x512xf32>, vector<32x512xf32> -> vector<32x512xf32>
    %160 = arith.addf %156, %159 : vector<32x512xf32>
    %c15_i32_85 = arith.constant 15 : i32
    %161 = tpu.dynamic_rotate %151 by %c15_i32_85 dim 1 : vector<4x512xf32>, i32 -> vector<4x512xf32>
    %162 = arith.mulf %161, %51 : vector<4x512xf32>
    %cst_86 = arith.constant dense<0.000000e+00> : vector<32x512xf32>
    %163 = tpu.matmul %5, %162, %cst_86 {dimension_numbers = #tpu.dot_dimension_numbers<[1], [0], [0], [1], [0, 0, 1, 1], [], []>} : vector<32x4xf32>, vector<4x512xf32>, vector<32x512xf32> -> vector<32x512xf32>
    %164 = arith.addf %160, %163 : vector<32x512xf32>
    %c1_i32_87 = arith.constant 1 : i32
    %165 = tpu.dynamic_rotate %151 by %c1_i32_87 dim 1 : vector<4x512xf32>, i32 -> vector<4x512xf32>
    %166 = arith.mulf %165, %54 : vector<4x512xf32>
    %cst_88 = arith.constant dense<0.000000e+00> : vector<32x512xf32>
    %167 = tpu.matmul %7, %166, %cst_88 {dimension_numbers = #tpu.dot_dimension_numbers<[1], [0], [0], [1], [0, 0, 1, 1], [], []>} : vector<32x4xf32>, vector<4x512xf32>, vector<32x512xf32> -> vector<32x512xf32>
    %168 = arith.addf %164, %167 : vector<32x512xf32>
    %cst_89 = arith.constant dense<0.000000e+00> : vector<32x512xf32>
    %169 = tpu.matmul %9, %151, %cst_89 {dimension_numbers = #tpu.dot_dimension_numbers<[1], [0], [0], [1], [0, 0, 1, 1], [], []>} : vector<32x4xf32>, vector<4x512xf32>, vector<32x512xf32> -> vector<32x512xf32>
    %170 = arith.addf %168, %169 : vector<32x512xf32>
    %c511_i32_90 = arith.constant 511 : i32
    %171 = tpu.dynamic_rotate %151 by %c511_i32_90 dim 1 : vector<4x512xf32>, i32 -> vector<4x512xf32>
    %172 = arith.mulf %171, %57 : vector<4x512xf32>
    %cst_91 = arith.constant dense<0.000000e+00> : vector<32x512xf32>
    %173 = tpu.matmul %11, %172, %cst_91 {dimension_numbers = #tpu.dot_dimension_numbers<[1], [0], [0], [1], [0, 0, 1, 1], [], []>} : vector<32x4xf32>, vector<4x512xf32>, vector<32x512xf32> -> vector<32x512xf32>
    %174 = arith.addf %170, %173 : vector<32x512xf32>
    %c497_i32_92 = arith.constant 497 : i32
    %175 = tpu.dynamic_rotate %151 by %c497_i32_92 dim 1 : vector<4x512xf32>, i32 -> vector<4x512xf32>
    %176 = arith.mulf %175, %60 : vector<4x512xf32>
    %cst_93 = arith.constant dense<0.000000e+00> : vector<32x512xf32>
    %177 = tpu.matmul %13, %176, %cst_93 {dimension_numbers = #tpu.dot_dimension_numbers<[1], [0], [0], [1], [0, 0, 1, 1], [], []>} : vector<32x4xf32>, vector<4x512xf32>, vector<32x512xf32> -> vector<32x512xf32>
    %178 = arith.addf %174, %177 : vector<32x512xf32>
    %c496_i32_94 = arith.constant 496 : i32
    %179 = tpu.dynamic_rotate %151 by %c496_i32_94 dim 1 : vector<4x512xf32>, i32 -> vector<4x512xf32>
    %180 = arith.mulf %179, %63 : vector<4x512xf32>
    %cst_95 = arith.constant dense<0.000000e+00> : vector<32x512xf32>
    %181 = tpu.matmul %15, %180, %cst_95 {dimension_numbers = #tpu.dot_dimension_numbers<[1], [0], [0], [1], [0, 0, 1, 1], [], []>} : vector<32x4xf32>, vector<4x512xf32>, vector<32x512xf32> -> vector<32x512xf32>
    %182 = arith.addf %178, %181 : vector<32x512xf32>
    %c495_i32_96 = arith.constant 495 : i32
    %183 = tpu.dynamic_rotate %151 by %c495_i32_96 dim 1 : vector<4x512xf32>, i32 -> vector<4x512xf32>
    %184 = arith.mulf %183, %66 : vector<4x512xf32>
    %cst_97 = arith.constant dense<0.000000e+00> : vector<32x512xf32>
    %185 = tpu.matmul %17, %184, %cst_97 {dimension_numbers = #tpu.dot_dimension_numbers<[1], [0], [0], [1], [0, 0, 1, 1], [], []>} : vector<32x4xf32>, vector<4x512xf32>, vector<32x512xf32> -> vector<32x512xf32>
    %186 = arith.addf %182, %185 : vector<32x512xf32>
    %187 = arith.negf %186 : vector<32x512xf32>
    %188 = math.exp %187 : vector<32x512xf32>
    %cst_98 = arith.constant 1.000000e+00 : f32
    %189 = vector.broadcast %cst_98 : f32 to vector<32x512xf32>
    %190 = arith.addf %189, %188 : vector<32x512xf32>
    %191 = arith.divf %189, %190 : vector<32x512xf32>
    %192 = arith.mulf %186, %191 : vector<32x512xf32>
    %c17_i32_99 = arith.constant 17 : i32
    %193 = tpu.dynamic_rotate %192 by %c17_i32_99 dim 1 : vector<32x512xf32>, i32 -> vector<32x512xf32>
    %cst_100 = arith.constant dense<0.000000e+00> : vector<4x512xf32>
    %194 = tpu.matmul %19, %193, %cst_100 {dimension_numbers = #tpu.dot_dimension_numbers<[1], [0], [0], [1], [0, 0, 1, 1], [], []>} : vector<4x32xf32>, vector<32x512xf32>, vector<4x512xf32> -> vector<4x512xf32>
    %195 = arith.mulf %194, %45 : vector<4x512xf32>
    %196 = arith.addf %41, %195 : vector<4x512xf32>
    %c16_i32_101 = arith.constant 16 : i32
    %197 = tpu.dynamic_rotate %192 by %c16_i32_101 dim 1 : vector<32x512xf32>, i32 -> vector<32x512xf32>
    %cst_102 = arith.constant dense<0.000000e+00> : vector<4x512xf32>
    %198 = tpu.matmul %21, %197, %cst_102 {dimension_numbers = #tpu.dot_dimension_numbers<[1], [0], [0], [1], [0, 0, 1, 1], [], []>} : vector<4x32xf32>, vector<32x512xf32>, vector<4x512xf32> -> vector<4x512xf32>
    %199 = arith.mulf %198, %48 : vector<4x512xf32>
    %200 = arith.addf %196, %199 : vector<4x512xf32>
    %c15_i32_103 = arith.constant 15 : i32
    %201 = tpu.dynamic_rotate %192 by %c15_i32_103 dim 1 : vector<32x512xf32>, i32 -> vector<32x512xf32>
    %cst_104 = arith.constant dense<0.000000e+00> : vector<4x512xf32>
    %202 = tpu.matmul %23, %201, %cst_104 {dimension_numbers = #tpu.dot_dimension_numbers<[1], [0], [0], [1], [0, 0, 1, 1], [], []>} : vector<4x32xf32>, vector<32x512xf32>, vector<4x512xf32> -> vector<4x512xf32>
    %203 = arith.mulf %202, %51 : vector<4x512xf32>
    %204 = arith.addf %200, %203 : vector<4x512xf32>
    %c1_i32_105 = arith.constant 1 : i32
    %205 = tpu.dynamic_rotate %192 by %c1_i32_105 dim 1 : vector<32x512xf32>, i32 -> vector<32x512xf32>
    %cst_106 = arith.constant dense<0.000000e+00> : vector<4x512xf32>
    %206 = tpu.matmul %25, %205, %cst_106 {dimension_numbers = #tpu.dot_dimension_numbers<[1], [0], [0], [1], [0, 0, 1, 1], [], []>} : vector<4x32xf32>, vector<32x512xf32>, vector<4x512xf32> -> vector<4x512xf32>
    %207 = arith.mulf %206, %54 : vector<4x512xf32>
    %208 = arith.addf %204, %207 : vector<4x512xf32>
    %cst_107 = arith.constant dense<0.000000e+00> : vector<4x512xf32>
    %209 = tpu.matmul %27, %192, %cst_107 {dimension_numbers = #tpu.dot_dimension_numbers<[1], [0], [0], [1], [0, 0, 1, 1], [], []>} : vector<4x32xf32>, vector<32x512xf32>, vector<4x512xf32> -> vector<4x512xf32>
    %210 = arith.addf %208, %209 : vector<4x512xf32>
    %c511_i32_108 = arith.constant 511 : i32
    %211 = tpu.dynamic_rotate %192 by %c511_i32_108 dim 1 : vector<32x512xf32>, i32 -> vector<32x512xf32>
    %cst_109 = arith.constant dense<0.000000e+00> : vector<4x512xf32>
    %212 = tpu.matmul %29, %211, %cst_109 {dimension_numbers = #tpu.dot_dimension_numbers<[1], [0], [0], [1], [0, 0, 1, 1], [], []>} : vector<4x32xf32>, vector<32x512xf32>, vector<4x512xf32> -> vector<4x512xf32>
    %213 = arith.mulf %212, %57 : vector<4x512xf32>
    %214 = arith.addf %210, %213 : vector<4x512xf32>
    %c497_i32_110 = arith.constant 497 : i32
    %215 = tpu.dynamic_rotate %192 by %c497_i32_110 dim 1 : vector<32x512xf32>, i32 -> vector<32x512xf32>
    %cst_111 = arith.constant dense<0.000000e+00> : vector<4x512xf32>
    %216 = tpu.matmul %31, %215, %cst_111 {dimension_numbers = #tpu.dot_dimension_numbers<[1], [0], [0], [1], [0, 0, 1, 1], [], []>} : vector<4x32xf32>, vector<32x512xf32>, vector<4x512xf32> -> vector<4x512xf32>
    %217 = arith.mulf %216, %60 : vector<4x512xf32>
    %218 = arith.addf %214, %217 : vector<4x512xf32>
    %c496_i32_112 = arith.constant 496 : i32
    %219 = tpu.dynamic_rotate %192 by %c496_i32_112 dim 1 : vector<32x512xf32>, i32 -> vector<32x512xf32>
    %cst_113 = arith.constant dense<0.000000e+00> : vector<4x512xf32>
    %220 = tpu.matmul %33, %219, %cst_113 {dimension_numbers = #tpu.dot_dimension_numbers<[1], [0], [0], [1], [0, 0, 1, 1], [], []>} : vector<4x32xf32>, vector<32x512xf32>, vector<4x512xf32> -> vector<4x512xf32>
    %221 = arith.mulf %220, %63 : vector<4x512xf32>
    %222 = arith.addf %218, %221 : vector<4x512xf32>
    %c495_i32_114 = arith.constant 495 : i32
    %223 = tpu.dynamic_rotate %192 by %c495_i32_114 dim 1 : vector<32x512xf32>, i32 -> vector<32x512xf32>
    %cst_115 = arith.constant dense<0.000000e+00> : vector<4x512xf32>
    %224 = tpu.matmul %35, %223, %cst_115 {dimension_numbers = #tpu.dot_dimension_numbers<[1], [0], [0], [1], [0, 0, 1, 1], [], []>} : vector<4x32xf32>, vector<32x512xf32>, vector<4x512xf32> -> vector<4x512xf32>
    %225 = arith.mulf %224, %66 : vector<4x512xf32>
    %226 = arith.addf %222, %225 : vector<4x512xf32>
    %227 = arith.index_cast %152 : i32 to index
    %228 = memref.load %arg0[%227] : memref<4xf32, #tpu.memory_space<smem>>
    %229 = arith.index_cast %152 : i32 to index
    %230 = memref.load %arg1[%229] : memref<4xf32, #tpu.memory_space<smem>>
    %231 = vector.broadcast %230 : f32 to vector<4x512xf32>
    %232 = arith.mulf %231, %226 : vector<4x512xf32>
    %233 = arith.subf %151, %232 : vector<4x512xf32>
    %234 = vector.broadcast %228 : f32 to vector<4x512xf32>
    %235 = arith.mulf %234, %233 : vector<4x512xf32>
    %c2_i32 = arith.constant 2 : i32
    %c3_i32_116 = arith.constant 3 : i32
    %236 = arith.subi %c3_i32_116, %c2_i32 : i32
    %c17_i32_117 = arith.constant 17 : i32
    %237 = tpu.dynamic_rotate %235 by %c17_i32_117 dim 1 : vector<4x512xf32>, i32 -> vector<4x512xf32>
    %238 = arith.mulf %237, %45 : vector<4x512xf32>
    %cst_118 = arith.constant dense<0.000000e+00> : vector<32x512xf32>
    %239 = tpu.matmul %1, %238, %cst_118 {dimension_numbers = #tpu.dot_dimension_numbers<[1], [0], [0], [1], [0, 0, 1, 1], [], []>} : vector<32x4xf32>, vector<4x512xf32>, vector<32x512xf32> -> vector<32x512xf32>
    %240 = arith.addf %38, %239 : vector<32x512xf32>
    %c16_i32_119 = arith.constant 16 : i32
    %241 = tpu.dynamic_rotate %235 by %c16_i32_119 dim 1 : vector<4x512xf32>, i32 -> vector<4x512xf32>
    %242 = arith.mulf %241, %48 : vector<4x512xf32>
    %cst_120 = arith.constant dense<0.000000e+00> : vector<32x512xf32>
    %243 = tpu.matmul %3, %242, %cst_120 {dimension_numbers = #tpu.dot_dimension_numbers<[1], [0], [0], [1], [0, 0, 1, 1], [], []>} : vector<32x4xf32>, vector<4x512xf32>, vector<32x512xf32> -> vector<32x512xf32>
    %244 = arith.addf %240, %243 : vector<32x512xf32>
    %c15_i32_121 = arith.constant 15 : i32
    %245 = tpu.dynamic_rotate %235 by %c15_i32_121 dim 1 : vector<4x512xf32>, i32 -> vector<4x512xf32>
    %246 = arith.mulf %245, %51 : vector<4x512xf32>
    %cst_122 = arith.constant dense<0.000000e+00> : vector<32x512xf32>
    %247 = tpu.matmul %5, %246, %cst_122 {dimension_numbers = #tpu.dot_dimension_numbers<[1], [0], [0], [1], [0, 0, 1, 1], [], []>} : vector<32x4xf32>, vector<4x512xf32>, vector<32x512xf32> -> vector<32x512xf32>
    %248 = arith.addf %244, %247 : vector<32x512xf32>
    %c1_i32_123 = arith.constant 1 : i32
    %249 = tpu.dynamic_rotate %235 by %c1_i32_123 dim 1 : vector<4x512xf32>, i32 -> vector<4x512xf32>
    %250 = arith.mulf %249, %54 : vector<4x512xf32>
    %cst_124 = arith.constant dense<0.000000e+00> : vector<32x512xf32>
    %251 = tpu.matmul %7, %250, %cst_124 {dimension_numbers = #tpu.dot_dimension_numbers<[1], [0], [0], [1], [0, 0, 1, 1], [], []>} : vector<32x4xf32>, vector<4x512xf32>, vector<32x512xf32> -> vector<32x512xf32>
    %252 = arith.addf %248, %251 : vector<32x512xf32>
    %cst_125 = arith.constant dense<0.000000e+00> : vector<32x512xf32>
    %253 = tpu.matmul %9, %235, %cst_125 {dimension_numbers = #tpu.dot_dimension_numbers<[1], [0], [0], [1], [0, 0, 1, 1], [], []>} : vector<32x4xf32>, vector<4x512xf32>, vector<32x512xf32> -> vector<32x512xf32>
    %254 = arith.addf %252, %253 : vector<32x512xf32>
    %c511_i32_126 = arith.constant 511 : i32
    %255 = tpu.dynamic_rotate %235 by %c511_i32_126 dim 1 : vector<4x512xf32>, i32 -> vector<4x512xf32>
    %256 = arith.mulf %255, %57 : vector<4x512xf32>
    %cst_127 = arith.constant dense<0.000000e+00> : vector<32x512xf32>
    %257 = tpu.matmul %11, %256, %cst_127 {dimension_numbers = #tpu.dot_dimension_numbers<[1], [0], [0], [1], [0, 0, 1, 1], [], []>} : vector<32x4xf32>, vector<4x512xf32>, vector<32x512xf32> -> vector<32x512xf32>
    %258 = arith.addf %254, %257 : vector<32x512xf32>
    %c497_i32_128 = arith.constant 497 : i32
    %259 = tpu.dynamic_rotate %235 by %c497_i32_128 dim 1 : vector<4x512xf32>, i32 -> vector<4x512xf32>
    %260 = arith.mulf %259, %60 : vector<4x512xf32>
    %cst_129 = arith.constant dense<0.000000e+00> : vector<32x512xf32>
    %261 = tpu.matmul %13, %260, %cst_129 {dimension_numbers = #tpu.dot_dimension_numbers<[1], [0], [0], [1], [0, 0, 1, 1], [], []>} : vector<32x4xf32>, vector<4x512xf32>, vector<32x512xf32> -> vector<32x512xf32>
    %262 = arith.addf %258, %261 : vector<32x512xf32>
    %c496_i32_130 = arith.constant 496 : i32
    %263 = tpu.dynamic_rotate %235 by %c496_i32_130 dim 1 : vector<4x512xf32>, i32 -> vector<4x512xf32>
    %264 = arith.mulf %263, %63 : vector<4x512xf32>
    %cst_131 = arith.constant dense<0.000000e+00> : vector<32x512xf32>
    %265 = tpu.matmul %15, %264, %cst_131 {dimension_numbers = #tpu.dot_dimension_numbers<[1], [0], [0], [1], [0, 0, 1, 1], [], []>} : vector<32x4xf32>, vector<4x512xf32>, vector<32x512xf32> -> vector<32x512xf32>
    %266 = arith.addf %262, %265 : vector<32x512xf32>
    %c495_i32_132 = arith.constant 495 : i32
    %267 = tpu.dynamic_rotate %235 by %c495_i32_132 dim 1 : vector<4x512xf32>, i32 -> vector<4x512xf32>
    %268 = arith.mulf %267, %66 : vector<4x512xf32>
    %cst_133 = arith.constant dense<0.000000e+00> : vector<32x512xf32>
    %269 = tpu.matmul %17, %268, %cst_133 {dimension_numbers = #tpu.dot_dimension_numbers<[1], [0], [0], [1], [0, 0, 1, 1], [], []>} : vector<32x4xf32>, vector<4x512xf32>, vector<32x512xf32> -> vector<32x512xf32>
    %270 = arith.addf %266, %269 : vector<32x512xf32>
    %271 = arith.negf %270 : vector<32x512xf32>
    %272 = math.exp %271 : vector<32x512xf32>
    %cst_134 = arith.constant 1.000000e+00 : f32
    %273 = vector.broadcast %cst_134 : f32 to vector<32x512xf32>
    %274 = arith.addf %273, %272 : vector<32x512xf32>
    %275 = arith.divf %273, %274 : vector<32x512xf32>
    %276 = arith.mulf %270, %275 : vector<32x512xf32>
    %c17_i32_135 = arith.constant 17 : i32
    %277 = tpu.dynamic_rotate %276 by %c17_i32_135 dim 1 : vector<32x512xf32>, i32 -> vector<32x512xf32>
    %cst_136 = arith.constant dense<0.000000e+00> : vector<4x512xf32>
    %278 = tpu.matmul %19, %277, %cst_136 {dimension_numbers = #tpu.dot_dimension_numbers<[1], [0], [0], [1], [0, 0, 1, 1], [], []>} : vector<4x32xf32>, vector<32x512xf32>, vector<4x512xf32> -> vector<4x512xf32>
    %279 = arith.mulf %278, %45 : vector<4x512xf32>
    %280 = arith.addf %41, %279 : vector<4x512xf32>
    %c16_i32_137 = arith.constant 16 : i32
    %281 = tpu.dynamic_rotate %276 by %c16_i32_137 dim 1 : vector<32x512xf32>, i32 -> vector<32x512xf32>
    %cst_138 = arith.constant dense<0.000000e+00> : vector<4x512xf32>
    %282 = tpu.matmul %21, %281, %cst_138 {dimension_numbers = #tpu.dot_dimension_numbers<[1], [0], [0], [1], [0, 0, 1, 1], [], []>} : vector<4x32xf32>, vector<32x512xf32>, vector<4x512xf32> -> vector<4x512xf32>
    %283 = arith.mulf %282, %48 : vector<4x512xf32>
    %284 = arith.addf %280, %283 : vector<4x512xf32>
    %c15_i32_139 = arith.constant 15 : i32
    %285 = tpu.dynamic_rotate %276 by %c15_i32_139 dim 1 : vector<32x512xf32>, i32 -> vector<32x512xf32>
    %cst_140 = arith.constant dense<0.000000e+00> : vector<4x512xf32>
    %286 = tpu.matmul %23, %285, %cst_140 {dimension_numbers = #tpu.dot_dimension_numbers<[1], [0], [0], [1], [0, 0, 1, 1], [], []>} : vector<4x32xf32>, vector<32x512xf32>, vector<4x512xf32> -> vector<4x512xf32>
    %287 = arith.mulf %286, %51 : vector<4x512xf32>
    %288 = arith.addf %284, %287 : vector<4x512xf32>
    %c1_i32_141 = arith.constant 1 : i32
    %289 = tpu.dynamic_rotate %276 by %c1_i32_141 dim 1 : vector<32x512xf32>, i32 -> vector<32x512xf32>
    %cst_142 = arith.constant dense<0.000000e+00> : vector<4x512xf32>
    %290 = tpu.matmul %25, %289, %cst_142 {dimension_numbers = #tpu.dot_dimension_numbers<[1], [0], [0], [1], [0, 0, 1, 1], [], []>} : vector<4x32xf32>, vector<32x512xf32>, vector<4x512xf32> -> vector<4x512xf32>
    %291 = arith.mulf %290, %54 : vector<4x512xf32>
    %292 = arith.addf %288, %291 : vector<4x512xf32>
    %cst_143 = arith.constant dense<0.000000e+00> : vector<4x512xf32>
    %293 = tpu.matmul %27, %276, %cst_143 {dimension_numbers = #tpu.dot_dimension_numbers<[1], [0], [0], [1], [0, 0, 1, 1], [], []>} : vector<4x32xf32>, vector<32x512xf32>, vector<4x512xf32> -> vector<4x512xf32>
    %294 = arith.addf %292, %293 : vector<4x512xf32>
    %c511_i32_144 = arith.constant 511 : i32
    %295 = tpu.dynamic_rotate %276 by %c511_i32_144 dim 1 : vector<32x512xf32>, i32 -> vector<32x512xf32>
    %cst_145 = arith.constant dense<0.000000e+00> : vector<4x512xf32>
    %296 = tpu.matmul %29, %295, %cst_145 {dimension_numbers = #tpu.dot_dimension_numbers<[1], [0], [0], [1], [0, 0, 1, 1], [], []>} : vector<4x32xf32>, vector<32x512xf32>, vector<4x512xf32> -> vector<4x512xf32>
    %297 = arith.mulf %296, %57 : vector<4x512xf32>
    %298 = arith.addf %294, %297 : vector<4x512xf32>
    %c497_i32_146 = arith.constant 497 : i32
    %299 = tpu.dynamic_rotate %276 by %c497_i32_146 dim 1 : vector<32x512xf32>, i32 -> vector<32x512xf32>
    %cst_147 = arith.constant dense<0.000000e+00> : vector<4x512xf32>
    %300 = tpu.matmul %31, %299, %cst_147 {dimension_numbers = #tpu.dot_dimension_numbers<[1], [0], [0], [1], [0, 0, 1, 1], [], []>} : vector<4x32xf32>, vector<32x512xf32>, vector<4x512xf32> -> vector<4x512xf32>
    %301 = arith.mulf %300, %60 : vector<4x512xf32>
    %302 = arith.addf %298, %301 : vector<4x512xf32>
    %c496_i32_148 = arith.constant 496 : i32
    %303 = tpu.dynamic_rotate %276 by %c496_i32_148 dim 1 : vector<32x512xf32>, i32 -> vector<32x512xf32>
    %cst_149 = arith.constant dense<0.000000e+00> : vector<4x512xf32>
    %304 = tpu.matmul %33, %303, %cst_149 {dimension_numbers = #tpu.dot_dimension_numbers<[1], [0], [0], [1], [0, 0, 1, 1], [], []>} : vector<4x32xf32>, vector<32x512xf32>, vector<4x512xf32> -> vector<4x512xf32>
    %305 = arith.mulf %304, %63 : vector<4x512xf32>
    %306 = arith.addf %302, %305 : vector<4x512xf32>
    %c495_i32_150 = arith.constant 495 : i32
    %307 = tpu.dynamic_rotate %276 by %c495_i32_150 dim 1 : vector<32x512xf32>, i32 -> vector<32x512xf32>
    %cst_151 = arith.constant dense<0.000000e+00> : vector<4x512xf32>
    %308 = tpu.matmul %35, %307, %cst_151 {dimension_numbers = #tpu.dot_dimension_numbers<[1], [0], [0], [1], [0, 0, 1, 1], [], []>} : vector<4x32xf32>, vector<32x512xf32>, vector<4x512xf32> -> vector<4x512xf32>
    %309 = arith.mulf %308, %66 : vector<4x512xf32>
    %310 = arith.addf %306, %309 : vector<4x512xf32>
    %311 = arith.index_cast %236 : i32 to index
    %312 = memref.load %arg0[%311] : memref<4xf32, #tpu.memory_space<smem>>
    %313 = arith.index_cast %236 : i32 to index
    %314 = memref.load %arg1[%313] : memref<4xf32, #tpu.memory_space<smem>>
    %315 = vector.broadcast %314 : f32 to vector<4x512xf32>
    %316 = arith.mulf %315, %310 : vector<4x512xf32>
    %317 = arith.subf %235, %316 : vector<4x512xf32>
    %318 = vector.broadcast %312 : f32 to vector<4x512xf32>
    %319 = arith.mulf %318, %317 : vector<4x512xf32>
    %c3_i32_152 = arith.constant 3 : i32
    %c0_153 = arith.constant 0 : index
    %c0_154 = arith.constant 0 : index
    %320 = vector.load %arg8[%c0_153, %c0_154] : memref<4x512xf32, #tpu.memory_space<vmem>>, vector<4x512xf32>
    tpu.vector_store %arg8[%c0_153, %c0_154], %319 {strides = array<i32>} : memref<4x512xf32, #tpu.memory_space<vmem>>, vector<4x512xf32>,
    return
  }
}

</mosaic_0001>

<llo_original>
// kernel: diffusion_forward.1
$region0: #{diffusion_forward.1}
  #allocation0 [shape = 'u32[]', space=smem, size = 0x4, offset = 0x4, fixed_abs, tag = 'smem constant byte address 0x4 - core index']
  #allocation1 [shape = 'u32[144,128]{1,0:T(1,128)}', space=vmem, size = 0x12000, scoped, tag = 'internal scratch']
  %s0 = inlined_call_operand.vmem [shape: f32[4], index: 0, kind: input, shape index: {}]
  %s1 = inlined_call_operand.vmem [shape: f32[4], index: 1, kind: input, shape index: {}]
  %s2 = inlined_call_operand.vmem [shape: f32[4,512], index: 2, kind: input, shape index: {}]
  %s3 = inlined_call_operand.vmem [shape: f32[9,32,4], index: 3, kind: input, shape index: {}]
  %s4 = inlined_call_operand.vmem [shape: f32[32,1], index: 4, kind: input, shape index: {}]
  %s5 = inlined_call_operand.vmem [shape: f32[9,4,32], index: 5, kind: input, shape index: {}]
  %s6 = inlined_call_operand.vmem [shape: f32[4,1], index: 6, kind: input, shape index: {}]
  %s7 = inlined_call_operand.vmem [shape: f32[9,512], index: 7, kind: input, shape index: {}]
  %s8 = inlined_call_operand.vmem [shape: f32[4,512], index: 8, kind: output, shape index: {}]
  %s9 = sld [smem:[#allocation0]]
  $region50: #{diffusion_forward.1} parent=0
    _
  %s11 = ssub.s32 1, %s9
  %s12 = scalar_select 0, %s11, %s9
  $region1: #{diffusion_forward.1} parent=0
    #allocation2 [shape = 'u8[512]{0}', space=smem, size = 0x200, scoped, tag = 'input window, operand 0, single buffered']
    #allocation3 [shape = 's32[1]{0}', space=sflag, size = 0x4, scoped, tag = 'scoped memory for diffusion_forward.1']
    #allocation4 [shape = 'u8[512]{0}', space=smem, size = 0x200, scoped, tag = 'input window, operand 1, single buffered']
    #allocation5 [shape = 's32[1]{0}', space=sflag, size = 0x4, scoped, tag = 'scoped memory for diffusion_forward.1']
    %13 = vsyncpa [#allocation3], 0
    %14 = vsyncpa [#allocation5], 0
    // Predicated region
    $region2: #{diffusion_forward.1} parent=1 // pred_check
      _
    $region3: #{diffusion_forward.1} parent=1 // pred_check_branch
      %16 = sbr.rel (0) target = $region5
    $region4: #{diffusion_forward.1} parent=1 // pred_region
      %s18 = ssub.s32 16, 16
      %19 = vsyncadd [#allocation3], %s18
      %s21 = sshll.u32 %s0, 4
      %s22 = int_to_ptr.vmem [resolvable:$true] %s21
      %24 = dma.vmem_to_smem %s22, 16, [#allocation2], [#allocation3]
    $region5: #{diffusion_forward.1} parent=1 // pred_fallthru
      _
    // Predicated region
    $region6: #{diffusion_forward.1} parent=1 // pred_check
      _
    $region7: #{diffusion_forward.1} parent=1 // pred_check_branch
      %26 = sbr.rel (0) target = $region9
    $region8: #{diffusion_forward.1} parent=1 // pred_region
      %s28 = ssub.s32 16, 16
      %29 = vsyncadd [#allocation5], %s28
      %s31 = sshll.u32 %s1, 4
      %s32 = int_to_ptr.vmem [resolvable:$true] %s31
      %34 = dma.vmem_to_smem %s32, 16, [#allocation4], [#allocation5]
    $region9: #{diffusion_forward.1} parent=1 // pred_fallthru
      _
    // Predicated region
    $region10: #{diffusion_forward.1} parent=1 // pred_check
      _
    $region11: #{diffusion_forward.1} parent=1 // pred_check_branch
      %36 = sbr.rel (0) target = $region13
    $region12: #{diffusion_forward.1} parent=1 // pred_region
      _
    $region13: #{diffusion_forward.1} parent=1 // pred_fallthru
      _
    // Predicated region
    $region14: #{diffusion_forward.1} parent=1 // pred_check
      _
    $region15: #{diffusion_forward.1} parent=1 // pred_check_branch
      %38 = sbr.rel (0) target = $region17
    $region16: #{diffusion_forward.1} parent=1 // pred_region
      _
    $region17: #{diffusion_forward.1} parent=1 // pred_fallthru
      _
    // Predicated region
    $region18: #{diffusion_forward.1} parent=1 // pred_check
      _
    $region19: #{diffusion_forward.1} parent=1 // pred_check_branch
      %40 = sbr.rel (0) target = $region21
    $region20: #{diffusion_forward.1} parent=1 // pred_region
      _
    $region21: #{diffusion_forward.1} parent=1 // pred_fallthru
      _
    // Predicated region
    $region22: #{diffusion_forward.1} parent=1 // pred_check
      _
    $region23: #{diffusion_forward.1} parent=1 // pred_check_branch
      %42 = sbr.rel (0) target = $region25
    $region24: #{diffusion_forward.1} parent=1 // pred_region
      _
    $region25: #{diffusion_forward.1} parent=1 // pred_fallthru
      _
    // Predicated region
    $region26: #{diffusion_forward.1} parent=1 // pred_check
      _
    $region27: #{diffusion_forward.1} parent=1 // pred_check_branch
      %44 = sbr.rel (0) target = $region29
    $region28: #{diffusion_forward.1} parent=1 // pred_region
      _
    $region29: #{diffusion_forward.1} parent=1 // pred_fallthru
      _
    // Predicated region
    $region30: #{diffusion_forward.1} parent=1 // pred_check
      _
    $region31: #{diffusion_forward.1} parent=1 // pred_check_branch
      %46 = sbr.rel (0) target = $region33
    $region32: #{diffusion_forward.1} parent=1 // pred_region
      _
    $region33: #{diffusion_forward.1} parent=1 // pred_fallthru
      _
    // Predicated region
    $region34: #{diffusion_forward.1} parent=1 // pred_check
      _
    $region35: #{diffusion_forward.1} parent=1 // pred_check_branch
      %48 = sbr.rel (0) target = $region37
    $region36: #{diffusion_forward.1} parent=1 // pred_region
      %49 = dma.done [#allocation3], 16
    $region37: #{diffusion_forward.1} parent=1 // pred_fallthru
      _
    // Predicated region
    $region38: #{diffusion_forward.1} parent=1 // pred_check
      _
    $region39: #{diffusion_forward.1} parent=1 // pred_check_branch
      %51 = sbr.rel (0) target = $region41
    $region40: #{diffusion_forward.1} parent=1 // pred_region
      %52 = dma.done [#allocation5], 16
    $region41: #{diffusion_forward.1} parent=1 // pred_fallthru
      _
    %53 = sfence
    %v54 = vld [vmem:[%s3] sm:$0xff]
    %v55 = vld [vmem:[%s3 + $0x8] sm:$0xff]
    %v56 = vld [vmem:[%s3 + $0x10] sm:$0xff]
    %v57 = vld [vmem:[%s3 + $0x18] sm:$0xff]
    %s58 = scalar_lea.vmem %s3, 32
    %v59 = vld [vmem:[%s58] sm:$0xff]
    %v60 = vld [vmem:[%s58 + $0x8] sm:$0xff]
    %v61 = vld [vmem:[%s58 + $0x10] sm:$0xff]
    %v62 = vld [vmem:[%s58 + $0x18] sm:$0xff]
    %s63 = scalar_lea.vmem %s3, 64
    %v64 = vld [vmem:[%s63] sm:$0xff]
    %v65 = vld [vmem:[%s63 + $0x8] sm:$0xff]
    %v66 = vld [vmem:[%s63 + $0x10] sm:$0xff]
    %v67 = vld [vmem:[%s63 + $0x18] sm:$0xff]
    %s68 = scalar_lea.vmem %s3, 96
    %v69 = vld [vmem:[%s68] sm:$0xff]
    %v70 = vld [vmem:[%s68 + $0x8] sm:$0xff]
    %v71 = vld [vmem:[%s68 + $0x10] sm:$0xff]
    %v72 = vld [vmem:[%s68 + $0x18] sm:$0xff]
    %s73 = scalar_lea.vmem %s3, 128
    %v74 = vld [vmem:[%s73] sm:$0xff]
    %v75 = vld [vmem:[%s73 + $0x8] sm:$0xff]
    %v76 = vld [vmem:[%s73 + $0x10] sm:$0xff]
    %v77 = vld [vmem:[%s73 + $0x18] sm:$0xff]
    %s78 = scalar_lea.vmem %s3, 160
    %v79 = vld [vmem:[%s78] sm:$0xff]
    %v80 = vld [vmem:[%s78 + $0x8] sm:$0xff]
    %v81 = vld [vmem:[%s78 + $0x10] sm:$0xff]
    %v82 = vld [vmem:[%s78 + $0x18] sm:$0xff]
    %s83 = scalar_lea.vmem %s3, 192
    %v84 = vld [vmem:[%s83] sm:$0xff]
    %v85 = vld [vmem:[%s83 + $0x8] sm:$0xff]
    %v86 = vld [vmem:[%s83 + $0x10] sm:$0xff]
    %v87 = vld [vmem:[%s83 + $0x18] sm:$0xff]
    %s88 = scalar_lea.vmem %s3, 224
    %v89 = vld [vmem:[%s88] sm:$0xff]
    %v90 = vld [vmem:[%s88 + $0x8] sm:$0xff]
    %v91 = vld [vmem:[%s88 + $0x10] sm:$0xff]
    %v92 = vld [vmem:[%s88 + $0x18] sm:$0xff]
    %s93 = scalar_lea.vmem %s3, 256
    %v94 = vld [vmem:[%s93] sm:$0xff]
    %v95 = vld [vmem:[%s93 + $0x8] sm:$0xff]
    %v96 = vld [vmem:[%s93 + $0x10] sm:$0xff]
    %v97 = vld [vmem:[%s93 + $0x18] sm:$0xff]
    %v98 = vld [vmem:[%s5] sm:$0xf]
    %s99 = scalar_lea.vmem %s5, 4
    %v100 = vld [vmem:[%s99] sm:$0xf]
    %s101 = scalar_lea.vmem %s5, 8
    %v102 = vld [vmem:[%s101] sm:$0xf]
    %s103 = scalar_lea.vmem %s5, 12
    %v104 = vld [vmem:[%s103] sm:$0xf]
    %s105 = scalar_lea.vmem %s5, 16
    %v106 = vld [vmem:[%s105] sm:$0xf]
    %s107 = scalar_lea.vmem %s5, 20
    %v108 = vld [vmem:[%s107] sm:$0xf]
    %s109 = scalar_lea.vmem %s5, 24
    %v110 = vld [vmem:[%s109] sm:$0xf]
    %s111 = scalar_lea.vmem %s5, 28
    %v112 = vld [vmem:[%s111] sm:$0xf]
    %s113 = scalar_lea.vmem %s5, 32
    %v114 = vld [vmem:[%s113] sm:$0xf]
    %v115 = vld [vmem:[%s4] sm:$0xff]
    %v116 = vld [vmem:[%s4 + $0x8] sm:$0xff]
    %v117 = vld [vmem:[%s4 + $0x10] sm:$0xff]
    %v118 = vld [vmem:[%s4 + $0x18] sm:$0xff]
    %120 = vset.pattern.permute.xlu0 0
    %121 = vperm.xlu0 %120, %v115
    %v122 = vpop.permute.xlu0 %121
    %125 = vset.pattern.permute.xlu0 0
    %126 = vperm.xlu0 %125, %v116
    %v127 = vpop.permute.xlu0 %126
    %130 = vset.pattern.permute.xlu0 0
    %131 = vperm.xlu0 %130, %v117
    %v132 = vpop.permute.xlu0 %131
    %135 = vset.pattern.permute.xlu0 0
    %136 = vperm.xlu0 %135, %v118
    %v137 = vpop.permute.xlu0 %136
    %v139 = vld [vmem:[%s6] sm:$0xf]
    %141 = vset.pattern.permute.xlu0 0
    %142 = vperm.xlu0 %141, %v139
    %v143 = vpop.permute.xlu0 %142
    %v145 = vld [vmem:[%s7] sm:$0xff]
    %v146 = vld [vmem:[%s7 + $0x8] sm:$0xff]
    %v147 = vld [vmem:[%s7 + $0x10] sm:$0xff]
    %v148 = vld [vmem:[%s7 + $0x18] sm:$0xff]
    %v149 = vld [vmem:[%s7 + $0x20] sm:$0x1]
    %v150 = vld [vmem:[%s7 + $0x28] sm:$0x1]
    %v151 = vld [vmem:[%s7 + $0x30] sm:$0x1]
    %v152 = vld [vmem:[%s7 + $0x38] sm:$0x1]
    %v153 = vlaneseq
    %v154 = vshrl.u32 %v153, 7
    %v155 = vsub.s32 0, %v154
    %v156 = vrot.slane %v145, %v155
    %v157 = vlaneseq
    %v158 = vshrl.u32 %v157, 7
    %v159 = vsub.s32 0, %v158
    %v160 = vrot.slane %v146, %v159
    %v161 = vlaneseq
    %v162 = vshrl.u32 %v161, 7
    %v163 = vsub.s32 0, %v162
    %v164 = vrot.slane %v147, %v163
    %v165 = vlaneseq
    %v166 = vshrl.u32 %v165, 7
    %v167 = vsub.s32 0, %v166
    %v168 = vrot.slane %v148, %v167
    %v169 = vlaneseq
    %v170 = vshrl.u32 %v169, 7
    %v171 = vsub.s32 1, %v170
    %v172 = vrot.slane %v145, %v171
    %v173 = vlaneseq
    %v174 = vshrl.u32 %v173, 7
    %v175 = vsub.s32 1, %v174
    %v176 = vrot.slane %v146, %v175
    %v177 = vlaneseq
    %v178 = vshrl.u32 %v177, 7
    %v179 = vsub.s32 1, %v178
    %v180 = vrot.slane %v147, %v179
    %v181 = vlaneseq
    %v182 = vshrl.u32 %v181, 7
    %v183 = vsub.s32 1, %v182
    %v184 = vrot.slane %v148, %v183
    %v185 = vlaneseq
    %v186 = vshrl.u32 %v185, 7
    %v187 = vsub.s32 2, %v186
    %v188 = vrot.slane %v145, %v187
    %v189 = vlaneseq
    %v190 = vshrl.u32 %v189, 7
    %v191 = vsub.s32 2, %v190
    %v192 = vrot.slane %v146, %v191
    %v193 = vlaneseq
    %v194 = vshrl.u32 %v193, 7
    %v195 = vsub.s32 2, %v194
    %v196 = vrot.slane %v147, %v195
    %v197 = vlaneseq
    %v198 = vshrl.u32 %v197, 7
    %v199 = vsub.s32 2, %v198
    %v200 = vrot.slane %v148, %v199
    %v201 = vlaneseq
    %v202 = vshrl.u32 %v201, 7
    %v203 = vsub.s32 3, %v202
    %v204 = vrot.slane %v145, %v203
    %v205 = vlaneseq
    %v206 = vshrl.u32 %v205, 7
    %v207 = vsub.s32 3, %v206
    %v208 = vrot.slane %v146, %v207
    %v209 = vlaneseq
    %v210 = vshrl.u32 %v209, 7
    %v211 = vsub.s32 3, %v210
    %v212 = vrot.slane %v147, %v211
    %v213 = vlaneseq
    %v214 = vshrl.u32 %v213, 7
    %v215 = vsub.s32 3, %v214
    %v216 = vrot.slane %v148, %v215
    %v217 = vlaneseq
    %v218 = vshrl.u32 %v217, 7
    %v219 = vsub.s32 5, %v218
    %v220 = vrot.slane %v145, %v219
    %v221 = vlaneseq
    %v222 = vshrl.u32 %v221, 7
    %v223 = vsub.s32 5, %v222
    %v224 = vrot.slane %v146, %v223
    %v225 = vlaneseq
    %v226 = vshrl.u32 %v225, 7
    %v227 = vsub.s32 5, %v226
    %v228 = vrot.slane %v147, %v227
    %v229 = vlaneseq
    %v230 = vshrl.u32 %v229, 7
    %v231 = vsub.s32 5, %v230
    %v232 = vrot.slane %v148, %v231
    %v233 = vlaneseq
    %v234 = vshrl.u32 %v233, 7
    %v235 = vsub.s32 6, %v234
    %v236 = vrot.slane %v145, %v235
    %v237 = vlaneseq
    %v238 = vshrl.u32 %v237, 7
    %v239 = vsub.s32 6, %v238
    %v240 = vrot.slane %v146, %v239
    %v241 = vlaneseq
    %v242 = vshrl.u32 %v241, 7
    %v243 = vsub.s32 6, %v242
    %v244 = vrot.slane %v147, %v243
    %v245 = vlaneseq
    %v246 = vshrl.u32 %v245, 7
    %v247 = vsub.s32 6, %v246
    %v248 = vrot.slane %v148, %v247
    %v249 = vlaneseq
    %v250 = vshrl.u32 %v249, 7
    %v251 = vsub.s32 7, %v250
    %v252 = vrot.slane %v145, %v251
    %v253 = vlaneseq
    %v254 = vshrl.u32 %v253, 7
    %v255 = vsub.s32 7, %v254
    %v256 = vrot.slane %v146, %v255
    %v257 = vlaneseq
    %v258 = vshrl.u32 %v257, 7
    %v259 = vsub.s32 7, %v258
    %v260 = vrot.slane %v147, %v259
    %v261 = vlaneseq
    %v262 = vshrl.u32 %v261, 7
    %v263 = vsub.s32 7, %v262
    %v264 = vrot.slane %v148, %v263
    %v265 = vlaneseq
    %v266 = vshrl.u32 %v265, 7
    %v267 = vsub.s32 0, %v266
    %v268 = vrot.slane %v149, %v267
    %v269 = vlaneseq
    %v270 = vshrl.u32 %v269, 7
    %v271 = vsub.s32 0, %v270
    %v272 = vrot.slane %v150, %v271
    %v273 = vlaneseq
    %v274 = vshrl.u32 %v273, 7
    %v275 = vsub.s32 0, %v274
    %v276 = vrot.slane %v151, %v275
    %v277 = vlaneseq
    %v278 = vshrl.u32 %v277, 7
    %v279 = vsub.s32 0, %v278
    %v280 = vrot.slane %v152, %v279
    %v281 = vld [vmem:[%s2] sm:$0xff]
    %v282 = vld [vmem:[%s2 + $0x8] sm:$0xff]
    %v285 = vcombine.high %v281, %v281
    %v286 = vcombine.high %v282, %v282
    %289 = vrot.lane.b32.xlu0 %v281, 17
    %v290 = vpop.permute.xlu0 %289
    %291 = vrot.lane.b32.xlu0 %v285, 17
    %v292 = vpop.permute.xlu0 %291
    %293 = vrot.lane.b32.xlu0 %v282, 17
    %v294 = vpop.permute.xlu0 %293
    %295 = vrot.lane.b32.xlu0 %v286, 17
    %v296 = vpop.permute.xlu0 %295
    %v297 = vlaneseq
    %v298 = vand.u32 %v297, 127
    %vm299 = vcmp.lt.s32.totalorder %v298, 17
    %v300 = vsel %vm299, %v294, %v296
    %v301 = vsel %vm299, %v292, %v294
    %v302 = vsel %vm299, %v290, %v292
    %v303 = vsel %vm299, %v296, %v290
    %v304 = vmul.f32 %v303, %v156
    %v305 = vmul.f32 %v302, %v160
    %v306 = vmul.f32 %v301, %v164
    %v307 = vmul.f32 %v300, %v168
    %vm308 = vcmask 31744
    %v310 = vsel %vm308, %v54, 0
    %v313 = vsel %vm308, %v55, 0
    %v316 = vsel %vm308, %v56, 0
    %v319 = vsel %vm308, %v57, 0
    %vm321 = vcmask 1043456
    %v323 = vsel %vm321, %v304, 0
    %v326 = vsel %vm321, %v305, 0
    %v329 = vsel %vm321, %v306, 0
    %v332 = vsel %vm321, %v307, 0
    %334 = vmatprep.subr.mxu0 %v326
    %335 = vmatpush1.msra.mxu0 %v323
    %336 = vmatprep.subr.mxu0 0.0
    %337 = vmatpush1.msra.mxu0 0.0
    %338 = vmatprep.subr.mxu0 0.0
    %339 = vmatpush1.msra.mxu0 0.0
    %340 = vmatprep.subr.mxu0 0.0
    %341 = vmatpush1.msra.mxu0 0.0
    %342 = vmatprep.subr.mxu0 0.0
    %343 = vmatpush1.msra.mxu0 0.0
    %344 = vmatprep.subr.mxu0 0.0
    %345 = vmatpush1.msra.mxu0 0.0
    %346 = vmatprep.subr.mxu0 0.0
    %347 = vmatpush1.msra.mxu0 0.0
    %348 = vmatprep.subr.mxu0 0.0
    %349 = vmatpush1.msra.mxu0 0.0
    %350 = vmatprep.subr.mxu0 0.0
    %351 = vmatpush1.msra.mxu0 0.0
    %352 = vmatprep.subr.mxu0 0.0
    %353 = vmatpush1.msra.mxu0 0.0
    %354 = vmatprep.subr.mxu0 0.0
    %355 = vmatpush1.msra.mxu0 0.0
    %356 = vmatprep.subr.mxu0 0.0
    %357 = vmatpush1.msra.mxu0 0.0
    %358 = vmatprep.subr.mxu0 0.0
    %359 = vmatpush1.msra.mxu0 0.0
    %360 = vmatprep.subr.mxu0 0.0
    %361 = vmatpush1.msra.mxu0 0.0
    %362 = vmatprep.subr.mxu0 0.0
    %363 = vmatpush1.msra.mxu0 0.0
    %364 = vmatprep.subr.mxu0 0.0
    %365 = vmatpush1.msra.mxu0 0.0
    %366 = vmatprep.subr.mxu0 0.0
    %367 = vmatpush1.msra.mxu0 0.0
    %368 = vmatprep.subr.mxu0 0.0
    %369 = vmatpush1.msra.mxu0 0.0
    %370 = vmatprep.subr.mxu0 0.0
    %371 = vmatpush1.msra.mxu0 0.0
    %372 = vmatprep.subr.mxu0 0.0
    %373 = vmatpush1.msra.mxu0 0.0
    %374 = vmatprep.subr.mxu0 0.0
    %375 = vmatpush1.msra.mxu0 0.0
    %376 = vmatprep.subr.mxu0 0.0
    %377 = vmatpush1.msra.mxu0 0.0
    %378 = vmatprep.subr.mxu0 0.0
    %379 = vmatpush1.msra.mxu0 0.0
    %380 = vmatprep.subr.mxu0 0.0
    %381 = vmatpush1.msra.mxu0 0.0
    %382 = vmatprep.subr.mxu0 0.0
    %383 = vmatpush1.msra.mxu0 0.0
    %384 = vmatprep.subr.mxu0 0.0
    %385 = vmatpush1.msra.mxu0 0.0
    %386 = vmatprep.subr.mxu0 0.0
    %387 = vmatpush1.msra.mxu0 0.0
    %388 = vmatprep.subr.mxu0 0.0
    %389 = vmatpush1.msra.mxu0 0.0
    %390 = vmatprep.subr.mxu0 0.0
    %391 = vmatpush1.msra.mxu0 0.0
    %392 = vmatprep.subr.mxu0 0.0
    %393 = vmatpush1.msra.mxu0 0.0
    %394 = vmatprep.subr.mxu0 0.0
    %395 = vmatpush1.msra.mxu0 0.0
    %396 = vmatprep.subr.mxu0 0.0
    %397 = vmatpush1.msra.mxu0 0.0
    %398 = vmatprep.mubr.f32.mxu0 0.0
    %399 = vmatmul.mubr.f32.gmra.mrb[0].mxu0 %v310
    %v400 = vpop.f32.mrb[0].mxu0
    %v401 = vadd.f32 0.0, %v400
    %v402 = vpop.f32.mrb[0].mxu0
    %v403 = vadd.f32 0.0, %v402
    %404 = vmatprep.mubr.f32.mxu0 0.0
    %405 = vmatmul.mubr.f32.gmra.mrb[0].mxu0 %v313
    %v406 = vpop.f32.mrb[0].mxu0
    %v407 = vadd.f32 0.0, %v406
    %v408 = vpop.f32.mrb[0].mxu0
    %v409 = vadd.f32 0.0, %v408
    %410 = vmatprep.mubr.f32.mxu0 0.0
    %411 = vmatmul.mubr.f32.gmra.mrb[0].mxu0 %v316
    %v412 = vpop.f32.mrb[0].mxu0
    %v413 = vadd.f32 0.0, %v412
    %v414 = vpop.f32.mrb[0].mxu0
    %v415 = vadd.f32 0.0, %v414
    %416 = vmatprep.mubr.f32.mxu0 0.0
    %417 = vmatmul.mubr.f32.gmra.mrb[0].mxu0 %v319
    %v418 = vpop.f32.mrb[0].mxu0
    %v419 = vadd.f32 0.0, %v418
    %v420 = vpop.f32.mrb[0].mxu0
    %v421 = vadd.f32 0.0, %v420
    %422 = vdwg.mxu0
    %423 = vmatprep.subr.mxu0 %v332
    %424 = vmatpush1.msra.mxu0 %v329
    %425 = vmatprep.subr.mxu0 0.0
    %426 = vmatpush1.msra.mxu0 0.0
    %427 = vmatprep.subr.mxu0 0.0
    %428 = vmatpush1.msra.mxu0 0.0
    %429 = vmatprep.subr.mxu0 0.0
    %430 = vmatpush1.msra.mxu0 0.0
    %431 = vmatprep.subr.mxu0 0.0
    %432 = vmatpush1.msra.mxu0 0.0
    %433 = vmatprep.subr.mxu0 0.0
    %434 = vmatpush1.msra.mxu0 0.0
    %435 = vmatprep.subr.mxu0 0.0
    %436 = vmatpush1.msra.mxu0 0.0
    %437 = vmatprep.subr.mxu0 0.0
    %438 = vmatpush1.msra.mxu0 0.0
    %439 = vmatprep.subr.mxu0 0.0
    %440 = vmatpush1.msra.mxu0 0.0
    %441 = vmatprep.subr.mxu0 0.0
    %442 = vmatpush1.msra.mxu0 0.0
    %443 = vmatprep.subr.mxu0 0.0
    %444 = vmatpush1.msra.mxu0 0.0
    %445 = vmatprep.subr.mxu0 0.0
    %446 = vmatpush1.msra.mxu0 0.0
    %447 = vmatprep.subr.mxu0 0.0
    %448 = vmatpush1.msra.mxu0 0.0
    %449 = vmatprep.subr.mxu0 0.0
    %450 = vmatpush1.msra.mxu0 0.0
    %451 = vmatprep.subr.mxu0 0.0
    %452 = vmatpush1.msra.mxu0 0.0
    %453 = vmatprep.subr.mxu0 0.0
    %454 = vmatpush1.msra.mxu0 0.0
    %455 = vmatprep.subr.mxu0 0.0
    %456 = vmatpush1.msra.mxu0 0.0
    %457 = vmatprep.subr.mxu0 0.0
    %458 = vmatpush1.msra.mxu0 0.0
    %459 = vmatprep.subr.mxu0 0.0
    %460 = vmatpush1.msra.mxu0 0.0
    %461 = vmatprep.subr.mxu0 0.0
    %462 = vmatpush1.msra.mxu0 0.0
    %463 = vmatprep.subr.mxu0 0.0
    %464 = vmatpush1.msra.mxu0 0.0
    %465 = vmatprep.subr.mxu0 0.0
    %466 = vmatpush1.msra.mxu0 0.0
    %467 = vmatprep.subr.mxu0 0.0
    %468 = vmatpush1.msra.mxu0 0.0
    %469 = vmatprep.subr.mxu0 0.0
    %470 = vmatpush1.msra.mxu0 0.0
    %471 = vmatprep.subr.mxu0 0.0
    %472 = vmatpush1.msra.mxu0 0.0
    %473 = vmatprep.subr.mxu0 0.0
    %474 = vmatpush1.msra.mxu0 0.0
    %475 = vmatprep.subr.mxu0 0.0
    %476 = vmatpush1.msra.mxu0 0.0
    %477 = vmatprep.subr.mxu0 0.0
    %478 = vmatpush1.msra.mxu0 0.0
    %479 = vmatprep.subr.mxu0 0.0
    %480 = vmatpush1.msra.mxu0 0.0
    %481 = vmatprep.subr.mxu0 0.0
    %482 = vmatpush1.msra.mxu0 0.0
    %483 = vmatprep.subr.mxu0 0.0
    %484 = vmatpush1.msra.mxu0 0.0
    %485 = vmatprep.subr.mxu0 0.0
    %486 = vmatpush1.msra.mxu0 0.0
    %487 = vmatprep.mubr.f32.mxu0 0.0
    %488 = vmatmul.mubr.f32.gmra.mrb[0].mxu0 %v310
    %v489 = vpop.f32.mrb[0].mxu0
    %v490 = vadd.f32 0.0, %v489
    %v491 = vpop.f32.mrb[0].mxu0
    %v492 = vadd.f32 0.0, %v491
    %493 = vmatprep.mubr.f32.mxu0 0.0
    %494 = vmatmul.mubr.f32.gmra.mrb[0].mxu0 %v313
    %v495 = vpop.f32.mrb[0].mxu0
    %v496 = vadd.f32 0.0, %v495
    %v497 = vpop.f32.mrb[0].mxu0
    %v498 = vadd.f32 0.0, %v497
    %499 = vmatprep.mubr.f32.mxu0 0.0
    %500 = vmatmul.mubr.f32.gmra.mrb[0].mxu0 %v316
    %v501 = vpop.f32.mrb[0].mxu0
    %v502 = vadd.f32 0.0, %v501
    %v503 = vpop.f32.mrb[0].mxu0
    %v504 = vadd.f32 0.0, %v503
    %505 = vmatprep.mubr.f32.mxu0 0.0
    %506 = vmatmul.mubr.f32.gmra.mrb[0].mxu0 %v319
    %v507 = vpop.f32.mrb[0].mxu0
    %v508 = vadd.f32 0.0, %v507
    %v509 = vpop.f32.mrb[0].mxu0
    %v510 = vadd.f32 0.0, %v509
    %511 = vdwg.mxu0
    %v512 = vadd.f32 %v122, %v401
    %v513 = vadd.f32 %v122, %v403
    %v514 = vadd.f32 %v122, %v490
    %v515 = vadd.f32 %v122, %v492
    %v516 = vadd.f32 %v127, %v407
    %v517 = vadd.f32 %v127, %v409
    %v518 = vadd.f32 %v127, %v496
    %v519 = vadd.f32 %v127, %v498
    %v520 = vadd.f32 %v132, %v413
    %v521 = vadd.f32 %v132, %v415
    %v522 = vadd.f32 %v132, %v502
    %v523 = vadd.f32 %v132, %v504
    %v524 = vadd.f32 %v137, %v419
    %v525 = vadd.f32 %v137, %v421
    %v526 = vadd.f32 %v137, %v508
    %v527 = vadd.f32 %v137, %v510
    %528 = vrot.lane.b32.xlu0 %v281, 16
    %v529 = vpop.permute.xlu0 %528
    %530 = vrot.lane.b32.xlu0 %v285, 16
    %v531 = vpop.permute.xlu0 %530
    %532 = vrot.lane.b32.xlu0 %v282, 16
    %v533 = vpop.permute.xlu0 %532
    %534 = vrot.lane.b32.xlu0 %v286, 16
    %v535 = vpop.permute.xlu0 %534
    %vm536 = vcmp.lt.s32.totalorder %v298, 16
    %v537 = vsel %vm536, %v533, %v535
    %v538 = vsel %vm536, %v531, %v533
    %v539 = vsel %vm536, %v529, %v531
    %v540 = vsel %vm536, %v535, %v529
    %v541 = vmul.f32 %v540, %v172
    %v542 = vmul.f32 %v539, %v176
    %v543 = vmul.f32 %v538, %v180
    %v544 = vmul.f32 %v537, %v184
    %v546 = vsel %vm308, %v59, 0
    %v549 = vsel %vm308, %v60, 0
    %v552 = vsel %vm308, %v61, 0
    %v555 = vsel %vm308, %v62, 0
    %v558 = vsel %vm321, %v541, 0
    %v561 = vsel %vm321, %v542, 0
    %v564 = vsel %vm321, %v543, 0
    %v567 = vsel %vm321, %v544, 0
    %569 = vmatprep.subr.mxu0 %v561
    %570 = vmatpush1.msra.mxu0 %v558
    %571 = vmatprep.subr.mxu0 0.0
    %572 = vmatpush1.msra.mxu0 0.0
    %573 = vmatprep.subr.mxu0 0.0
    %574 = vmatpush1.msra.mxu0 0.0
    %575 = vmatprep.subr.mxu0 0.0
    %576 = vmatpush1.msra.mxu0 0.0
    %577 = vmatprep.subr.mxu0 0.0
    %578 = vmatpush1.msra.mxu0 0.0
    %579 = vmatprep.subr.mxu0 0.0
    %580 = vmatpush1.msra.mxu0 0.0
    %581 = vmatprep.subr.mxu0 0.0
    %582 = vmatpush1.msra.mxu0 0.0
    %583 = vmatprep.subr.mxu0 0.0
    %584 = vmatpush1.msra.mxu0 0.0
    %585 = vmatprep.subr.mxu0 0.0
    %586 = vmatpush1.msra.mxu0 0.0
    %587 = vmatprep.subr.mxu0 0.0
    %588 = vmatpush1.msra.mxu0 0.0
    %589 = vmatprep.subr.mxu0 0.0
    %590 = vmatpush1.msra.mxu0 0.0
    %591 = vmatprep.subr.mxu0 0.0
    %592 = vmatpush1.msra.mxu0 0.0
    %593 = vmatprep.subr.mxu0 0.0
    %594 = vmatpush1.msra.mxu0 0.0
    %595 = vmatprep.subr.mxu0 0.0
    %596 = vmatpush1.msra.mxu0 0.0
    %597 = vmatprep.subr.mxu0 0.0
    %598 = vmatpush1.msra.mxu0 0.0
    %599 = vmatprep.subr.mxu0 0.0
    %600 = vmatpush1.msra.mxu0 0.0
    %601 = vmatprep.subr.mxu0 0.0
    %602 = vmatpush1.msra.mxu0 0.0
    %603 = vmatprep.subr.mxu0 0.0
    %604 = vmatpush1.msra.mxu0 0.0
    %605 = vmatprep.subr.mxu0 0.0
    %606 = vmatpush1.msra.mxu0 0.0
    %607 = vmatprep.subr.mxu0 0.0
    %608 = vmatpush1.msra.mxu0 0.0
    %609 = vmatprep.subr.mxu0 0.0
    %610 = vmatpush1.msra.mxu0 0.0
    %611 = vmatprep.subr.mxu0 0.0
    %612 = vmatpush1.msra.mxu0 0.0
    %613 = vmatprep.subr.mxu0 0.0
    %614 = vmatpush1.msra.mxu0 0.0
    %615 = vmatprep.subr.mxu0 0.0
    %616 = vmatpush1.msra.mxu0 0.0
    %617 = vmatprep.subr.mxu0 0.0
    %618 = vmatpush1.msra.mxu0 0.0
    %619 = vmatprep.subr.mxu0 0.0
    %620 = vmatpush1.msra.mxu0 0.0
    %621 = vmatprep.subr.mxu0 0.0
    %622 = vmatpush1.msra.mxu0 0.0
    %623 = vmatprep.subr.mxu0 0.0
    %624 = vmatpush1.msra.mxu0 0.0
    %625 = vmatprep.subr.mxu0 0.0
    %626 = vmatpush1.msra.mxu0 0.0
    %627 = vmatprep.subr.mxu0 0.0
    %628 = vmatpush1.msra.mxu0 0.0
    %629 = vmatprep.subr.mxu0 0.0
    %630 = vmatpush1.msra.mxu0 0.0
    %631 = vmatprep.subr.mxu0 0.0
    %632 = vmatpush1.msra.mxu0 0.0
    %633 = vmatprep.mubr.f32.mxu0 0.0
    %634 = vmatmul.mubr.f32.gmra.mrb[0].mxu0 %v546
    %v635 = vpop.f32.mrb[0].mxu0
    %v636 = vadd.f32 0.0, %v635
    %v637 = vpop.f32.mrb[0].mxu0
    %v638 = vadd.f32 0.0, %v637
    %639 = vmatprep.mubr.f32.mxu0 0.0
    %640 = vmatmul.mubr.f32.gmra.mrb[0].mxu0 %v549
    %v641 = vpop.f32.mrb[0].mxu0
    %v642 = vadd.f32 0.0, %v641
    %v643 = vpop.f32.mrb[0].mxu0
    %v644 = vadd.f32 0.0, %v643
    %645 = vmatprep.mubr.f32.mxu0 0.0
    %646 = vmatmul.mubr.f32.gmra.mrb[0].mxu0 %v552
    %v647 = vpop.f32.mrb[0].mxu0
    %v648 = vadd.f32 0.0, %v647
    %v649 = vpop.f32.mrb[0].mxu0
    %v650 = vadd.f32 0.0, %v649
    %651 = vmatprep.mubr.f32.mxu0 0.0
    %652 = vmatmul.mubr.f32.gmra.mrb[0].mxu0 %v555
    %v653 = vpop.f32.mrb[0].mxu0
    %v654 = vadd.f32 0.0, %v653
    %v655 = vpop.f32.mrb[0].mxu0
    %v656 = vadd.f32 0.0, %v655
    %657 = vdwg.mxu0
    %658 = vmatprep.subr.mxu0 %v567
    %659 = vmatpush1.msra.mxu0 %v564
    %660 = vmatprep.subr.mxu0 0.0
    %661 = vmatpush1.msra.mxu0 0.0
    %662 = vmatprep.subr.mxu0 0.0
    %663 = vmatpush1.msra.mxu0 0.0
    %664 = vmatprep.subr.mxu0 0.0
    %665 = vmatpush1.msra.mxu0 0.0
    %666 = vmatprep.subr.mxu0 0.0
    %667 = vmatpush1.msra.mxu0 0.0
    %668 = vmatprep.subr.mxu0 0.0
    %669 = vmatpush1.msra.mxu0 0.0
    %670 = vmatprep.subr.mxu0 0.0
    %671 = vmatpush1.msra.mxu0 0.0
    %672 = vmatprep.subr.mxu0 0.0
    %673 = vmatpush1.msra.mxu0 0.0
    %674 = vmatprep.subr.mxu0 0.0
    %675 = vmatpush1.msra.mxu0 0.0
    %676 = vmatprep.subr.mxu0 0.0
    %677 = vmatpush1.msra.mxu0 0.0
    %678 = vmatprep.subr.mxu0 0.0
    %679 = vmatpush1.msra.mxu0 0.0
    %680 = vmatprep.subr.mxu0 0.0
    %681 = vmatpush1.msra.mxu0 0.0
    %682 = vmatprep.subr.mxu0 0.0
    %683 = vmatpush1.msra.mxu0 0.0
    %684 = vmatprep.subr.mxu0 0.0
    %685 = vmatpush1.msra.mxu0 0.0
    %686 = vmatprep.subr.mxu0 0.0
    %687 = vmatpush1.msra.mxu0 0.0
    %688 = vmatprep.subr.mxu0 0.0
    %689 = vmatpush1.msra.mxu0 0.0
    %690 = vmatprep.subr.mxu0 0.0
    %691 = vmatpush1.msra.mxu0 0.0
    %692 = vmatprep.subr.mxu0 0.0
    %693 = vmatpush1.msra.mxu0 0.0
    %694 = vmatprep.subr.mxu0 0.0
    %695 = vmatpush1.msra.mxu0 0.0
    %696 = vmatprep.subr.mxu0 0.0
    %697 = vmatpush1.msra.mxu0 0.0
    %698 = vmatprep.subr.mxu0 0.0
    %699 = vmatpush1.msra.mxu0 0.0
    %700 = vmatprep.subr.mxu0 0.0
    %701 = vmatpush1.msra.mxu0 0.0
    %702 = vmatprep.subr.mxu0 0.0
    %703 = vmatpush1.msra.mxu0 0.0
    %704 = vmatprep.subr.mxu0 0.0
    %705 = vmatpush1.msra.mxu0 0.0
    %706 = vmatprep.subr.mxu0 0.0
    %707 = vmatpush1.msra.mxu0 0.0
    %708 = vmatprep.subr.mxu0 0.0
    %709 = vmatpush1.msra.mxu0 0.0
    %710 = vmatprep.subr.mxu0 0.0
    %711 = vmatpush1.msra.mxu0 0.0
    %712 = vmatprep.subr.mxu0 0.0
    %713 = vmatpush1.msra.mxu0 0.0
    %714 = vmatprep.subr.mxu0 0.0
    %715 = vmatpush1.msra.mxu0 0.0
    %716 = vmatprep.subr.mxu0 0.0
    %717 = vmatpush1.msra.mxu0 0.0
    %718 = vmatprep.subr.mxu0 0.0
    %719 = vmatpush1.msra.mxu0 0.0
    %720 = vmatprep.subr.mxu0 0.0
    %721 = vmatpush1.msra.mxu0 0.0
    %722 = vmatprep.mubr.f32.mxu0 0.0
    %723 = vmatmul.mubr.f32.gmra.mrb[0].mxu0 %v546
    %v724 = vpop.f32.mrb[0].mxu0
    %v725 = vadd.f32 0.0, %v724
    %v726 = vpop.f32.mrb[0].mxu0
    %v727 = vadd.f32 0.0, %v726
    %728 = vmatprep.mubr.f32.mxu0 0.0
    %729 = vmatmul.mubr.f32.gmra.mrb[0].mxu0 %v549
    %v730 = vpop.f32.mrb[0].mxu0
    %v731 = vadd.f32 0.0, %v730
    %v732 = vpop.f32.mrb[0].mxu0
    %v733 = vadd.f32 0.0, %v732
    %734 = vmatprep.mubr.f32.mxu0 0.0
    %735 = vmatmul.mubr.f32.gmra.mrb[0].mxu0 %v552
    %v736 = vpop.f32.mrb[0].mxu0
    %v737 = vadd.f32 0.0, %v736
    %v738 = vpop.f32.mrb[0].mxu0
    %v739 = vadd.f32 0.0, %v738
    %740 = vmatprep.mubr.f32.mxu0 0.0
    %741 = vmatmul.mubr.f32.gmra.mrb[0].mxu0 %v555
    %v742 = vpop.f32.mrb[0].mxu0
    %v743 = vadd.f32 0.0, %v742
    %v744 = vpop.f32.mrb[0].mxu0
    %v745 = vadd.f32 0.0, %v744
    %746 = vdwg.mxu0
    %v747 = vadd.f32 %v512, %v636
    %v748 = vadd.f32 %v513, %v638
    %v749 = vadd.f32 %v514, %v725
    %v750 = vadd.f32 %v515, %v727
    %v751 = vadd.f32 %v516, %v642
    %v752 = vadd.f32 %v517, %v644
    %v753 = vadd.f32 %v518, %v731
    %v754 = vadd.f32 %v519, %v733
    %v755 = vadd.f32 %v520, %v648
    %v756 = vadd.f32 %v521, %v650
    %v757 = vadd.f32 %v522, %v737
    %v758 = vadd.f32 %v523, %v739
    %v759 = vadd.f32 %v524, %v654
    %v760 = vadd.f32 %v525, %v656
    %v761 = vadd.f32 %v526, %v743
    %v762 = vadd.f32 %v527, %v745
    %763 = vrot.lane.b32.xlu0 %v281, 15
    %v764 = vpop.permute.xlu0 %763
    %765 = vrot.lane.b32.xlu0 %v285, 15
    %v766 = vpop.permute.xlu0 %765
    %767 = vrot.lane.b32.xlu0 %v282, 15
    %v768 = vpop.permute.xlu0 %767
    %769 = vrot.lane.b32.xlu0 %v286, 15
    %v770 = vpop.permute.xlu0 %769
    %vm771 = vcmp.lt.s32.totalorder %v298, 15
    %v772 = vsel %vm771, %v768, %v770
    %v773 = vsel %vm771, %v766, %v768
    %v774 = vsel %vm771, %v764, %v766
    %v775 = vsel %vm771, %v770, %v764
    %v776 = vmul.f32 %v775, %v188
    %v777 = vmul.f32 %v774, %v192
    %v778 = vmul.f32 %v773, %v196
    %v779 = vmul.f32 %v772, %v200
    %v781 = vsel %vm308, %v64, 0
    %v784 = vsel %vm308, %v65, 0
    %v787 = vsel %vm308, %v66, 0
    %v790 = vsel %vm308, %v67, 0
    %v793 = vsel %vm321, %v776, 0
    %v796 = vsel %vm321, %v777, 0
    %v799 = vsel %vm321, %v778, 0
    %v802 = vsel %vm321, %v779, 0
    %804 = vmatprep.subr.mxu0 %v796
    %805 = vmatpush1.msra.mxu0 %v793
    %806 = vmatprep.subr.mxu0 0.0
    %807 = vmatpush1.msra.mxu0 0.0
    %808 = vmatprep.subr.mxu0 0.0
    %809 = vmatpush1.msra.mxu0 0.0
    %810 = vmatprep.subr.mxu0 0.0
    %811 = vmatpush1.msra.mxu0 0.0
    %812 = vmatprep.subr.mxu0 0.0
    %813 = vmatpush1.msra.mxu0 0.0
    %814 = vmatprep.subr.mxu0 0.0
    %815 = vmatpush1.msra.mxu0 0.0
    %816 = vmatprep.subr.mxu0 0.0
    %817 = vmatpush1.msra.mxu0 0.0
    %818 = vmatprep.subr.mxu0 0.0
    %819 = vmatpush1.msra.mxu0 0.0
    %820 = vmatprep.subr.mxu0 0.0
    %821 = vmatpush1.msra.mxu0 0.0
    %822 = vmatprep.subr.mxu0 0.0
    %823 = vmatpush1.msra.mxu0 0.0
    %824 = vmatprep.subr.mxu0 0.0
    %825 = vmatpush1.msra.mxu0 0.0
    %826 = vmatprep.subr.mxu0 0.0
    %827 = vmatpush1.msra.mxu0 0.0
    %828 = vmatprep.subr.mxu0 0.0
    %829 = vmatpush1.msra.mxu0 0.0
    %830 = vmatprep.subr.mxu0 0.0
    %831 = vmatpush1.msra.mxu0 0.0
    %832 = vmatprep.subr.mxu0 0.0
    %833 = vmatpush1.msra.mxu0 0.0
    %834 = vmatprep.subr.mxu0 0.0
    %835 = vmatpush1.msra.mxu0 0.0
    %836 = vmatprep.subr.mxu0 0.0
    %837 = vmatpush1.msra.mxu0 0.0
    %838 = vmatprep.subr.mxu0 0.0
    %839 = vmatpush1.msra.mxu0 0.0
    %840 = vmatprep.subr.mxu0 0.0
    %841 = vmatpush1.msra.mxu0 0.0
    %842 = vmatprep.subr.mxu0 0.0
    %843 = vmatpush1.msra.mxu0 0.0
    %844 = vmatprep.subr.mxu0 0.0
    %845 = vmatpush1.msra.mxu0 0.0
    %846 = vmatprep.subr.mxu0 0.0
    %847 = vmatpush1.msra.mxu0 0.0
    %848 = vmatprep.subr.mxu0 0.0
    %849 = vmatpush1.msra.mxu0 0.0
    %850 = vmatprep.subr.mxu0 0.0
    %851 = vmatpush1.msra.mxu0 0.0
    %852 = vmatprep.subr.mxu0 0.0
    %853 = vmatpush1.msra.mxu0 0.0
    %854 = vmatprep.subr.mxu0 0.0
    %855 = vmatpush1.msra.mxu0 0.0
    %856 = vmatprep.subr.mxu0 0.0
    %857 = vmatpush1.msra.mxu0 0.0
    %858 = vmatprep.subr.mxu0 0.0
    %859 = vmatpush1.msra.mxu0 0.0
    %860 = vmatprep.subr.mxu0 0.0
    %861 = vmatpush1.msra.mxu0 0.0
    %862 = vmatprep.subr.mxu0 0.0
    %863 = vmatpush1.msra.mxu0 0.0
    %864 = vmatprep.subr.mxu0 0.0
    %865 = vmatpush1.msra.mxu0 0.0
    %866 = vmatprep.subr.mxu0 0.0
    %867 = vmatpush1.msra.mxu0 0.0
    %868 = vmatprep.mubr.f32.mxu0 0.0
    %869 = vmatmul.mubr.f32.gmra.mrb[0].mxu0 %v781
    %v870 = vpop.f32.mrb[0].mxu0
    %v871 = vadd.f32 0.0, %v870
    %v872 = vpop.f32.mrb[0].mxu0
    %v873 = vadd.f32 0.0, %v872
    %874 = vmatprep.mubr.f32.mxu0 0.0
    %875 = vmatmul.mubr.f32.gmra.mrb[0].mxu0 %v784
    %v876 = vpop.f32.mrb[0].mxu0
    %v877 = vadd.f32 0.0, %v876
    %v878 = vpop.f32.mrb[0].mxu0
    %v879 = vadd.f32 0.0, %v878
    %880 = vmatprep.mubr.f32.mxu0 0.0
    %881 = vmatmul.mubr.f32.gmra.mrb[0].mxu0 %v787
    %v882 = vpop.f32.mrb[0].mxu0
    %v883 = vadd.f32 0.0, %v882
    %v884 = vpop.f32.mrb[0].mxu0
    %v885 = vadd.f32 0.0, %v884
    %886 = vmatprep.mubr.f32.mxu0 0.0
    %887 = vmatmul.mubr.f32.gmra.mrb[0].mxu0 %v790
    %v888 = vpop.f32.mrb[0].mxu0
    %v889 = vadd.f32 0.0, %v888
    %v890 = vpop.f32.mrb[0].mxu0
    %v891 = vadd.f32 0.0, %v890
    %892 = vdwg.mxu0
    %893 = vmatprep.subr.mxu0 %v802
    %894 = vmatpush1.msra.mxu0 %v799
    %895 = vmatprep.subr.mxu0 0.0
    %896 = vmatpush1.msra.mxu0 0.0
    %897 = vmatprep.subr.mxu0 0.0
    %898 = vmatpush1.msra.mxu0 0.0
    %899 = vmatprep.subr.mxu0 0.0
    %900 = vmatpush1.msra.mxu0 0.0
    %901 = vmatprep.subr.mxu0 0.0
    %902 = vmatpush1.msra.mxu0 0.0
    %903 = vmatprep.subr.mxu0 0.0
    %904 = vmatpush1.msra.mxu0 0.0
    %905 = vmatprep.subr.mxu0 0.0
    %906 = vmatpush1.msra.mxu0 0.0
    %907 = vmatprep.subr.mxu0 0.0
    %908 = vmatpush1.msra.mxu0 0.0
    %909 = vmatprep.subr.mxu0 0.0
    %910 = vmatpush1.msra.mxu0 0.0
    %911 = vmatprep.subr.mxu0 0.0
    %912 = vmatpush1.msra.mxu0 0.0
    %913 = vmatprep.subr.mxu0 0.0
    %914 = vmatpush1.msra.mxu0 0.0
    %915 = vmatprep.subr.mxu0 0.0
    %916 = vmatpush1.msra.mxu0 0.0
    %917 = vmatprep.subr.mxu0 0.0
    %918 = vmatpush1.msra.mxu0 0.0
    %919 = vmatprep.subr.mxu0 0.0
    %920 = vmatpush1.msra.mxu0 0.0
    %921 = vmatprep.subr.mxu0 0.0
    %922 = vmatpush1.msra.mxu0 0.0
    %923 = vmatprep.subr.mxu0 0.0
    %924 = vmatpush1.msra.mxu0 0.0
    %925 = vmatprep.subr.mxu0 0.0
    %926 = vmatpush1.msra.mxu0 0.0
    %927 = vmatprep.subr.mxu0 0.0
    %928 = vmatpush1.msra.mxu0 0.0
    %929 = vmatprep.subr.mxu0 0.0
    %930 = vmatpush1.msra.mxu0 0.0
    %931 = vmatprep.subr.mxu0 0.0
    %932 = vmatpush1.msra.mxu0 0.0
    %933 = vmatprep.subr.mxu0 0.0
    %934 = vmatpush1.msra.mxu0 0.0
    %935 = vmatprep.subr.mxu0 0.0
    %936 = vmatpush1.msra.mxu0 0.0
    %937 = vmatprep.subr.mxu0 0.0
    %938 = vmatpush1.msra.mxu0 0.0
    %939 = vmatprep.subr.mxu0 0.0
    %940 = vmatpush1.msra.mxu0 0.0
    %941 = vmatprep.subr.mxu0 0.0
    %942 = vmatpush1.msra.mxu0 0.0
    %943 = vmatprep.subr.mxu0 0.0
    %944 = vmatpush1.msra.mxu0 0.0
    %945 = vmatprep.subr.mxu0 0.0
    %946 = vmatpush1.msra.mxu0 0.0
    %947 = vmatprep.subr.mxu0 0.0
    %948 = vmatpush1.msra.mxu0 0.0
    %949 = vmatprep.subr.mxu0 0.0
    %950 = vmatpush1.msra.mxu0 0.0
    %951 = vmatprep.subr.mxu0 0.0
    %952 = vmatpush1.msra.mxu0 0.0
    %953 = vmatprep.subr.mxu0 0.0
    %954 = vmatpush1.msra.mxu0 0.0
    %955 = vmatprep.subr.mxu0 0.0
    %956 = vmatpush1.msra.mxu0 0.0
    %957 = vmatprep.mubr.f32.mxu0 0.0
    %958 = vmatmul.mubr.f32.gmra.mrb[0].mxu0 %v781
    %v959 = vpop.f32.mrb[0].mxu0
    %v960 = vadd.f32 0.0, %v959
    %v961 = vpop.f32.mrb[0].mxu0
    %v962 = vadd.f32 0.0, %v961
    %963 = vmatprep.mubr.f32.mxu0 0.0
    %964 = vmatmul.mubr.f32.gmra.mrb[0].mxu0 %v784
    %v965 = vpop.f32.mrb[0].mxu0
    %v966 = vadd.f32 0.0, %v965
    %v967 = vpop.f32.mrb[0].mxu0
    %v968 = vadd.f32 0.0, %v967
    %969 = vmatprep.mubr.f32.mxu0 0.0
    %970 = vmatmul.mubr.f32.gmra.mrb[0].mxu0 %v787
    %v971 = vpop.f32.mrb[0].mxu0
    %v972 = vadd.f32 0.0, %v971
    %v973 = vpop.f32.mrb[0].mxu0
    %v974 = vadd.f32 0.0, %v973
    %975 = vmatprep.mubr.f32.mxu0 0.0
    %976 = vmatmul.mubr.f32.gmra.mrb[0].mxu0 %v790
    %v977 = vpop.f32.mrb[0].mxu0
    %v978 = vadd.f32 0.0, %v977
    %v979 = vpop.f32.mrb[0].mxu0
    %v980 = vadd.f32 0.0, %v979
    %981 = vdwg.mxu0
    %v982 = vadd.f32 %v747, %v871
    %v983 = vadd.f32 %v748, %v873
    %v984 = vadd.f32 %v749, %v960
    %v985 = vadd.f32 %v750, %v962
    %v986 = vadd.f32 %v751, %v877
    %v987 = vadd.f32 %v752, %v879
    %v988 = vadd.f32 %v753, %v966
    %v989 = vadd.f32 %v754, %v968
    %v990 = vadd.f32 %v755, %v883
    %v991 = vadd.f32 %v756, %v885
    %v992 = vadd.f32 %v757, %v972
    %v993 = vadd.f32 %v758, %v974
    %v994 = vadd.f32 %v759, %v889
    %v995 = vadd.f32 %v760, %v891
    %v996 = vadd.f32 %v761, %v978
    %v997 = vadd.f32 %v762, %v980
    %998 = vrot.lane.b32.xlu0 %v281, 1
    %v999 = vpop.permute.xlu0 %998
    %1000 = vrot.lane.b32.xlu0 %v285, 1
    %v1001 = vpop.permute.xlu0 %1000
    %1002 = vrot.lane.b32.xlu0 %v282, 1
    %v1003 = vpop.permute.xlu0 %1002
    %1004 = vrot.lane.b32.xlu0 %v286, 1
    %v1005 = vpop.permute.xlu0 %1004
    %vm1006 = vcmp.lt.s32.totalorder %v298, 1
    %v1007 = vsel %vm1006, %v1003, %v1005
    %v1008 = vsel %vm1006, %v1001, %v1003
    %v1009 = vsel %vm1006, %v999, %v1001
    %v1010 = vsel %vm1006, %v1005, %v999
    %v1011 = vmul.f32 %v1010, %v204
    %v1012 = vmul.f32 %v1009, %v208
    %v1013 = vmul.f32 %v1008, %v212
    %v1014 = vmul.f32 %v1007, %v216
    %v1016 = vsel %vm308, %v69, 0
    %v1019 = vsel %vm308, %v70, 0
    %v1022 = vsel %vm308, %v71, 0
    %v1025 = vsel %vm308, %v72, 0
    %v1028 = vsel %vm321, %v1011, 0
    %v1031 = vsel %vm321, %v1012, 0
    %v1034 = vsel %vm321, %v1013, 0
    %v1037 = vsel %vm321, %v1014, 0
    %1039 = vmatprep.subr.mxu0 %v1031
    %1040 = vmatpush1.msra.mxu0 %v1028
    %1041 = vmatprep.subr.mxu0 0.0
    %1042 = vmatpush1.msra.mxu0 0.0
    %1043 = vmatprep.subr.mxu0 0.0
    %1044 = vmatpush1.msra.mxu0 0.0
    %1045 = vmatprep.subr.mxu0 0.0
    %1046 = vmatpush1.msra.mxu0 0.0
    %1047 = vmatprep.subr.mxu0 0.0
    %1048 = vmatpush1.msra.mxu0 0.0
    %1049 = vmatprep.subr.mxu0 0.0
    %1050 = vmatpush1.msra.mxu0 0.0
    %1051 = vmatprep.subr.mxu0 0.0
    %1052 = vmatpush1.msra.mxu0 0.0
    %1053 = vmatprep.subr.mxu0 0.0
    %1054 = vmatpush1.msra.mxu0 0.0
    %1055 = vmatprep.subr.mxu0 0.0
    %1056 = vmatpush1.msra.mxu0 0.0
    %1057 = vmatprep.subr.mxu0 0.0
    %1058 = vmatpush1.msra.mxu0 0.0
    %1059 = vmatprep.subr.mxu0 0.0
    %1060 = vmatpush1.msra.mxu0 0.0
    %1061 = vmatprep.subr.mxu0 0.0
    %1062 = vmatpush1.msra.mxu0 0.0
    %1063 = vmatprep.subr.mxu0 0.0
    %1064 = vmatpush1.msra.mxu0 0.0
    %1065 = vmatprep.subr.mxu0 0.0
    %1066 = vmatpush1.msra.mxu0 0.0
    %1067 = vmatprep.subr.mxu0 0.0
    %1068 = vmatpush1.msra.mxu0 0.0
    %1069 = vmatprep.subr.mxu0 0.0
    %1070 = vmatpush1.msra.mxu0 0.0
    %1071 = vmatprep.subr.mxu0 0.0
    %1072 = vmatpush1.msra.mxu0 0.0
    %1073 = vmatprep.subr.mxu0 0.0
    %1074 = vmatpush1.msra.mxu0 0.0
    %1075 = vmatprep.subr.mxu0 0.0
    %1076 = vmatpush1.msra.mxu0 0.0
    %1077 = vmatprep.subr.mxu0 0.0
    %1078 = vmatpush1.msra.mxu0 0.0
    %1079 = vmatprep.subr.mxu0 0.0
    %1080 = vmatpush1.msra.mxu0 0.0
    %1081 = vmatprep.subr.mxu0 0.0
    %1082 = vmatpush1.msra.mxu0 0.0
    %1083 = vmatprep.subr.mxu0 0.0
    %1084 = vmatpush1.msra.mxu0 0.0
    %1085 = vmatprep.subr.mxu0 0.0
    %1086 = vmatpush1.msra.mxu0 0.0
    %1087 = vmatprep.subr.mxu0 0.0
    %1088 = vmatpush1.msra.mxu0 0.0
    %1089 = vmatprep.subr.mxu0 0.0
    %1090 = vmatpush1.msra.mxu0 0.0
    %1091 = vmatprep.subr.mxu0 0.0
    %1092 = vmatpush1.msra.mxu0 0.0
    %1093 = vmatprep.subr.mxu0 0.0
    %1094 = vmatpush1.msra.mxu0 0.0
    %1095 = vmatprep.subr.mxu0 0.0
    %1096 = vmatpush1.msra.mxu0 0.0
    %1097 = vmatprep.subr.mxu0 0.0
    %1098 = vmatpush1.msra.mxu0 0.0
    %1099 = vmatprep.subr.mxu0 0.0
    %1100 = vmatpush1.msra.mxu0 0.0
    %1101 = vmatprep.subr.mxu0 0.0
    %1102 = vmatpush1.msra.mxu0 0.0
    %1103 = vmatprep.mubr.f32.mxu0 0.0
    %1104 = vmatmul.mubr.f32.gmra.mrb[0].mxu0 %v1016
    %v1105 = vpop.f32.mrb[0].mxu0
    %v1106 = vadd.f32 0.0, %v1105
    %v1107 = vpop.f32.mrb[0].mxu0
    %v1108 = vadd.f32 0.0, %v1107
    %1109 = vmatprep.mubr.f32.mxu0 0.0
    %1110 = vmatmul.mubr.f32.gmra.mrb[0].mxu0 %v1019
    %v1111 = vpop.f32.mrb[0].mxu0
    %v1112 = vadd.f32 0.0, %v1111
    %v1113 = vpop.f32.mrb[0].mxu0
    %v1114 = vadd.f32 0.0, %v1113
    %1115 = vmatprep.mubr.f32.mxu0 0.0
    %1116 = vmatmul.mubr.f32.gmra.mrb[0].mxu0 %v1022
    %v1117 = vpop.f32.mrb[0].mxu0
    %v1118 = vadd.f32 0.0, %v1117
    %v1119 = vpop.f32.mrb[0].mxu0
    %v1120 = vadd.f32 0.0, %v1119
    %1121 = vmatprep.mubr.f32.mxu0 0.0
    %1122 = vmatmul.mubr.f32.gmra.mrb[0].mxu0 %v1025
    %v1123 = vpop.f32.mrb[0].mxu0
    %v1124 = vadd.f32 0.0, %v1123
    %v1125 = vpop.f32.mrb[0].mxu0
    %v1126 = vadd.f32 0.0, %v1125
    %1127 = vdwg.mxu0
    %1128 = vmatprep.subr.mxu0 %v1037
    %1129 = vmatpush1.msra.mxu0 %v1034
    %1130 = vmatprep.subr.mxu0 0.0
    %1131 = vmatpush1.msra.mxu0 0.0
    %1132 = vmatprep.subr.mxu0 0.0
    %1133 = vmatpush1.msra.mxu0 0.0
    %1134 = vmatprep.subr.mxu0 0.0
    %1135 = vmatpush1.msra.mxu0 0.0
    %1136 = vmatprep.subr.mxu0 0.0
    %1137 = vmatpush1.msra.mxu0 0.0
    %1138 = vmatprep.subr.mxu0 0.0
    %1139 = vmatpush1.msra.mxu0 0.0
    %1140 = vmatprep.subr.mxu0 0.0
    %1141 = vmatpush1.msra.mxu0 0.0
    %1142 = vmatprep.subr.mxu0 0.0
    %1143 = vmatpush1.msra.mxu0 0.0
    %1144 = vmatprep.subr.mxu0 0.0
    %1145 = vmatpush1.msra.mxu0 0.0
    %1146 = vmatprep.subr.mxu0 0.0
    %1147 = vmatpush1.msra.mxu0 0.0
    %1148 = vmatprep.subr.mxu0 0.0
    %1149 = vmatpush1.msra.mxu0 0.0
    %1150 = vmatprep.subr.mxu0 0.0
    %1151 = vmatpush1.msra.mxu0 0.0
    %1152 = vmatprep.subr.mxu0 0.0
    %1153 = vmatpush1.msra.mxu0 0.0
    %1154 = vmatprep.subr.mxu0 0.0
    %1155 = vmatpush1.msra.mxu0 0.0
    %1156 = vmatprep.subr.mxu0 0.0
    %1157 = vmatpush1.msra.mxu0 0.0
    %1158 = vmatprep.subr.mxu0 0.0
    %1159 = vmatpush1.msra.mxu0 0.0
    %1160 = vmatprep.subr.mxu0 0.0
    %1161 = vmatpush1.msra.mxu0 0.0
    %1162 = vmatprep.subr.mxu0 0.0
    %1163 = vmatpush1.msra.mxu0 0.0
    %1164 = vmatprep.subr.mxu0 0.0
    %1165 = vmatpush1.msra.mxu0 0.0
    %1166 = vmatprep.subr.mxu0 0.0
    %1167 = vmatpush1.msra.mxu0 0.0
    %1168 = vmatprep.subr.mxu0 0.0
    %1169 = vmatpush1.msra.mxu0 0.0
    %1170 = vmatprep.subr.mxu0 0.0
    %1171 = vmatpush1.msra.mxu0 0.0
    %1172 = vmatprep.subr.mxu0 0.0
    %1173 = vmatpush1.msra.mxu0 0.0
    %1174 = vmatprep.subr.mxu0 0.0
    %1175 = vmatpush1.msra.mxu0 0.0
    %1176 = vmatprep.subr.mxu0 0.0
    %1177 = vmatpush1.msra.mxu0 0.0
    %1178 = vmatprep.subr.mxu0 0.0
    %1179 = vmatpush1.msra.mxu0 0.0
    %1180 = vmatprep.subr.mxu0 0.0
    %1181 = vmatpush1.msra.mxu0 0.0
    %1182 = vmatprep.subr.mxu0 0.0
    %1183 = vmatpush1.msra.mxu0 0.0
    %1184 = vmatprep.subr.mxu0 0.0
    %1185 = vmatpush1.msra.mxu0 0.0
    %1186 = vmatprep.subr.mxu0 0.0
    %1187 = vmatpush1.msra.mxu0 0.0
    %1188 = vmatprep.subr.mxu0 0.0
    %1189 = vmatpush1.msra.mxu0 0.0
    %1190 = vmatprep.subr.mxu0 0.0
    %1191 = vmatpush1.msra.mxu0 0.0
    %1192 = vmatprep.mubr.f32.mxu0 0.0
    %1193 = vmatmul.mubr.f32.gmra.mrb[0].mxu0 %v1016
    %v1194 = vpop.f32.mrb[0].mxu0
    %v1195 = vadd.f32 0.0, %v1194
    %v1196 = vpop.f32.mrb[0].mxu0
    %v1197 = vadd.f32 0.0, %v1196
    %1198 = vmatprep.mubr.f32.mxu0 0.0
    %1199 = vmatmul.mubr.f32.gmra.mrb[0].mxu0 %v1019
    %v1200 = vpop.f32.mrb[0].mxu0
    %v1201 = vadd.f32 0.0, %v1200
    %v1202 = vpop.f32.mrb[0].mxu0
    %v1203 = vadd.f32 0.0, %v1202
    %1204 = vmatprep.mubr.f32.mxu0 0.0
    %1205 = vmatmul.mubr.f32.gmra.mrb[0].mxu0 %v1022
    %v1206 = vpop.f32.mrb[0].mxu0
    %v1207 = vadd.f32 0.0, %v1206
    %v1208 = vpop.f32.mrb[0].mxu0
    %v1209 = vadd.f32 0.0, %v1208
    %1210 = vmatprep.mubr.f32.mxu0 0.0
    %1211 = vmatmul.mubr.f32.gmra.mrb[0].mxu0 %v1025
    %v1212 = vpop.f32.mrb[0].mxu0
    %v1213 = vadd.f32 0.0, %v1212
    %v1214 = vpop.f32.mrb[0].mxu0
    %v1215 = vadd.f32 0.0, %v1214
    %1216 = vdwg.mxu0
    %v1217 = vadd.f32 %v982, %v1106
    %v1218 = vadd.f32 %v983, %v1108
    %v1219 = vadd.f32 %v984, %v1195
    %v1220 = vadd.f32 %v985, %v1197
    %v1221 = vadd.f32 %v986, %v1112
    %v1222 = vadd.f32 %v987, %v1114
    %v1223 = vadd.f32 %v988, %v1201
    %v1224 = vadd.f32 %v989, %v1203
    %v1225 = vadd.f32 %v990, %v1118
    %v1226 = vadd.f32 %v991, %v1120
    %v1227 = vadd.f32 %v992, %v1207
    %v1228 = vadd.f32 %v993, %v1209
    %v1229 = vadd.f32 %v994, %v1124
    %v1230 = vadd.f32 %v995, %v1126
    %v1231 = vadd.f32 %v996, %v1213
    %v1232 = vadd.f32 %v997, %v1215
    %v1234 = vsel %vm308, %v74, 0
    %v1237 = vsel %vm308, %v75, 0
    %v1240 = vsel %vm308, %v76, 0
    %v1243 = vsel %vm308, %v77, 0
    %v1245 = vsel %vm321, %v281, 0
    %v1247 = vsel %vm321, %v285, 0
    %v1249 = vsel %vm321, %v282, 0
    %v1251 = vsel %vm321, %v286, 0
    %1253 = vmatprep.subr.mxu0 %v1247
    %1254 = vmatpush1.msra.mxu0 %v1245
    %1255 = vmatprep.subr.mxu0 0.0
    %1256 = vmatpush1.msra.mxu0 0.0
    %1257 = vmatprep.subr.mxu0 0.0
    %1258 = vmatpush1.msra.mxu0 0.0
    %1259 = vmatprep.subr.mxu0 0.0
    %1260 = vmatpush1.msra.mxu0 0.0
    %1261 = vmatprep.subr.mxu0 0.0
    %1262 = vmatpush1.msra.mxu0 0.0
    %1263 = vmatprep.subr.mxu0 0.0
    %1264 = vmatpush1.msra.mxu0 0.0
    %1265 = vmatprep.subr.mxu0 0.0
    %1266 = vmatpush1.msra.mxu0 0.0
    %1267 = vmatprep.subr.mxu0 0.0
    %1268 = vmatpush1.msra.mxu0 0.0
    %1269 = vmatprep.subr.mxu0 0.0
    %1270 = vmatpush1.msra.mxu0 0.0
    %1271 = vmatprep.subr.mxu0 0.0
    %1272 = vmatpush1.msra.mxu0 0.0
    %1273 = vmatprep.subr.mxu0 0.0
    %1274 = vmatpush1.msra.mxu0 0.0
    %1275 = vmatprep.subr.mxu0 0.0
    %1276 = vmatpush1.msra.mxu0 0.0
    %1277 = vmatprep.subr.mxu0 0.0
    %1278 = vmatpush1.msra.mxu0 0.0
    %1279 = vmatprep.subr.mxu0 0.0
    %1280 = vmatpush1.msra.mxu0 0.0
    %1281 = vmatprep.subr.mxu0 0.0
    %1282 = vmatpush1.msra.mxu0 0.0
    %1283 = vmatprep.subr.mxu0 0.0
    %1284 = vmatpush1.msra.mxu0 0.0
    %1285 = vmatprep.subr.mxu0 0.0
    %1286 = vmatpush1.msra.mxu0 0.0
    %1287 = vmatprep.subr.mxu0 0.0
    %1288 = vmatpush1.msra.mxu0 0.0
    %1289 = vmatprep.subr.mxu0 0.0
    %1290 = vmatpush1.msra.mxu0 0.0
    %1291 = vmatprep.subr.mxu0 0.0
    %1292 = vmatpush1.msra.mxu0 0.0
    %1293 = vmatprep.subr.mxu0 0.0
    %1294 = vmatpush1.msra.mxu0 0.0
    %1295 = vmatprep.subr.mxu0 0.0
    %1296 = vmatpush1.msra.mxu0 0.0
    %1297 = vmatprep.subr.mxu0 0.0
    %1298 = vmatpush1.msra.mxu0 0.0
    %1299 = vmatprep.subr.mxu0 0.0
    %1300 = vmatpush1.msra.mxu0 0.0
    %1301 = vmatprep.subr.mxu0 0.0
    %1302 = vmatpush1.msra.mxu0 0.0
    %1303 = vmatprep.subr.mxu0 0.0
    %1304 = vmatpush1.msra.mxu0 0.0
    %1305 = vmatprep.subr.mxu0 0.0
    %1306 = vmatpush1.msra.mxu0 0.0
    %1307 = vmatprep.subr.mxu0 0.0
    %1308 = vmatpush1.msra.mxu0 0.0
    %1309 = vmatprep.subr.mxu0 0.0
    %1310 = vmatpush1.msra.mxu0 0.0
    %1311 = vmatprep.subr.mxu0 0.0
    %1312 = vmatpush1.msra.mxu0 0.0
    %1313 = vmatprep.subr.mxu0 0.0
    %1314 = vmatpush1.msra.mxu0 0.0
    %1315 = vmatprep.subr.mxu0 0.0
    %1316 = vmatpush1.msra.mxu0 0.0
    %1317 = vmatprep.mubr.f32.mxu0 0.0
    %1318 = vmatmul.mubr.f32.gmra.mrb[0].mxu0 %v1234
    %v1319 = vpop.f32.mrb[0].mxu0
    %v1320 = vadd.f32 0.0, %v1319
    %v1321 = vpop.f32.mrb[0].mxu0
    %v1322 = vadd.f32 0.0, %v1321
    %1323 = vmatprep.mubr.f32.mxu0 0.0
    %1324 = vmatmul.mubr.f32.gmra.mrb[0].mxu0 %v1237
    %v1325 = vpop.f32.mrb[0].mxu0
    %v1326 = vadd.f32 0.0, %v1325
    %v1327 = vpop.f32.mrb[0].mxu0
    %v1328 = vadd.f32 0.0, %v1327
    %1329 = vmatprep.mubr.f32.mxu0 0.0
    %1330 = vmatmul.mubr.f32.gmra.mrb[0].mxu0 %v1240
    %v1331 = vpop.f32.mrb[0].mxu0
    %v1332 = vadd.f32 0.0, %v1331
    %v1333 = vpop.f32.mrb[0].mxu0
    %v1334 = vadd.f32 0.0, %v1333
    %1335 = vmatprep.mubr.f32.mxu0 0.0
    %1336 = vmatmul.mubr.f32.gmra.mrb[0].mxu0 %v1243
    %v1337 = vpop.f32.mrb[0].mxu0
    %v1338 = vadd.f32 0.0, %v1337
    %v1339 = vpop.f32.mrb[0].mxu0
    %v1340 = vadd.f32 0.0, %v1339
    %1341 = vdwg.mxu0
    %1342 = vmatprep.subr.mxu0 %v1251
    %1343 = vmatpush1.msra.mxu0 %v1249
    %1344 = vmatprep.subr.mxu0 0.0
    %1345 = vmatpush1.msra.mxu0 0.0
    %1346 = vmatprep.subr.mxu0 0.0
    %1347 = vmatpush1.msra.mxu0 0.0
    %1348 = vmatprep.subr.mxu0 0.0
    %1349 = vmatpush1.msra.mxu0 0.0
    %1350 = vmatprep.subr.mxu0 0.0
    %1351 = vmatpush1.msra.mxu0 0.0
    %1352 = vmatprep.subr.mxu0 0.0
    %1353 = vmatpush1.msra.mxu0 0.0
    %1354 = vmatprep.subr.mxu0 0.0
    %1355 = vmatpush1.msra.mxu0 0.0
    %1356 = vmatprep.subr.mxu0 0.0
    %1357 = vmatpush1.msra.mxu0 0.0
    %1358 = vmatprep.subr.mxu0 0.0
    %1359 = vmatpush1.msra.mxu0 0.0
    %1360 = vmatprep.subr.mxu0 0.0
    %1361 = vmatpush1.msra.mxu0 0.0
    %1362 = vmatprep.subr.mxu0 0.0
    %1363 = vmatpush1.msra.mxu0 0.0
    %1364 = vmatprep.subr.mxu0 0.0
    %1365 = vmatpush1.msra.mxu0 0.0
    %1366 = vmatprep.subr.mxu0 0.0
    %1367 = vmatpush1.msra.mxu0 0.0
    %1368 = vmatprep.subr.mxu0 0.0
    %1369 = vmatpush1.msra.mxu0 0.0
    %1370 = vmatprep.subr.mxu0 0.0
    %1371 = vmatpush1.msra.mxu0 0.0
    %1372 = vmatprep.subr.mxu0 0.0
    %1373 = vmatpush1.msra.mxu0 0.0
    %1374 = vmatprep.subr.mxu0 0.0
    %1375 = vmatpush1.msra.mxu0 0.0
    %1376 = vmatprep.subr.mxu0 0.0
    %1377 = vmatpush1.msra.mxu0 0.0
    %1378 = vmatprep.subr.mxu0 0.0
    %1379 = vmatpush1.msra.mxu0 0.0
    %1380 = vmatprep.subr.mxu0 0.0
    %1381 = vmatpush1.msra.mxu0 0.0
    %1382 = vmatprep.subr.mxu0 0.0
    %1383 = vmatpush1.msra.mxu0 0.0
    %1384 = vmatprep.subr.mxu0 0.0
    %1385 = vmatpush1.msra.mxu0 0.0
    %1386 = vmatprep.subr.mxu0 0.0
    %1387 = vmatpush1.msra.mxu0 0.0
    %1388 = vmatprep.subr.mxu0 0.0
    %1389 = vmatpush1.msra.mxu0 0.0
    %1390 = vmatprep.subr.mxu0 0.0
    %1391 = vmatpush1.msra.mxu0 0.0
    %1392 = vmatprep.subr.mxu0 0.0
    %1393 = vmatpush1.msra.mxu0 0.0
    %1394 = vmatprep.subr.mxu0 0.0
    %1395 = vmatpush1.msra.mxu0 0.0
    %1396 = vmatprep.subr.mxu0 0.0
    %1397 = vmatpush1.msra.mxu0 0.0
    %1398 = vmatprep.subr.mxu0 0.0
    %1399 = vmatpush1.msra.mxu0 0.0
    %1400 = vmatprep.subr.mxu0 0.0
    %1401 = vmatpush1.msra.mxu0 0.0
    %1402 = vmatprep.subr.mxu0 0.0
    %1403 = vmatpush1.msra.mxu0 0.0
    %1404 = vmatprep.subr.mxu0 0.0
    %1405 = vmatpush1.msra.mxu0 0.0
    %1406 = vmatprep.mubr.f32.mxu0 0.0
    %1407 = vmatmul.mubr.f32.gmra.mrb[0].mxu0 %v1234
    %v1408 = vpop.f32.mrb[0].mxu0
    %v1409 = vadd.f32 0.0, %v1408
    %v1410 = vpop.f32.mrb[0].mxu0
    %v1411 = vadd.f32 0.0, %v1410
    %1412 = vmatprep.mubr.f32.mxu0 0.0
    %1413 = vmatmul.mubr.f32.gmra.mrb[0].mxu0 %v1237
    %v1414 = vpop.f32.mrb[0].mxu0
    %v1415 = vadd.f32 0.0, %v1414
    %v1416 = vpop.f32.mrb[0].mxu0
    %v1417 = vadd.f32 0.0, %v1416
    %1418 = vmatprep.mubr.f32.mxu0 0.0
    %1419 = vmatmul.mubr.f32.gmra.mrb[0].mxu0 %v1240
    %v1420 = vpop.f32.mrb[0].mxu0
    %v1421 = vadd.f32 0.0, %v1420
    %v1422 = vpop.f32.mrb[0].mxu0
    %v1423 = vadd.f32 0.0, %v1422
    %1424 = vmatprep.mubr.f32.mxu0 0.0
    %1425 = vmatmul.mubr.f32.gmra.mrb[0].mxu0 %v1243
    %v1426 = vpop.f32.mrb[0].mxu0
    %v1427 = vadd.f32 0.0, %v1426
    %v1428 = vpop.f32.mrb[0].mxu0
    %v1429 = vadd.f32 0.0, %v1428
    %1430 = vdwg.mxu0
    %v1431 = vadd.f32 %v1217, %v1320
    %v1432 = vadd.f32 %v1218, %v1322
    %v1433 = vadd.f32 %v1219, %v1409
    %v1434 = vadd.f32 %v1220, %v1411
    %v1435 = vadd.f32 %v1221, %v1326
    %v1436 = vadd.f32 %v1222, %v1328
    %v1437 = vadd.f32 %v1223, %v1415
    %v1438 = vadd.f32 %v1224, %v1417
    %v1439 = vadd.f32 %v1225, %v1332
    %v1440 = vadd.f32 %v1226, %v1334
    %v1441 = vadd.f32 %v1227, %v1421
    %v1442 = vadd.f32 %v1228, %v1423
    %v1443 = vadd.f32 %v1229, %v1338
    %v1444 = vadd.f32 %v1230, %v1340
    %v1445 = vadd.f32 %v1231, %v1427
    %v1446 = vadd.f32 %v1232, %v1429
    %1447 = vrot.lane.b32.xlu0 %v281, 127
    %v1448 = vpop.permute.xlu0 %1447
    %1449 = vrot.lane.b32.xlu0 %v285, 127
    %v1450 = vpop.permute.xlu0 %1449
    %1451 = vrot.lane.b32.xlu0 %v282, 127
    %v1452 = vpop.permute.xlu0 %1451
    %1453 = vrot.lane.b32.xlu0 %v286, 127
    %v1454 = vpop.permute.xlu0 %1453
    %vm1455 = vcmp.lt.s32.totalorder %v298, 127
    %v1456 = vsel %vm1455, %v1452, %v1454
    %v1457 = vsel %vm1455, %v1450, %v1452
    %v1458 = vsel %vm1455, %v1448, %v1450
    %v1459 = vsel %vm1455, %v1454, %v1448
    %v1460 = vmul.f32 %v1458, %v220
    %v1461 = vmul.f32 %v1457, %v224
    %v1462 = vmul.f32 %v1456, %v228
    %v1463 = vmul.f32 %v1459, %v232
    %v1465 = vsel %vm308, %v79, 0
    %v1468 = vsel %vm308, %v80, 0
    %v1471 = vsel %vm308, %v81, 0
    %v1474 = vsel %vm308, %v82, 0
    %v1477 = vsel %vm321, %v1460, 0
    %v1480 = vsel %vm321, %v1461, 0
    %v1483 = vsel %vm321, %v1462, 0
    %v1486 = vsel %vm321, %v1463, 0
    %1488 = vmatprep.subr.mxu0 %v1480
    %1489 = vmatpush1.msra.mxu0 %v1477
    %1490 = vmatprep.subr.mxu0 0.0
    %1491 = vmatpush1.msra.mxu0 0.0
    %1492 = vmatprep.subr.mxu0 0.0
    %1493 = vmatpush1.msra.mxu0 0.0
    %1494 = vmatprep.subr.mxu0 0.0
    %1495 = vmatpush1.msra.mxu0 0.0
    %1496 = vmatprep.subr.mxu0 0.0
    %1497 = vmatpush1.msra.mxu0 0.0
    %1498 = vmatprep.subr.mxu0 0.0
    %1499 = vmatpush1.msra.mxu0 0.0
    %1500 = vmatprep.subr.mxu0 0.0
    %1501 = vmatpush1.msra.mxu0 0.0
    %1502 = vmatprep.subr.mxu0 0.0
    %1503 = vmatpush1.msra.mxu0 0.0
    %1504 = vmatprep.subr.mxu0 0.0
    %1505 = vmatpush1.msra.mxu0 0.0
    %1506 = vmatprep.subr.mxu0 0.0
    %1507 = vmatpush1.msra.mxu0 0.0
    %1508 = vmatprep.subr.mxu0 0.0
    %1509 = vmatpush1.msra.mxu0 0.0
    %1510 = vmatprep.subr.mxu0 0.0
    %1511 = vmatpush1.msra.mxu0 0.0
    %1512 = vmatprep.subr.mxu0 0.0
    %1513 = vmatpush1.msra.mxu0 0.0
    %1514 = vmatprep.subr.mxu0 0.0
    %1515 = vmatpush1.msra.mxu0 0.0
    %1516 = vmatprep.subr.mxu0 0.0
    %1517 = vmatpush1.msra.mxu0 0.0
    %1518 = vmatprep.subr.mxu0 0.0
    %1519 = vmatpush1.msra.mxu0 0.0
    %1520 = vmatprep.subr.mxu0 0.0
    %1521 = vmatpush1.msra.mxu0 0.0
    %1522 = vmatprep.subr.mxu0 0.0
    %1523 = vmatpush1.msra.mxu0 0.0
    %1524 = vmatprep.subr.mxu0 0.0
    %1525 = vmatpush1.msra.mxu0 0.0
    %1526 = vmatprep.subr.mxu0 0.0
    %1527 = vmatpush1.msra.mxu0 0.0
    %1528 = vmatprep.subr.mxu0 0.0
    %1529 = vmatpush1.msra.mxu0 0.0
    %1530 = vmatprep.subr.mxu0 0.0
    %1531 = vmatpush1.msra.mxu0 0.0
    %1532 = vmatprep.subr.mxu0 0.0
    %1533 = vmatpush1.msra.mxu0 0.0
    %1534 = vmatprep.subr.mxu0 0.0
    %1535 = vmatpush1.msra.mxu0 0.0
    %1536 = vmatprep.subr.mxu0 0.0
    %1537 = vmatpush1.msra.mxu0 0.0
    %1538 = vmatprep.subr.mxu0 0.0
    %1539 = vmatpush1.msra.mxu0 0.0
    %1540 = vmatprep.subr.mxu0 0.0
    %1541 = vmatpush1.msra.mxu0 0.0
    %1542 = vmatprep.subr.mxu0 0.0
    %1543 = vmatpush1.msra.mxu0 0.0
    %1544 = vmatprep.subr.mxu0 0.0
    %1545 = vmatpush1.msra.mxu0 0.0
    %1546 = vmatprep.subr.mxu0 0.0
    %1547 = vmatpush1.msra.mxu0 0.0
    %1548 = vmatprep.subr.mxu0 0.0
    %1549 = vmatpush1.msra.mxu0 0.0
    %1550 = vmatprep.subr.mxu0 0.0
    %1551 = vmatpush1.msra.mxu0 0.0
    %1552 = vmatprep.mubr.f32.mxu0 0.0
    %1553 = vmatmul.mubr.f32.gmra.mrb[0].mxu0 %v1465
    %v1554 = vpop.f32.mrb[0].mxu0
    %v1555 = vadd.f32 0.0, %v1554
    %v1556 = vpop.f32.mrb[0].mxu0
    %v1557 = vadd.f32 0.0, %v1556
    %1558 = vmatprep.mubr.f32.mxu0 0.0
    %1559 = vmatmul.mubr.f32.gmra.mrb[0].mxu0 %v1468
    %v1560 = vpop.f32.mrb[0].mxu0
    %v1561 = vadd.f32 0.0, %v1560
    %v1562 = vpop.f32.mrb[0].mxu0
    %v1563 = vadd.f32 0.0, %v1562
    %1564 = vmatprep.mubr.f32.mxu0 0.0
    %1565 = vmatmul.mubr.f32.gmra.mrb[0].mxu0 %v1471
    %v1566 = vpop.f32.mrb[0].mxu0
    %v1567 = vadd.f32 0.0, %v1566
    %v1568 = vpop.f32.mrb[0].mxu0
    %v1569 = vadd.f32 0.0, %v1568
    %1570 = vmatprep.mubr.f32.mxu0 0.0
    %1571 = vmatmul.mubr.f32.gmra.mrb[0].mxu0 %v1474
    %v1572 = vpop.f32.mrb[0].mxu0
    %v1573 = vadd.f32 0.0, %v1572
    %v1574 = vpop.f32.mrb[0].mxu0
    %v1575 = vadd.f32 0.0, %v1574
    %1576 = vdwg.mxu0
    %1577 = vmatprep.subr.mxu0 %v1486
    %1578 = vmatpush1.msra.mxu0 %v1483
    %1579 = vmatprep.subr.mxu0 0.0
    %1580 = vmatpush1.msra.mxu0 0.0
    %1581 = vmatprep.subr.mxu0 0.0
    %1582 = vmatpush1.msra.mxu0 0.0
    %1583 = vmatprep.subr.mxu0 0.0
    %1584 = vmatpush1.msra.mxu0 0.0
    %1585 = vmatprep.subr.mxu0 0.0
    %1586 = vmatpush1.msra.mxu0 0.0
    %1587 = vmatprep.subr.mxu0 0.0
    %1588 = vmatpush1.msra.mxu0 0.0
    %1589 = vmatprep.subr.mxu0 0.0
    %1590 = vmatpush1.msra.mxu0 0.0
    %1591 = vmatprep.subr.mxu0 0.0
    %1592 = vmatpush1.msra.mxu0 0.0
    %1593 = vmatprep.subr.mxu0 0.0
    %1594 = vmatpush1.msra.mxu0 0.0
    %1595 = vmatprep.subr.mxu0 0.0
    %1596 = vmatpush1.msra.mxu0 0.0
    %1597 = vmatprep.subr.mxu0 0.0
    %1598 = vmatpush1.msra.mxu0 0.0
    %1599 = vmatprep.subr.mxu0 0.0
    %1600 = vmatpush1.msra.mxu0 0.0
    %1601 = vmatprep.subr.mxu0 0.0
    %1602 = vmatpush1.msra.mxu0 0.0
    %1603 = vmatprep.subr.mxu0 0.0
    %1604 = vmatpush1.msra.mxu0 0.0
    %1605 = vmatprep.subr.mxu0 0.0
    %1606 = vmatpush1.msra.mxu0 0.0
    %1607 = vmatprep.subr.mxu0 0.0
    %1608 = vmatpush1.msra.mxu0 0.0
    %1609 = vmatprep.subr.mxu0 0.0
    %1610 = vmatpush1.msra.mxu0 0.0
    %1611 = vmatprep.subr.mxu0 0.0
    %1612 = vmatpush1.msra.mxu0 0.0
    %1613 = vmatprep.subr.mxu0 0.0
    %1614 = vmatpush1.msra.mxu0 0.0
    %1615 = vmatprep.subr.mxu0 0.0
    %1616 = vmatpush1.msra.mxu0 0.0
    %1617 = vmatprep.subr.mxu0 0.0
    %1618 = vmatpush1.msra.mxu0 0.0
    %1619 = vmatprep.subr.mxu0 0.0
    %1620 = vmatpush1.msra.mxu0 0.0
    %1621 = vmatprep.subr.mxu0 0.0
    %1622 = vmatpush1.msra.mxu0 0.0
    %1623 = vmatprep.subr.mxu0 0.0
    %1624 = vmatpush1.msra.mxu0 0.0
    %1625 = vmatprep.subr.mxu0 0.0
    %1626 = vmatpush1.msra.mxu0 0.0
    %1627 = vmatprep.subr.mxu0 0.0
    %1628 = vmatpush1.msra.mxu0 0.0
    %1629 = vmatprep.subr.mxu0 0.0
    %1630 = vmatpush1.msra.mxu0 0.0
    %1631 = vmatprep.subr.mxu0 0.0
    %1632 = vmatpush1.msra.mxu0 0.0
    %1633 = vmatprep.subr.mxu0 0.0
    %1634 = vmatpush1.msra.mxu0 0.0
    %1635 = vmatprep.subr.mxu0 0.0
    %1636 = vmatpush1.msra.mxu0 0.0
    %1637 = vmatprep.subr.mxu0 0.0
    %1638 = vmatpush1.msra.mxu0 0.0
    %1639 = vmatprep.subr.mxu0 0.0
    %1640 = vmatpush1.msra.mxu0 0.0
    %1641 = vmatprep.mubr.f32.mxu0 0.0
    %1642 = vmatmul.mubr.f32.gmra.mrb[0].mxu0 %v1465
    %v1643 = vpop.f32.mrb[0].mxu0
    %v1644 = vadd.f32 0.0, %v1643
    %v1645 = vpop.f32.mrb[0].mxu0
    %v1646 = vadd.f32 0.0, %v1645
    %1647 = vmatprep.mubr.f32.mxu0 0.0
    %1648 = vmatmul.mubr.f32.gmra.mrb[0].mxu0 %v1468
    %v1649 = vpop.f32.mrb[0].mxu0
    %v1650 = vadd.f32 0.0, %v1649
    %v1651 = vpop.f32.mrb[0].mxu0
    %v1652 = vadd.f32 0.0, %v1651
    %1653 = vmatprep.mubr.f32.mxu0 0.0
    %1654 = vmatmul.mubr.f32.gmra.mrb[0].mxu0 %v1471
    %v1655 = vpop.f32.mrb[0].mxu0
    %v1656 = vadd.f32 0.0, %v1655
    %v1657 = vpop.f32.mrb[0].mxu0
    %v1658 = vadd.f32 0.0, %v1657
    %1659 = vmatprep.mubr.f32.mxu0 0.0
    %1660 = vmatmul.mubr.f32.gmra.mrb[0].mxu0 %v1474
    %v1661 = vpop.f32.mrb[0].mxu0
    %v1662 = vadd.f32 0.0, %v1661
    %v1663 = vpop.f32.mrb[0].mxu0
    %v1664 = vadd.f32 0.0, %v1663
    %1665 = vdwg.mxu0
    %v1666 = vadd.f32 %v1431, %v1555
    %v1667 = vadd.f32 %v1432, %v1557
    %v1668 = vadd.f32 %v1433, %v1644
    %v1669 = vadd.f32 %v1434, %v1646
    %v1670 = vadd.f32 %v1435, %v1561
    %v1671 = vadd.f32 %v1436, %v1563
    %v1672 = vadd.f32 %v1437, %v1650
    %v1673 = vadd.f32 %v1438, %v1652
    %v1674 = vadd.f32 %v1439, %v1567
    %v1675 = vadd.f32 %v1440, %v1569
    %v1676 = vadd.f32 %v1441, %v1656
    %v1677 = vadd.f32 %v1442, %v1658
    %v1678 = vadd.f32 %v1443, %v1573
    %v1679 = vadd.f32 %v1444, %v1575
    %v1680 = vadd.f32 %v1445, %v1662
    %v1681 = vadd.f32 %v1446, %v1664
    %1682 = vrot.lane.b32.xlu0 %v281, 113
    %v1683 = vpop.permute.xlu0 %1682
    %1684 = vrot.lane.b32.xlu0 %v285, 113
    %v1685 = vpop.permute.xlu0 %1684
    %1686 = vrot.lane.b32.xlu0 %v282, 113
    %v1687 = vpop.permute.xlu0 %1686
    %1688 = vrot.lane.b32.xlu0 %v286, 113
    %v1689 = vpop.permute.xlu0 %1688
    %vm1690 = vcmp.lt.s32.totalorder %v298, 113
    %v1691 = vsel %vm1690, %v1687, %v1689
    %v1692 = vsel %vm1690, %v1685, %v1687
    %v1693 = vsel %vm1690, %v1683, %v1685
    %v1694 = vsel %vm1690, %v1689, %v1683
    %v1695 = vmul.f32 %v1693, %v236
    %v1696 = vmul.f32 %v1692, %v240
    %v1697 = vmul.f32 %v1691, %v244
    %v1698 = vmul.f32 %v1694, %v248
    %v1700 = vsel %vm308, %v84, 0
    %v1703 = vsel %vm308, %v85, 0
    %v1706 = vsel %vm308, %v86, 0
    %v1709 = vsel %vm308, %v87, 0
    %v1712 = vsel %vm321, %v1695, 0
    %v1715 = vsel %vm321, %v1696, 0
    %v1718 = vsel %vm321, %v1697, 0
    %v1721 = vsel %vm321, %v1698, 0
    %1723 = vmatprep.subr.mxu0 %v1715
    %1724 = vmatpush1.msra.mxu0 %v1712
    %1725 = vmatprep.subr.mxu0 0.0
    %1726 = vmatpush1.msra.mxu0 0.0
    %1727 = vmatprep.subr.mxu0 0.0
    %1728 = vmatpush1.msra.mxu0 0.0
    %1729 = vmatprep.subr.mxu0 0.0
    %1730 = vmatpush1.msra.mxu0 0.0
    %1731 = vmatprep.subr.mxu0 0.0
    %1732 = vmatpush1.msra.mxu0 0.0
    %1733 = vmatprep.subr.mxu0 0.0
    %1734 = vmatpush1.msra.mxu0 0.0
    %1735 = vmatprep.subr.mxu0 0.0
    %1736 = vmatpush1.msra.mxu0 0.0
    %1737 = vmatprep.subr.mxu0 0.0
    %1738 = vmatpush1.msra.mxu0 0.0
    %1739 = vmatprep.subr.mxu0 0.0
    %1740 = vmatpush1.msra.mxu0 0.0
    %1741 = vmatprep.subr.mxu0 0.0
    %1742 = vmatpush1.msra.mxu0 0.0
    %1743 = vmatprep.subr.mxu0 0.0
    %1744 = vmatpush1.msra.mxu0 0.0
    %1745 = vmatprep.subr.mxu0 0.0
    %1746 = vmatpush1.msra.mxu0 0.0
    %1747 = vmatprep.subr.mxu0 0.0
    %1748 = vmatpush1.msra.mxu0 0.0
    %1749 = vmatprep.subr.mxu0 0.0
    %1750 = vmatpush1.msra.mxu0 0.0
    %1751 = vmatprep.subr.mxu0 0.0
    %1752 = vmatpush1.msra.mxu0 0.0
    %1753 = vmatprep.subr.mxu0 0.0
    %1754 = vmatpush1.msra.mxu0 0.0
    %1755 = vmatprep.subr.mxu0 0.0
    %1756 = vmatpush1.msra.mxu0 0.0
    %1757 = vmatprep.subr.mxu0 0.0
    %1758 = vmatpush1.msra.mxu0 0.0
    %1759 = vmatprep.subr.mxu0 0.0
    %1760 = vmatpush1.msra.mxu0 0.0
    %1761 = vmatprep.subr.mxu0 0.0
    %1762 = vmatpush1.msra.mxu0 0.0
    %1763 = vmatprep.subr.mxu0 0.0
    %1764 = vmatpush1.msra.mxu0 0.0
    %1765 = vmatprep.subr.mxu0 0.0
    %1766 = vmatpush1.msra.mxu0 0.0
    %1767 = vmatprep.subr.mxu0 0.0
    %1768 = vmatpush1.msra.mxu0 0.0
    %1769 = vmatprep.subr.mxu0 0.0
    %1770 = vmatpush1.msra.mxu0 0.0
    %1771 = vmatprep.subr.mxu0 0.0
    %1772 = vmatpush1.msra.mxu0 0.0
    %1773 = vmatprep.subr.mxu0 0.0
    %1774 = vmatpush1.msra.mxu0 0.0
    %1775 = vmatprep.subr.mxu0 0.0
    %1776 = vmatpush1.msra.mxu0 0.0
    %1777 = vmatprep.subr.mxu0 0.0
    %1778 = vmatpush1.msra.mxu0 0.0
    %1779 = vmatprep.subr.mxu0 0.0
    %1780 = vmatpush1.msra.mxu0 0.0
    %1781 = vmatprep.subr.mxu0 0.0
    %1782 = vmatpush1.msra.mxu0 0.0
    %1783 = vmatprep.subr.mxu0 0.0
    %1784 = vmatpush1.msra.mxu0 0.0
    %1785 = vmatprep.subr.mxu0 0.0
    %1786 = vmatpush1.msra.mxu0 0.0
    %1787 = vmatprep.mubr.f32.mxu0 0.0
    %1788 = vmatmul.mubr.f32.gmra.mrb[0].mxu0 %v1700
    %v1789 = vpop.f32.mrb[0].mxu0
    %v1790 = vadd.f32 0.0, %v1789
    %v1791 = vpop.f32.mrb[0].mxu0
    %v1792 = vadd.f32 0.0, %v1791
    %1793 = vmatprep.mubr.f32.mxu0 0.0
    %1794 = vmatmul.mubr.f32.gmra.mrb[0].mxu0 %v1703
    %v1795 = vpop.f32.mrb[0].mxu0
    %v1796 = vadd.f32 0.0, %v1795
    %v1797 = vpop.f32.mrb[0].mxu0
    %v1798 = vadd.f32 0.0, %v1797
    %1799 = vmatprep.mubr.f32.mxu0 0.0
    %1800 = vmatmul.mubr.f32.gmra.mrb[0].mxu0 %v1706
    %v1801 = vpop.f32.mrb[0].mxu0
    %v1802 = vadd.f32 0.0, %v1801
    %v1803 = vpop.f32.mrb[0].mxu0
    %v1804 = vadd.f32 0.0, %v1803
    %1805 = vmatprep.mubr.f32.mxu0 0.0
    %1806 = vmatmul.mubr.f32.gmra.mrb[0].mxu0 %v1709
    %v1807 = vpop.f32.mrb[0].mxu0
    %v1808 = vadd.f32 0.0, %v1807
    %v1809 = vpop.f32.mrb[0].mxu0
    %v1810 = vadd.f32 0.0, %v1809
    %1811 = vdwg.mxu0
    %1812 = vmatprep.subr.mxu0 %v1721
    %1813 = vmatpush1.msra.mxu0 %v1718
    %1814 = vmatprep.subr.mxu0 0.0
    %1815 = vmatpush1.msra.mxu0 0.0
    %1816 = vmatprep.subr.mxu0 0.0
    %1817 = vmatpush1.msra.mxu0 0.0
    %1818 = vmatprep.subr.mxu0 0.0
    %1819 = vmatpush1.msra.mxu0 0.0
    %1820 = vmatprep.subr.mxu0 0.0
    %1821 = vmatpush1.msra.mxu0 0.0
    %1822 = vmatprep.subr.mxu0 0.0
    %1823 = vmatpush1.msra.mxu0 0.0
    %1824 = vmatprep.subr.mxu0 0.0
    %1825 = vmatpush1.msra.mxu0 0.0
    %1826 = vmatprep.subr.mxu0 0.0
    %1827 = vmatpush1.msra.mxu0 0.0
    %1828 = vmatprep.subr.mxu0 0.0
    %1829 = vmatpush1.msra.mxu0 0.0
    %1830 = vmatprep.subr.mxu0 0.0
    %1831 = vmatpush1.msra.mxu0 0.0
    %1832 = vmatprep.subr.mxu0 0.0
    %1833 = vmatpush1.msra.mxu0 0.0
    %1834 = vmatprep.subr.mxu0 0.0
    %1835 = vmatpush1.msra.mxu0 0.0
    %1836 = vmatprep.subr.mxu0 0.0
    %1837 = vmatpush1.msra.mxu0 0.0
    %1838 = vmatprep.subr.mxu0 0.0
    %1839 = vmatpush1.msra.mxu0 0.0
    %1840 = vmatprep.subr.mxu0 0.0
    %1841 = vmatpush1.msra.mxu0 0.0
    %1842 = vmatprep.subr.mxu0 0.0
    %1843 = vmatpush1.msra.mxu0 0.0
    %1844 = vmatprep.subr.mxu0 0.0
    %1845 = vmatpush1.msra.mxu0 0.0
    %1846 = vmatprep.subr.mxu0 0.0
    %1847 = vmatpush1.msra.mxu0 0.0
    %1848 = vmatprep.subr.mxu0 0.0
    %1849 = vmatpush1.msra.mxu0 0.0
    %1850 = vmatprep.subr.mxu0 0.0
    %1851 = vmatpush1.msra.mxu0 0.0
    %1852 = vmatprep.subr.mxu0 0.0
    %1853 = vmatpush1.msra.mxu0 0.0
    %1854 = vmatprep.subr.mxu0 0.0
    %1855 = vmatpush1.msra.mxu0 0.0
    %1856 = vmatprep.subr.mxu0 0.0
    %1857 = vmatpush1.msra.mxu0 0.0
    %1858 = vmatprep.subr.mxu0 0.0
    %1859 = vmatpush1.msra.mxu0 0.0
    %1860 = vmatprep.subr.mxu0 0.0
    %1861 = vmatpush1.msra.mxu0 0.0
    %1862 = vmatprep.subr.mxu0 0.0
    %1863 = vmatpush1.msra.mxu0 0.0
    %1864 = vmatprep.subr.mxu0 0.0
    %1865 = vmatpush1.msra.mxu0 0.0
    %1866 = vmatprep.subr.mxu0 0.0
    %1867 = vmatpush1.msra.mxu0 0.0
    %1868 = vmatprep.subr.mxu0 0.0
    %1869 = vmatpush1.msra.mxu0 0.0
    %1870 = vmatprep.subr.mxu0 0.0
    %1871 = vmatpush1.msra.mxu0 0.0
    %1872 = vmatprep.subr.mxu0 0.0
    %1873 = vmatpush1.msra.mxu0 0.0
    %1874 = vmatprep.subr.mxu0 0.0
    %1875 = vmatpush1.msra.mxu0 0.0
    %1876 = vmatprep.mubr.f32.mxu0 0.0
    %1877 = vmatmul.mubr.f32.gmra.mrb[0].mxu0 %v1700
    %v1878 = vpop.f32.mrb[0].mxu0
    %v1879 = vadd.f32 0.0, %v1878
    %v1880 = vpop.f32.mrb[0].mxu0
    %v1881 = vadd.f32 0.0, %v1880
    %1882 = vmatprep.mubr.f32.mxu0 0.0
    %1883 = vmatmul.mubr.f32.gmra.mrb[0].mxu0 %v1703
    %v1884 = vpop.f32.mrb[0].mxu0
    %v1885 = vadd.f32 0.0, %v1884
    %v1886 = vpop.f32.mrb[0].mxu0
    %v1887 = vadd.f32 0.0, %v1886
    %1888 = vmatprep.mubr.f32.mxu0 0.0
    %1889 = vmatmul.mubr.f32.gmra.mrb[0].mxu0 %v1706
    %v1890 = vpop.f32.mrb[0].mxu0
    %v1891 = vadd.f32 0.0, %v1890
    %v1892 = vpop.f32.mrb[0].mxu0
    %v1893 = vadd.f32 0.0, %v1892
    %1894 = vmatprep.mubr.f32.mxu0 0.0
    %1895 = vmatmul.mubr.f32.gmra.mrb[0].mxu0 %v1709
    %v1896 = vpop.f32.mrb[0].mxu0
    %v1897 = vadd.f32 0.0, %v1896
    %v1898 = vpop.f32.mrb[0].mxu0
    %v1899 = vadd.f32 0.0, %v1898
    %1900 = vdwg.mxu0
    %v1901 = vadd.f32 %v1666, %v1790
    %v1902 = vadd.f32 %v1667, %v1792
    %v1903 = vadd.f32 %v1668, %v1879
    %v1904 = vadd.f32 %v1669, %v1881
    %v1905 = vadd.f32 %v1670, %v1796
    %v1906 = vadd.f32 %v1671, %v1798
    %v1907 = vadd.f32 %v1672, %v1885
    %v1908 = vadd.f32 %v1673, %v1887
    %v1909 = vadd.f32 %v1674, %v1802
    %v1910 = vadd.f32 %v1675, %v1804
    %v1911 = vadd.f32 %v1676, %v1891
    %v1912 = vadd.f32 %v1677, %v1893
    %v1913 = vadd.f32 %v1678, %v1808
    %v1914 = vadd.f32 %v1679, %v1810
    %v1915 = vadd.f32 %v1680, %v1897
    %v1916 = vadd.f32 %v1681, %v1899
    %1917 = vrot.lane.b32.xlu0 %v281, 112
    %v1918 = vpop.permute.xlu0 %1917
    %1919 = vrot.lane.b32.xlu0 %v285, 112
    %v1920 = vpop.permute.xlu0 %1919
    %1921 = vrot.lane.b32.xlu0 %v282, 112
    %v1922 = vpop.permute.xlu0 %1921
    %1923 = vrot.lane.b32.xlu0 %v286, 112
    %v1924 = vpop.permute.xlu0 %1923
    %vm1925 = vcmp.lt.s32.totalorder %v298, 112
    %v1926 = vsel %vm1925, %v1922, %v1924
    %v1927 = vsel %vm1925, %v1920, %v1922
    %v1928 = vsel %vm1925, %v1918, %v1920
    %v1929 = vsel %vm1925, %v1924, %v1918
    %v1930 = vmul.f32 %v1928, %v252
    %v1931 = vmul.f32 %v1927, %v256
    %v1932 = vmul.f32 %v1926, %v260
    %v1933 = vmul.f32 %v1929, %v264
    %v1935 = vsel %vm308, %v89, 0
    %v1938 = vsel %vm308, %v90, 0
    %v1941 = vsel %vm308, %v91, 0
    %v1944 = vsel %vm308, %v92, 0
    %v1947 = vsel %vm321, %v1930, 0
    %v1950 = vsel %vm321, %v1931, 0
    %v1953 = vsel %vm321, %v1932, 0
    %v1956 = vsel %vm321, %v1933, 0
    %1958 = vmatprep.subr.mxu0 %v1950
    %1959 = vmatpush1.msra.mxu0 %v1947
    %1960 = vmatprep.subr.mxu0 0.0
    %1961 = vmatpush1.msra.mxu0 0.0
    %1962 = vmatprep.subr.mxu0 0.0
    %1963 = vmatpush1.msra.mxu0 0.0
    %1964 = vmatprep.subr.mxu0 0.0
    %1965 = vmatpush1.msra.mxu0 0.0
    %1966 = vmatprep.subr.mxu0 0.0
    %1967 = vmatpush1.msra.mxu0 0.0
    %1968 = vmatprep.subr.mxu0 0.0
    %1969 = vmatpush1.msra.mxu0 0.0
    %1970 = vmatprep.subr.mxu0 0.0
    %1971 = vmatpush1.msra.mxu0 0.0
    %1972 = vmatprep.subr.mxu0 0.0
    %1973 = vmatpush1.msra.mxu0 0.0
    %1974 = vmatprep.subr.mxu0 0.0
    %1975 = vmatpush1.msra.mxu0 0.0
    %1976 = vmatprep.subr.mxu0 0.0
    %1977 = vmatpush1.msra.mxu0 0.0
    %1978 = vmatprep.subr.mxu0 0.0
    %1979 = vmatpush1.msra.mxu0 0.0
    %1980 = vmatprep.subr.mxu0 0.0
    %1981 = vmatpush1.msra.mxu0 0.0
    %1982 = vmatprep.subr.mxu0 0.0
    %1983 = vmatpush1.msra.mxu0 0.0
    %1984 = vmatprep.subr.mxu0 0.0
    %1985 = vmatpush1.msra.mxu0 0.0
    %1986 = vmatprep.subr.mxu0 0.0
    %1987 = vmatpush1.msra.mxu0 0.0
    %1988 = vmatprep.subr.mxu0 0.0
    %1989 = vmatpush1.msra.mxu0 0.0
    %1990 = vmatprep.subr.mxu0 0.0
    %1991 = vmatpush1.msra.mxu0 0.0
    %1992 = vmatprep.subr.mxu0 0.0
    %1993 = vmatpush1.msra.mxu0 0.0
    %1994 = vmatprep.subr.mxu0 0.0
    %1995 = vmatpush1.msra.mxu0 0.0
    %1996 = vmatprep.subr.mxu0 0.0
    %1997 = vmatpush1.msra.mxu0 0.0
    %1998 = vmatprep.subr.mxu0 0.0
    %1999 = vmatpush1.msra.mxu0 0.0
    %2000 = vmatprep.subr.mxu0 0.0
    %2001 = vmatpush1.msra.mxu0 0.0
    %2002 = vmatprep.subr.mxu0 0.0
    %2003 = vmatpush1.msra.mxu0 0.0
    %2004 = vmatprep.subr.mxu0 0.0
    %2005 = vmatpush1.msra.mxu0 0.0
    %2006 = vmatprep.subr.mxu0 0.0
    %2007 = vmatpush1.msra.mxu0 0.0
    %2008 = vmatprep.subr.mxu0 0.0
    %2009 = vmatpush1.msra.mxu0 0.0
    %2010 = vmatprep.subr.mxu0 0.0
    %2011 = vmatpush1.msra.mxu0 0.0
    %2012 = vmatprep.subr.mxu0 0.0
    %2013 = vmatpush1.msra.mxu0 0.0
    %2014 = vmatprep.subr.mxu0 0.0
    %2015 = vmatpush1.msra.mxu0 0.0
    %2016 = vmatprep.subr.mxu0 0.0
    %2017 = vmatpush1.msra.mxu0 0.0
    %2018 = vmatprep.subr.mxu0 0.0
    %2019 = vmatpush1.msra.mxu0 0.0
    %2020 = vmatprep.subr.mxu0 0.0
    %2021 = vmatpush1.msra.mxu0 0.0
    %2022 = vmatprep.mubr.f32.mxu0 0.0
    %2023 = vmatmul.mubr.f32.gmra.mrb[0].mxu0 %v1935
    %v2024 = vpop.f32.mrb[0].mxu0
    %v2025 = vadd.f32 0.0, %v2024
    %v2026 = vpop.f32.mrb[0].mxu0
    %v2027 = vadd.f32 0.0, %v2026
    %2028 = vmatprep.mubr.f32.mxu0 0.0
    %2029 = vmatmul.mubr.f32.gmra.mrb[0].mxu0 %v1938
    %v2030 = vpop.f32.mrb[0].mxu0
    %v2031 = vadd.f32 0.0, %v2030
    %v2032 = vpop.f32.mrb[0].mxu0
    %v2033 = vadd.f32 0.0, %v2032
    %2034 = vmatprep.mubr.f32.mxu0 0.0
    %2035 = vmatmul.mubr.f32.gmra.mrb[0].mxu0 %v1941
    %v2036 = vpop.f32.mrb[0].mxu0
    %v2037 = vadd.f32 0.0, %v2036
    %v2038 = vpop.f32.mrb[0].mxu0
    %v2039 = vadd.f32 0.0, %v2038
    %2040 = vmatprep.mubr.f32.mxu0 0.0
    %2041 = vmatmul.mubr.f32.gmra.mrb[0].mxu0 %v1944
    %v2042 = vpop.f32.mrb[0].mxu0
    %v2043 = vadd.f32 0.0, %v2042
    %v2044 = vpop.f32.mrb[0].mxu0
    %v2045 = vadd.f32 0.0, %v2044
    %2046 = vdwg.mxu0
    %2047 = vmatprep.subr.mxu0 %v1956
    %2048 = vmatpush1.msra.mxu0 %v1953
    %2049 = vmatprep.subr.mxu0 0.0
    %2050 = vmatpush1.msra.mxu0 0.0
    %2051 = vmatprep.subr.mxu0 0.0
    %2052 = vmatpush1.msra.mxu0 0.0
    %2053 = vmatprep.subr.mxu0 0.0
    %2054 = vmatpush1.msra.mxu0 0.0
    %2055 = vmatprep.subr.mxu0 0.0
    %2056 = vmatpush1.msra.mxu0 0.0
    %2057 = vmatprep.subr.mxu0 0.0
    %2058 = vmatpush1.msra.mxu0 0.0
    %2059 = vmatprep.subr.mxu0 0.0
    %2060 = vmatpush1.msra.mxu0 0.0
    %2061 = vmatprep.subr.mxu0 0.0
    %2062 = vmatpush1.msra.mxu0 0.0
    %2063 = vmatprep.subr.mxu0 0.0
    %2064 = vmatpush1.msra.mxu0 0.0
    %2065 = vmatprep.subr.mxu0 0.0
    %2066 = vmatpush1.msra.mxu0 0.0
    %2067 = vmatprep.subr.mxu0 0.0
    %2068 = vmatpush1.msra.mxu0 0.0
    %2069 = vmatprep.subr.mxu0 0.0
    %2070 = vmatpush1.msra.mxu0 0.0
    %2071 = vmatprep.subr.mxu0 0.0
    %2072 = vmatpush1.msra.mxu0 0.0
    %2073 = vmatprep.subr.mxu0 0.0
    %2074 = vmatpush1.msra.mxu0 0.0
    %2075 = vmatprep.subr.mxu0 0.0
    %2076 = vmatpush1.msra.mxu0 0.0
    %2077 = vmatprep.subr.mxu0 0.0
    %2078 = vmatpush1.msra.mxu0 0.0
    %2079 = vmatprep.subr.mxu0 0.0
    %2080 = vmatpush1.msra.mxu0 0.0
    %2081 = vmatprep.subr.mxu0 0.0
    %2082 = vmatpush1.msra.mxu0 0.0
    %2083 = vmatprep.subr.mxu0 0.0
    %2084 = vmatpush1.msra.mxu0 0.0
    %2085 = vmatprep.subr.mxu0 0.0
    %2086 = vmatpush1.msra.mxu0 0.0
    %2087 = vmatprep.subr.mxu0 0.0
    %2088 = vmatpush1.msra.mxu0 0.0
    %2089 = vmatprep.subr.mxu0 0.0
    %2090 = vmatpush1.msra.mxu0 0.0
    %2091 = vmatprep.subr.mxu0 0.0
    %2092 = vmatpush1.msra.mxu0 0.0
    %2093 = vmatprep.subr.mxu0 0.0
    %2094 = vmatpush1.msra.mxu0 0.0
    %2095 = vmatprep.subr.mxu0 0.0
    %2096 = vmatpush1.msra.mxu0 0.0
    %2097 = vmatprep.subr.mxu0 0.0
    %2098 = vmatpush1.msra.mxu0 0.0
    %2099 = vmatprep.subr.mxu0 0.0
    %2100 = vmatpush1.msra.mxu0 0.0
    %2101 = vmatprep.subr.mxu0 0.0
    %2102 = vmatpush1.msra.mxu0 0.0
    %2103 = vmatprep.subr.mxu0 0.0
    %2104 = vmatpush1.msra.mxu0 0.0
    %2105 = vmatprep.subr.mxu0 0.0
    %2106 = vmatpush1.msra.mxu0 0.0
    %2107 = vmatprep.subr.mxu0 0.0
    %2108 = vmatpush1.msra.mxu0 0.0
    %2109 = vmatprep.subr.mxu0 0.0
    %2110 = vmatpush1.msra.mxu0 0.0
    %2111 = vmatprep.mubr.f32.mxu0 0.0
    %2112 = vmatmul.mubr.f32.gmra.mrb[0].mxu0 %v1935
    %v2113 = vpop.f32.mrb[0].mxu0
    %v2114 = vadd.f32 0.0, %v2113
    %v2115 = vpop.f32.mrb[0].mxu0
    %v2116 = vadd.f32 0.0, %v2115
    %2117 = vmatprep.mubr.f32.mxu0 0.0
    %2118 = vmatmul.mubr.f32.gmra.mrb[0].mxu0 %v1938
    %v2119 = vpop.f32.mrb[0].mxu0
    %v2120 = vadd.f32 0.0, %v2119
    %v2121 = vpop.f32.mrb[0].mxu0
    %v2122 = vadd.f32 0.0, %v2121
    %2123 = vmatprep.mubr.f32.mxu0 0.0
    %2124 = vmatmul.mubr.f32.gmra.mrb[0].mxu0 %v1941
    %v2125 = vpop.f32.mrb[0].mxu0
    %v2126 = vadd.f32 0.0, %v2125
    %v2127 = vpop.f32.mrb[0].mxu0
    %v2128 = vadd.f32 0.0, %v2127
    %2129 = vmatprep.mubr.f32.mxu0 0.0
    %2130 = vmatmul.mubr.f32.gmra.mrb[0].mxu0 %v1944
    %v2131 = vpop.f32.mrb[0].mxu0
    %v2132 = vadd.f32 0.0, %v2131
    %v2133 = vpop.f32.mrb[0].mxu0
    %v2134 = vadd.f32 0.0, %v2133
    %2135 = vdwg.mxu0
    %v2136 = vadd.f32 %v1901, %v2025
    %v2137 = vadd.f32 %v1902, %v2027
    %v2138 = vadd.f32 %v1903, %v2114
    %v2139 = vadd.f32 %v1904, %v2116
    %v2140 = vadd.f32 %v1905, %v2031
    %v2141 = vadd.f32 %v1906, %v2033
    %v2142 = vadd.f32 %v1907, %v2120
    %v2143 = vadd.f32 %v1908, %v2122
    %v2144 = vadd.f32 %v1909, %v2037
    %v2145 = vadd.f32 %v1910, %v2039
    %v2146 = vadd.f32 %v1911, %v2126
    %v2147 = vadd.f32 %v1912, %v2128
    %v2148 = vadd.f32 %v1913, %v2043
    %v2149 = vadd.f32 %v1914, %v2045
    %v2150 = vadd.f32 %v1915, %v2132
    %v2151 = vadd.f32 %v1916, %v2134
    %2152 = vrot.lane.b32.xlu0 %v281, 111
    %v2153 = vpop.permute.xlu0 %2152
    %2154 = vrot.lane.b32.xlu0 %v285, 111
    %v2155 = vpop.permute.xlu0 %2154
    %2156 = vrot.lane.b32.xlu0 %v282, 111
    %v2157 = vpop.permute.xlu0 %2156
    %2158 = vrot.lane.b32.xlu0 %v286, 111
    %v2159 = vpop.permute.xlu0 %2158
    %vm2160 = vcmp.lt.s32.totalorder %v298, 111
    %v2161 = vsel %vm2160, %v2157, %v2159
    %v2162 = vsel %vm2160, %v2155, %v2157
    %v2163 = vsel %vm2160, %v2153, %v2155
    %v2164 = vsel %vm2160, %v2159, %v2153
    %v2165 = vmul.f32 %v2163, %v268
    %v2166 = vmul.f32 %v2162, %v272
    %v2167 = vmul.f32 %v2161, %v276
    %v2168 = vmul.f32 %v2164, %v280
    %v2170 = vsel %vm308, %v94, 0
    %v2173 = vsel %vm308, %v95, 0
    %v2176 = vsel %vm308, %v96, 0
    %v2179 = vsel %vm308, %v97, 0
    %v2182 = vsel %vm321, %v2165, 0
    %v2185 = vsel %vm321, %v2166, 0
    %v2188 = vsel %vm321, %v2167, 0
    %v2191 = vsel %vm321, %v2168, 0
    %2193 = vmatprep.subr.mxu0 %v2185
    %2194 = vmatpush1.msra.mxu0 %v2182
    %2195 = vmatprep.subr.mxu0 0.0
    %2196 = vmatpush1.msra.mxu0 0.0
    %2197 = vmatprep.subr.mxu0 0.0
    %2198 = vmatpush1.msra.mxu0 0.0
    %2199 = vmatprep.subr.mxu0 0.0
    %2200 = vmatpush1.msra.mxu0 0.0
    %2201 = vmatprep.subr.mxu0 0.0
    %2202 = vmatpush1.msra.mxu0 0.0
    %2203 = vmatprep.subr.mxu0 0.0
    %2204 = vmatpush1.msra.mxu0 0.0
    %2205 = vmatprep.subr.mxu0 0.0
    %2206 = vmatpush1.msra.mxu0 0.0
    %2207 = vmatprep.subr.mxu0 0.0
    %2208 = vmatpush1.msra.mxu0 0.0
    %2209 = vmatprep.subr.mxu0 0.0
    %2210 = vmatpush1.msra.mxu0 0.0
    %2211 = vmatprep.subr.mxu0 0.0
    %2212 = vmatpush1.msra.mxu0 0.0
    %2213 = vmatprep.subr.mxu0 0.0
    %2214 = vmatpush1.msra.mxu0 0.0
    %2215 = vmatprep.subr.mxu0 0.0
    %2216 = vmatpush1.msra.mxu0 0.0
    %2217 = vmatprep.subr.mxu0 0.0
    %2218 = vmatpush1.msra.mxu0 0.0
    %2219 = vmatprep.subr.mxu0 0.0
    %2220 = vmatpush1.msra.mxu0 0.0
    %2221 = vmatprep.subr.mxu0 0.0
    %2222 = vmatpush1.msra.mxu0 0.0
    %2223 = vmatprep.subr.mxu0 0.0
    %2224 = vmatpush1.msra.mxu0 0.0
    %2225 = vmatprep.subr.mxu0 0.0
    %2226 = vmatpush1.msra.mxu0 0.0
    %2227 = vmatprep.subr.mxu0 0.0
    %2228 = vmatpush1.msra.mxu0 0.0
    %2229 = vmatprep.subr.mxu0 0.0
    %2230 = vmatpush1.msra.mxu0 0.0
    %2231 = vmatprep.subr.mxu0 0.0
    %2232 = vmatpush1.msra.mxu0 0.0
    %2233 = vmatprep.subr.mxu0 0.0
    %2234 = vmatpush1.msra.mxu0 0.0
    %2235 = vmatprep.subr.mxu0 0.0
    %2236 = vmatpush1.msra.mxu0 0.0
    %2237 = vmatprep.subr.mxu0 0.0
    %2238 = vmatpush1.msra.mxu0 0.0
    %2239 = vmatprep.subr.mxu0 0.0
    %2240 = vmatpush1.msra.mxu0 0.0
    %2241 = vmatprep.subr.mxu0 0.0
    %2242 = vmatpush1.msra.mxu0 0.0
    %2243 = vmatprep.subr.mxu0 0.0
    %2244 = vmatpush1.msra.mxu0 0.0
    %2245 = vmatprep.subr.mxu0 0.0
    %2246 = vmatpush1.msra.mxu0 0.0
    %2247 = vmatprep.subr.mxu0 0.0
    %2248 = vmatpush1.msra.mxu0 0.0
    %2249 = vmatprep.subr.mxu0 0.0
    %2250 = vmatpush1.msra.mxu0 0.0
    %2251 = vmatprep.subr.mxu0 0.0
    %2252 = vmatpush1.msra.mxu0 0.0
    %2253 = vmatprep.subr.mxu0 0.0
    %2254 = vmatpush1.msra.mxu0 0.0
    %2255 = vmatprep.subr.mxu0 0.0
    %2256 = vmatpush1.msra.mxu0 0.0
    %2257 = vmatprep.mubr.f32.mxu0 0.0
    %2258 = vmatmul.mubr.f32.gmra.mrb[0].mxu0 %v2170
    %v2259 = vpop.f32.mrb[0].mxu0
    %v2260 = vadd.f32 0.0, %v2259
    %v2261 = vpop.f32.mrb[0].mxu0
    %v2262 = vadd.f32 0.0, %v2261
    %2263 = vmatprep.mubr.f32.mxu0 0.0
    %2264 = vmatmul.mubr.f32.gmra.mrb[0].mxu0 %v2173
    %v2265 = vpop.f32.mrb[0].mxu0
    %v2266 = vadd.f32 0.0, %v2265
    %v2267 = vpop.f32.mrb[0].mxu0
    %v2268 = vadd.f32 0.0, %v2267
    %2269 = vmatprep.mubr.f32.mxu0 0.0
    %2270 = vmatmul.mubr.f32.gmra.mrb[0].mxu0 %v2176
    %v2271 = vpop.f32.mrb[0].mxu0
    %v2272 = vadd.f32 0.0, %v2271
    %v2273 = vpop.f32.mrb[0].mxu0
    %v2274 = vadd.f32 0.0, %v2273
    %2275 = vmatprep.mubr.f32.mxu0 0.0
    %2276 = vmatmul.mubr.f32.gmra.mrb[0].mxu0 %v2179
    %v2277 = vpop.f32.mrb[0].mxu0
    %v2278 = vadd.f32 0.0, %v2277
    %v2279 = vpop.f32.mrb[0].mxu0
    %v2280 = vadd.f32 0.0, %v2279
    %2281 = vdwg.mxu0
    %2282 = vmatprep.subr.mxu0 %v2191
    %2283 = vmatpush1.msra.mxu0 %v2188
    %2284 = vmatprep.subr.mxu0 0.0
    %2285 = vmatpush1.msra.mxu0 0.0
    %2286 = vmatprep.subr.mxu0 0.0
    %2287 = vmatpush1.msra.mxu0 0.0
    %2288 = vmatprep.subr.mxu0 0.0
    %2289 = vmatpush1.msra.mxu0 0.0
    %2290 = vmatprep.subr.mxu0 0.0
    %2291 = vmatpush1.msra.mxu0 0.0
    %2292 = vmatprep.subr.mxu0 0.0
    %2293 = vmatpush1.msra.mxu0 0.0
    %2294 = vmatprep.subr.mxu0 0.0
    %2295 = vmatpush1.msra.mxu0 0.0
    %2296 = vmatprep.subr.mxu0 0.0
    %2297 = vmatpush1.msra.mxu0 0.0
    %2298 = vmatprep.subr.mxu0 0.0
    %2299 = vmatpush1.msra.mxu0 0.0
    %2300 = vmatprep.subr.mxu0 0.0
    %2301 = vmatpush1.msra.mxu0 0.0
    %2302 = vmatprep.subr.mxu0 0.0
    %2303 = vmatpush1.msra.mxu0 0.0
    %2304 = vmatprep.subr.mxu0 0.0
    %2305 = vmatpush1.msra.mxu0 0.0
    %2306 = vmatprep.subr.mxu0 0.0
    %2307 = vmatpush1.msra.mxu0 0.0
    %2308 = vmatprep.subr.mxu0 0.0
    %2309 = vmatpush1.msra.mxu0 0.0
    %2310 = vmatprep.subr.mxu0 0.0
    %2311 = vmatpush1.msra.mxu0 0.0
    %2312 = vmatprep.subr.mxu0 0.0
    %2313 = vmatpush1.msra.mxu0 0.0
    %2314 = vmatprep.subr.mxu0 0.0
    %2315 = vmatpush1.msra.mxu0 0.0
    %2316 = vmatprep.subr.mxu0 0.0
    %2317 = vmatpush1.msra.mxu0 0.0
    %2318 = vmatprep.subr.mxu0 0.0
    %2319 = vmatpush1.msra.mxu0 0.0
    %2320 = vmatprep.subr.mxu0 0.0
    %2321 = vmatpush1.msra.mxu0 0.0
    %2322 = vmatprep.subr.mxu0 0.0
    %2323 = vmatpush1.msra.mxu0 0.0
    %2324 = vmatprep.subr.mxu0 0.0
    %2325 = vmatpush1.msra.mxu0 0.0
    %2326 = vmatprep.subr.mxu0 0.0
    %2327 = vmatpush1.msra.mxu0 0.0
    %2328 = vmatprep.subr.mxu0 0.0
    %2329 = vmatpush1.msra.mxu0 0.0
    %2330 = vmatprep.subr.mxu0 0.0
    %2331 = vmatpush1.msra.mxu0 0.0
    %2332 = vmatprep.subr.mxu0 0.0
    %2333 = vmatpush1.msra.mxu0 0.0
    %2334 = vmatprep.subr.mxu0 0.0
    %2335 = vmatpush1.msra.mxu0 0.0
    %2336 = vmatprep.subr.mxu0 0.0
    %2337 = vmatpush1.msra.mxu0 0.0
    %2338 = vmatprep.subr.mxu0 0.0
    %2339 = vmatpush1.msra.mxu0 0.0
    %2340 = vmatprep.subr.mxu0 0.0
    %2341 = vmatpush1.msra.mxu0 0.0
    %2342 = vmatprep.subr.mxu0 0.0
    %2343 = vmatpush1.msra.mxu0 0.0
    %2344 = vmatprep.subr.mxu0 0.0
    %2345 = vmatpush1.msra.mxu0 0.0
    %2346 = vmatprep.mubr.f32.mxu0 0.0
    %2347 = vmatmul.mubr.f32.gmra.mrb[0].mxu0 %v2170
    %v2348 = vpop.f32.mrb[0].mxu0
    %v2349 = vadd.f32 0.0, %v2348
    %v2350 = vpop.f32.mrb[0].mxu0
    %v2351 = vadd.f32 0.0, %v2350
    %2352 = vmatprep.mubr.f32.mxu0 0.0
    %2353 = vmatmul.mubr.f32.gmra.mrb[0].mxu0 %v2173
    %v2354 = vpop.f32.mrb[0].mxu0
    %v2355 = vadd.f32 0.0, %v2354
    %v2356 = vpop.f32.mrb[0].mxu0
    %v2357 = vadd.f32 0.0, %v2356
    %2358 = vmatprep.mubr.f32.mxu0 0.0
    %2359 = vmatmul.mubr.f32.gmra.mrb[0].mxu0 %v2176
    %v2360 = vpop.f32.mrb[0].mxu0
    %v2361 = vadd.f32 0.0, %v2360
    %v2362 = vpop.f32.mrb[0].mxu0
    %v2363 = vadd.f32 0.0, %v2362
    %2364 = vmatprep.mubr.f32.mxu0 0.0
    %2365 = vmatmul.mubr.f32.gmra.mrb[0].mxu0 %v2179
    %v2366 = vpop.f32.mrb[0].mxu0
    %v2367 = vadd.f32 0.0, %v2366
    %v2368 = vpop.f32.mrb[0].mxu0
    %v2369 = vadd.f32 0.0, %v2368
    %2370 = vdwg.mxu0
    %v2371 = vadd.f32 %v2136, %v2260
    %v2372 = vadd.f32 %v2137, %v2262
    %v2373 = vadd.f32 %v2138, %v2349
    %v2374 = vadd.f32 %v2139, %v2351
    %v2375 = vadd.f32 %v2140, %v2266
    %v2376 = vadd.f32 %v2141, %v2268
    %v2377 = vadd.f32 %v2142, %v2355
    %v2378 = vadd.f32 %v2143, %v2357
    %v2379 = vadd.f32 %v2144, %v2272
    %v2380 = vadd.f32 %v2145, %v2274
    %v2381 = vadd.f32 %v2146, %v2361
    %v2382 = vadd.f32 %v2147, %v2363
    %v2383 = vadd.f32 %v2148, %v2278
    %v2384 = vadd.f32 %v2149, %v2280
    %v2385 = vadd.f32 %v2150, %v2367
    %v2386 = vadd.f32 %v2151, %v2369
    %v2387 = vxor.u32 %v2371, 2147483648
    %v2388 = vxor.u32 %v2372, 2147483648
    %v2389 = vxor.u32 %v2373, 2147483648
    %v2390 = vxor.u32 %v2374, 2147483648
    %v2391 = vxor.u32 %v2375, 2147483648
    %v2392 = vxor.u32 %v2376, 2147483648
    %v2393 = vxor.u32 %v2377, 2147483648
    %v2394 = vxor.u32 %v2378, 2147483648
    %v2395 = vxor.u32 %v2379, 2147483648
    %v2396 = vxor.u32 %v2380, 2147483648
    %v2397 = vxor.u32 %v2381, 2147483648
    %v2398 = vxor.u32 %v2382, 2147483648
    %v2399 = vxor.u32 %v2383, 2147483648
    %v2400 = vxor.u32 %v2384, 2147483648
    %v2401 = vxor.u32 %v2385, 2147483648
    %v2402 = vxor.u32 %v2386, 2147483648
    %v2403 = vmul.f32 %v2387, 1.442695
    %v2404 = vpow.pop %v2403
    %v2405 = vmul.f32 %v2388, 1.442695
    %v2406 = vpow.pop %v2405
    %v2407 = vmul.f32 %v2389, 1.442695
    %v2408 = vpow.pop %v2407
    %v2409 = vmul.f32 %v2390, 1.442695
    %v2410 = vpow.pop %v2409
    %v2411 = vmul.f32 %v2391, 1.442695
    %v2412 = vpow.pop %v2411
    %v2413 = vmul.f32 %v2392, 1.442695
    %v2414 = vpow.pop %v2413
    %v2415 = vmul.f32 %v2393, 1.442695
    %v2416 = vpow.pop %v2415
    %v2417 = vmul.f32 %v2394, 1.442695
    %v2418 = vpow.pop %v2417
    %v2419 = vmul.f32 %v2395, 1.442695
    %v2420 = vpow.pop %v2419
    %v2421 = vmul.f32 %v2396, 1.442695
    %v2422 = vpow.pop %v2421
    %v2423 = vmul.f32 %v2397, 1.442695
    %v2424 = vpow.pop %v2423
    %v2425 = vmul.f32 %v2398, 1.442695
    %v2426 = vpow.pop %v2425
    %v2427 = vmul.f32 %v2399, 1.442695
    %v2428 = vpow.pop %v2427
    %v2429 = vmul.f32 %v2400, 1.442695
    %v2430 = vpow.pop %v2429
    %v2431 = vmul.f32 %v2401, 1.442695
    %v2432 = vpow.pop %v2431
    %v2433 = vmul.f32 %v2402, 1.442695
    %v2434 = vpow.pop %v2433
    %v2435 = vadd.f32 %v2404, 1.0
    %v2436 = vadd.f32 %v2406, 1.0
    %v2437 = vadd.f32 %v2408, 1.0
    %v2438 = vadd.f32 %v2410, 1.0
    %v2439 = vadd.f32 %v2412, 1.0
    %v2440 = vadd.f32 %v2414, 1.0
    %v2441 = vadd.f32 %v2416, 1.0
    %v2442 = vadd.f32 %v2418, 1.0
    %v2443 = vadd.f32 %v2420, 1.0
    %v2444 = vadd.f32 %v2422, 1.0
    %v2445 = vadd.f32 %v2424, 1.0
    %v2446 = vadd.f32 %v2426, 1.0
    %v2447 = vadd.f32 %v2428, 1.0
    %v2448 = vadd.f32 %v2430, 1.0
    %v2449 = vadd.f32 %v2432, 1.0
    %v2450 = vadd.f32 %v2434, 1.0
    %v2451 = vrcp.pop %v2435
    %v2452 = vmul.f32 1.0, %v2451
    %v2453 = vrcp.pop %v2436
    %v2454 = vmul.f32 1.0, %v2453
    %v2455 = vrcp.pop %v2437
    %v2456 = vmul.f32 1.0, %v2455
    %v2457 = vrcp.pop %v2438
    %v2458 = vmul.f32 1.0, %v2457
    %v2459 = vrcp.pop %v2439
    %v2460 = vmul.f32 1.0, %v2459
    %v2461 = vrcp.pop %v2440
    %v2462 = vmul.f32 1.0, %v2461
    %v2463 = vrcp.pop %v2441
    %v2464 = vmul.f32 1.0, %v2463
    %v2465 = vrcp.pop %v2442
    %v2466 = vmul.f32 1.0, %v2465
    %v2467 = vrcp.pop %v2443
    %v2468 = vmul.f32 1.0, %v2467
    %v2469 = vrcp.pop %v2444
    %v2470 = vmul.f32 1.0, %v2469
    %v2471 = vrcp.pop %v2445
    %v2472 = vmul.f32 1.0, %v2471
    %v2473 = vrcp.pop %v2446
    %v2474 = vmul.f32 1.0, %v2473
    %v2475 = vrcp.pop %v2447
    %v2476 = vmul.f32 1.0, %v2475
    %v2477 = vrcp.pop %v2448
    %v2478 = vmul.f32 1.0, %v2477
    %v2479 = vrcp.pop %v2449
    %v2480 = vmul.f32 1.0, %v2479
    %v2481 = vrcp.pop %v2450
    %v2482 = vmul.f32 1.0, %v2481
    %v2483 = vmul.f32 %v2371, %v2452
    %v2484 = vmul.f32 %v2372, %v2454
    %v2485 = vmul.f32 %v2373, %v2456
    %v2486 = vmul.f32 %v2374, %v2458
    %v2487 = vmul.f32 %v2375, %v2460
    %v2488 = vmul.f32 %v2376, %v2462
    %v2489 = vmul.f32 %v2377, %v2464
    %v2490 = vmul.f32 %v2378, %v2466
    %v2491 = vmul.f32 %v2379, %v2468
    %v2492 = vmul.f32 %v2380, %v2470
    %v2493 = vmul.f32 %v2381, %v2472
    %v2494 = vmul.f32 %v2382, %v2474
    %v2495 = vmul.f32 %v2383, %v2476
    %v2496 = vmul.f32 %v2384, %v2478
    %v2497 = vmul.f32 %v2385, %v2480
    %v2498 = vmul.f32 %v2386, %v2482
    %2499 = vrot.lane.b32.xlu0 %v2483, 17
    %v2500 = vpop.permute.xlu0 %2499
    %2501 = vrot.lane.b32.xlu0 %v2487, 17
    %v2502 = vpop.permute.xlu0 %2501
    %2503 = vrot.lane.b32.xlu0 %v2491, 17
    %v2504 = vpop.permute.xlu0 %2503
    %2505 = vrot.lane.b32.xlu0 %v2495, 17
    %v2506 = vpop.permute.xlu0 %2505
    %2507 = vrot.lane.b32.xlu0 %v2484, 17
    %v2508 = vpop.permute.xlu0 %2507
    %2509 = vrot.lane.b32.xlu0 %v2488, 17
    %v2510 = vpop.permute.xlu0 %2509
    %2511 = vrot.lane.b32.xlu0 %v2492, 17
    %v2512 = vpop.permute.xlu0 %2511
    %2513 = vrot.lane.b32.xlu0 %v2496, 17
    %v2514 = vpop.permute.xlu0 %2513
    %2515 = vrot.lane.b32.xlu0 %v2485, 17
    %v2516 = vpop.permute.xlu0 %2515
    %2517 = vrot.lane.b32.xlu0 %v2489, 17
    %v2518 = vpop.permute.xlu0 %2517
    %2519 = vrot.lane.b32.xlu0 %v2493, 17
    %v2520 = vpop.permute.xlu0 %2519
    %2521 = vrot.lane.b32.xlu0 %v2497, 17
    %v2522 = vpop.permute.xlu0 %2521
    %2523 = vrot.lane.b32.xlu0 %v2486, 17
    %v2524 = vpop.permute.xlu0 %2523
    %2525 = vrot.lane.b32.xlu0 %v2490, 17
    %v2526 = vpop.permute.xlu0 %2525
    %2527 = vrot.lane.b32.xlu0 %v2494, 17
    %v2528 = vpop.permute.xlu0 %2527
    %2529 = vrot.lane.b32.xlu0 %v2498, 17
    %v2530 = vpop.permute.xlu0 %2529
    %v2531 = vsel %vm299, %v2516, %v2524
    %v2532 = vsel %vm299, %v2518, %v2526
    %v2533 = vsel %vm299, %v2520, %v2528
    %v2534 = vsel %vm299, %v2522, %v2530
    %v2535 = vsel %vm299, %v2508, %v2516
    %v2536 = vsel %vm299, %v2510, %v2518
    %v2537 = vsel %vm299, %v2512, %v2520
    %v2538 = vsel %vm299, %v2514, %v2522
    %v2539 = vsel %vm299, %v2500, %v2508
    %v2540 = vsel %vm299, %v2502, %v2510
    %v2541 = vsel %vm299, %v2504, %v2512
    %v2542 = vsel %vm299, %v2506, %v2514
    %v2543 = vsel %vm299, %v2524, %v2500
    %v2544 = vsel %vm299, %v2526, %v2502
    %v2545 = vsel %vm299, %v2528, %v2504
    %v2546 = vsel %vm299, %v2530, %v2506
    %vm2547 = vcmask 261120
    %v2549 = vsel %vm2547, %v98, 0
    %2551 = vmatprep.subr.mxu0 %v2539
    %2552 = vmatpush1.msra.mxu0 %v2543
    %2553 = vmatprep.subr.mxu0 %v2540
    %2554 = vmatpush1.msra.mxu0 %v2544
    %2555 = vmatprep.subr.mxu0 %v2541
    %2556 = vmatpush1.msra.mxu0 %v2545
    %2557 = vmatprep.subr.mxu0 %v2542
    %2558 = vmatpush1.msra.mxu0 %v2546
    %2559 = vmatprep.subr.mxu0 0.0
    %2560 = vmatpush1.msra.mxu0 0.0
    %2561 = vmatprep.subr.mxu0 0.0
    %2562 = vmatpush1.msra.mxu0 0.0
    %2563 = vmatprep.subr.mxu0 0.0
    %2564 = vmatpush1.msra.mxu0 0.0
    %2565 = vmatprep.subr.mxu0 0.0
    %2566 = vmatpush1.msra.mxu0 0.0
    %2567 = vmatprep.subr.mxu0 0.0
    %2568 = vmatpush1.msra.mxu0 0.0
    %2569 = vmatprep.subr.mxu0 0.0
    %2570 = vmatpush1.msra.mxu0 0.0
    %2571 = vmatprep.subr.mxu0 0.0
    %2572 = vmatpush1.msra.mxu0 0.0
    %2573 = vmatprep.subr.mxu0 0.0
    %2574 = vmatpush1.msra.mxu0 0.0
    %2575 = vmatprep.subr.mxu0 0.0
    %2576 = vmatpush1.msra.mxu0 0.0
    %2577 = vmatprep.subr.mxu0 0.0
    %2578 = vmatpush1.msra.mxu0 0.0
    %2579 = vmatprep.subr.mxu0 0.0
    %2580 = vmatpush1.msra.mxu0 0.0
    %2581 = vmatprep.subr.mxu0 0.0
    %2582 = vmatpush1.msra.mxu0 0.0
    %2583 = vmatprep.subr.mxu0 0.0
    %2584 = vmatpush1.msra.mxu0 0.0
    %2585 = vmatprep.subr.mxu0 0.0
    %2586 = vmatpush1.msra.mxu0 0.0
    %2587 = vmatprep.subr.mxu0 0.0
    %2588 = vmatpush1.msra.mxu0 0.0
    %2589 = vmatprep.subr.mxu0 0.0
    %2590 = vmatpush1.msra.mxu0 0.0
    %2591 = vmatprep.subr.mxu0 0.0
    %2592 = vmatpush1.msra.mxu0 0.0
    %2593 = vmatprep.subr.mxu0 0.0
    %2594 = vmatpush1.msra.mxu0 0.0
    %2595 = vmatprep.subr.mxu0 0.0
    %2596 = vmatpush1.msra.mxu0 0.0
    %2597 = vmatprep.subr.mxu0 0.0
    %2598 = vmatpush1.msra.mxu0 0.0
    %2599 = vmatprep.subr.mxu0 0.0
    %2600 = vmatpush1.msra.mxu0 0.0
    %2601 = vmatprep.subr.mxu0 0.0
    %2602 = vmatpush1.msra.mxu0 0.0
    %2603 = vmatprep.subr.mxu0 0.0
    %2604 = vmatpush1.msra.mxu0 0.0
    %2605 = vmatprep.subr.mxu0 0.0
    %2606 = vmatpush1.msra.mxu0 0.0
    %2607 = vmatprep.subr.mxu0 0.0
    %2608 = vmatpush1.msra.mxu0 0.0
    %2609 = vmatprep.subr.mxu0 0.0
    %2610 = vmatpush1.msra.mxu0 0.0
    %2611 = vmatprep.subr.mxu0 0.0
    %2612 = vmatpush1.msra.mxu0 0.0
    %2613 = vmatprep.subr.mxu0 0.0
    %2614 = vmatpush1.msra.mxu0 0.0
    %2615 = vmatprep.mubr.f32.mxu0 0.0
    %2616 = vmatmul.mubr.f32.gmra.mrb[0].mxu0 %v2549
    %v2617 = vpop.f32.mrb[0].mxu0
    %v2618 = vadd.f32 0.0, %v2617
    %v2619 = vpop.f32.mrb[0].mxu0
    %v2620 = vadd.f32 0.0, %v2619
    %2621 = vdwg.mxu0
    %2622 = vmatprep.subr.mxu0 %v2531
    %2623 = vmatpush1.msra.mxu0 %v2535
    %2624 = vmatprep.subr.mxu0 %v2532
    %2625 = vmatpush1.msra.mxu0 %v2536
    %2626 = vmatprep.subr.mxu0 %v2533
    %2627 = vmatpush1.msra.mxu0 %v2537
    %2628 = vmatprep.subr.mxu0 %v2534
    %2629 = vmatpush1.msra.mxu0 %v2538
    %2630 = vmatprep.subr.mxu0 0.0
    %2631 = vmatpush1.msra.mxu0 0.0
    %2632 = vmatprep.subr.mxu0 0.0
    %2633 = vmatpush1.msra.mxu0 0.0
    %2634 = vmatprep.subr.mxu0 0.0
    %2635 = vmatpush1.msra.mxu0 0.0
    %2636 = vmatprep.subr.mxu0 0.0
    %2637 = vmatpush1.msra.mxu0 0.0
    %2638 = vmatprep.subr.mxu0 0.0
    %2639 = vmatpush1.msra.mxu0 0.0
    %2640 = vmatprep.subr.mxu0 0.0
    %2641 = vmatpush1.msra.mxu0 0.0
    %2642 = vmatprep.subr.mxu0 0.0
    %2643 = vmatpush1.msra.mxu0 0.0
    %2644 = vmatprep.subr.mxu0 0.0
    %2645 = vmatpush1.msra.mxu0 0.0
    %2646 = vmatprep.subr.mxu0 0.0
    %2647 = vmatpush1.msra.mxu0 0.0
    %2648 = vmatprep.subr.mxu0 0.0
    %2649 = vmatpush1.msra.mxu0 0.0
    %2650 = vmatprep.subr.mxu0 0.0
    %2651 = vmatpush1.msra.mxu0 0.0
    %2652 = vmatprep.subr.mxu0 0.0
    %2653 = vmatpush1.msra.mxu0 0.0
    %2654 = vmatprep.subr.mxu0 0.0
    %2655 = vmatpush1.msra.mxu0 0.0
    %2656 = vmatprep.subr.mxu0 0.0
    %2657 = vmatpush1.msra.mxu0 0.0
    %2658 = vmatprep.subr.mxu0 0.0
    %2659 = vmatpush1.msra.mxu0 0.0
    %2660 = vmatprep.subr.mxu0 0.0
    %2661 = vmatpush1.msra.mxu0 0.0
    %2662 = vmatprep.subr.mxu0 0.0
    %2663 = vmatpush1.msra.mxu0 0.0
    %2664 = vmatprep.subr.mxu0 0.0
    %2665 = vmatpush1.msra.mxu0 0.0
    %2666 = vmatprep.subr.mxu0 0.0
    %2667 = vmatpush1.msra.mxu0 0.0
    %2668 = vmatprep.subr.mxu0 0.0
    %2669 = vmatpush1.msra.mxu0 0.0
    %2670 = vmatprep.subr.mxu0 0.0
    %2671 = vmatpush1.msra.mxu0 0.0
    %2672 = vmatprep.subr.mxu0 0.0
    %2673 = vmatpush1.msra.mxu0 0.0
    %2674 = vmatprep.subr.mxu0 0.0
    %2675 = vmatpush1.msra.mxu0 0.0
    %2676 = vmatprep.subr.mxu0 0.0
    %2677 = vmatpush1.msra.mxu0 0.0
    %2678 = vmatprep.subr.mxu0 0.0
    %2679 = vmatpush1.msra.mxu0 0.0
    %2680 = vmatprep.subr.mxu0 0.0
    %2681 = vmatpush1.msra.mxu0 0.0
    %2682 = vmatprep.subr.mxu0 0.0
    %2683 = vmatpush1.msra.mxu0 0.0
    %2684 = vmatprep.subr.mxu0 0.0
    %2685 = vmatpush1.msra.mxu0 0.0
    %2686 = vmatprep.mubr.f32.mxu0 0.0
    %2687 = vmatmul.mubr.f32.gmra.mrb[0].mxu0 %v2549
    %v2688 = vpop.f32.mrb[0].mxu0
    %v2689 = vadd.f32 0.0, %v2688
    %v2690 = vpop.f32.mrb[0].mxu0
    %v2691 = vadd.f32 0.0, %v2690
    %2692 = vdwg.mxu0
    %v2693 = vmul.f32 %v2618, %v156
    %v2694 = vmul.f32 %v2620, %v160
    %v2695 = vmul.f32 %v2689, %v164
    %v2696 = vmul.f32 %v2691, %v168
    %v2697 = vadd.f32 %v143, %v2693
    %v2698 = vadd.f32 %v143, %v2694
    %v2699 = vadd.f32 %v143, %v2695
    %v2700 = vadd.f32 %v143, %v2696
    %2701 = vrot.lane.b32.xlu0 %v2483, 16
    %v2702 = vpop.permute.xlu0 %2701
    %2703 = vrot.lane.b32.xlu0 %v2487, 16
    %v2704 = vpop.permute.xlu0 %2703
    %2705 = vrot.lane.b32.xlu0 %v2491, 16
    %v2706 = vpop.permute.xlu0 %2705
    %2707 = vrot.lane.b32.xlu0 %v2495, 16
    %v2708 = vpop.permute.xlu0 %2707
    %2709 = vrot.lane.b32.xlu0 %v2484, 16
    %v2710 = vpop.permute.xlu0 %2709
    %2711 = vrot.lane.b32.xlu0 %v2488, 16
    %v2712 = vpop.permute.xlu0 %2711
    %2713 = vrot.lane.b32.xlu0 %v2492, 16
    %v2714 = vpop.permute.xlu0 %2713
    %2715 = vrot.lane.b32.xlu0 %v2496, 16
    %v2716 = vpop.permute.xlu0 %2715
    %2717 = vrot.lane.b32.xlu0 %v2485, 16
    %v2718 = vpop.permute.xlu0 %2717
    %2719 = vrot.lane.b32.xlu0 %v2489, 16
    %v2720 = vpop.permute.xlu0 %2719
    %2721 = vrot.lane.b32.xlu0 %v2493, 16
    %v2722 = vpop.permute.xlu0 %2721
    %2723 = vrot.lane.b32.xlu0 %v2497, 16
    %v2724 = vpop.permute.xlu0 %2723
    %2725 = vrot.lane.b32.xlu0 %v2486, 16
    %v2726 = vpop.permute.xlu0 %2725
    %2727 = vrot.lane.b32.xlu0 %v2490, 16
    %v2728 = vpop.permute.xlu0 %2727
    %2729 = vrot.lane.b32.xlu0 %v2494, 16
    %v2730 = vpop.permute.xlu0 %2729
    %2731 = vrot.lane.b32.xlu0 %v2498, 16
    %v2732 = vpop.permute.xlu0 %2731
    %v2733 = vsel %vm536, %v2718, %v2726
    %v2734 = vsel %vm536, %v2720, %v2728
    %v2735 = vsel %vm536, %v2722, %v2730
    %v2736 = vsel %vm536, %v2724, %v2732
    %v2737 = vsel %vm536, %v2710, %v2718
    %v2738 = vsel %vm536, %v2712, %v2720
    %v2739 = vsel %vm536, %v2714, %v2722
    %v2740 = vsel %vm536, %v2716, %v2724
    %v2741 = vsel %vm536, %v2702, %v2710
    %v2742 = vsel %vm536, %v2704, %v2712
    %v2743 = vsel %vm536, %v2706, %v2714
    %v2744 = vsel %vm536, %v2708, %v2716
    %v2745 = vsel %vm536, %v2726, %v2702
    %v2746 = vsel %vm536, %v2728, %v2704
    %v2747 = vsel %vm536, %v2730, %v2706
    %v2748 = vsel %vm536, %v2732, %v2708
    %v2750 = vsel %vm2547, %v100, 0
    %2752 = vmatprep.subr.mxu0 %v2741
    %2753 = vmatpush1.msra.mxu0 %v2745
    %2754 = vmatprep.subr.mxu0 %v2742
    %2755 = vmatpush1.msra.mxu0 %v2746
    %2756 = vmatprep.subr.mxu0 %v2743
    %2757 = vmatpush1.msra.mxu0 %v2747
    %2758 = vmatprep.subr.mxu0 %v2744
    %2759 = vmatpush1.msra.mxu0 %v2748
    %2760 = vmatprep.subr.mxu0 0.0
    %2761 = vmatpush1.msra.mxu0 0.0
    %2762 = vmatprep.subr.mxu0 0.0
    %2763 = vmatpush1.msra.mxu0 0.0
    %2764 = vmatprep.subr.mxu0 0.0
    %2765 = vmatpush1.msra.mxu0 0.0
    %2766 = vmatprep.subr.mxu0 0.0
    %2767 = vmatpush1.msra.mxu0 0.0
    %2768 = vmatprep.subr.mxu0 0.0
    %2769 = vmatpush1.msra.mxu0 0.0
    %2770 = vmatprep.subr.mxu0 0.0
    %2771 = vmatpush1.msra.mxu0 0.0
    %2772 = vmatprep.subr.mxu0 0.0
    %2773 = vmatpush1.msra.mxu0 0.0
    %2774 = vmatprep.subr.mxu0 0.0
    %2775 = vmatpush1.msra.mxu0 0.0
    %2776 = vmatprep.subr.mxu0 0.0
    %2777 = vmatpush1.msra.mxu0 0.0
    %2778 = vmatprep.subr.mxu0 0.0
    %2779 = vmatpush1.msra.mxu0 0.0
    %2780 = vmatprep.subr.mxu0 0.0
    %2781 = vmatpush1.msra.mxu0 0.0
    %2782 = vmatprep.subr.mxu0 0.0
    %2783 = vmatpush1.msra.mxu0 0.0
    %2784 = vmatprep.subr.mxu0 0.0
    %2785 = vmatpush1.msra.mxu0 0.0
    %2786 = vmatprep.subr.mxu0 0.0
    %2787 = vmatpush1.msra.mxu0 0.0
    %2788 = vmatprep.subr.mxu0 0.0
    %2789 = vmatpush1.msra.mxu0 0.0
    %2790 = vmatprep.subr.mxu0 0.0
    %2791 = vmatpush1.msra.mxu0 0.0
    %2792 = vmatprep.subr.mxu0 0.0
    %2793 = vmatpush1.msra.mxu0 0.0
    %2794 = vmatprep.subr.mxu0 0.0
    %2795 = vmatpush1.msra.mxu0 0.0
    %2796 = vmatprep.subr.mxu0 0.0
    %2797 = vmatpush1.msra.mxu0 0.0
    %2798 = vmatprep.subr.mxu0 0.0
    %2799 = vmatpush1.msra.mxu0 0.0
    %2800 = vmatprep.subr.mxu0 0.0
    %2801 = vmatpush1.msra.mxu0 0.0
    %2802 = vmatprep.subr.mxu0 0.0
    %2803 = vmatpush1.msra.mxu0 0.0
    %2804 = vmatprep.subr.mxu0 0.0
    %2805 = vmatpush1.msra.mxu0 0.0
    %2806 = vmatprep.subr.mxu0 0.0
    %2807 = vmatpush1.msra.mxu0 0.0
    %2808 = vmatprep.subr.mxu0 0.0
    %2809 = vmatpush1.msra.mxu0 0.0
    %2810 = vmatprep.subr.mxu0 0.0
    %2811 = vmatpush1.msra.mxu0 0.0
    %2812 = vmatprep.subr.mxu0 0.0
    %2813 = vmatpush1.msra.mxu0 0.0
    %2814 = vmatprep.subr.mxu0 0.0
    %2815 = vmatpush1.msra.mxu0 0.0
    %2816 = vmatprep.mubr.f32.mxu0 0.0
    %2817 = vmatmul.mubr.f32.gmra.mrb[0].mxu0 %v2750
    %v2818 = vpop.f32.mrb[0].mxu0
    %v2819 = vadd.f32 0.0, %v2818
    %v2820 = vpop.f32.mrb[0].mxu0
    %v2821 = vadd.f32 0.0, %v2820
    %2822 = vdwg.mxu0
    %2823 = vmatprep.subr.mxu0 %v2733
    %2824 = vmatpush1.msra.mxu0 %v2737
    %2825 = vmatprep.subr.mxu0 %v2734
    %2826 = vmatpush1.msra.mxu0 %v2738
    %2827 = vmatprep.subr.mxu0 %v2735
    %2828 = vmatpush1.msra.mxu0 %v2739
    %2829 = vmatprep.subr.mxu0 %v2736
    %2830 = vmatpush1.msra.mxu0 %v2740
    %2831 = vmatprep.subr.mxu0 0.0
    %2832 = vmatpush1.msra.mxu0 0.0
    %2833 = vmatprep.subr.mxu0 0.0
    %2834 = vmatpush1.msra.mxu0 0.0
    %2835 = vmatprep.subr.mxu0 0.0
    %2836 = vmatpush1.msra.mxu0 0.0
    %2837 = vmatprep.subr.mxu0 0.0
    %2838 = vmatpush1.msra.mxu0 0.0
    %2839 = vmatprep.subr.mxu0 0.0
    %2840 = vmatpush1.msra.mxu0 0.0
    %2841 = vmatprep.subr.mxu0 0.0
    %2842 = vmatpush1.msra.mxu0 0.0
    %2843 = vmatprep.subr.mxu0 0.0
    %2844 = vmatpush1.msra.mxu0 0.0
    %2845 = vmatprep.subr.mxu0 0.0
    %2846 = vmatpush1.msra.mxu0 0.0
    %2847 = vmatprep.subr.mxu0 0.0
    %2848 = vmatpush1.msra.mxu0 0.0
    %2849 = vmatprep.subr.mxu0 0.0
    %2850 = vmatpush1.msra.mxu0 0.0
    %2851 = vmatprep.subr.mxu0 0.0
    %2852 = vmatpush1.msra.mxu0 0.0
    %2853 = vmatprep.subr.mxu0 0.0
    %2854 = vmatpush1.msra.mxu0 0.0
    %2855 = vmatprep.subr.mxu0 0.0
    %2856 = vmatpush1.msra.mxu0 0.0
    %2857 = vmatprep.subr.mxu0 0.0
    %2858 = vmatpush1.msra.mxu0 0.0
    %2859 = vmatprep.subr.mxu0 0.0
    %2860 = vmatpush1.msra.mxu0 0.0
    %2861 = vmatprep.subr.mxu0 0.0
    %2862 = vmatpush1.msra.mxu0 0.0
    %2863 = vmatprep.subr.mxu0 0.0
    %2864 = vmatpush1.msra.mxu0 0.0
    %2865 = vmatprep.subr.mxu0 0.0
    %2866 = vmatpush1.msra.mxu0 0.0
    %2867 = vmatprep.subr.mxu0 0.0
    %2868 = vmatpush1.msra.mxu0 0.0
    %2869 = vmatprep.subr.mxu0 0.0
    %2870 = vmatpush1.msra.mxu0 0.0
    %2871 = vmatprep.subr.mxu0 0.0
    %2872 = vmatpush1.msra.mxu0 0.0
    %2873 = vmatprep.subr.mxu0 0.0
    %2874 = vmatpush1.msra.mxu0 0.0
    %2875 = vmatprep.subr.mxu0 0.0
    %2876 = vmatpush1.msra.mxu0 0.0
    %2877 = vmatprep.subr.mxu0 0.0
    %2878 = vmatpush1.msra.mxu0 0.0
    %2879 = vmatprep.subr.mxu0 0.0
    %2880 = vmatpush1.msra.mxu0 0.0
    %2881 = vmatprep.subr.mxu0 0.0
    %2882 = vmatpush1.msra.mxu0 0.0
    %2883 = vmatprep.subr.mxu0 0.0
    %2884 = vmatpush1.msra.mxu0 0.0
    %2885 = vmatprep.subr.mxu0 0.0
    %2886 = vmatpush1.msra.mxu0 0.0
    %2887 = vmatprep.mubr.f32.mxu0 0.0
    %2888 = vmatmul.mubr.f32.gmra.mrb[0].mxu0 %v2750
    %v2889 = vpop.f32.mrb[0].mxu0
    %v2890 = vadd.f32 0.0, %v2889
    %v2891 = vpop.f32.mrb[0].mxu0
    %v2892 = vadd.f32 0.0, %v2891
    %2893 = vdwg.mxu0
    %v2894 = vmul.f32 %v2819, %v172
    %v2895 = vmul.f32 %v2821, %v176
    %v2896 = vmul.f32 %v2890, %v180
    %v2897 = vmul.f32 %v2892, %v184
    %v2898 = vadd.f32 %v2697, %v2894
    %v2899 = vadd.f32 %v2698, %v2895
    %v2900 = vadd.f32 %v2699, %v2896
    %v2901 = vadd.f32 %v2700, %v2897
    %2902 = vrot.lane.b32.xlu0 %v2483, 15
    %v2903 = vpop.permute.xlu0 %2902
    %2904 = vrot.lane.b32.xlu0 %v2487, 15
    %v2905 = vpop.permute.xlu0 %2904
    %2906 = vrot.lane.b32.xlu0 %v2491, 15
    %v2907 = vpop.permute.xlu0 %2906
    %2908 = vrot.lane.b32.xlu0 %v2495, 15
    %v2909 = vpop.permute.xlu0 %2908
    %2910 = vrot.lane.b32.xlu0 %v2484, 15
    %v2911 = vpop.permute.xlu0 %2910
    %2912 = vrot.lane.b32.xlu0 %v2488, 15
    %v2913 = vpop.permute.xlu0 %2912
    %2914 = vrot.lane.b32.xlu0 %v2492, 15
    %v2915 = vpop.permute.xlu0 %2914
    %2916 = vrot.lane.b32.xlu0 %v2496, 15
    %v2917 = vpop.permute.xlu0 %2916
    %2918 = vrot.lane.b32.xlu0 %v2485, 15
    %v2919 = vpop.permute.xlu0 %2918
    %2920 = vrot.lane.b32.xlu0 %v2489, 15
    %v2921 = vpop.permute.xlu0 %2920
    %2922 = vrot.lane.b32.xlu0 %v2493, 15
    %v2923 = vpop.permute.xlu0 %2922
    %2924 = vrot.lane.b32.xlu0 %v2497, 15
    %v2925 = vpop.permute.xlu0 %2924
    %2926 = vrot.lane.b32.xlu0 %v2486, 15
    %v2927 = vpop.permute.xlu0 %2926
    %2928 = vrot.lane.b32.xlu0 %v2490, 15
    %v2929 = vpop.permute.xlu0 %2928
    %2930 = vrot.lane.b32.xlu0 %v2494, 15
    %v2931 = vpop.permute.xlu0 %2930
    %2932 = vrot.lane.b32.xlu0 %v2498, 15
    %v2933 = vpop.permute.xlu0 %2932
    %v2934 = vsel %vm771, %v2919, %v2927
    %v2935 = vsel %vm771, %v2921, %v2929
    %v2936 = vsel %vm771, %v2923, %v2931
    %v2937 = vsel %vm771, %v2925, %v2933
    %v2938 = vsel %vm771, %v2911, %v2919
    %v2939 = vsel %vm771, %v2913, %v2921
    %v2940 = vsel %vm771, %v2915, %v2923
    %v2941 = vsel %vm771, %v2917, %v2925
    %v2942 = vsel %vm771, %v2903, %v2911
    %v2943 = vsel %vm771, %v2905, %v2913
    %v2944 = vsel %vm771, %v2907, %v2915
    %v2945 = vsel %vm771, %v2909, %v2917
    %v2946 = vsel %vm771, %v2927, %v2903
    %v2947 = vsel %vm771, %v2929, %v2905
    %v2948 = vsel %vm771, %v2931, %v2907
    %v2949 = vsel %vm771, %v2933, %v2909
    %v2951 = vsel %vm2547, %v102, 0
    %2953 = vmatprep.subr.mxu0 %v2942
    %2954 = vmatpush1.msra.mxu0 %v2946
    %2955 = vmatprep.subr.mxu0 %v2943
    %2956 = vmatpush1.msra.mxu0 %v2947
    %2957 = vmatprep.subr.mxu0 %v2944
    %2958 = vmatpush1.msra.mxu0 %v2948
    %2959 = vmatprep.subr.mxu0 %v2945
    %2960 = vmatpush1.msra.mxu0 %v2949
    %2961 = vmatprep.subr.mxu0 0.0
    %2962 = vmatpush1.msra.mxu0 0.0
    %2963 = vmatprep.subr.mxu0 0.0
    %2964 = vmatpush1.msra.mxu0 0.0
    %2965 = vmatprep.subr.mxu0 0.0
    %2966 = vmatpush1.msra.mxu0 0.0
    %2967 = vmatprep.subr.mxu0 0.0
    %2968 = vmatpush1.msra.mxu0 0.0
    %2969 = vmatprep.subr.mxu0 0.0
    %2970 = vmatpush1.msra.mxu0 0.0
    %2971 = vmatprep.subr.mxu0 0.0
    %2972 = vmatpush1.msra.mxu0 0.0
    %2973 = vmatprep.subr.mxu0 0.0
    %2974 = vmatpush1.msra.mxu0 0.0
    %2975 = vmatprep.subr.mxu0 0.0
    %2976 = vmatpush1.msra.mxu0 0.0
    %2977 = vmatprep.subr.mxu0 0.0
    %2978 = vmatpush1.msra.mxu0 0.0
    %2979 = vmatprep.subr.mxu0 0.0
    %2980 = vmatpush1.msra.mxu0 0.0
    %2981 = vmatprep.subr.mxu0 0.0
    %2982 = vmatpush1.msra.mxu0 0.0
    %2983 = vmatprep.subr.mxu0 0.0
    %2984 = vmatpush1.msra.mxu0 0.0
    %2985 = vmatprep.subr.mxu0 0.0
    %2986 = vmatpush1.msra.mxu0 0.0
    %2987 = vmatprep.subr.mxu0 0.0
    %2988 = vmatpush1.msra.mxu0 0.0
    %2989 = vmatprep.subr.mxu0 0.0
    %2990 = vmatpush1.msra.mxu0 0.0
    %2991 = vmatprep.subr.mxu0 0.0
    %2992 = vmatpush1.msra.mxu0 0.0
    %2993 = vmatprep.subr.mxu0 0.0
    %2994 = vmatpush1.msra.mxu0 0.0
    %2995 = vmatprep.subr.mxu0 0.0
    %2996 = vmatpush1.msra.mxu0 0.0
    %2997 = vmatprep.subr.mxu0 0.0
    %2998 = vmatpush1.msra.mxu0 0.0
    %2999 = vmatprep.subr.mxu0 0.0
    %3000 = vmatpush1.msra.mxu0 0.0
    %3001 = vmatprep.subr.mxu0 0.0
    %3002 = vmatpush1.msra.mxu0 0.0
    %3003 = vmatprep.subr.mxu0 0.0
    %3004 = vmatpush1.msra.mxu0 0.0
    %3005 = vmatprep.subr.mxu0 0.0
    %3006 = vmatpush1.msra.mxu0 0.0
    %3007 = vmatprep.subr.mxu0 0.0
    %3008 = vmatpush1.msra.mxu0 0.0
    %3009 = vmatprep.subr.mxu0 0.0
    %3010 = vmatpush1.msra.mxu0 0.0
    %3011 = vmatprep.subr.mxu0 0.0
    %3012 = vmatpush1.msra.mxu0 0.0
    %3013 = vmatprep.subr.mxu0 0.0
    %3014 = vmatpush1.msra.mxu0 0.0
    %3015 = vmatprep.subr.mxu0 0.0
    %3016 = vmatpush1.msra.mxu0 0.0
    %3017 = vmatprep.mubr.f32.mxu0 0.0
    %3018 = vmatmul.mubr.f32.gmra.mrb[0].mxu0 %v2951
    %v3019 = vpop.f32.mrb[0].mxu0
    %v3020 = vadd.f32 0.0, %v3019
    %v3021 = vpop.f32.mrb[0].mxu0
    %v3022 = vadd.f32 0.0, %v3021
    %3023 = vdwg.mxu0
    %3024 = vmatprep.subr.mxu0 %v2934
    %3025 = vmatpush1.msra.mxu0 %v2938
    %3026 = vmatprep.subr.mxu0 %v2935
    %3027 = vmatpush1.msra.mxu0 %v2939
    %3028 = vmatprep.subr.mxu0 %v2936
    %3029 = vmatpush1.msra.mxu0 %v2940
    %3030 = vmatprep.subr.mxu0 %v2937
    %3031 = vmatpush1.msra.mxu0 %v2941
    %3032 = vmatprep.subr.mxu0 0.0
    %3033 = vmatpush1.msra.mxu0 0.0
    %3034 = vmatprep.subr.mxu0 0.0
    %3035 = vmatpush1.msra.mxu0 0.0
    %3036 = vmatprep.subr.mxu0 0.0
    %3037 = vmatpush1.msra.mxu0 0.0
    %3038 = vmatprep.subr.mxu0 0.0
    %3039 = vmatpush1.msra.mxu0 0.0
    %3040 = vmatprep.subr.mxu0 0.0
    %3041 = vmatpush1.msra.mxu0 0.0
    %3042 = vmatprep.subr.mxu0 0.0
    %3043 = vmatpush1.msra.mxu0 0.0
    %3044 = vmatprep.subr.mxu0 0.0
    %3045 = vmatpush1.msra.mxu0 0.0
    %3046 = vmatprep.subr.mxu0 0.0
    %3047 = vmatpush1.msra.mxu0 0.0
    %3048 = vmatprep.subr.mxu0 0.0
    %3049 = vmatpush1.msra.mxu0 0.0
    %3050 = vmatprep.subr.mxu0 0.0
    %3051 = vmatpush1.msra.mxu0 0.0
    %3052 = vmatprep.subr.mxu0 0.0
    %3053 = vmatpush1.msra.mxu0 0.0
    %3054 = vmatprep.subr.mxu0 0.0
    %3055 = vmatpush1.msra.mxu0 0.0
    %3056 = vmatprep.subr.mxu0 0.0
    %3057 = vmatpush1.msra.mxu0 0.0
    %3058 = vmatprep.subr.mxu0 0.0
    %3059 = vmatpush1.msra.mxu0 0.0
    %3060 = vmatprep.subr.mxu0 0.0
    %3061 = vmatpush1.msra.mxu0 0.0
    %3062 = vmatprep.subr.mxu0 0.0
    %3063 = vmatpush1.msra.mxu0 0.0
    %3064 = vmatprep.subr.mxu0 0.0
    %3065 = vmatpush1.msra.mxu0 0.0
    %3066 = vmatprep.subr.mxu0 0.0
    %3067 = vmatpush1.msra.mxu0 0.0
    %3068 = vmatprep.subr.mxu0 0.0
    %3069 = vmatpush1.msra.mxu0 0.0
    %3070 = vmatprep.subr.mxu0 0.0
    %3071 = vmatpush1.msra.mxu0 0.0
    %3072 = vmatprep.subr.mxu0 0.0
    %3073 = vmatpush1.msra.mxu0 0.0
    %3074 = vmatprep.subr.mxu0 0.0
    %3075 = vmatpush1.msra.mxu0 0.0
    %3076 = vmatprep.subr.mxu0 0.0
    %3077 = vmatpush1.msra.mxu0 0.0
    %3078 = vmatprep.subr.mxu0 0.0
    %3079 = vmatpush1.msra.mxu0 0.0
    %3080 = vmatprep.subr.mxu0 0.0
    %3081 = vmatpush1.msra.mxu0 0.0
    %3082 = vmatprep.subr.mxu0 0.0
    %3083 = vmatpush1.msra.mxu0 0.0
    %3084 = vmatprep.subr.mxu0 0.0
    %3085 = vmatpush1.msra.mxu0 0.0
    %3086 = vmatprep.subr.mxu0 0.0
    %3087 = vmatpush1.msra.mxu0 0.0
    %3088 = vmatprep.mubr.f32.mxu0 0.0
    %3089 = vmatmul.mubr.f32.gmra.mrb[0].mxu0 %v2951
    %v3090 = vpop.f32.mrb[0].mxu0
    %v3091 = vadd.f32 0.0, %v3090
    %v3092 = vpop.f32.mrb[0].mxu0
    %v3093 = vadd.f32 0.0, %v3092
    %3094 = vdwg.mxu0
    %v3095 = vmul.f32 %v3020, %v188
    %v3096 = vmul.f32 %v3022, %v192
    %v3097 = vmul.f32 %v3091, %v196
    %v3098 = vmul.f32 %v3093, %v200
    %v3099 = vadd.f32 %v2898, %v3095
    %v3100 = vadd.f32 %v2899, %v3096
    %v3101 = vadd.f32 %v2900, %v3097
    %v3102 = vadd.f32 %v2901, %v3098
    %3103 = vrot.lane.b32.xlu0 %v2483, 1
    %v3104 = vpop.permute.xlu0 %3103
    %3105 = vrot.lane.b32.xlu0 %v2487, 1
    %v3106 = vpop.permute.xlu0 %3105
    %3107 = vrot.lane.b32.xlu0 %v2491, 1
    %v3108 = vpop.permute.xlu0 %3107
    %3109 = vrot.lane.b32.xlu0 %v2495, 1
    %v3110 = vpop.permute.xlu0 %3109
    %3111 = vrot.lane.b32.xlu0 %v2484, 1
    %v3112 = vpop.permute.xlu0 %3111
    %3113 = vrot.lane.b32.xlu0 %v2488, 1
    %v3114 = vpop.permute.xlu0 %3113
    %3115 = vrot.lane.b32.xlu0 %v2492, 1
    %v3116 = vpop.permute.xlu0 %3115
    %3117 = vrot.lane.b32.xlu0 %v2496, 1
    %v3118 = vpop.permute.xlu0 %3117
    %3119 = vrot.lane.b32.xlu0 %v2485, 1
    %v3120 = vpop.permute.xlu0 %3119
    %3121 = vrot.lane.b32.xlu0 %v2489, 1
    %v3122 = vpop.permute.xlu0 %3121
    %3123 = vrot.lane.b32.xlu0 %v2493, 1
    %v3124 = vpop.permute.xlu0 %3123
    %3125 = vrot.lane.b32.xlu0 %v2497, 1
    %v3126 = vpop.permute.xlu0 %3125
    %3127 = vrot.lane.b32.xlu0 %v2486, 1
    %v3128 = vpop.permute.xlu0 %3127
    %3129 = vrot.lane.b32.xlu0 %v2490, 1
    %v3130 = vpop.permute.xlu0 %3129
    %3131 = vrot.lane.b32.xlu0 %v2494, 1
    %v3132 = vpop.permute.xlu0 %3131
    %3133 = vrot.lane.b32.xlu0 %v2498, 1
    %v3134 = vpop.permute.xlu0 %3133
    %v3135 = vsel %vm1006, %v3120, %v3128
    %v3136 = vsel %vm1006, %v3122, %v3130
    %v3137 = vsel %vm1006, %v3124, %v3132
    %v3138 = vsel %vm1006, %v3126, %v3134
    %v3139 = vsel %vm1006, %v3112, %v3120
    %v3140 = vsel %vm1006, %v3114, %v3122
    %v3141 = vsel %vm1006, %v3116, %v3124
    %v3142 = vsel %vm1006, %v3118, %v3126
    %v3143 = vsel %vm1006, %v3104, %v3112
    %v3144 = vsel %vm1006, %v3106, %v3114
    %v3145 = vsel %vm1006, %v3108, %v3116
    %v3146 = vsel %vm1006, %v3110, %v3118
    %v3147 = vsel %vm1006, %v3128, %v3104
    %v3148 = vsel %vm1006, %v3130, %v3106
    %v3149 = vsel %vm1006, %v3132, %v3108
    %v3150 = vsel %vm1006, %v3134, %v3110
    %v3152 = vsel %vm2547, %v104, 0
    %3154 = vmatprep.subr.mxu0 %v3143
    %3155 = vmatpush1.msra.mxu0 %v3147
    %3156 = vmatprep.subr.mxu0 %v3144
    %3157 = vmatpush1.msra.mxu0 %v3148
    %3158 = vmatprep.subr.mxu0 %v3145
    %3159 = vmatpush1.msra.mxu0 %v3149
    %3160 = vmatprep.subr.mxu0 %v3146
    %3161 = vmatpush1.msra.mxu0 %v3150
    %3162 = vmatprep.subr.mxu0 0.0
    %3163 = vmatpush1.msra.mxu0 0.0
    %3164 = vmatprep.subr.mxu0 0.0
    %3165 = vmatpush1.msra.mxu0 0.0
    %3166 = vmatprep.subr.mxu0 0.0
    %3167 = vmatpush1.msra.mxu0 0.0
    %3168 = vmatprep.subr.mxu0 0.0
    %3169 = vmatpush1.msra.mxu0 0.0
    %3170 = vmatprep.subr.mxu0 0.0
    %3171 = vmatpush1.msra.mxu0 0.0
    %3172 = vmatprep.subr.mxu0 0.0
    %3173 = vmatpush1.msra.mxu0 0.0
    %3174 = vmatprep.subr.mxu0 0.0
    %3175 = vmatpush1.msra.mxu0 0.0
    %3176 = vmatprep.subr.mxu0 0.0
    %3177 = vmatpush1.msra.mxu0 0.0
    %3178 = vmatprep.subr.mxu0 0.0
    %3179 = vmatpush1.msra.mxu0 0.0
    %3180 = vmatprep.subr.mxu0 0.0
    %3181 = vmatpush1.msra.mxu0 0.0
    %3182 = vmatprep.subr.mxu0 0.0
    %3183 = vmatpush1.msra.mxu0 0.0
    %3184 = vmatprep.subr.mxu0 0.0
    %3185 = vmatpush1.msra.mxu0 0.0
    %3186 = vmatprep.subr.mxu0 0.0
    %3187 = vmatpush1.msra.mxu0 0.0
    %3188 = vmatprep.subr.mxu0 0.0
    %3189 = vmatpush1.msra.mxu0 0.0
    %3190 = vmatprep.subr.mxu0 0.0
    %3191 = vmatpush1.msra.mxu0 0.0
    %3192 = vmatprep.subr.mxu0 0.0
    %3193 = vmatpush1.msra.mxu0 0.0
    %3194 = vmatprep.subr.mxu0 0.0
    %3195 = vmatpush1.msra.mxu0 0.0
    %3196 = vmatprep.subr.mxu0 0.0
    %3197 = vmatpush1.msra.mxu0 0.0
    %3198 = vmatprep.subr.mxu0 0.0
    %3199 = vmatpush1.msra.mxu0 0.0
    %3200 = vmatprep.subr.mxu0 0.0
    %3201 = vmatpush1.msra.mxu0 0.0
    %3202 = vmatprep.subr.mxu0 0.0
    %3203 = vmatpush1.msra.mxu0 0.0
    %3204 = vmatprep.subr.mxu0 0.0
    %3205 = vmatpush1.msra.mxu0 0.0
    %3206 = vmatprep.subr.mxu0 0.0
    %3207 = vmatpush1.msra.mxu0 0.0
    %3208 = vmatprep.subr.mxu0 0.0
    %3209 = vmatpush1.msra.mxu0 0.0
    %3210 = vmatprep.subr.mxu0 0.0
    %3211 = vmatpush1.msra.mxu0 0.0
    %3212 = vmatprep.subr.mxu0 0.0
    %3213 = vmatpush1.msra.mxu0 0.0
    %3214 = vmatprep.subr.mxu0 0.0
    %3215 = vmatpush1.msra.mxu0 0.0
    %3216 = vmatprep.subr.mxu0 0.0
    %3217 = vmatpush1.msra.mxu0 0.0
    %3218 = vmatprep.mubr.f32.mxu0 0.0
    %3219 = vmatmul.mubr.f32.gmra.mrb[0].mxu0 %v3152
    %v3220 = vpop.f32.mrb[0].mxu0
    %v3221 = vadd.f32 0.0, %v3220
    %v3222 = vpop.f32.mrb[0].mxu0
    %v3223 = vadd.f32 0.0, %v3222
    %3224 = vdwg.mxu0
    %3225 = vmatprep.subr.mxu0 %v3135
    %3226 = vmatpush1.msra.mxu0 %v3139
    %3227 = vmatprep.subr.mxu0 %v3136
    %3228 = vmatpush1.msra.mxu0 %v3140
    %3229 = vmatprep.subr.mxu0 %v3137
    %3230 = vmatpush1.msra.mxu0 %v3141
    %3231 = vmatprep.subr.mxu0 %v3138
    %3232 = vmatpush1.msra.mxu0 %v3142
    %3233 = vmatprep.subr.mxu0 0.0
    %3234 = vmatpush1.msra.mxu0 0.0
    %3235 = vmatprep.subr.mxu0 0.0
    %3236 = vmatpush1.msra.mxu0 0.0
    %3237 = vmatprep.subr.mxu0 0.0
    %3238 = vmatpush1.msra.mxu0 0.0
    %3239 = vmatprep.subr.mxu0 0.0
    %3240 = vmatpush1.msra.mxu0 0.0
    %3241 = vmatprep.subr.mxu0 0.0
    %3242 = vmatpush1.msra.mxu0 0.0
    %3243 = vmatprep.subr.mxu0 0.0
    %3244 = vmatpush1.msra.mxu0 0.0
    %3245 = vmatprep.subr.mxu0 0.0
    %3246 = vmatpush1.msra.mxu0 0.0
    %3247 = vmatprep.subr.mxu0 0.0
    %3248 = vmatpush1.msra.mxu0 0.0
    %3249 = vmatprep.subr.mxu0 0.0
    %3250 = vmatpush1.msra.mxu0 0.0
    %3251 = vmatprep.subr.mxu0 0.0
    %3252 = vmatpush1.msra.mxu0 0.0
    %3253 = vmatprep.subr.mxu0 0.0
    %3254 = vmatpush1.msra.mxu0 0.0
    %3255 = vmatprep.subr.mxu0 0.0
    %3256 = vmatpush1.msra.mxu0 0.0
    %3257 = vmatprep.subr.mxu0 0.0
    %3258 = vmatpush1.msra.mxu0 0.0
    %3259 = vmatprep.subr.mxu0 0.0
    %3260 = vmatpush1.msra.mxu0 0.0
    %3261 = vmatprep.subr.mxu0 0.0
    %3262 = vmatpush1.msra.mxu0 0.0
    %3263 = vmatprep.subr.mxu0 0.0
    %3264 = vmatpush1.msra.mxu0 0.0
    %3265 = vmatprep.subr.mxu0 0.0
    %3266 = vmatpush1.msra.mxu0 0.0
    %3267 = vmatprep.subr.mxu0 0.0
    %3268 = vmatpush1.msra.mxu0 0.0
    %3269 = vmatprep.subr.mxu0 0.0
    %3270 = vmatpush1.msra.mxu0 0.0
    %3271 = vmatprep.subr.mxu0 0.0
    %3272 = vmatpush1.msra.mxu0 0.0
    %3273 = vmatprep.subr.mxu0 0.0
    %3274 = vmatpush1.msra.mxu0 0.0
    %3275 = vmatprep.subr.mxu0 0.0
    %3276 = vmatpush1.msra.mxu0 0.0
    %3277 = vmatprep.subr.mxu0 0.0
    %3278 = vmatpush1.msra.mxu0 0.0
    %3279 = vmatprep.subr.mxu0 0.0
    %3280 = vmatpush1.msra.mxu0 0.0
    %3281 = vmatprep.subr.mxu0 0.0
    %3282 = vmatpush1.msra.mxu0 0.0
    %3283 = vmatprep.subr.mxu0 0.0
    %3284 = vmatpush1.msra.mxu0 0.0
    %3285 = vmatprep.subr.mxu0 0.0
    %3286 = vmatpush1.msra.mxu0 0.0
    %3287 = vmatprep.subr.mxu0 0.0
    %3288 = vmatpush1.msra.mxu0 0.0
    %3289 = vmatprep.mubr.f32.mxu0 0.0
    %3290 = vmatmul.mubr.f32.gmra.mrb[0].mxu0 %v3152
    %v3291 = vpop.f32.mrb[0].mxu0
    %v3292 = vadd.f32 0.0, %v3291
    %v3293 = vpop.f32.mrb[0].mxu0
    %v3294 = vadd.f32 0.0, %v3293
    %3295 = vdwg.mxu0
    %v3296 = vmul.f32 %v3221, %v204
    %v3297 = vmul.f32 %v3223, %v208
    %v3298 = vmul.f32 %v3292, %v212
    %v3299 = vmul.f32 %v3294, %v216
    %v3300 = vadd.f32 %v3099, %v3296
    %v3301 = vadd.f32 %v3100, %v3297
    %v3302 = vadd.f32 %v3101, %v3298
    %v3303 = vadd.f32 %v3102, %v3299
    %v3305 = vsel %vm2547, %v106, 0
    %3307 = vmatprep.subr.mxu0 %v2484
    %3308 = vmatpush1.msra.mxu0 %v2483
    %3309 = vmatprep.subr.mxu0 %v2488
    %3310 = vmatpush1.msra.mxu0 %v2487
    %3311 = vmatprep.subr.mxu0 %v2492
    %3312 = vmatpush1.msra.mxu0 %v2491
    %3313 = vmatprep.subr.mxu0 %v2496
    %3314 = vmatpush1.msra.mxu0 %v2495
    %3315 = vmatprep.subr.mxu0 0.0
    %3316 = vmatpush1.msra.mxu0 0.0
    %3317 = vmatprep.subr.mxu0 0.0
    %3318 = vmatpush1.msra.mxu0 0.0
    %3319 = vmatprep.subr.mxu0 0.0
    %3320 = vmatpush1.msra.mxu0 0.0
    %3321 = vmatprep.subr.mxu0 0.0
    %3322 = vmatpush1.msra.mxu0 0.0
    %3323 = vmatprep.subr.mxu0 0.0
    %3324 = vmatpush1.msra.mxu0 0.0
    %3325 = vmatprep.subr.mxu0 0.0
    %3326 = vmatpush1.msra.mxu0 0.0
    %3327 = vmatprep.subr.mxu0 0.0
    %3328 = vmatpush1.msra.mxu0 0.0
    %3329 = vmatprep.subr.mxu0 0.0
    %3330 = vmatpush1.msra.mxu0 0.0
    %3331 = vmatprep.subr.mxu0 0.0
    %3332 = vmatpush1.msra.mxu0 0.0
    %3333 = vmatprep.subr.mxu0 0.0
    %3334 = vmatpush1.msra.mxu0 0.0
    %3335 = vmatprep.subr.mxu0 0.0
    %3336 = vmatpush1.msra.mxu0 0.0
    %3337 = vmatprep.subr.mxu0 0.0
    %3338 = vmatpush1.msra.mxu0 0.0
    %3339 = vmatprep.subr.mxu0 0.0
    %3340 = vmatpush1.msra.mxu0 0.0
    %3341 = vmatprep.subr.mxu0 0.0
    %3342 = vmatpush1.msra.mxu0 0.0
    %3343 = vmatprep.subr.mxu0 0.0
    %3344 = vmatpush1.msra.mxu0 0.0
    %3345 = vmatprep.subr.mxu0 0.0
    %3346 = vmatpush1.msra.mxu0 0.0
    %3347 = vmatprep.subr.mxu0 0.0
    %3348 = vmatpush1.msra.mxu0 0.0
    %3349 = vmatprep.subr.mxu0 0.0
    %3350 = vmatpush1.msra.mxu0 0.0
    %3351 = vmatprep.subr.mxu0 0.0
    %3352 = vmatpush1.msra.mxu0 0.0
    %3353 = vmatprep.subr.mxu0 0.0
    %3354 = vmatpush1.msra.mxu0 0.0
    %3355 = vmatprep.subr.mxu0 0.0
    %3356 = vmatpush1.msra.mxu0 0.0
    %3357 = vmatprep.subr.mxu0 0.0
    %3358 = vmatpush1.msra.mxu0 0.0
    %3359 = vmatprep.subr.mxu0 0.0
    %3360 = vmatpush1.msra.mxu0 0.0
    %3361 = vmatprep.subr.mxu0 0.0
    %3362 = vmatpush1.msra.mxu0 0.0
    %3363 = vmatprep.subr.mxu0 0.0
    %3364 = vmatpush1.msra.mxu0 0.0
    %3365 = vmatprep.subr.mxu0 0.0
    %3366 = vmatpush1.msra.mxu0 0.0
    %3367 = vmatprep.subr.mxu0 0.0
    %3368 = vmatpush1.msra.mxu0 0.0
    %3369 = vmatprep.subr.mxu0 0.0
    %3370 = vmatpush1.msra.mxu0 0.0
    %3371 = vmatprep.mubr.f32.mxu0 0.0
    %3372 = vmatmul.mubr.f32.gmra.mrb[0].mxu0 %v3305
    %v3373 = vpop.f32.mrb[0].mxu0
    %v3374 = vadd.f32 0.0, %v3373
    %v3375 = vpop.f32.mrb[0].mxu0
    %v3376 = vadd.f32 0.0, %v3375
    %3377 = vdwg.mxu0
    %3378 = vmatprep.subr.mxu0 %v2486
    %3379 = vmatpush1.msra.mxu0 %v2485
    %3380 = vmatprep.subr.mxu0 %v2490
    %3381 = vmatpush1.msra.mxu0 %v2489
    %3382 = vmatprep.subr.mxu0 %v2494
    %3383 = vmatpush1.msra.mxu0 %v2493
    %3384 = vmatprep.subr.mxu0 %v2498
    %3385 = vmatpush1.msra.mxu0 %v2497
    %3386 = vmatprep.subr.mxu0 0.0
    %3387 = vmatpush1.msra.mxu0 0.0
    %3388 = vmatprep.subr.mxu0 0.0
    %3389 = vmatpush1.msra.mxu0 0.0
    %3390 = vmatprep.subr.mxu0 0.0
    %3391 = vmatpush1.msra.mxu0 0.0
    %3392 = vmatprep.subr.mxu0 0.0
    %3393 = vmatpush1.msra.mxu0 0.0
    %3394 = vmatprep.subr.mxu0 0.0
    %3395 = vmatpush1.msra.mxu0 0.0
    %3396 = vmatprep.subr.mxu0 0.0
    %3397 = vmatpush1.msra.mxu0 0.0
    %3398 = vmatprep.subr.mxu0 0.0
    %3399 = vmatpush1.msra.mxu0 0.0
    %3400 = vmatprep.subr.mxu0 0.0
    %3401 = vmatpush1.msra.mxu0 0.0
    %3402 = vmatprep.subr.mxu0 0.0
    %3403 = vmatpush1.msra.mxu0 0.0
    %3404 = vmatprep.subr.mxu0 0.0
    %3405 = vmatpush1.msra.mxu0 0.0
    %3406 = vmatprep.subr.mxu0 0.0
    %3407 = vmatpush1.msra.mxu0 0.0
    %3408 = vmatprep.subr.mxu0 0.0
    %3409 = vmatpush1.msra.mxu0 0.0
    %3410 = vmatprep.subr.mxu0 0.0
    %3411 = vmatpush1.msra.mxu0 0.0
    %3412 = vmatprep.subr.mxu0 0.0
    %3413 = vmatpush1.msra.mxu0 0.0
    %3414 = vmatprep.subr.mxu0 0.0
    %3415 = vmatpush1.msra.mxu0 0.0
    %3416 = vmatprep.subr.mxu0 0.0
    %3417 = vmatpush1.msra.mxu0 0.0
    %3418 = vmatprep.subr.mxu0 0.0
    %3419 = vmatpush1.msra.mxu0 0.0
    %3420 = vmatprep.subr.mxu0 0.0
    %3421 = vmatpush1.msra.mxu0 0.0
    %3422 = vmatprep.subr.mxu0 0.0
    %3423 = vmatpush1.msra.mxu0 0.0
    %3424 = vmatprep.subr.mxu0 0.0
    %3425 = vmatpush1.msra.mxu0 0.0
    %3426 = vmatprep.subr.mxu0 0.0
    %3427 = vmatpush1.msra.mxu0 0.0
    %3428 = vmatprep.subr.mxu0 0.0
    %3429 = vmatpush1.msra.mxu0 0.0
    %3430 = vmatprep.subr.mxu0 0.0
    %3431 = vmatpush1.msra.mxu0 0.0
    %3432 = vmatprep.subr.mxu0 0.0
    %3433 = vmatpush1.msra.mxu0 0.0
    %3434 = vmatprep.subr.mxu0 0.0
    %3435 = vmatpush1.msra.mxu0 0.0
    %3436 = vmatprep.subr.mxu0 0.0
    %3437 = vmatpush1.msra.mxu0 0.0
    %3438 = vmatprep.subr.mxu0 0.0
    %3439 = vmatpush1.msra.mxu0 0.0
    %3440 = vmatprep.subr.mxu0 0.0
    %3441 = vmatpush1.msra.mxu0 0.0
    %3442 = vmatprep.mubr.f32.mxu0 0.0
    %3443 = vmatmul.mubr.f32.gmra.mrb[0].mxu0 %v3305
    %v3444 = vpop.f32.mrb[0].mxu0
    %v3445 = vadd.f32 0.0, %v3444
    %v3446 = vpop.f32.mrb[0].mxu0
    %v3447 = vadd.f32 0.0, %v3446
    %3448 = vdwg.mxu0
    %v3449 = vadd.f32 %v3300, %v3374
    %v3450 = vadd.f32 %v3301, %v3376
    %v3451 = vadd.f32 %v3302, %v3445
    %v3452 = vadd.f32 %v3303, %v3447
    %3453 = vrot.lane.b32.xlu0 %v2483, 127
    %v3454 = vpop.permute.xlu0 %3453
    %3455 = vrot.lane.b32.xlu0 %v2487, 127
    %v3456 = vpop.permute.xlu0 %3455
    %3457 = vrot.lane.b32.xlu0 %v2491, 127
    %v3458 = vpop.permute.xlu0 %3457
    %3459 = vrot.lane.b32.xlu0 %v2495, 127
    %v3460 = vpop.permute.xlu0 %3459
    %3461 = vrot.lane.b32.xlu0 %v2484, 127
    %v3462 = vpop.permute.xlu0 %3461
    %3463 = vrot.lane.b32.xlu0 %v2488, 127
    %v3464 = vpop.permute.xlu0 %3463
    %3465 = vrot.lane.b32.xlu0 %v2492, 127
    %v3466 = vpop.permute.xlu0 %3465
    %3467 = vrot.lane.b32.xlu0 %v2496, 127
    %v3468 = vpop.permute.xlu0 %3467
    %3469 = vrot.lane.b32.xlu0 %v2485, 127
    %v3470 = vpop.permute.xlu0 %3469
    %3471 = vrot.lane.b32.xlu0 %v2489, 127
    %v3472 = vpop.permute.xlu0 %3471
    %3473 = vrot.lane.b32.xlu0 %v2493, 127
    %v3474 = vpop.permute.xlu0 %3473
    %3475 = vrot.lane.b32.xlu0 %v2497, 127
    %v3476 = vpop.permute.xlu0 %3475
    %3477 = vrot.lane.b32.xlu0 %v2486, 127
    %v3478 = vpop.permute.xlu0 %3477
    %3479 = vrot.lane.b32.xlu0 %v2490, 127
    %v3480 = vpop.permute.xlu0 %3479
    %3481 = vrot.lane.b32.xlu0 %v2494, 127
    %v3482 = vpop.permute.xlu0 %3481
    %3483 = vrot.lane.b32.xlu0 %v2498, 127
    %v3484 = vpop.permute.xlu0 %3483
    %v3485 = vsel %vm1455, %v3470, %v3478
    %v3486 = vsel %vm1455, %v3472, %v3480
    %v3487 = vsel %vm1455, %v3474, %v3482
    %v3488 = vsel %vm1455, %v3476, %v3484
    %v3489 = vsel %vm1455, %v3462, %v3470
    %v3490 = vsel %vm1455, %v3464, %v3472
    %v3491 = vsel %vm1455, %v3466, %v3474
    %v3492 = vsel %vm1455, %v3468, %v3476
    %v3493 = vsel %vm1455, %v3454, %v3462
    %v3494 = vsel %vm1455, %v3456, %v3464
    %v3495 = vsel %vm1455, %v3458, %v3466
    %v3496 = vsel %vm1455, %v3460, %v3468
    %v3497 = vsel %vm1455, %v3478, %v3454
    %v3498 = vsel %vm1455, %v3480, %v3456
    %v3499 = vsel %vm1455, %v3482, %v3458
    %v3500 = vsel %vm1455, %v3484, %v3460
    %v3502 = vsel %vm2547, %v108, 0
    %3504 = vmatprep.subr.mxu0 %v3489
    %3505 = vmatpush1.msra.mxu0 %v3493
    %3506 = vmatprep.subr.mxu0 %v3490
    %3507 = vmatpush1.msra.mxu0 %v3494
    %3508 = vmatprep.subr.mxu0 %v3491
    %3509 = vmatpush1.msra.mxu0 %v3495
    %3510 = vmatprep.subr.mxu0 %v3492
    %3511 = vmatpush1.msra.mxu0 %v3496
    %3512 = vmatprep.subr.mxu0 0.0
    %3513 = vmatpush1.msra.mxu0 0.0
    %3514 = vmatprep.subr.mxu0 0.0
    %3515 = vmatpush1.msra.mxu0 0.0
    %3516 = vmatprep.subr.mxu0 0.0
    %3517 = vmatpush1.msra.mxu0 0.0
    %3518 = vmatprep.subr.mxu0 0.0
    %3519 = vmatpush1.msra.mxu0 0.0
    %3520 = vmatprep.subr.mxu0 0.0
    %3521 = vmatpush1.msra.mxu0 0.0
    %3522 = vmatprep.subr.mxu0 0.0
    %3523 = vmatpush1.msra.mxu0 0.0
    %3524 = vmatprep.subr.mxu0 0.0
    %3525 = vmatpush1.msra.mxu0 0.0
    %3526 = vmatprep.subr.mxu0 0.0
    %3527 = vmatpush1.msra.mxu0 0.0
    %3528 = vmatprep.subr.mxu0 0.0
    %3529 = vmatpush1.msra.mxu0 0.0
    %3530 = vmatprep.subr.mxu0 0.0
    %3531 = vmatpush1.msra.mxu0 0.0
    %3532 = vmatprep.subr.mxu0 0.0
    %3533 = vmatpush1.msra.mxu0 0.0
    %3534 = vmatprep.subr.mxu0 0.0
    %3535 = vmatpush1.msra.mxu0 0.0
    %3536 = vmatprep.subr.mxu0 0.0
    %3537 = vmatpush1.msra.mxu0 0.0
    %3538 = vmatprep.subr.mxu0 0.0
    %3539 = vmatpush1.msra.mxu0 0.0
    %3540 = vmatprep.subr.mxu0 0.0
    %3541 = vmatpush1.msra.mxu0 0.0
    %3542 = vmatprep.subr.mxu0 0.0
    %3543 = vmatpush1.msra.mxu0 0.0
    %3544 = vmatprep.subr.mxu0 0.0
    %3545 = vmatpush1.msra.mxu0 0.0
    %3546 = vmatprep.subr.mxu0 0.0
    %3547 = vmatpush1.msra.mxu0 0.0
    %3548 = vmatprep.subr.mxu0 0.0
    %3549 = vmatpush1.msra.mxu0 0.0
    %3550 = vmatprep.subr.mxu0 0.0
    %3551 = vmatpush1.msra.mxu0 0.0
    %3552 = vmatprep.subr.mxu0 0.0
    %3553 = vmatpush1.msra.mxu0 0.0
    %3554 = vmatprep.subr.mxu0 0.0
    %3555 = vmatpush1.msra.mxu0 0.0
    %3556 = vmatprep.subr.mxu0 0.0
    %3557 = vmatpush1.msra.mxu0 0.0
    %3558 = vmatprep.subr.mxu0 0.0
    %3559 = vmatpush1.msra.mxu0 0.0
    %3560 = vmatprep.subr.mxu0 0.0
    %3561 = vmatpush1.msra.mxu0 0.0
    %3562 = vmatprep.subr.mxu0 0.0
    %3563 = vmatpush1.msra.mxu0 0.0
    %3564 = vmatprep.subr.mxu0 0.0
    %3565 = vmatpush1.msra.mxu0 0.0
    %3566 = vmatprep.subr.mxu0 0.0
    %3567 = vmatpush1.msra.mxu0 0.0
    %3568 = vmatprep.mubr.f32.mxu0 0.0
    %3569 = vmatmul.mubr.f32.gmra.mrb[0].mxu0 %v3502
    %v3570 = vpop.f32.mrb[0].mxu0
    %v3571 = vadd.f32 0.0, %v3570
    %v3572 = vpop.f32.mrb[0].mxu0
    %v3573 = vadd.f32 0.0, %v3572
    %3574 = vdwg.mxu0
    %3575 = vmatprep.subr.mxu0 %v3497
    %3576 = vmatpush1.msra.mxu0 %v3485
    %3577 = vmatprep.subr.mxu0 %v3498
    %3578 = vmatpush1.msra.mxu0 %v3486
    %3579 = vmatprep.subr.mxu0 %v3499
    %3580 = vmatpush1.msra.mxu0 %v3487
    %3581 = vmatprep.subr.mxu0 %v3500
    %3582 = vmatpush1.msra.mxu0 %v3488
    %3583 = vmatprep.subr.mxu0 0.0
    %3584 = vmatpush1.msra.mxu0 0.0
    %3585 = vmatprep.subr.mxu0 0.0
    %3586 = vmatpush1.msra.mxu0 0.0
    %3587 = vmatprep.subr.mxu0 0.0
    %3588 = vmatpush1.msra.mxu0 0.0
    %3589 = vmatprep.subr.mxu0 0.0
    %3590 = vmatpush1.msra.mxu0 0.0
    %3591 = vmatprep.subr.mxu0 0.0
    %3592 = vmatpush1.msra.mxu0 0.0
    %3593 = vmatprep.subr.mxu0 0.0
    %3594 = vmatpush1.msra.mxu0 0.0
    %3595 = vmatprep.subr.mxu0 0.0
    %3596 = vmatpush1.msra.mxu0 0.0
    %3597 = vmatprep.subr.mxu0 0.0
    %3598 = vmatpush1.msra.mxu0 0.0
    %3599 = vmatprep.subr.mxu0 0.0
    %3600 = vmatpush1.msra.mxu0 0.0
    %3601 = vmatprep.subr.mxu0 0.0
    %3602 = vmatpush1.msra.mxu0 0.0
    %3603 = vmatprep.subr.mxu0 0.0
    %3604 = vmatpush1.msra.mxu0 0.0
    %3605 = vmatprep.subr.mxu0 0.0
    %3606 = vmatpush1.msra.mxu0 0.0
    %3607 = vmatprep.subr.mxu0 0.0
    %3608 = vmatpush1.msra.mxu0 0.0
    %3609 = vmatprep.subr.mxu0 0.0
    %3610 = vmatpush1.msra.mxu0 0.0
    %3611 = vmatprep.subr.mxu0 0.0
    %3612 = vmatpush1.msra.mxu0 0.0
    %3613 = vmatprep.subr.mxu0 0.0
    %3614 = vmatpush1.msra.mxu0 0.0
    %3615 = vmatprep.subr.mxu0 0.0
    %3616 = vmatpush1.msra.mxu0 0.0
    %3617 = vmatprep.subr.mxu0 0.0
    %3618 = vmatpush1.msra.mxu0 0.0
    %3619 = vmatprep.subr.mxu0 0.0
    %3620 = vmatpush1.msra.mxu0 0.0
    %3621 = vmatprep.subr.mxu0 0.0
    %3622 = vmatpush1.msra.mxu0 0.0
    %3623 = vmatprep.subr.mxu0 0.0
    %3624 = vmatpush1.msra.mxu0 0.0
    %3625 = vmatprep.subr.mxu0 0.0
    %3626 = vmatpush1.msra.mxu0 0.0
    %3627 = vmatprep.subr.mxu0 0.0
    %3628 = vmatpush1.msra.mxu0 0.0
    %3629 = vmatprep.subr.mxu0 0.0
    %3630 = vmatpush1.msra.mxu0 0.0
    %3631 = vmatprep.subr.mxu0 0.0
    %3632 = vmatpush1.msra.mxu0 0.0
    %3633 = vmatprep.subr.mxu0 0.0
    %3634 = vmatpush1.msra.mxu0 0.0
    %3635 = vmatprep.subr.mxu0 0.0
    %3636 = vmatpush1.msra.mxu0 0.0
    %3637 = vmatprep.subr.mxu0 0.0
    %3638 = vmatpush1.msra.mxu0 0.0
    %3639 = vmatprep.mubr.f32.mxu0 0.0
    %3640 = vmatmul.mubr.f32.gmra.mrb[0].mxu0 %v3502
    %v3641 = vpop.f32.mrb[0].mxu0
    %v3642 = vadd.f32 0.0, %v3641
    %v3643 = vpop.f32.mrb[0].mxu0
    %v3644 = vadd.f32 0.0, %v3643
    %3645 = vdwg.mxu0
    %v3646 = vmul.f32 %v3571, %v220
    %v3647 = vmul.f32 %v3573, %v224
    %v3648 = vmul.f32 %v3642, %v228
    %v3649 = vmul.f32 %v3644, %v232
    %v3650 = vadd.f32 %v3449, %v3646
    %v3651 = vadd.f32 %v3450, %v3647
    %v3652 = vadd.f32 %v3451, %v3648
    %v3653 = vadd.f32 %v3452, %v3649
    %3654 = vrot.lane.b32.xlu0 %v2483, 113
    %v3655 = vpop.permute.xlu0 %3654
    %3656 = vrot.lane.b32.xlu0 %v2487, 113
    %v3657 = vpop.permute.xlu0 %3656
    %3658 = vrot.lane.b32.xlu0 %v2491, 113
    %v3659 = vpop.permute.xlu0 %3658
    %3660 = vrot.lane.b32.xlu0 %v2495, 113
    %v3661 = vpop.permute.xlu0 %3660
    %3662 = vrot.lane.b32.xlu0 %v2484, 113
    %v3663 = vpop.permute.xlu0 %3662
    %3664 = vrot.lane.b32.xlu0 %v2488, 113
    %v3665 = vpop.permute.xlu0 %3664
    %3666 = vrot.lane.b32.xlu0 %v2492, 113
    %v3667 = vpop.permute.xlu0 %3666
    %3668 = vrot.lane.b32.xlu0 %v2496, 113
    %v3669 = vpop.permute.xlu0 %3668
    %3670 = vrot.lane.b32.xlu0 %v2485, 113
    %v3671 = vpop.permute.xlu0 %3670
    %3672 = vrot.lane.b32.xlu0 %v2489, 113
    %v3673 = vpop.permute.xlu0 %3672
    %3674 = vrot.lane.b32.xlu0 %v2493, 113
    %v3675 = vpop.permute.xlu0 %3674
    %3676 = vrot.lane.b32.xlu0 %v2497, 113
    %v3677 = vpop.permute.xlu0 %3676
    %3678 = vrot.lane.b32.xlu0 %v2486, 113
    %v3679 = vpop.permute.xlu0 %3678
    %3680 = vrot.lane.b32.xlu0 %v2490, 113
    %v3681 = vpop.permute.xlu0 %3680
    %3682 = vrot.lane.b32.xlu0 %v2494, 113
    %v3683 = vpop.permute.xlu0 %3682
    %3684 = vrot.lane.b32.xlu0 %v2498, 113
    %v3685 = vpop.permute.xlu0 %3684
    %v3686 = vsel %vm1690, %v3671, %v3679
    %v3687 = vsel %vm1690, %v3673, %v3681
    %v3688 = vsel %vm1690, %v3675, %v3683
    %v3689 = vsel %vm1690, %v3677, %v3685
    %v3690 = vsel %vm1690, %v3663, %v3671
    %v3691 = vsel %vm1690, %v3665, %v3673
    %v3692 = vsel %vm1690, %v3667, %v3675
    %v3693 = vsel %vm1690, %v3669, %v3677
    %v3694 = vsel %vm1690, %v3655, %v3663
    %v3695 = vsel %vm1690, %v3657, %v3665
    %v3696 = vsel %vm1690, %v3659, %v3667
    %v3697 = vsel %vm1690, %v3661, %v3669
    %v3698 = vsel %vm1690, %v3679, %v3655
    %v3699 = vsel %vm1690, %v3681, %v3657
    %v3700 = vsel %vm1690, %v3683, %v3659
    %v3701 = vsel %vm1690, %v3685, %v3661
    %v3703 = vsel %vm2547, %v110, 0
    %3705 = vmatprep.subr.mxu0 %v3690
    %3706 = vmatpush1.msra.mxu0 %v3694
    %3707 = vmatprep.subr.mxu0 %v3691
    %3708 = vmatpush1.msra.mxu0 %v3695
    %3709 = vmatprep.subr.mxu0 %v3692
    %3710 = vmatpush1.msra.mxu0 %v3696
    %3711 = vmatprep.subr.mxu0 %v3693
    %3712 = vmatpush1.msra.mxu0 %v3697
    %3713 = vmatprep.subr.mxu0 0.0
    %3714 = vmatpush1.msra.mxu0 0.0
    %3715 = vmatprep.subr.mxu0 0.0
    %3716 = vmatpush1.msra.mxu0 0.0
    %3717 = vmatprep.subr.mxu0 0.0
    %3718 = vmatpush1.msra.mxu0 0.0
    %3719 = vmatprep.subr.mxu0 0.0
    %3720 = vmatpush1.msra.mxu0 0.0
    %3721 = vmatprep.subr.mxu0 0.0
    %3722 = vmatpush1.msra.mxu0 0.0
    %3723 = vmatprep.subr.mxu0 0.0
    %3724 = vmatpush1.msra.mxu0 0.0
    %3725 = vmatprep.subr.mxu0 0.0
    %3726 = vmatpush1.msra.mxu0 0.0
    %3727 = vmatprep.subr.mxu0 0.0
    %3728 = vmatpush1.msra.mxu0 0.0
    %3729 = vmatprep.subr.mxu0 0.0
    %3730 = vmatpush1.msra.mxu0 0.0
    %3731 = vmatprep.subr.mxu0 0.0
    %3732 = vmatpush1.msra.mxu0 0.0
    %3733 = vmatprep.subr.mxu0 0.0
    %3734 = vmatpush1.msra.mxu0 0.0
    %3735 = vmatprep.subr.mxu0 0.0
    %3736 = vmatpush1.msra.mxu0 0.0
    %3737 = vmatprep.subr.mxu0 0.0
    %3738 = vmatpush1.msra.mxu0 0.0
    %3739 = vmatprep.subr.mxu0 0.0
    %3740 = vmatpush1.msra.mxu0 0.0
    %3741 = vmatprep.subr.mxu0 0.0
    %3742 = vmatpush1.msra.mxu0 0.0
    %3743 = vmatprep.subr.mxu0 0.0
    %3744 = vmatpush1.msra.mxu0 0.0
    %3745 = vmatprep.subr.mxu0 0.0
    %3746 = vmatpush1.msra.mxu0 0.0
    %3747 = vmatprep.subr.mxu0 0.0
    %3748 = vmatpush1.msra.mxu0 0.0
    %3749 = vmatprep.subr.mxu0 0.0
    %3750 = vmatpush1.msra.mxu0 0.0
    %3751 = vmatprep.subr.mxu0 0.0
    %3752 = vmatpush1.msra.mxu0 0.0
    %3753 = vmatprep.subr.mxu0 0.0
    %3754 = vmatpush1.msra.mxu0 0.0
    %3755 = vmatprep.subr.mxu0 0.0
    %3756 = vmatpush1.msra.mxu0 0.0
    %3757 = vmatprep.subr.mxu0 0.0
    %3758 = vmatpush1.msra.mxu0 0.0
    %3759 = vmatprep.subr.mxu0 0.0
    %3760 = vmatpush1.msra.mxu0 0.0
    %3761 = vmatprep.subr.mxu0 0.0
    %3762 = vmatpush1.msra.mxu0 0.0
    %3763 = vmatprep.subr.mxu0 0.0
    %3764 = vmatpush1.msra.mxu0 0.0
    %3765 = vmatprep.subr.mxu0 0.0
    %3766 = vmatpush1.msra.mxu0 0.0
    %3767 = vmatprep.subr.mxu0 0.0
    %3768 = vmatpush1.msra.mxu0 0.0
    %3769 = vmatprep.mubr.f32.mxu0 0.0
    %3770 = vmatmul.mubr.f32.gmra.mrb[0].mxu0 %v3703
    %v3771 = vpop.f32.mrb[0].mxu0
    %v3772 = vadd.f32 0.0, %v3771
    %v3773 = vpop.f32.mrb[0].mxu0
    %v3774 = vadd.f32 0.0, %v3773
    %3775 = vdwg.mxu0
    %3776 = vmatprep.subr.mxu0 %v3698
    %3777 = vmatpush1.msra.mxu0 %v3686
    %3778 = vmatprep.subr.mxu0 %v3699
    %3779 = vmatpush1.msra.mxu0 %v3687
    %3780 = vmatprep.subr.mxu0 %v3700
    %3781 = vmatpush1.msra.mxu0 %v3688
    %3782 = vmatprep.subr.mxu0 %v3701
    %3783 = vmatpush1.msra.mxu0 %v3689
    %3784 = vmatprep.subr.mxu0 0.0
    %3785 = vmatpush1.msra.mxu0 0.0
    %3786 = vmatprep.subr.mxu0 0.0
    %3787 = vmatpush1.msra.mxu0 0.0
    %3788 = vmatprep.subr.mxu0 0.0
    %3789 = vmatpush1.msra.mxu0 0.0
    %3790 = vmatprep.subr.mxu0 0.0
    %3791 = vmatpush1.msra.mxu0 0.0
    %3792 = vmatprep.subr.mxu0 0.0
    %3793 = vmatpush1.msra.mxu0 0.0
    %3794 = vmatprep.subr.mxu0 0.0
    %3795 = vmatpush1.msra.mxu0 0.0
    %3796 = vmatprep.subr.mxu0 0.0
    %3797 = vmatpush1.msra.mxu0 0.0
    %3798 = vmatprep.subr.mxu0 0.0
    %3799 = vmatpush1.msra.mxu0 0.0
    %3800 = vmatprep.subr.mxu0 0.0
    %3801 = vmatpush1.msra.mxu0 0.0
    %3802 = vmatprep.subr.mxu0 0.0
    %3803 = vmatpush1.msra.mxu0 0.0
    %3804 = vmatprep.subr.mxu0 0.0
    %3805 = vmatpush1.msra.mxu0 0.0
    %3806 = vmatprep.subr.mxu0 0.0
    %3807 = vmatpush1.msra.mxu0 0.0
    %3808 = vmatprep.subr.mxu0 0.0
    %3809 = vmatpush1.msra.mxu0 0.0
    %3810 = vmatprep.subr.mxu0 0.0
    %3811 = vmatpush1.msra.mxu0 0.0
    %3812 = vmatprep.subr.mxu0 0.0
    %3813 = vmatpush1.msra.mxu0 0.0
    %3814 = vmatprep.subr.mxu0 0.0
    %3815 = vmatpush1.msra.mxu0 0.0
    %3816 = vmatprep.subr.mxu0 0.0
    %3817 = vmatpush1.msra.mxu0 0.0
    %3818 = vmatprep.subr.mxu0 0.0
    %3819 = vmatpush1.msra.mxu0 0.0
    %3820 = vmatprep.subr.mxu0 0.0
    %3821 = vmatpush1.msra.mxu0 0.0
    %3822 = vmatprep.subr.mxu0 0.0
    %3823 = vmatpush1.msra.mxu0 0.0
    %3824 = vmatprep.subr.mxu0 0.0
    %3825 = vmatpush1.msra.mxu0 0.0
    %3826 = vmatprep.subr.mxu0 0.0
    %3827 = vmatpush1.msra.mxu0 0.0
    %3828 = vmatprep.subr.mxu0 0.0
    %3829 = vmatpush1.msra.mxu0 0.0
    %3830 = vmatprep.subr.mxu0 0.0
    %3831 = vmatpush1.msra.mxu0 0.0
    %3832 = vmatprep.subr.mxu0 0.0
    %3833 = vmatpush1.msra.mxu0 0.0
    %3834 = vmatprep.subr.mxu0 0.0
    %3835 = vmatpush1.msra.mxu0 0.0
    %3836 = vmatprep.subr.mxu0 0.0
    %3837 = vmatpush1.msra.mxu0 0.0
    %3838 = vmatprep.subr.mxu0 0.0
    %3839 = vmatpush1.msra.mxu0 0.0
    %3840 = vmatprep.mubr.f32.mxu0 0.0
    %3841 = vmatmul.mubr.f32.gmra.mrb[0].mxu0 %v3703
    %v3842 = vpop.f32.mrb[0].mxu0
    %v3843 = vadd.f32 0.0, %v3842
    %v3844 = vpop.f32.mrb[0].mxu0
    %v3845 = vadd.f32 0.0, %v3844
    %3846 = vdwg.mxu0
    %v3847 = vmul.f32 %v3772, %v236
    %v3848 = vmul.f32 %v3774, %v240
    %v3849 = vmul.f32 %v3843, %v244
    %v3850 = vmul.f32 %v3845, %v248
    %v3851 = vadd.f32 %v3650, %v3847
    %v3852 = vadd.f32 %v3651, %v3848
    %v3853 = vadd.f32 %v3652, %v3849
    %v3854 = vadd.f32 %v3653, %v3850
    %3855 = vrot.lane.b32.xlu0 %v2483, 112
    %v3856 = vpop.permute.xlu0 %3855
    %3857 = vrot.lane.b32.xlu0 %v2487, 112
    %v3858 = vpop.permute.xlu0 %3857
    %3859 = vrot.lane.b32.xlu0 %v2491, 112
    %v3860 = vpop.permute.xlu0 %3859
    %3861 = vrot.lane.b32.xlu0 %v2495, 112
    %v3862 = vpop.permute.xlu0 %3861
    %3863 = vrot.lane.b32.xlu0 %v2484, 112
    %v3864 = vpop.permute.xlu0 %3863
    %3865 = vrot.lane.b32.xlu0 %v2488, 112
    %v3866 = vpop.permute.xlu0 %3865
    %3867 = vrot.lane.b32.xlu0 %v2492, 112
    %v3868 = vpop.permute.xlu0 %3867
    %3869 = vrot.lane.b32.xlu0 %v2496, 112
    %v3870 = vpop.permute.xlu0 %3869
    %3871 = vrot.lane.b32.xlu0 %v2485, 112
    %v3872 = vpop.permute.xlu0 %3871
    %3873 = vrot.lane.b32.xlu0 %v2489, 112
    %v3874 = vpop.permute.xlu0 %3873
    %3875 = vrot.lane.b32.xlu0 %v2493, 112
    %v3876 = vpop.permute.xlu0 %3875
    %3877 = vrot.lane.b32.xlu0 %v2497, 112
    %v3878 = vpop.permute.xlu0 %3877
    %3879 = vrot.lane.b32.xlu0 %v2486, 112
    %v3880 = vpop.permute.xlu0 %3879
    %3881 = vrot.lane.b32.xlu0 %v2490, 112
    %v3882 = vpop.permute.xlu0 %3881
    %3883 = vrot.lane.b32.xlu0 %v2494, 112
    %v3884 = vpop.permute.xlu0 %3883
    %3885 = vrot.lane.b32.xlu0 %v2498, 112
    %v3886 = vpop.permute.xlu0 %3885
    %v3887 = vsel %vm1925, %v3872, %v3880
    %v3888 = vsel %vm1925, %v3874, %v3882
    %v3889 = vsel %vm1925, %v3876, %v3884
    %v3890 = vsel %vm1925, %v3878, %v3886
    %v3891 = vsel %vm1925, %v3864, %v3872
    %v3892 = vsel %vm1925, %v3866, %v3874
    %v3893 = vsel %vm1925, %v3868, %v3876
    %v3894 = vsel %vm1925, %v3870, %v3878
    %v3895 = vsel %vm1925, %v3856, %v3864
    %v3896 = vsel %vm1925, %v3858, %v3866
    %v3897 = vsel %vm1925, %v3860, %v3868
    %v3898 = vsel %vm1925, %v3862, %v3870
    %v3899 = vsel %vm1925, %v3880, %v3856
    %v3900 = vsel %vm1925, %v3882, %v3858
    %v3901 = vsel %vm1925, %v3884, %v3860
    %v3902 = vsel %vm1925, %v3886, %v3862
    %v3904 = vsel %vm2547, %v112, 0
    %3906 = vmatprep.subr.mxu0 %v3891
    %3907 = vmatpush1.msra.mxu0 %v3895
    %3908 = vmatprep.subr.mxu0 %v3892
    %3909 = vmatpush1.msra.mxu0 %v3896
    %3910 = vmatprep.subr.mxu0 %v3893
    %3911 = vmatpush1.msra.mxu0 %v3897
    %3912 = vmatprep.subr.mxu0 %v3894
    %3913 = vmatpush1.msra.mxu0 %v3898
    %3914 = vmatprep.subr.mxu0 0.0
    %3915 = vmatpush1.msra.mxu0 0.0
    %3916 = vmatprep.subr.mxu0 0.0
    %3917 = vmatpush1.msra.mxu0 0.0
    %3918 = vmatprep.subr.mxu0 0.0
    %3919 = vmatpush1.msra.mxu0 0.0
    %3920 = vmatprep.subr.mxu0 0.0
    %3921 = vmatpush1.msra.mxu0 0.0
    %3922 = vmatprep.subr.mxu0 0.0
    %3923 = vmatpush1.msra.mxu0 0.0
    %3924 = vmatprep.subr.mxu0 0.0
    %3925 = vmatpush1.msra.mxu0 0.0
    %3926 = vmatprep.subr.mxu0 0.0
    %3927 = vmatpush1.msra.mxu0 0.0
    %3928 = vmatprep.subr.mxu0 0.0
    %3929 = vmatpush1.msra.mxu0 0.0
    %3930 = vmatprep.subr.mxu0 0.0
    %3931 = vmatpush1.msra.mxu0 0.0
    %3932 = vmatprep.subr.mxu0 0.0
    %3933 = vmatpush1.msra.mxu0 0.0
    %3934 = vmatprep.subr.mxu0 0.0
    %3935 = vmatpush1.msra.mxu0 0.0
    %3936 = vmatprep.subr.mxu0 0.0
    %3937 = vmatpush1.msra.mxu0 0.0
    %3938 = vmatprep.subr.mxu0 0.0
    %3939 = vmatpush1.msra.mxu0 0.0
    %3940 = vmatprep.subr.mxu0 0.0
    %3941 = vmatpush1.msra.mxu0 0.0
    %3942 = vmatprep.subr.mxu0 0.0
    %3943 = vmatpush1.msra.mxu0 0.0
    %3944 = vmatprep.subr.mxu0 0.0
    %3945 = vmatpush1.msra.mxu0 0.0
    %3946 = vmatprep.subr.mxu0 0.0
    %3947 = vmatpush1.msra.mxu0 0.0
    %3948 = vmatprep.subr.mxu0 0.0
    %3949 = vmatpush1.msra.mxu0 0.0
    %3950 = vmatprep.subr.mxu0 0.0
    %3951 = vmatpush1.msra.mxu0 0.0
    %3952 = vmatprep.subr.mxu0 0.0
    %3953 = vmatpush1.msra.mxu0 0.0
    %3954 = vmatprep.subr.mxu0 0.0
    %3955 = vmatpush1.msra.mxu0 0.0
    %3956 = vmatprep.subr.mxu0 0.0
    %3957 = vmatpush1.msra.mxu0 0.0
    %3958 = vmatprep.subr.mxu0 0.0
    %3959 = vmatpush1.msra.mxu0 0.0
    %3960 = vmatprep.subr.mxu0 0.0
    %3961 = vmatpush1.msra.mxu0 0.0
    %3962 = vmatprep.subr.mxu0 0.0
    %3963 = vmatpush1.msra.mxu0 0.0
    %3964 = vmatprep.subr.mxu0 0.0
    %3965 = vmatpush1.msra.mxu0 0.0
    %3966 = vmatprep.subr.mxu0 0.0
    %3967 = vmatpush1.msra.mxu0 0.0
    %3968 = vmatprep.subr.mxu0 0.0
    %3969 = vmatpush1.msra.mxu0 0.0
    %3970 = vmatprep.mubr.f32.mxu0 0.0
    %3971 = vmatmul.mubr.f32.gmra.mrb[0].mxu0 %v3904
    %v3972 = vpop.f32.mrb[0].mxu0
    %v3973 = vadd.f32 0.0, %v3972
    %v3974 = vpop.f32.mrb[0].mxu0
    %v3975 = vadd.f32 0.0, %v3974
    %3976 = vdwg.mxu0
    %3977 = vmatprep.subr.mxu0 %v3899
    %3978 = vmatpush1.msra.mxu0 %v3887
    %3979 = vmatprep.subr.mxu0 %v3900
    %3980 = vmatpush1.msra.mxu0 %v3888
    %3981 = vmatprep.subr.mxu0 %v3901
    %3982 = vmatpush1.msra.mxu0 %v3889
    %3983 = vmatprep.subr.mxu0 %v3902
    %3984 = vmatpush1.msra.mxu0 %v3890
    %3985 = vmatprep.subr.mxu0 0.0
    %3986 = vmatpush1.msra.mxu0 0.0
    %3987 = vmatprep.subr.mxu0 0.0
    %3988 = vmatpush1.msra.mxu0 0.0
    %3989 = vmatprep.subr.mxu0 0.0
    %3990 = vmatpush1.msra.mxu0 0.0
    %3991 = vmatprep.subr.mxu0 0.0
    %3992 = vmatpush1.msra.mxu0 0.0
    %3993 = vmatprep.subr.mxu0 0.0
    %3994 = vmatpush1.msra.mxu0 0.0
    %3995 = vmatprep.subr.mxu0 0.0
    %3996 = vmatpush1.msra.mxu0 0.0
    %3997 = vmatprep.subr.mxu0 0.0
    %3998 = vmatpush1.msra.mxu0 0.0
    %3999 = vmatprep.subr.mxu0 0.0
    %4000 = vmatpush1.msra.mxu0 0.0
    %4001 = vmatprep.subr.mxu0 0.0
    %4002 = vmatpush1.msra.mxu0 0.0
    %4003 = vmatprep.subr.mxu0 0.0
    %4004 = vmatpush1.msra.mxu0 0.0
    %4005 = vmatprep.subr.mxu0 0.0
    %4006 = vmatpush1.msra.mxu0 0.0
    %4007 = vmatprep.subr.mxu0 0.0
    %4008 = vmatpush1.msra.mxu0 0.0
    %4009 = vmatprep.subr.mxu0 0.0
    %4010 = vmatpush1.msra.mxu0 0.0
    %4011 = vmatprep.subr.mxu0 0.0
    %4012 = vmatpush1.msra.mxu0 0.0
    %4013 = vmatprep.subr.mxu0 0.0
    %4014 = vmatpush1.msra.mxu0 0.0
    %4015 = vmatprep.subr.mxu0 0.0
    %4016 = vmatpush1.msra.mxu0 0.0
    %4017 = vmatprep.subr.mxu0 0.0
    %4018 = vmatpush1.msra.mxu0 0.0
    %4019 = vmatprep.subr.mxu0 0.0
    %4020 = vmatpush1.msra.mxu0 0.0
    %4021 = vmatprep.subr.mxu0 0.0
    %4022 = vmatpush1.msra.mxu0 0.0
    %4023 = vmatprep.subr.mxu0 0.0
    %4024 = vmatpush1.msra.mxu0 0.0
    %4025 = vmatprep.subr.mxu0 0.0
    %4026 = vmatpush1.msra.mxu0 0.0
    %4027 = vmatprep.subr.mxu0 0.0
    %4028 = vmatpush1.msra.mxu0 0.0
    %4029 = vmatprep.subr.mxu0 0.0
    %4030 = vmatpush1.msra.mxu0 0.0
    %4031 = vmatprep.subr.mxu0 0.0
    %4032 = vmatpush1.msra.mxu0 0.0
    %4033 = vmatprep.subr.mxu0 0.0
    %4034 = vmatpush1.msra.mxu0 0.0
    %4035 = vmatprep.subr.mxu0 0.0
    %4036 = vmatpush1.msra.mxu0 0.0
    %4037 = vmatprep.subr.mxu0 0.0
    %4038 = vmatpush1.msra.mxu0 0.0
    %4039 = vmatprep.subr.mxu0 0.0
    %4040 = vmatpush1.msra.mxu0 0.0
    %4041 = vmatprep.mubr.f32.mxu0 0.0
    %4042 = vmatmul.mubr.f32.gmra.mrb[0].mxu0 %v3904
    %v4043 = vpop.f32.mrb[0].mxu0
    %v4044 = vadd.f32 0.0, %v4043
    %v4045 = vpop.f32.mrb[0].mxu0
    %v4046 = vadd.f32 0.0, %v4045
    %4047 = vdwg.mxu0
    %v4048 = vmul.f32 %v3973, %v252
    %v4049 = vmul.f32 %v3975, %v256
    %v4050 = vmul.f32 %v4044, %v260
    %v4051 = vmul.f32 %v4046, %v264
    %v4052 = vadd.f32 %v3851, %v4048
    %v4053 = vadd.f32 %v3852, %v4049
    %v4054 = vadd.f32 %v3853, %v4050
    %v4055 = vadd.f32 %v3854, %v4051
    %4056 = vrot.lane.b32.xlu0 %v2483, 111
    %v4057 = vpop.permute.xlu0 %4056
    %4058 = vrot.lane.b32.xlu0 %v2487, 111
    %v4059 = vpop.permute.xlu0 %4058
    %4060 = vrot.lane.b32.xlu0 %v2491, 111
    %v4061 = vpop.permute.xlu0 %4060
    %4062 = vrot.lane.b32.xlu0 %v2495, 111
    %v4063 = vpop.permute.xlu0 %4062
    %4064 = vrot.lane.b32.xlu0 %v2484, 111
    %v4065 = vpop.permute.xlu0 %4064
    %4066 = vrot.lane.b32.xlu0 %v2488, 111
    %v4067 = vpop.permute.xlu0 %4066
    %4068 = vrot.lane.b32.xlu0 %v2492, 111
    %v4069 = vpop.permute.xlu0 %4068
    %4070 = vrot.lane.b32.xlu0 %v2496, 111
    %v4071 = vpop.permute.xlu0 %4070
    %4072 = vrot.lane.b32.xlu0 %v2485, 111
    %v4073 = vpop.permute.xlu0 %4072
    %4074 = vrot.lane.b32.xlu0 %v2489, 111
    %v4075 = vpop.permute.xlu0 %4074
    %4076 = vrot.lane.b32.xlu0 %v2493, 111
    %v4077 = vpop.permute.xlu0 %4076
    %4078 = vrot.lane.b32.xlu0 %v2497, 111
    %v4079 = vpop.permute.xlu0 %4078
    %4080 = vrot.lane.b32.xlu0 %v2486, 111
    %v4081 = vpop.permute.xlu0 %4080
    %4082 = vrot.lane.b32.xlu0 %v2490, 111
    %v4083 = vpop.permute.xlu0 %4082
    %4084 = vrot.lane.b32.xlu0 %v2494, 111
    %v4085 = vpop.permute.xlu0 %4084
    %4086 = vrot.lane.b32.xlu0 %v2498, 111
    %v4087 = vpop.permute.xlu0 %4086
    %v4088 = vsel %vm2160, %v4073, %v4081
    %v4089 = vsel %vm2160, %v4075, %v4083
    %v4090 = vsel %vm2160, %v4077, %v4085
    %v4091 = vsel %vm2160, %v4079, %v4087
    %v4092 = vsel %vm2160, %v4065, %v4073
    %v4093 = vsel %vm2160, %v4067, %v4075
    %v4094 = vsel %vm2160, %v4069, %v4077
    %v4095 = vsel %vm2160, %v4071, %v4079
    %v4096 = vsel %vm2160, %v4057, %v4065
    %v4097 = vsel %vm2160, %v4059, %v4067
    %v4098 = vsel %vm2160, %v4061, %v4069
    %v4099 = vsel %vm2160, %v4063, %v4071
    %v4100 = vsel %vm2160, %v4081, %v4057
    %v4101 = vsel %vm2160, %v4083, %v4059
    %v4102 = vsel %vm2160, %v4085, %v4061
    %v4103 = vsel %vm2160, %v4087, %v4063
    %v4105 = vsel %vm2547, %v114, 0
    %4107 = vmatprep.subr.mxu0 %v4092
    %4108 = vmatpush1.msra.mxu0 %v4096
    %4109 = vmatprep.subr.mxu0 %v4093
    %4110 = vmatpush1.msra.mxu0 %v4097
    %4111 = vmatprep.subr.mxu0 %v4094
    %4112 = vmatpush1.msra.mxu0 %v4098
    %4113 = vmatprep.subr.mxu0 %v4095
    %4114 = vmatpush1.msra.mxu0 %v4099
    %4115 = vmatprep.subr.mxu0 0.0
    %4116 = vmatpush1.msra.mxu0 0.0
    %4117 = vmatprep.subr.mxu0 0.0
    %4118 = vmatpush1.msra.mxu0 0.0
    %4119 = vmatprep.subr.mxu0 0.0
    %4120 = vmatpush1.msra.mxu0 0.0
    %4121 = vmatprep.subr.mxu0 0.0
    %4122 = vmatpush1.msra.mxu0 0.0
    %4123 = vmatprep.subr.mxu0 0.0
    %4124 = vmatpush1.msra.mxu0 0.0
    %4125 = vmatprep.subr.mxu0 0.0
    %4126 = vmatpush1.msra.mxu0 0.0
    %4127 = vmatprep.subr.mxu0 0.0
    %4128 = vmatpush1.msra.mxu0 0.0
    %4129 = vmatprep.subr.mxu0 0.0
    %4130 = vmatpush1.msra.mxu0 0.0
    %4131 = vmatprep.subr.mxu0 0.0
    %4132 = vmatpush1.msra.mxu0 0.0
    %4133 = vmatprep.subr.mxu0 0.0
    %4134 = vmatpush1.msra.mxu0 0.0
    %4135 = vmatprep.subr.mxu0 0.0
    %4136 = vmatpush1.msra.mxu0 0.0
    %4137 = vmatprep.subr.mxu0 0.0
    %4138 = vmatpush1.msra.mxu0 0.0
    %4139 = vmatprep.subr.mxu0 0.0
    %4140 = vmatpush1.msra.mxu0 0.0
    %4141 = vmatprep.subr.mxu0 0.0
    %4142 = vmatpush1.msra.mxu0 0.0
    %4143 = vmatprep.subr.mxu0 0.0
    %4144 = vmatpush1.msra.mxu0 0.0
    %4145 = vmatprep.subr.mxu0 0.0
    %4146 = vmatpush1.msra.mxu0 0.0
    %4147 = vmatprep.subr.mxu0 0.0
    %4148 = vmatpush1.msra.mxu0 0.0
    %4149 = vmatprep.subr.mxu0 0.0
    %4150 = vmatpush1.msra.mxu0 0.0
    %4151 = vmatprep.subr.mxu0 0.0
    %4152 = vmatpush1.msra.mxu0 0.0
    %4153 = vmatprep.subr.mxu0 0.0
    %4154 = vmatpush1.msra.mxu0 0.0
    %4155 = vmatprep.subr.mxu0 0.0
    %4156 = vmatpush1.msra.mxu0 0.0
    %4157 = vmatprep.subr.mxu0 0.0
    %4158 = vmatpush1.msra.mxu0 0.0
    %4159 = vmatprep.subr.mxu0 0.0
    %4160 = vmatpush1.msra.mxu0 0.0
    %4161 = vmatprep.subr.mxu0 0.0
    %4162 = vmatpush1.msra.mxu0 0.0
    %4163 = vmatprep.subr.mxu0 0.0
    %4164 = vmatpush1.msra.mxu0 0.0
    %4165 = vmatprep.subr.mxu0 0.0
    %4166 = vmatpush1.msra.mxu0 0.0
    %4167 = vmatprep.subr.mxu0 0.0
    %4168 = vmatpush1.msra.mxu0 0.0
    %4169 = vmatprep.subr.mxu0 0.0
    %4170 = vmatpush1.msra.mxu0 0.0
    %4171 = vmatprep.mubr.f32.mxu0 0.0
    %4172 = vmatmul.mubr.f32.gmra.mrb[0].mxu0 %v4105
    %v4173 = vpop.f32.mrb[0].mxu0
    %v4174 = vadd.f32 0.0, %v4173
    %v4175 = vpop.f32.mrb[0].mxu0
    %v4176 = vadd.f32 0.0, %v4175
    %4177 = vdwg.mxu0
    %4178 = vmatprep.subr.mxu0 %v4100
    %4179 = vmatpush1.msra.mxu0 %v4088
    %4180 = vmatprep.subr.mxu0 %v4101
    %4181 = vmatpush1.msra.mxu0 %v4089
    %4182 = vmatprep.subr.mxu0 %v4102
    %4183 = vmatpush1.msra.mxu0 %v4090
    %4184 = vmatprep.subr.mxu0 %v4103
    %4185 = vmatpush1.msra.mxu0 %v4091
    %4186 = vmatprep.subr.mxu0 0.0
    %4187 = vmatpush1.msra.mxu0 0.0
    %4188 = vmatprep.subr.mxu0 0.0
    %4189 = vmatpush1.msra.mxu0 0.0
    %4190 = vmatprep.subr.mxu0 0.0
    %4191 = vmatpush1.msra.mxu0 0.0
    %4192 = vmatprep.subr.mxu0 0.0
    %4193 = vmatpush1.msra.mxu0 0.0
    %4194 = vmatprep.subr.mxu0 0.0
    %4195 = vmatpush1.msra.mxu0 0.0
    %4196 = vmatprep.subr.mxu0 0.0
    %4197 = vmatpush1.msra.mxu0 0.0
    %4198 = vmatprep.subr.mxu0 0.0
    %4199 = vmatpush1.msra.mxu0 0.0
    %4200 = vmatprep.subr.mxu0 0.0
    %4201 = vmatpush1.msra.mxu0 0.0
    %4202 = vmatprep.subr.mxu0 0.0
    %4203 = vmatpush1.msra.mxu0 0.0
    %4204 = vmatprep.subr.mxu0 0.0
    %4205 = vmatpush1.msra.mxu0 0.0
    %4206 = vmatprep.subr.mxu0 0.0
    %4207 = vmatpush1.msra.mxu0 0.0
    %4208 = vmatprep.subr.mxu0 0.0
    %4209 = vmatpush1.msra.mxu0 0.0
    %4210 = vmatprep.subr.mxu0 0.0
    %4211 = vmatpush1.msra.mxu0 0.0
    %4212 = vmatprep.subr.mxu0 0.0
    %4213 = vmatpush1.msra.mxu0 0.0
    %4214 = vmatprep.subr.mxu0 0.0
    %4215 = vmatpush1.msra.mxu0 0.0
    %4216 = vmatprep.subr.mxu0 0.0
    %4217 = vmatpush1.msra.mxu0 0.0
    %4218 = vmatprep.subr.mxu0 0.0
    %4219 = vmatpush1.msra.mxu0 0.0
    %4220 = vmatprep.subr.mxu0 0.0
    %4221 = vmatpush1.msra.mxu0 0.0
    %4222 = vmatprep.subr.mxu0 0.0
    %4223 = vmatpush1.msra.mxu0 0.0
    %4224 = vmatprep.subr.mxu0 0.0
    %4225 = vmatpush1.msra.mxu0 0.0
    %4226 = vmatprep.subr.mxu0 0.0
    %4227 = vmatpush1.msra.mxu0 0.0
    %4228 = vmatprep.subr.mxu0 0.0
    %4229 = vmatpush1.msra.mxu0 0.0
    %4230 = vmatprep.subr.mxu0 0.0
    %4231 = vmatpush1.msra.mxu0 0.0
    %4232 = vmatprep.subr.mxu0 0.0
    %4233 = vmatpush1.msra.mxu0 0.0
    %4234 = vmatprep.subr.mxu0 0.0
    %4235 = vmatpush1.msra.mxu0 0.0
    %4236 = vmatprep.subr.mxu0 0.0
    %4237 = vmatpush1.msra.mxu0 0.0
    %4238 = vmatprep.subr.mxu0 0.0
    %4239 = vmatpush1.msra.mxu0 0.0
    %4240 = vmatprep.subr.mxu0 0.0
    %4241 = vmatpush1.msra.mxu0 0.0
    %4242 = vmatprep.mubr.f32.mxu0 0.0
    %4243 = vmatmul.mubr.f32.gmra.mrb[0].mxu0 %v4105
    %v4244 = vpop.f32.mrb[0].mxu0
    %v4245 = vadd.f32 0.0, %v4244
    %v4246 = vpop.f32.mrb[0].mxu0
    %v4247 = vadd.f32 0.0, %v4246
    %4248 = vdwg.mxu0
    %v4249 = vmul.f32 %v4174, %v268
    %v4250 = vmul.f32 %v4176, %v272
    %v4251 = vmul.f32 %v4245, %v276
    %v4252 = vmul.f32 %v4247, %v280
    %v4253 = vadd.f32 %v4052, %v4249
    %v4254 = vadd.f32 %v4053, %v4250
    %v4255 = vadd.f32 %v4054, %v4251
    %v4256 = vadd.f32 %v4055, %v4252
    %s4257 = sld [smem:[#allocation2 + $0x3]]
    %s4258 = sld [smem:[#allocation4 + $0x3]]
    %v4259 = vstv %s4258
    %v4260 = vmul.f32 %v4259, %v4253
    %v4261 = vmul.f32 %v4259, %v4254
    %v4262 = vmul.f32 %v4259, %v4255
    %v4263 = vmul.f32 %v4259, %v4256
    %v4268 = vcombine.low %v4260, %v4261
    %v4269 = vcombine.low %v4262, %v4263
    %v4272 = vsub.f32 %v281, %v4268
    %v4273 = vsub.f32 %v282, %v4269
    %v4274 = vstv %s4257
    %v4275 = vmul.f32 %v4274, %v4272
    %v4276 = vmul.f32 %v4274, %v4273
    %v4279 = vcombine.high %v4275, %v4275
    %v4280 = vcombine.high %v4276, %v4276
    %4283 = vrot.lane.b32.xlu0 %v4275, 17
    %v4284 = vpop.permute.xlu0 %4283
    %4285 = vrot.lane.b32.xlu0 %v4279, 17
    %v4286 = vpop.permute.xlu0 %4285
    %4287 = vrot.lane.b32.xlu0 %v4276, 17
    %v4288 = vpop.permute.xlu0 %4287
    %4289 = vrot.lane.b32.xlu0 %v4280, 17
    %v4290 = vpop.permute.xlu0 %4289
    %v4291 = vsel %vm299, %v4288, %v4290
    %v4292 = vsel %vm299, %v4286, %v4288
    %v4293 = vsel %vm299, %v4284, %v4286
    %v4294 = vsel %vm299, %v4290, %v4284
    %v4295 = vmul.f32 %v4294, %v156
    %v4296 = vmul.f32 %v4293, %v160
    %v4297 = vmul.f32 %v4292, %v164
    %v4298 = vmul.f32 %v4291, %v168
    %v4300 = vsel %vm321, %v4295, 0
    %v4303 = vsel %vm321, %v4296, 0
    %v4306 = vsel %vm321, %v4297, 0
    %v4309 = vsel %vm321, %v4298, 0
    %4311 = vmatprep.subr.mxu0 %v4303
    %4312 = vmatpush1.msra.mxu0 %v4300
    %4313 = vmatprep.subr.mxu0 0.0
    %4314 = vmatpush1.msra.mxu0 0.0
    %4315 = vmatprep.subr.mxu0 0.0
    %4316 = vmatpush1.msra.mxu0 0.0
    %4317 = vmatprep.subr.mxu0 0.0
    %4318 = vmatpush1.msra.mxu0 0.0
    %4319 = vmatprep.subr.mxu0 0.0
    %4320 = vmatpush1.msra.mxu0 0.0
    %4321 = vmatprep.subr.mxu0 0.0
    %4322 = vmatpush1.msra.mxu0 0.0
    %4323 = vmatprep.subr.mxu0 0.0
    %4324 = vmatpush1.msra.mxu0 0.0
    %4325 = vmatprep.subr.mxu0 0.0
    %4326 = vmatpush1.msra.mxu0 0.0
    %4327 = vmatprep.subr.mxu0 0.0
    %4328 = vmatpush1.msra.mxu0 0.0
    %4329 = vmatprep.subr.mxu0 0.0
    %4330 = vmatpush1.msra.mxu0 0.0
    %4331 = vmatprep.subr.mxu0 0.0
    %4332 = vmatpush1.msra.mxu0 0.0
    %4333 = vmatprep.subr.mxu0 0.0
    %4334 = vmatpush1.msra.mxu0 0.0
    %4335 = vmatprep.subr.mxu0 0.0
    %4336 = vmatpush1.msra.mxu0 0.0
    %4337 = vmatprep.subr.mxu0 0.0
    %4338 = vmatpush1.msra.mxu0 0.0
    %4339 = vmatprep.subr.mxu0 0.0
    %4340 = vmatpush1.msra.mxu0 0.0
    %4341 = vmatprep.subr.mxu0 0.0
    %4342 = vmatpush1.msra.mxu0 0.0
    %4343 = vmatprep.subr.mxu0 0.0
    %4344 = vmatpush1.msra.mxu0 0.0
    %4345 = vmatprep.subr.mxu0 0.0
    %4346 = vmatpush1.msra.mxu0 0.0
    %4347 = vmatprep.subr.mxu0 0.0
    %4348 = vmatpush1.msra.mxu0 0.0
    %4349 = vmatprep.subr.mxu0 0.0
    %4350 = vmatpush1.msra.mxu0 0.0
    %4351 = vmatprep.subr.mxu0 0.0
    %4352 = vmatpush1.msra.mxu0 0.0
    %4353 = vmatprep.subr.mxu0 0.0
    %4354 = vmatpush1.msra.mxu0 0.0
    %4355 = vmatprep.subr.mxu0 0.0
    %4356 = vmatpush1.msra.mxu0 0.0
    %4357 = vmatprep.subr.mxu0 0.0
    %4358 = vmatpush1.msra.mxu0 0.0
    %4359 = vmatprep.subr.mxu0 0.0
    %4360 = vmatpush1.msra.mxu0 0.0
    %4361 = vmatprep.subr.mxu0 0.0
    %4362 = vmatpush1.msra.mxu0 0.0
    %4363 = vmatprep.subr.mxu0 0.0
    %4364 = vmatpush1.msra.mxu0 0.0
    %4365 = vmatprep.subr.mxu0 0.0
    %4366 = vmatpush1.msra.mxu0 0.0
    %4367 = vmatprep.subr.mxu0 0.0
    %4368 = vmatpush1.msra.mxu0 0.0
    %4369 = vmatprep.subr.mxu0 0.0
    %4370 = vmatpush1.msra.mxu0 0.0
    %4371 = vmatprep.subr.mxu0 0.0
    %4372 = vmatpush1.msra.mxu0 0.0
    %4373 = vmatprep.subr.mxu0 0.0
    %4374 = vmatpush1.msra.mxu0 0.0
    %4375 = vmatprep.mubr.f32.mxu0 0.0
    %4376 = vmatmul.mubr.f32.gmra.mrb[0].mxu0 %v310
    %v4377 = vpop.f32.mrb[0].mxu0
    %v4378 = vadd.f32 0.0, %v4377
    %v4379 = vpop.f32.mrb[0].mxu0
    %v4380 = vadd.f32 0.0, %v4379
    %4381 = vmatprep.mubr.f32.mxu0 0.0
    %4382 = vmatmul.mubr.f32.gmra.mrb[0].mxu0 %v313
    %v4383 = vpop.f32.mrb[0].mxu0
    %v4384 = vadd.f32 0.0, %v4383
    %v4385 = vpop.f32.mrb[0].mxu0
    %v4386 = vadd.f32 0.0, %v4385
    %4387 = vmatprep.mubr.f32.mxu0 0.0
    %4388 = vmatmul.mubr.f32.gmra.mrb[0].mxu0 %v316
    %v4389 = vpop.f32.mrb[0].mxu0
    %v4390 = vadd.f32 0.0, %v4389
    %v4391 = vpop.f32.mrb[0].mxu0
    %v4392 = vadd.f32 0.0, %v4391
    %4393 = vmatprep.mubr.f32.mxu0 0.0
    %4394 = vmatmul.mubr.f32.gmra.mrb[0].mxu0 %v319
    %v4395 = vpop.f32.mrb[0].mxu0
    %v4396 = vadd.f32 0.0, %v4395
    %v4397 = vpop.f32.mrb[0].mxu0
    %v4398 = vadd.f32 0.0, %v4397
    %4399 = vdwg.mxu0
    %4400 = vmatprep.subr.mxu0 %v4309
    %4401 = vmatpush1.msra.mxu0 %v4306
    %4402 = vmatprep.subr.mxu0 0.0
    %4403 = vmatpush1.msra.mxu0 0.0
    %4404 = vmatprep.subr.mxu0 0.0
    %4405 = vmatpush1.msra.mxu0 0.0
    %4406 = vmatprep.subr.mxu0 0.0
    %4407 = vmatpush1.msra.mxu0 0.0
    %4408 = vmatprep.subr.mxu0 0.0
    %4409 = vmatpush1.msra.mxu0 0.0
    %4410 = vmatprep.subr.mxu0 0.0
    %4411 = vmatpush1.msra.mxu0 0.0
    %4412 = vmatprep.subr.mxu0 0.0
    %4413 = vmatpush1.msra.mxu0 0.0
    %4414 = vmatprep.subr.mxu0 0.0
    %4415 = vmatpush1.msra.mxu0 0.0
    %4416 = vmatprep.subr.mxu0 0.0
    %4417 = vmatpush1.msra.mxu0 0.0
    %4418 = vmatprep.subr.mxu0 0.0
    %4419 = vmatpush1.msra.mxu0 0.0
    %4420 = vmatprep.subr.mxu0 0.0
    %4421 = vmatpush1.msra.mxu0 0.0
    %4422 = vmatprep.subr.mxu0 0.0
    %4423 = vmatpush1.msra.mxu0 0.0
    %4424 = vmatprep.subr.mxu0 0.0
    %4425 = vmatpush1.msra.mxu0 0.0
    %4426 = vmatprep.subr.mxu0 0.0
    %4427 = vmatpush1.msra.mxu0 0.0
    %4428 = vmatprep.subr.mxu0 0.0
    %4429 = vmatpush1.msra.mxu0 0.0
    %4430 = vmatprep.subr.mxu0 0.0
    %4431 = vmatpush1.msra.mxu0 0.0
    %4432 = vmatprep.subr.mxu0 0.0
    %4433 = vmatpush1.msra.mxu0 0.0
    %4434 = vmatprep.subr.mxu0 0.0
    %4435 = vmatpush1.msra.mxu0 0.0
    %4436 = vmatprep.subr.mxu0 0.0
    %4437 = vmatpush1.msra.mxu0 0.0
    %4438 = vmatprep.subr.mxu0 0.0
    %4439 = vmatpush1.msra.mxu0 0.0
    %4440 = vmatprep.subr.mxu0 0.0
    %4441 = vmatpush1.msra.mxu0 0.0
    %4442 = vmatprep.subr.mxu0 0.0
    %4443 = vmatpush1.msra.mxu0 0.0
    %4444 = vmatprep.subr.mxu0 0.0
    %4445 = vmatpush1.msra.mxu0 0.0
    %4446 = vmatprep.subr.mxu0 0.0
    %4447 = vmatpush1.msra.mxu0 0.0
    %4448 = vmatprep.subr.mxu0 0.0
    %4449 = vmatpush1.msra.mxu0 0.0
    %4450 = vmatprep.subr.mxu0 0.0
    %4451 = vmatpush1.msra.mxu0 0.0
    %4452 = vmatprep.subr.mxu0 0.0
    %4453 = vmatpush1.msra.mxu0 0.0
    %4454 = vmatprep.subr.mxu0 0.0
    %4455 = vmatpush1.msra.mxu0 0.0
    %4456 = vmatprep.subr.mxu0 0.0
    %4457 = vmatpush1.msra.mxu0 0.0
    %4458 = vmatprep.subr.mxu0 0.0
    %4459 = vmatpush1.msra.mxu0 0.0
    %4460 = vmatprep.subr.mxu0 0.0
    %4461 = vmatpush1.msra.mxu0 0.0
    %4462 = vmatprep.subr.mxu0 0.0
    %4463 = vmatpush1.msra.mxu0 0.0
    %4464 = vmatprep.mubr.f32.mxu0 0.0
    %4465 = vmatmul.mubr.f32.gmra.mrb[0].mxu0 %v310
    %v4466 = vpop.f32.mrb[0].mxu0
    %v4467 = vadd.f32 0.0, %v4466
    %v4468 = vpop.f32.mrb[0].mxu0
    %v4469 = vadd.f32 0.0, %v4468
    %4470 = vmatprep.mubr.f32.mxu0 0.0
    %4471 = vmatmul.mubr.f32.gmra.mrb[0].mxu0 %v313
    %v4472 = vpop.f32.mrb[0].mxu0
    %v4473 = vadd.f32 0.0, %v4472
    %v4474 = vpop.f32.mrb[0].mxu0
    %v4475 = vadd.f32 0.0, %v4474
    %4476 = vmatprep.mubr.f32.mxu0 0.0
    %4477 = vmatmul.mubr.f32.gmra.mrb[0].mxu0 %v316
    %v4478 = vpop.f32.mrb[0].mxu0
    %v4479 = vadd.f32 0.0, %v4478
    %v4480 = vpop.f32.mrb[0].mxu0
    %v4481 = vadd.f32 0.0, %v4480
    %4482 = vmatprep.mubr.f32.mxu0 0.0
    %4483 = vmatmul.mubr.f32.gmra.mrb[0].mxu0 %v319
    %v4484 = vpop.f32.mrb[0].mxu0
    %v4485 = vadd.f32 0.0, %v4484
    %v4486 = vpop.f32.mrb[0].mxu0
    %v4487 = vadd.f32 0.0, %v4486
    %4488 = vdwg.mxu0
    %v4489 = vadd.f32 %v122, %v4378
    %v4490 = vadd.f32 %v122, %v4380
    %v4491 = vadd.f32 %v122, %v4467
    %v4492 = vadd.f32 %v122, %v4469
    %v4493 = vadd.f32 %v127, %v4384
    %v4494 = vadd.f32 %v127, %v4386
    %v4495 = vadd.f32 %v127, %v4473
    %v4496 = vadd.f32 %v127, %v4475
    %v4497 = vadd.f32 %v132, %v4390
    %v4498 = vadd.f32 %v132, %v4392
    %v4499 = vadd.f32 %v132, %v4479
    %v4500 = vadd.f32 %v132, %v4481
    %v4501 = vadd.f32 %v137, %v4396
    %v4502 = vadd.f32 %v137, %v4398
    %v4503 = vadd.f32 %v137, %v4485
    %v4504 = vadd.f32 %v137, %v4487
    %4505 = vrot.lane.b32.xlu0 %v4275, 16
    %v4506 = vpop.permute.xlu0 %4505
    %4507 = vrot.lane.b32.xlu0 %v4279, 16
    %v4508 = vpop.permute.xlu0 %4507
    %4509 = vrot.lane.b32.xlu0 %v4276, 16
    %v4510 = vpop.permute.xlu0 %4509
    %4511 = vrot.lane.b32.xlu0 %v4280, 16
    %v4512 = vpop.permute.xlu0 %4511
    %v4513 = vsel %vm536, %v4510, %v4512
    %v4514 = vsel %vm536, %v4508, %v4510
    %v4515 = vsel %vm536, %v4506, %v4508
    %v4516 = vsel %vm536, %v4512, %v4506
    %v4517 = vmul.f32 %v4516, %v172
    %v4518 = vmul.f32 %v4515, %v176
    %v4519 = vmul.f32 %v4514, %v180
    %v4520 = vmul.f32 %v4513, %v184
    %v4522 = vsel %vm321, %v4517, 0
    %v4525 = vsel %vm321, %v4518, 0
    %v4528 = vsel %vm321, %v4519, 0
    %v4531 = vsel %vm321, %v4520, 0
    %4533 = vmatprep.subr.mxu0 %v4525
    %4534 = vmatpush1.msra.mxu0 %v4522
    %4535 = vmatprep.subr.mxu0 0.0
    %4536 = vmatpush1.msra.mxu0 0.0
    %4537 = vmatprep.subr.mxu0 0.0
    %4538 = vmatpush1.msra.mxu0 0.0
    %4539 = vmatprep.subr.mxu0 0.0
    %4540 = vmatpush1.msra.mxu0 0.0
    %4541 = vmatprep.subr.mxu0 0.0
    %4542 = vmatpush1.msra.mxu0 0.0
    %4543 = vmatprep.subr.mxu0 0.0
    %4544 = vmatpush1.msra.mxu0 0.0
    %4545 = vmatprep.subr.mxu0 0.0
    %4546 = vmatpush1.msra.mxu0 0.0
    %4547 = vmatprep.subr.mxu0 0.0
    %4548 = vmatpush1.msra.mxu0 0.0
    %4549 = vmatprep.subr.mxu0 0.0
    %4550 = vmatpush1.msra.mxu0 0.0
    %4551 = vmatprep.subr.mxu0 0.0
    %4552 = vmatpush1.msra.mxu0 0.0
    %4553 = vmatprep.subr.mxu0 0.0
    %4554 = vmatpush1.msra.mxu0 0.0
    %4555 = vmatprep.subr.mxu0 0.0
    %4556 = vmatpush1.msra.mxu0 0.0
    %4557 = vmatprep.subr.mxu0 0.0
    %4558 = vmatpush1.msra.mxu0 0.0
    %4559 = vmatprep.subr.mxu0 0.0
    %4560 = vmatpush1.msra.mxu0 0.0
    %4561 = vmatprep.subr.mxu0 0.0
    %4562 = vmatpush1.msra.mxu0 0.0
    %4563 = vmatprep.subr.mxu0 0.0
    %4564 = vmatpush1.msra.mxu0 0.0
    %4565 = vmatprep.subr.mxu0 0.0
    %4566 = vmatpush1.msra.mxu0 0.0
    %4567 = vmatprep.subr.mxu0 0.0
    %4568 = vmatpush1.msra.mxu0 0.0
    %4569 = vmatprep.subr.mxu0 0.0
    %4570 = vmatpush1.msra.mxu0 0.0
    %4571 = vmatprep.subr.mxu0 0.0
    %4572 = vmatpush1.msra.mxu0 0.0
    %4573 = vmatprep.subr.mxu0 0.0
    %4574 = vmatpush1.msra.mxu0 0.0
    %4575 = vmatprep.subr.mxu0 0.0
    %4576 = vmatpush1.msra.mxu0 0.0
    %4577 = vmatprep.subr.mxu0 0.0
    %4578 = vmatpush1.msra.mxu0 0.0
    %4579 = vmatprep.subr.mxu0 0.0
    %4580 = vmatpush1.msra.mxu0 0.0
    %4581 = vmatprep.subr.mxu0 0.0
    %4582 = vmatpush1.msra.mxu0 0.0
    %4583 = vmatprep.subr.mxu0 0.0
    %4584 = vmatpush1.msra.mxu0 0.0
    %4585 = vmatprep.subr.mxu0 0.0
    %4586 = vmatpush1.msra.mxu0 0.0
    %4587 = vmatprep.subr.mxu0 0.0
    %4588 = vmatpush1.msra.mxu0 0.0
    %4589 = vmatprep.subr.mxu0 0.0
    %4590 = vmatpush1.msra.mxu0 0.0
    %4591 = vmatprep.subr.mxu0 0.0
    %4592 = vmatpush1.msra.mxu0 0.0
    %4593 = vmatprep.subr.mxu0 0.0
    %4594 = vmatpush1.msra.mxu0 0.0
    %4595 = vmatprep.subr.mxu0 0.0
    %4596 = vmatpush1.msra.mxu0 0.0
    %4597 = vmatprep.mubr.f32.mxu0 0.0
    %4598 = vmatmul.mubr.f32.gmra.mrb[0].mxu0 %v546
    %v4599 = vpop.f32.mrb[0].mxu0
    %v4600 = vadd.f32 0.0, %v4599
    %v4601 = vpop.f32.mrb[0].mxu0
    %v4602 = vadd.f32 0.0, %v4601
    %4603 = vmatprep.mubr.f32.mxu0 0.0
    %4604 = vmatmul.mubr.f32.gmra.mrb[0].mxu0 %v549
    %v4605 = vpop.f32.mrb[0].mxu0
    %v4606 = vadd.f32 0.0, %v4605
    %v4607 = vpop.f32.mrb[0].mxu0
    %v4608 = vadd.f32 0.0, %v4607
    %4609 = vmatprep.mubr.f32.mxu0 0.0
    %4610 = vmatmul.mubr.f32.gmra.mrb[0].mxu0 %v552
    %v4611 = vpop.f32.mrb[0].mxu0
    %v4612 = vadd.f32 0.0, %v4611
    %v4613 = vpop.f32.mrb[0].mxu0
    %v4614 = vadd.f32 0.0, %v4613
    %4615 = vmatprep.mubr.f32.mxu0 0.0
    %4616 = vmatmul.mubr.f32.gmra.mrb[0].mxu0 %v555
    %v4617 = vpop.f32.mrb[0].mxu0
    %v4618 = vadd.f32 0.0, %v4617
    %v4619 = vpop.f32.mrb[0].mxu0
    %v4620 = vadd.f32 0.0, %v4619
    %4621 = vdwg.mxu0
    %4622 = vmatprep.subr.mxu0 %v4531
    %4623 = vmatpush1.msra.mxu0 %v4528
    %4624 = vmatprep.subr.mxu0 0.0
    %4625 = vmatpush1.msra.mxu0 0.0
    %4626 = vmatprep.subr.mxu0 0.0
    %4627 = vmatpush1.msra.mxu0 0.0
    %4628 = vmatprep.subr.mxu0 0.0
    %4629 = vmatpush1.msra.mxu0 0.0
    %4630 = vmatprep.subr.mxu0 0.0
    %4631 = vmatpush1.msra.mxu0 0.0
    %4632 = vmatprep.subr.mxu0 0.0
    %4633 = vmatpush1.msra.mxu0 0.0
    %4634 = vmatprep.subr.mxu0 0.0
    %4635 = vmatpush1.msra.mxu0 0.0
    %4636 = vmatprep.subr.mxu0 0.0
    %4637 = vmatpush1.msra.mxu0 0.0
    %4638 = vmatprep.subr.mxu0 0.0
    %4639 = vmatpush1.msra.mxu0 0.0
    %4640 = vmatprep.subr.mxu0 0.0
    %4641 = vmatpush1.msra.mxu0 0.0
    %4642 = vmatprep.subr.mxu0 0.0
    %4643 = vmatpush1.msra.mxu0 0.0
    %4644 = vmatprep.subr.mxu0 0.0
    %4645 = vmatpush1.msra.mxu0 0.0
    %4646 = vmatprep.subr.mxu0 0.0
    %4647 = vmatpush1.msra.mxu0 0.0
    %4648 = vmatprep.subr.mxu0 0.0
    %4649 = vmatpush1.msra.mxu0 0.0
    %4650 = vmatprep.subr.mxu0 0.0
    %4651 = vmatpush1.msra.mxu0 0.0
    %4652 = vmatprep.subr.mxu0 0.0
    %4653 = vmatpush1.msra.mxu0 0.0
    %4654 = vmatprep.subr.mxu0 0.0
    %4655 = vmatpush1.msra.mxu0 0.0
    %4656 = vmatprep.subr.mxu0 0.0
    %4657 = vmatpush1.msra.mxu0 0.0
    %4658 = vmatprep.subr.mxu0 0.0
    %4659 = vmatpush1.msra.mxu0 0.0
    %4660 = vmatprep.subr.mxu0 0.0
    %4661 = vmatpush1.msra.mxu0 0.0
    %4662 = vmatprep.subr.mxu0 0.0
    %4663 = vmatpush1.msra.mxu0 0.0
    %4664 = vmatprep.subr.mxu0 0.0
    %4665 = vmatpush1.msra.mxu0 0.0
    %4666 = vmatprep.subr.mxu0 0.0
    %4667 = vmatpush1.msra.mxu0 0.0
    %4668 = vmatprep.subr.mxu0 0.0
    %4669 = vmatpush1.msra.mxu0 0.0
    %4670 = vmatprep.subr.mxu0 0.0
    %4671 = vmatpush1.msra.mxu0 0.0
    %4672 = vmatprep.subr.mxu0 0.0
    %4673 = vmatpush1.msra.mxu0 0.0
    %4674 = vmatprep.subr.mxu0 0.0
    %4675 = vmatpush1.msra.mxu0 0.0
    %4676 = vmatprep.subr.mxu0 0.0
    %4677 = vmatpush1.msra.mxu0 0.0
    %4678 = vmatprep.subr.mxu0 0.0
    %4679 = vmatpush1.msra.mxu0 0.0
    %4680 = vmatprep.subr.mxu0 0.0
    %4681 = vmatpush1.msra.mxu0 0.0
    %4682 = vmatprep.subr.mxu0 0.0
    %4683 = vmatpush1.msra.mxu0 0.0
    %4684 = vmatprep.subr.mxu0 0.0
    %4685 = vmatpush1.msra.mxu0 0.0
    %4686 = vmatprep.mubr.f32.mxu0 0.0
    %4687 = vmatmul.mubr.f32.gmra.mrb[0].mxu0 %v546
    %v4688 = vpop.f32.mrb[0].mxu0
    %v4689 = vadd.f32 0.0, %v4688
    %v4690 = vpop.f32.mrb[0].mxu0
    %v4691 = vadd.f32 0.0, %v4690
    %4692 = vmatprep.mubr.f32.mxu0 0.0
    %4693 = vmatmul.mubr.f32.gmra.mrb[0].mxu0 %v549
    %v4694 = vpop.f32.mrb[0].mxu0
    %v4695 = vadd.f32 0.0, %v4694
    %v4696 = vpop.f32.mrb[0].mxu0
    %v4697 = vadd.f32 0.0, %v4696
    %4698 = vmatprep.mubr.f32.mxu0 0.0
    %4699 = vmatmul.mubr.f32.gmra.mrb[0].mxu0 %v552
    %v4700 = vpop.f32.mrb[0].mxu0
    %v4701 = vadd.f32 0.0, %v4700
    %v4702 = vpop.f32.mrb[0].mxu0
    %v4703 = vadd.f32 0.0, %v4702
    %4704 = vmatprep.mubr.f32.mxu0 0.0
    %4705 = vmatmul.mubr.f32.gmra.mrb[0].mxu0 %v555
    %v4706 = vpop.f32.mrb[0].mxu0
    %v4707 = vadd.f32 0.0, %v4706
    %v4708 = vpop.f32.mrb[0].mxu0
    %v4709 = vadd.f32 0.0, %v4708
    %4710 = vdwg.mxu0
    %v4711 = vadd.f32 %v4489, %v4600
    %v4712 = vadd.f32 %v4490, %v4602
    %v4713 = vadd.f32 %v4491, %v4689
    %v4714 = vadd.f32 %v4492, %v4691
    %v4715 = vadd.f32 %v4493, %v4606
    %v4716 = vadd.f32 %v4494, %v4608
    %v4717 = vadd.f32 %v4495, %v4695
    %v4718 = vadd.f32 %v4496, %v4697
    %v4719 = vadd.f32 %v4497, %v4612
    %v4720 = vadd.f32 %v4498, %v4614
    %v4721 = vadd.f32 %v4499, %v4701
    %v4722 = vadd.f32 %v4500, %v4703
    %v4723 = vadd.f32 %v4501, %v4618
    %v4724 = vadd.f32 %v4502, %v4620
    %v4725 = vadd.f32 %v4503, %v4707
    %v4726 = vadd.f32 %v4504, %v4709
    %4727 = vrot.lane.b32.xlu0 %v4275, 15
    %v4728 = vpop.permute.xlu0 %4727
    %4729 = vrot.lane.b32.xlu0 %v4279, 15
    %v4730 = vpop.permute.xlu0 %4729
    %4731 = vrot.lane.b32.xlu0 %v4276, 15
    %v4732 = vpop.permute.xlu0 %4731
    %4733 = vrot.lane.b32.xlu0 %v4280, 15
    %v4734 = vpop.permute.xlu0 %4733
    %v4735 = vsel %vm771, %v4732, %v4734
    %v4736 = vsel %vm771, %v4730, %v4732
    %v4737 = vsel %vm771, %v4728, %v4730
    %v4738 = vsel %vm771, %v4734, %v4728
    %v4739 = vmul.f32 %v4738, %v188
    %v4740 = vmul.f32 %v4737, %v192
    %v4741 = vmul.f32 %v4736, %v196
    %v4742 = vmul.f32 %v4735, %v200
    %v4744 = vsel %vm321, %v4739, 0
    %v4747 = vsel %vm321, %v4740, 0
    %v4750 = vsel %vm321, %v4741, 0
    %v4753 = vsel %vm321, %v4742, 0
    %4755 = vmatprep.subr.mxu0 %v4747
    %4756 = vmatpush1.msra.mxu0 %v4744
    %4757 = vmatprep.subr.mxu0 0.0
    %4758 = vmatpush1.msra.mxu0 0.0
    %4759 = vmatprep.subr.mxu0 0.0
    %4760 = vmatpush1.msra.mxu0 0.0
    %4761 = vmatprep.subr.mxu0 0.0
    %4762 = vmatpush1.msra.mxu0 0.0
    %4763 = vmatprep.subr.mxu0 0.0
    %4764 = vmatpush1.msra.mxu0 0.0
    %4765 = vmatprep.subr.mxu0 0.0
    %4766 = vmatpush1.msra.mxu0 0.0
    %4767 = vmatprep.subr.mxu0 0.0
    %4768 = vmatpush1.msra.mxu0 0.0
    %4769 = vmatprep.subr.mxu0 0.0
    %4770 = vmatpush1.msra.mxu0 0.0
    %4771 = vmatprep.subr.mxu0 0.0
    %4772 = vmatpush1.msra.mxu0 0.0
    %4773 = vmatprep.subr.mxu0 0.0
    %4774 = vmatpush1.msra.mxu0 0.0
    %4775 = vmatprep.subr.mxu0 0.0
    %4776 = vmatpush1.msra.mxu0 0.0
    %4777 = vmatprep.subr.mxu0 0.0
    %4778 = vmatpush1.msra.mxu0 0.0
    %4779 = vmatprep.subr.mxu0 0.0
    %4780 = vmatpush1.msra.mxu0 0.0
    %4781 = vmatprep.subr.mxu0 0.0
    %4782 = vmatpush1.msra.mxu0 0.0
    %4783 = vmatprep.subr.mxu0 0.0
    %4784 = vmatpush1.msra.mxu0 0.0
    %4785 = vmatprep.subr.mxu0 0.0
    %4786 = vmatpush1.msra.mxu0 0.0
    %4787 = vmatprep.subr.mxu0 0.0
    %4788 = vmatpush1.msra.mxu0 0.0
    %4789 = vmatprep.subr.mxu0 0.0
    %4790 = vmatpush1.msra.mxu0 0.0
    %4791 = vmatprep.subr.mxu0 0.0
    %4792 = vmatpush1.msra.mxu0 0.0
    %4793 = vmatprep.subr.mxu0 0.0
    %4794 = vmatpush1.msra.mxu0 0.0
    %4795 = vmatprep.subr.mxu0 0.0
    %4796 = vmatpush1.msra.mxu0 0.0
    %4797 = vmatprep.subr.mxu0 0.0
    %4798 = vmatpush1.msra.mxu0 0.0
    %4799 = vmatprep.subr.mxu0 0.0
    %4800 = vmatpush1.msra.mxu0 0.0
    %4801 = vmatprep.subr.mxu0 0.0
    %4802 = vmatpush1.msra.mxu0 0.0
    %4803 = vmatprep.subr.mxu0 0.0
    %4804 = vmatpush1.msra.mxu0 0.0
    %4805 = vmatprep.subr.mxu0 0.0
    %4806 = vmatpush1.msra.mxu0 0.0
    %4807 = vmatprep.subr.mxu0 0.0
    %4808 = vmatpush1.msra.mxu0 0.0
    %4809 = vmatprep.subr.mxu0 0.0
    %4810 = vmatpush1.msra.mxu0 0.0
    %4811 = vmatprep.subr.mxu0 0.0
    %4812 = vmatpush1.msra.mxu0 0.0
    %4813 = vmatprep.subr.mxu0 0.0
    %4814 = vmatpush1.msra.mxu0 0.0
    %4815 = vmatprep.subr.mxu0 0.0
    %4816 = vmatpush1.msra.mxu0 0.0
    %4817 = vmatprep.subr.mxu0 0.0
    %4818 = vmatpush1.msra.mxu0 0.0
    %4819 = vmatprep.mubr.f32.mxu0 0.0
    %4820 = vmatmul.mubr.f32.gmra.mrb[0].mxu0 %v781
    %v4821 = vpop.f32.mrb[0].mxu0
    %v4822 = vadd.f32 0.0, %v4821
    %v4823 = vpop.f32.mrb[0].mxu0
    %v4824 = vadd.f32 0.0, %v4823
    %4825 = vmatprep.mubr.f32.mxu0 0.0
    %4826 = vmatmul.mubr.f32.gmra.mrb[0].mxu0 %v784
    %v4827 = vpop.f32.mrb[0].mxu0
    %v4828 = vadd.f32 0.0, %v4827
    %v4829 = vpop.f32.mrb[0].mxu0
    %v4830 = vadd.f32 0.0, %v4829
    %4831 = vmatprep.mubr.f32.mxu0 0.0
    %4832 = vmatmul.mubr.f32.gmra.mrb[0].mxu0 %v787
    %v4833 = vpop.f32.mrb[0].mxu0
    %v4834 = vadd.f32 0.0, %v4833
    %v4835 = vpop.f32.mrb[0].mxu0
    %v4836 = vadd.f32 0.0, %v4835
    %4837 = vmatprep.mubr.f32.mxu0 0.0
    %4838 = vmatmul.mubr.f32.gmra.mrb[0].mxu0 %v790
    %v4839 = vpop.f32.mrb[0].mxu0
    %v4840 = vadd.f32 0.0, %v4839
    %v4841 = vpop.f32.mrb[0].mxu0
    %v4842 = vadd.f32 0.0, %v4841
    %4843 = vdwg.mxu0
    %4844 = vmatprep.subr.mxu0 %v4753
    %4845 = vmatpush1.msra.mxu0 %v4750
    %4846 = vmatprep.subr.mxu0 0.0
    %4847 = vmatpush1.msra.mxu0 0.0
    %4848 = vmatprep.subr.mxu0 0.0
    %4849 = vmatpush1.msra.mxu0 0.0
    %4850 = vmatprep.subr.mxu0 0.0
    %4851 = vmatpush1.msra.mxu0 0.0
    %4852 = vmatprep.subr.mxu0 0.0
    %4853 = vmatpush1.msra.mxu0 0.0
    %4854 = vmatprep.subr.mxu0 0.0
    %4855 = vmatpush1.msra.mxu0 0.0
    %4856 = vmatprep.subr.mxu0 0.0
    %4857 = vmatpush1.msra.mxu0 0.0
    %4858 = vmatprep.subr.mxu0 0.0
    %4859 = vmatpush1.msra.mxu0 0.0
    %4860 = vmatprep.subr.mxu0 0.0
    %4861 = vmatpush1.msra.mxu0 0.0
    %4862 = vmatprep.subr.mxu0 0.0
    %4863 = vmatpush1.msra.mxu0 0.0
    %4864 = vmatprep.subr.mxu0 0.0
    %4865 = vmatpush1.msra.mxu0 0.0
    %4866 = vmatprep.subr.mxu0 0.0
    %4867 = vmatpush1.msra.mxu0 0.0
    %4868 = vmatprep.subr.mxu0 0.0
    %4869 = vmatpush1.msra.mxu0 0.0
    %4870 = vmatprep.subr.mxu0 0.0
    %4871 = vmatpush1.msra.mxu0 0.0
    %4872 = vmatprep.subr.mxu0 0.0
    %4873 = vmatpush1.msra.mxu0 0.0
    %4874 = vmatprep.subr.mxu0 0.0
    %4875 = vmatpush1.msra.mxu0 0.0
    %4876 = vmatprep.subr.mxu0 0.0
    %4877 = vmatpush1.msra.mxu0 0.0
    %4878 = vmatprep.subr.mxu0 0.0
    %4879 = vmatpush1.msra.mxu0 0.0
    %4880 = vmatprep.subr.mxu0 0.0
    %4881 = vmatpush1.msra.mxu0 0.0
    %4882 = vmatprep.subr.mxu0 0.0
    %4883 = vmatpush1.msra.mxu0 0.0
    %4884 = vmatprep.subr.mxu0 0.0
    %4885 = vmatpush1.msra.mxu0 0.0
    %4886 = vmatprep.subr.mxu0 0.0
    %4887 = vmatpush1.msra.mxu0 0.0
    %4888 = vmatprep.subr.mxu0 0.0
    %4889 = vmatpush1.msra.mxu0 0.0
    %4890 = vmatprep.subr.mxu0 0.0
    %4891 = vmatpush1.msra.mxu0 0.0
    %4892 = vmatprep.subr.mxu0 0.0
    %4893 = vmatpush1.msra.mxu0 0.0
    %4894 = vmatprep.subr.mxu0 0.0
    %4895 = vmatpush1.msra.mxu0 0.0
    %4896 = vmatprep.subr.mxu0 0.0
    %4897 = vmatpush1.msra.mxu0 0.0
    %4898 = vmatprep.subr.mxu0 0.0
    %4899 = vmatpush1.msra.mxu0 0.0
    %4900 = vmatprep.subr.mxu0 0.0
    %4901 = vmatpush1.msra.mxu0 0.0
    %4902 = vmatprep.subr.mxu0 0.0
    %4903 = vmatpush1.msra.mxu0 0.0
    %4904 = vmatprep.subr.mxu0 0.0
    %4905 = vmatpush1.msra.mxu0 0.0
    %4906 = vmatprep.subr.mxu0 0.0
    %4907 = vmatpush1.msra.mxu0 0.0
    %4908 = vmatprep.mubr.f32.mxu0 0.0
    %4909 = vmatmul.mubr.f32.gmra.mrb[0].mxu0 %v781
    %v4910 = vpop.f32.mrb[0].mxu0
    %v4911 = vadd.f32 0.0, %v4910
    %v4912 = vpop.f32.mrb[0].mxu0
    %v4913 = vadd.f32 0.0, %v4912
    %4914 = vmatprep.mubr.f32.mxu0 0.0
    %4915 = vmatmul.mubr.f32.gmra.mrb[0].mxu0 %v784
    %v4916 = vpop.f32.mrb[0].mxu0
    %v4917 = vadd.f32 0.0, %v4916
    %v4918 = vpop.f32.mrb[0].mxu0
    %v4919 = vadd.f32 0.0, %v4918
    %4920 = vmatprep.mubr.f32.mxu0 0.0
    %4921 = vmatmul.mubr.f32.gmra.mrb[0].mxu0 %v787
    %v4922 = vpop.f32.mrb[0].mxu0
    %v4923 = vadd.f32 0.0, %v4922
    %v4924 = vpop.f32.mrb[0].mxu0
    %v4925 = vadd.f32 0.0, %v4924
    %4926 = vmatprep.mubr.f32.mxu0 0.0
    %4927 = vmatmul.mubr.f32.gmra.mrb[0].mxu0 %v790
    %v4928 = vpop.f32.mrb[0].mxu0
    %v4929 = vadd.f32 0.0, %v4928
    %v4930 = vpop.f32.mrb[0].mxu0
    %v4931 = vadd.f32 0.0, %v4930
    %4932 = vdwg.mxu0
    %v4933 = vadd.f32 %v4711, %v4822
    %v4934 = vadd.f32 %v4712, %v4824
    %v4935 = vadd.f32 %v4713, %v4911
    %v4936 = vadd.f32 %v4714, %v4913
    %v4937 = vadd.f32 %v4715, %v4828
    %v4938 = vadd.f32 %v4716, %v4830
    %v4939 = vadd.f32 %v4717, %v4917
    %v4940 = vadd.f32 %v4718, %v4919
    %v4941 = vadd.f32 %v4719, %v4834
    %v4942 = vadd.f32 %v4720, %v4836
    %v4943 = vadd.f32 %v4721, %v4923
    %v4944 = vadd.f32 %v4722, %v4925
    %v4945 = vadd.f32 %v4723, %v4840
    %v4946 = vadd.f32 %v4724, %v4842
    %v4947 = vadd.f32 %v4725, %v4929
    %v4948 = vadd.f32 %v4726, %v4931
    %4949 = vrot.lane.b32.xlu0 %v4275, 1
    %v4950 = vpop.permute.xlu0 %4949
    %4951 = vrot.lane.b32.xlu0 %v4279, 1
    %v4952 = vpop.permute.xlu0 %4951
    %4953 = vrot.lane.b32.xlu0 %v4276, 1
    %v4954 = vpop.permute.xlu0 %4953
    %4955 = vrot.lane.b32.xlu0 %v4280, 1
    %v4956 = vpop.permute.xlu0 %4955
    %v4957 = vsel %vm1006, %v4954, %v4956
    %v4958 = vsel %vm1006, %v4952, %v4954
    %v4959 = vsel %vm1006, %v4950, %v4952
    %v4960 = vsel %vm1006, %v4956, %v4950
    %v4961 = vmul.f32 %v4960, %v204
    %v4962 = vmul.f32 %v4959, %v208
    %v4963 = vmul.f32 %v4958, %v212
    %v4964 = vmul.f32 %v4957, %v216
    %v4966 = vsel %vm321, %v4961, 0
    %v4969 = vsel %vm321, %v4962, 0
    %v4972 = vsel %vm321, %v4963, 0
    %v4975 = vsel %vm321, %v4964, 0
    %4977 = vmatprep.subr.mxu0 %v4969
    %4978 = vmatpush1.msra.mxu0 %v4966
    %4979 = vmatprep.subr.mxu0 0.0
    %4980 = vmatpush1.msra.mxu0 0.0
    %4981 = vmatprep.subr.mxu0 0.0
    %4982 = vmatpush1.msra.mxu0 0.0
    %4983 = vmatprep.subr.mxu0 0.0
    %4984 = vmatpush1.msra.mxu0 0.0
    %4985 = vmatprep.subr.mxu0 0.0
    %4986 = vmatpush1.msra.mxu0 0.0
    %4987 = vmatprep.subr.mxu0 0.0
    %4988 = vmatpush1.msra.mxu0 0.0
    %4989 = vmatprep.subr.mxu0 0.0
    %4990 = vmatpush1.msra.mxu0 0.0
    %4991 = vmatprep.subr.mxu0 0.0
    %4992 = vmatpush1.msra.mxu0 0.0
    %4993 = vmatprep.subr.mxu0 0.0
    %4994 = vmatpush1.msra.mxu0 0.0
    %4995 = vmatprep.subr.mxu0 0.0
    %4996 = vmatpush1.msra.mxu0 0.0
    %4997 = vmatprep.subr.mxu0 0.0
    %4998 = vmatpush1.msra.mxu0 0.0
    %4999 = vmatprep.subr.mxu0 0.0
    %5000 = vmatpush1.msra.mxu0 0.0
    %5001 = vmatprep.subr.mxu0 0.0
    %5002 = vmatpush1.msra.mxu0 0.0
    %5003 = vmatprep.subr.mxu0 0.0
    %5004 = vmatpush1.msra.mxu0 0.0
    %5005 = vmatprep.subr.mxu0 0.0
    %5006 = vmatpush1.msra.mxu0 0.0
    %5007 = vmatprep.subr.mxu0 0.0
    %5008 = vmatpush1.msra.mxu0 0.0
    %5009 = vmatprep.subr.mxu0 0.0
    %5010 = vmatpush1.msra.mxu0 0.0
    %5011 = vmatprep.subr.mxu0 0.0
    %5012 = vmatpush1.msra.mxu0 0.0
    %5013 = vmatprep.subr.mxu0 0.0
    %5014 = vmatpush1.msra.mxu0 0.0
    %5015 = vmatprep.subr.mxu0 0.0
    %5016 = vmatpush1.msra.mxu0 0.0
    %5017 = vmatprep.subr.mxu0 0.0
    %5018 = vmatpush1.msra.mxu0 0.0
    %5019 = vmatprep.subr.mxu0 0.0
    %5020 = vmatpush1.msra.mxu0 0.0
    %5021 = vmatprep.subr.mxu0 0.0
    %5022 = vmatpush1.msra.mxu0 0.0
    %5023 = vmatprep.subr.mxu0 0.0
    %5024 = vmatpush1.msra.mxu0 0.0
    %5025 = vmatprep.subr.mxu0 0.0
    %5026 = vmatpush1.msra.mxu0 0.0
    %5027 = vmatprep.subr.mxu0 0.0
    %5028 = vmatpush1.msra.mxu0 0.0
    %5029 = vmatprep.subr.mxu0 0.0
    %5030 = vmatpush1.msra.mxu0 0.0
    %5031 = vmatprep.subr.mxu0 0.0
    %5032 = vmatpush1.msra.mxu0 0.0
    %5033 = vmatprep.subr.mxu0 0.0
    %5034 = vmatpush1.msra.mxu0 0.0
    %5035 = vmatprep.subr.mxu0 0.0
    %5036 = vmatpush1.msra.mxu0 0.0
    %5037 = vmatprep.subr.mxu0 0.0
    %5038 = vmatpush1.msra.mxu0 0.0
    %5039 = vmatprep.subr.mxu0 0.0
    %5040 = vmatpush1.msra.mxu0 0.0
    %5041 = vmatprep.mubr.f32.mxu0 0.0
    %5042 = vmatmul.mubr.f32.gmra.mrb[0].mxu0 %v1016
    %v5043 = vpop.f32.mrb[0].mxu0
    %v5044 = vadd.f32 0.0, %v5043
    %v5045 = vpop.f32.mrb[0].mxu0
    %v5046 = vadd.f32 0.0, %v5045
    %5047 = vmatprep.mubr.f32.mxu0 0.0
    %5048 = vmatmul.mubr.f32.gmra.mrb[0].mxu0 %v1019
    %v5049 = vpop.f32.mrb[0].mxu0
    %v5050 = vadd.f32 0.0, %v5049
    %v5051 = vpop.f32.mrb[0].mxu0
    %v5052 = vadd.f32 0.0, %v5051
    %5053 = vmatprep.mubr.f32.mxu0 0.0
    %5054 = vmatmul.mubr.f32.gmra.mrb[0].mxu0 %v1022
    %v5055 = vpop.f32.mrb[0].mxu0
    %v5056 = vadd.f32 0.0, %v5055
    %v5057 = vpop.f32.mrb[0].mxu0
    %v5058 = vadd.f32 0.0, %v5057
    %5059 = vmatprep.mubr.f32.mxu0 0.0
    %5060 = vmatmul.mubr.f32.gmra.mrb[0].mxu0 %v1025
    %v5061 = vpop.f32.mrb[0].mxu0
    %v5062 = vadd.f32 0.0, %v5061
    %v5063 = vpop.f32.mrb[0].mxu0
    %v5064 = vadd.f32 0.0, %v5063
    %5065 = vdwg.mxu0
    %5066 = vmatprep.subr.mxu0 %v4975
    %5067 = vmatpush1.msra.mxu0 %v4972
    %5068 = vmatprep.subr.mxu0 0.0
    %5069 = vmatpush1.msra.mxu0 0.0
    %5070 = vmatprep.subr.mxu0 0.0
    %5071 = vmatpush1.msra.mxu0 0.0
    %5072 = vmatprep.subr.mxu0 0.0
    %5073 = vmatpush1.msra.mxu0 0.0
    %5074 = vmatprep.subr.mxu0 0.0
    %5075 = vmatpush1.msra.mxu0 0.0
    %5076 = vmatprep.subr.mxu0 0.0
    %5077 = vmatpush1.msra.mxu0 0.0
    %5078 = vmatprep.subr.mxu0 0.0
    %5079 = vmatpush1.msra.mxu0 0.0
    %5080 = vmatprep.subr.mxu0 0.0
    %5081 = vmatpush1.msra.mxu0 0.0
    %5082 = vmatprep.subr.mxu0 0.0
    %5083 = vmatpush1.msra.mxu0 0.0
    %5084 = vmatprep.subr.mxu0 0.0
    %5085 = vmatpush1.msra.mxu0 0.0
    %5086 = vmatprep.subr.mxu0 0.0
    %5087 = vmatpush1.msra.mxu0 0.0
    %5088 = vmatprep.subr.mxu0 0.0
    %5089 = vmatpush1.msra.mxu0 0.0
    %5090 = vmatprep.subr.mxu0 0.0
    %5091 = vmatpush1.msra.mxu0 0.0
    %5092 = vmatprep.subr.mxu0 0.0
    %5093 = vmatpush1.msra.mxu0 0.0
    %5094 = vmatprep.subr.mxu0 0.0
    %5095 = vmatpush1.msra.mxu0 0.0
    %5096 = vmatprep.subr.mxu0 0.0
    %5097 = vmatpush1.msra.mxu0 0.0
    %5098 = vmatprep.subr.mxu0 0.0
    %5099 = vmatpush1.msra.mxu0 0.0
    %5100 = vmatprep.subr.mxu0 0.0
    %5101 = vmatpush1.msra.mxu0 0.0
    %5102 = vmatprep.subr.mxu0 0.0
    %5103 = vmatpush1.msra.mxu0 0.0
    %5104 = vmatprep.subr.mxu0 0.0
    %5105 = vmatpush1.msra.mxu0 0.0
    %5106 = vmatprep.subr.mxu0 0.0
    %5107 = vmatpush1.msra.mxu0 0.0
    %5108 = vmatprep.subr.mxu0 0.0
    %5109 = vmatpush1.msra.mxu0 0.0
    %5110 = vmatprep.subr.mxu0 0.0
    %5111 = vmatpush1.msra.mxu0 0.0
    %5112 = vmatprep.subr.mxu0 0.0
    %5113 = vmatpush1.msra.mxu0 0.0
    %5114 = vmatprep.subr.mxu0 0.0
    %5115 = vmatpush1.msra.mxu0 0.0
    %5116 = vmatprep.subr.mxu0 0.0
    %5117 = vmatpush1.msra.mxu0 0.0
    %5118 = vmatprep.subr.mxu0 0.0
    %5119 = vmatpush1.msra.mxu0 0.0
    %5120 = vmatprep.subr.mxu0 0.0
    %5121 = vmatpush1.msra.mxu0 0.0
    %5122 = vmatprep.subr.mxu0 0.0
    %5123 = vmatpush1.msra.mxu0 0.0
    %5124 = vmatprep.subr.mxu0 0.0
    %5125 = vmatpush1.msra.mxu0 0.0
    %5126 = vmatprep.subr.mxu0 0.0
    %5127 = vmatpush1.msra.mxu0 0.0
    %5128 = vmatprep.subr.mxu0 0.0
    %5129 = vmatpush1.msra.mxu0 0.0
    %5130 = vmatprep.mubr.f32.mxu0 0.0
    %5131 = vmatmul.mubr.f32.gmra.mrb[0].mxu0 %v1016
    %v5132 = vpop.f32.mrb[0].mxu0
    %v5133 = vadd.f32 0.0, %v5132
    %v5134 = vpop.f32.mrb[0].mxu0
    %v5135 = vadd.f32 0.0, %v5134
    %5136 = vmatprep.mubr.f32.mxu0 0.0
    %5137 = vmatmul.mubr.f32.gmra.mrb[0].mxu0 %v1019
    %v5138 = vpop.f32.mrb[0].mxu0
    %v5139 = vadd.f32 0.0, %v5138
    %v5140 = vpop.f32.mrb[0].mxu0
    %v5141 = vadd.f32 0.0, %v5140
    %5142 = vmatprep.mubr.f32.mxu0 0.0
    %5143 = vmatmul.mubr.f32.gmra.mrb[0].mxu0 %v1022
    %v5144 = vpop.f32.mrb[0].mxu0
    %v5145 = vadd.f32 0.0, %v5144
    %v5146 = vpop.f32.mrb[0].mxu0
    %v5147 = vadd.f32 0.0, %v5146
    %5148 = vmatprep.mubr.f32.mxu0 0.0
    %5149 = vmatmul.mubr.f32.gmra.mrb[0].mxu0 %v1025
    %v5150 = vpop.f32.mrb[0].mxu0
    %v5151 = vadd.f32 0.0, %v5150
    %v5152 = vpop.f32.mrb[0].mxu0
    %v5153 = vadd.f32 0.0, %v5152
    %5154 = vdwg.mxu0
    %v5155 = vadd.f32 %v4933, %v5044
    %v5156 = vadd.f32 %v4934, %v5046
    %v5157 = vadd.f32 %v4935, %v5133
    %v5158 = vadd.f32 %v4936, %v5135
    %v5159 = vadd.f32 %v4937, %v5050
    %v5160 = vadd.f32 %v4938, %v5052
    %v5161 = vadd.f32 %v4939, %v5139
    %v5162 = vadd.f32 %v4940, %v5141
    %v5163 = vadd.f32 %v4941, %v5056
    %v5164 = vadd.f32 %v4942, %v5058
    %v5165 = vadd.f32 %v4943, %v5145
    %v5166 = vadd.f32 %v4944, %v5147
    %v5167 = vadd.f32 %v4945, %v5062
    %v5168 = vadd.f32 %v4946, %v5064
    %v5169 = vadd.f32 %v4947, %v5151
    %v5170 = vadd.f32 %v4948, %v5153
    %v5171 = vsel %vm321, %v4275, 0
    %v5173 = vsel %vm321, %v4279, 0
    %v5175 = vsel %vm321, %v4276, 0
    %v5177 = vsel %vm321, %v4280, 0
    %5179 = vmatprep.subr.mxu0 %v5173
    %5180 = vmatpush1.msra.mxu0 %v5171
    %5181 = vmatprep.subr.mxu0 0.0
    %5182 = vmatpush1.msra.mxu0 0.0
    %5183 = vmatprep.subr.mxu0 0.0
    %5184 = vmatpush1.msra.mxu0 0.0
    %5185 = vmatprep.subr.mxu0 0.0
    %5186 = vmatpush1.msra.mxu0 0.0
    %5187 = vmatprep.subr.mxu0 0.0
    %5188 = vmatpush1.msra.mxu0 0.0
    %5189 = vmatprep.subr.mxu0 0.0
    %5190 = vmatpush1.msra.mxu0 0.0
    %5191 = vmatprep.subr.mxu0 0.0
    %5192 = vmatpush1.msra.mxu0 0.0
    %5193 = vmatprep.subr.mxu0 0.0
    %5194 = vmatpush1.msra.mxu0 0.0
    %5195 = vmatprep.subr.mxu0 0.0
    %5196 = vmatpush1.msra.mxu0 0.0
    %5197 = vmatprep.subr.mxu0 0.0
    %5198 = vmatpush1.msra.mxu0 0.0
    %5199 = vmatprep.subr.mxu0 0.0
    %5200 = vmatpush1.msra.mxu0 0.0
    %5201 = vmatprep.subr.mxu0 0.0
    %5202 = vmatpush1.msra.mxu0 0.0
    %5203 = vmatprep.subr.mxu0 0.0
    %5204 = vmatpush1.msra.mxu0 0.0
    %5205 = vmatprep.subr.mxu0 0.0
    %5206 = vmatpush1.msra.mxu0 0.0
    %5207 = vmatprep.subr.mxu0 0.0
    %5208 = vmatpush1.msra.mxu0 0.0
    %5209 = vmatprep.subr.mxu0 0.0
    %5210 = vmatpush1.msra.mxu0 0.0
    %5211 = vmatprep.subr.mxu0 0.0
    %5212 = vmatpush1.msra.mxu0 0.0
    %5213 = vmatprep.subr.mxu0 0.0
    %5214 = vmatpush1.msra.mxu0 0.0
    %5215 = vmatprep.subr.mxu0 0.0
    %5216 = vmatpush1.msra.mxu0 0.0
    %5217 = vmatprep.subr.mxu0 0.0
    %5218 = vmatpush1.msra.mxu0 0.0
    %5219 = vmatprep.subr.mxu0 0.0
    %5220 = vmatpush1.msra.mxu0 0.0
    %5221 = vmatprep.subr.mxu0 0.0
    %5222 = vmatpush1.msra.mxu0 0.0
    %5223 = vmatprep.subr.mxu0 0.0
    %5224 = vmatpush1.msra.mxu0 0.0
    %5225 = vmatprep.subr.mxu0 0.0
    %5226 = vmatpush1.msra.mxu0 0.0
    %5227 = vmatprep.subr.mxu0 0.0
    %5228 = vmatpush1.msra.mxu0 0.0
    %5229 = vmatprep.subr.mxu0 0.0
    %5230 = vmatpush1.msra.mxu0 0.0
    %5231 = vmatprep.subr.mxu0 0.0
    %5232 = vmatpush1.msra.mxu0 0.0
    %5233 = vmatprep.subr.mxu0 0.0
    %5234 = vmatpush1.msra.mxu0 0.0
    %5235 = vmatprep.subr.mxu0 0.0
    %5236 = vmatpush1.msra.mxu0 0.0
    %5237 = vmatprep.subr.mxu0 0.0
    %5238 = vmatpush1.msra.mxu0 0.0
    %5239 = vmatprep.subr.mxu0 0.0
    %5240 = vmatpush1.msra.mxu0 0.0
    %5241 = vmatprep.subr.mxu0 0.0
    %5242 = vmatpush1.msra.mxu0 0.0
    %5243 = vmatprep.mubr.f32.mxu0 0.0
    %5244 = vmatmul.mubr.f32.gmra.mrb[0].mxu0 %v1234
    %v5245 = vpop.f32.mrb[0].mxu0
    %v5246 = vadd.f32 0.0, %v5245
    %v5247 = vpop.f32.mrb[0].mxu0
    %v5248 = vadd.f32 0.0, %v5247
    %5249 = vmatprep.mubr.f32.mxu0 0.0
    %5250 = vmatmul.mubr.f32.gmra.mrb[0].mxu0 %v1237
    %v5251 = vpop.f32.mrb[0].mxu0
    %v5252 = vadd.f32 0.0, %v5251
    %v5253 = vpop.f32.mrb[0].mxu0
    %v5254 = vadd.f32 0.0, %v5253
    %5255 = vmatprep.mubr.f32.mxu0 0.0
    %5256 = vmatmul.mubr.f32.gmra.mrb[0].mxu0 %v1240
    %v5257 = vpop.f32.mrb[0].mxu0
    %v5258 = vadd.f32 0.0, %v5257
    %v5259 = vpop.f32.mrb[0].mxu0
    %v5260 = vadd.f32 0.0, %v5259
    %5261 = vmatprep.mubr.f32.mxu0 0.0
    %5262 = vmatmul.mubr.f32.gmra.mrb[0].mxu0 %v1243
    %v5263 = vpop.f32.mrb[0].mxu0
    %v5264 = vadd.f32 0.0, %v5263
    %v5265 = vpop.f32.mrb[0].mxu0
    %v5266 = vadd.f32 0.0, %v5265
    %5267 = vdwg.mxu0
    %5268 = vmatprep.subr.mxu0 %v5177
    %5269 = vmatpush1.msra.mxu0 %v5175
    %5270 = vmatprep.subr.mxu0 0.0
    %5271 = vmatpush1.msra.mxu0 0.0
    %5272 = vmatprep.subr.mxu0 0.0
    %5273 = vmatpush1.msra.mxu0 0.0
    %5274 = vmatprep.subr.mxu0 0.0
    %5275 = vmatpush1.msra.mxu0 0.0
    %5276 = vmatprep.subr.mxu0 0.0
    %5277 = vmatpush1.msra.mxu0 0.0
    %5278 = vmatprep.subr.mxu0 0.0
    %5279 = vmatpush1.msra.mxu0 0.0
    %5280 = vmatprep.subr.mxu0 0.0
    %5281 = vmatpush1.msra.mxu0 0.0
    %5282 = vmatprep.subr.mxu0 0.0
    %5283 = vmatpush1.msra.mxu0 0.0
    %5284 = vmatprep.subr.mxu0 0.0
    %5285 = vmatpush1.msra.mxu0 0.0
    %5286 = vmatprep.subr.mxu0 0.0
    %5287 = vmatpush1.msra.mxu0 0.0
    %5288 = vmatprep.subr.mxu0 0.0
    %5289 = vmatpush1.msra.mxu0 0.0
    %5290 = vmatprep.subr.mxu0 0.0
    %5291 = vmatpush1.msra.mxu0 0.0
    %5292 = vmatprep.subr.mxu0 0.0
    %5293 = vmatpush1.msra.mxu0 0.0
    %5294 = vmatprep.subr.mxu0 0.0
    %5295 = vmatpush1.msra.mxu0 0.0
    %5296 = vmatprep.subr.mxu0 0.0
    %5297 = vmatpush1.msra.mxu0 0.0
    %5298 = vmatprep.subr.mxu0 0.0
    %5299 = vmatpush1.msra.mxu0 0.0
    %5300 = vmatprep.subr.mxu0 0.0
    %5301 = vmatpush1.msra.mxu0 0.0
    %5302 = vmatprep.subr.mxu0 0.0
    %5303 = vmatpush1.msra.mxu0 0.0
    %5304 = vmatprep.subr.mxu0 0.0
    %5305 = vmatpush1.msra.mxu0 0.0
    %5306 = vmatprep.subr.mxu0 0.0
    %5307 = vmatpush1.msra.mxu0 0.0
    %5308 = vmatprep.subr.mxu0 0.0
    %5309 = vmatpush1.msra.mxu0 0.0
    %5310 = vmatprep.subr.mxu0 0.0
    %5311 = vmatpush1.msra.mxu0 0.0
    %5312 = vmatprep.subr.mxu0 0.0
    %5313 = vmatpush1.msra.mxu0 0.0
    %5314 = vmatprep.subr.mxu0 0.0
    %5315 = vmatpush1.msra.mxu0 0.0
    %5316 = vmatprep.subr.mxu0 0.0
    %5317 = vmatpush1.msra.mxu0 0.0
    %5318 = vmatprep.subr.mxu0 0.0
    %5319 = vmatpush1.msra.mxu0 0.0
    %5320 = vmatprep.subr.mxu0 0.0
    %5321 = vmatpush1.msra.mxu0 0.0
    %5322 = vmatprep.subr.mxu0 0.0
    %5323 = vmatpush1.msra.mxu0 0.0
    %5324 = vmatprep.subr.mxu0 0.0
    %5325 = vmatpush1.msra.mxu0 0.0
    %5326 = vmatprep.subr.mxu0 0.0
    %5327 = vmatpush1.msra.mxu0 0.0
    %5328 = vmatprep.subr.mxu0 0.0
    %5329 = vmatpush1.msra.mxu0 0.0
    %5330 = vmatprep.subr.mxu0 0.0
    %5331 = vmatpush1.msra.mxu0 0.0
    %5332 = vmatprep.mubr.f32.mxu0 0.0
    %5333 = vmatmul.mubr.f32.gmra.mrb[0].mxu0 %v1234
    %v5334 = vpop.f32.mrb[0].mxu0
    %v5335 = vadd.f32 0.0, %v5334
    %v5336 = vpop.f32.mrb[0].mxu0
    %v5337 = vadd.f32 0.0, %v5336
    %5338 = vmatprep.mubr.f32.mxu0 0.0
    %5339 = vmatmul.mubr.f32.gmra.mrb[0].mxu0 %v1237
    %v5340 = vpop.f32.mrb[0].mxu0
    %v5341 = vadd.f32 0.0, %v5340
    %v5342 = vpop.f32.mrb[0].mxu0
    %v5343 = vadd.f32 0.0, %v5342
    %5344 = vmatprep.mubr.f32.mxu0 0.0
    %5345 = vmatmul.mubr.f32.gmra.mrb[0].mxu0 %v1240
    %v5346 = vpop.f32.mrb[0].mxu0
    %v5347 = vadd.f32 0.0, %v5346
    %v5348 = vpop.f32.mrb[0].mxu0
    %v5349 = vadd.f32 0.0, %v5348
    %5350 = vmatprep.mubr.f32.mxu0 0.0
    %5351 = vmatmul.mubr.f32.gmra.mrb[0].mxu0 %v1243
    %v5352 = vpop.f32.mrb[0].mxu0
    %v5353 = vadd.f32 0.0, %v5352
    %v5354 = vpop.f32.mrb[0].mxu0
    %v5355 = vadd.f32 0.0, %v5354
    %5356 = vdwg.mxu0
    %v5357 = vadd.f32 %v5155, %v5246
    %v5358 = vadd.f32 %v5156, %v5248
    %v5359 = vadd.f32 %v5157, %v5335
    %v5360 = vadd.f32 %v5158, %v5337
    %v5361 = vadd.f32 %v5159, %v5252
    %v5362 = vadd.f32 %v5160, %v5254
    %v5363 = vadd.f32 %v5161, %v5341
    %v5364 = vadd.f32 %v5162, %v5343
    %v5365 = vadd.f32 %v5163, %v5258
    %v5366 = vadd.f32 %v5164, %v5260
    %v5367 = vadd.f32 %v5165, %v5347
    %v5368 = vadd.f32 %v5166, %v5349
    %v5369 = vadd.f32 %v5167, %v5264
    %v5370 = vadd.f32 %v5168, %v5266
    %v5371 = vadd.f32 %v5169, %v5353
    %v5372 = vadd.f32 %v5170, %v5355
    %5373 = vrot.lane.b32.xlu0 %v4275, 127
    %v5374 = vpop.permute.xlu0 %5373
    %5375 = vrot.lane.b32.xlu0 %v4279, 127
    %v5376 = vpop.permute.xlu0 %5375
    %5377 = vrot.lane.b32.xlu0 %v4276, 127
    %v5378 = vpop.permute.xlu0 %5377
    %5379 = vrot.lane.b32.xlu0 %v4280, 127
    %v5380 = vpop.permute.xlu0 %5379
    %v5381 = vsel %vm1455, %v5378, %v5380
    %v5382 = vsel %vm1455, %v5376, %v5378
    %v5383 = vsel %vm1455, %v5374, %v5376
    %v5384 = vsel %vm1455, %v5380, %v5374
    %v5385 = vmul.f32 %v5383, %v220
    %v5386 = vmul.f32 %v5382, %v224
    %v5387 = vmul.f32 %v5381, %v228
    %v5388 = vmul.f32 %v5384, %v232
    %v5390 = vsel %vm321, %v5385, 0
    %v5393 = vsel %vm321, %v5386, 0
    %v5396 = vsel %vm321, %v5387, 0
    %v5399 = vsel %vm321, %v5388, 0
    %5401 = vmatprep.subr.mxu0 %v5393
    %5402 = vmatpush1.msra.mxu0 %v5390
    %5403 = vmatprep.subr.mxu0 0.0
    %5404 = vmatpush1.msra.mxu0 0.0
    %5405 = vmatprep.subr.mxu0 0.0
    %5406 = vmatpush1.msra.mxu0 0.0
    %5407 = vmatprep.subr.mxu0 0.0
    %5408 = vmatpush1.msra.mxu0 0.0
    %5409 = vmatprep.subr.mxu0 0.0
    %5410 = vmatpush1.msra.mxu0 0.0
    %5411 = vmatprep.subr.mxu0 0.0
    %5412 = vmatpush1.msra.mxu0 0.0
    %5413 = vmatprep.subr.mxu0 0.0
    %5414 = vmatpush1.msra.mxu0 0.0
    %5415 = vmatprep.subr.mxu0 0.0
    %5416 = vmatpush1.msra.mxu0 0.0
    %5417 = vmatprep.subr.mxu0 0.0
    %5418 = vmatpush1.msra.mxu0 0.0
    %5419 = vmatprep.subr.mxu0 0.0
    %5420 = vmatpush1.msra.mxu0 0.0
    %5421 = vmatprep.subr.mxu0 0.0
    %5422 = vmatpush1.msra.mxu0 0.0
    %5423 = vmatprep.subr.mxu0 0.0
    %5424 = vmatpush1.msra.mxu0 0.0
    %5425 = vmatprep.subr.mxu0 0.0
    %5426 = vmatpush1.msra.mxu0 0.0
    %5427 = vmatprep.subr.mxu0 0.0
    %5428 = vmatpush1.msra.mxu0 0.0
    %5429 = vmatprep.subr.mxu0 0.0
    %5430 = vmatpush1.msra.mxu0 0.0
    %5431 = vmatprep.subr.mxu0 0.0
    %5432 = vmatpush1.msra.mxu0 0.0
    %5433 = vmatprep.subr.mxu0 0.0
    %5434 = vmatpush1.msra.mxu0 0.0
    %5435 = vmatprep.subr.mxu0 0.0
    %5436 = vmatpush1.msra.mxu0 0.0
    %5437 = vmatprep.subr.mxu0 0.0
    %5438 = vmatpush1.msra.mxu0 0.0
    %5439 = vmatprep.subr.mxu0 0.0
    %5440 = vmatpush1.msra.mxu0 0.0
    %5441 = vmatprep.subr.mxu0 0.0
    %5442 = vmatpush1.msra.mxu0 0.0
    %5443 = vmatprep.subr.mxu0 0.0
    %5444 = vmatpush1.msra.mxu0 0.0
    %5445 = vmatprep.subr.mxu0 0.0
    %5446 = vmatpush1.msra.mxu0 0.0
    %5447 = vmatprep.subr.mxu0 0.0
    %5448 = vmatpush1.msra.mxu0 0.0
    %5449 = vmatprep.subr.mxu0 0.0
    %5450 = vmatpush1.msra.mxu0 0.0
    %5451 = vmatprep.subr.mxu0 0.0
    %5452 = vmatpush1.msra.mxu0 0.0
    %5453 = vmatprep.subr.mxu0 0.0
    %5454 = vmatpush1.msra.mxu0 0.0
    %5455 = vmatprep.subr.mxu0 0.0
    %5456 = vmatpush1.msra.mxu0 0.0
    %5457 = vmatprep.subr.mxu0 0.0
    %5458 = vmatpush1.msra.mxu0 0.0
    %5459 = vmatprep.subr.mxu0 0.0
    %5460 = vmatpush1.msra.mxu0 0.0
    %5461 = vmatprep.subr.mxu0 0.0
    %5462 = vmatpush1.msra.mxu0 0.0
    %5463 = vmatprep.subr.mxu0 0.0
    %5464 = vmatpush1.msra.mxu0 0.0
    %5465 = vmatprep.mubr.f32.mxu0 0.0
    %5466 = vmatmul.mubr.f32.gmra.mrb[0].mxu0 %v1465
    %v5467 = vpop.f32.mrb[0].mxu0
    %v5468 = vadd.f32 0.0, %v5467
    %v5469 = vpop.f32.mrb[0].mxu0
    %v5470 = vadd.f32 0.0, %v5469
    %5471 = vmatprep.mubr.f32.mxu0 0.0
    %5472 = vmatmul.mubr.f32.gmra.mrb[0].mxu0 %v1468
    %v5473 = vpop.f32.mrb[0].mxu0
    %v5474 = vadd.f32 0.0, %v5473
    %v5475 = vpop.f32.mrb[0].mxu0
    %v5476 = vadd.f32 0.0, %v5475
    %5477 = vmatprep.mubr.f32.mxu0 0.0
    %5478 = vmatmul.mubr.f32.gmra.mrb[0].mxu0 %v1471
    %v5479 = vpop.f32.mrb[0].mxu0
    %v5480 = vadd.f32 0.0, %v5479
    %v5481 = vpop.f32.mrb[0].mxu0
    %v5482 = vadd.f32 0.0, %v5481
    %5483 = vmatprep.mubr.f32.mxu0 0.0
    %5484 = vmatmul.mubr.f32.gmra.mrb[0].mxu0 %v1474
    %v5485 = vpop.f32.mrb[0].mxu0
    %v5486 = vadd.f32 0.0, %v5485
    %v5487 = vpop.f32.mrb[0].mxu0
    %v5488 = vadd.f32 0.0, %v5487
    %5489 = vdwg.mxu0
    %5490 = vmatprep.subr.mxu0 %v5399
    %5491 = vmatpush1.msra.mxu0 %v5396
    %5492 = vmatprep.subr.mxu0 0.0
    %5493 = vmatpush1.msra.mxu0 0.0
    %5494 = vmatprep.subr.mxu0 0.0
    %5495 = vmatpush1.msra.mxu0 0.0
    %5496 = vmatprep.subr.mxu0 0.0
    %5497 = vmatpush1.msra.mxu0 0.0
    %5498 = vmatprep.subr.mxu0 0.0
    %5499 = vmatpush1.msra.mxu0 0.0
    %5500 = vmatprep.subr.mxu0 0.0
    %5501 = vmatpush1.msra.mxu0 0.0
    %5502 = vmatprep.subr.mxu0 0.0
    %5503 = vmatpush1.msra.mxu0 0.0
    %5504 = vmatprep.subr.mxu0 0.0
    %5505 = vmatpush1.msra.mxu0 0.0
    %5506 = vmatprep.subr.mxu0 0.0
    %5507 = vmatpush1.msra.mxu0 0.0
    %5508 = vmatprep.subr.mxu0 0.0
    %5509 = vmatpush1.msra.mxu0 0.0
    %5510 = vmatprep.subr.mxu0 0.0
    %5511 = vmatpush1.msra.mxu0 0.0
    %5512 = vmatprep.subr.mxu0 0.0
    %5513 = vmatpush1.msra.mxu0 0.0
    %5514 = vmatprep.subr.mxu0 0.0
    %5515 = vmatpush1.msra.mxu0 0.0
    %5516 = vmatprep.subr.mxu0 0.0
    %5517 = vmatpush1.msra.mxu0 0.0
    %5518 = vmatprep.subr.mxu0 0.0
    %5519 = vmatpush1.msra.mxu0 0.0
    %5520 = vmatprep.subr.mxu0 0.0
    %5521 = vmatpush1.msra.mxu0 0.0
    %5522 = vmatprep.subr.mxu0 0.0
    %5523 = vmatpush1.msra.mxu0 0.0
    %5524 = vmatprep.subr.mxu0 0.0
    %5525 = vmatpush1.msra.mxu0 0.0
    %5526 = vmatprep.subr.mxu0 0.0
    %5527 = vmatpush1.msra.mxu0 0.0
    %5528 = vmatprep.subr.mxu0 0.0
    %5529 = vmatpush1.msra.mxu0 0.0
    %5530 = vmatprep.subr.mxu0 0.0
    %5531 = vmatpush1.msra.mxu0 0.0
    %5532 = vmatprep.subr.mxu0 0.0
    %5533 = vmatpush1.msra.mxu0 0.0
    %5534 = vmatprep.subr.mxu0 0.0
    %5535 = vmatpush1.msra.mxu0 0.0
    %5536 = vmatprep.subr.mxu0 0.0
    %5537 = vmatpush1.msra.mxu0 0.0
    %5538 = vmatprep.subr.mxu0 0.0
    %5539 = vmatpush1.msra.mxu0 0.0
    %5540 = vmatprep.subr.mxu0 0.0
    %5541 = vmatpush1.msra.mxu0 0.0
    %5542 = vmatprep.subr.mxu0 0.0
    %5543 = vmatpush1.msra.mxu0 0.0
    %5544 = vmatprep.subr.mxu0 0.0
    %5545 = vmatpush1.msra.mxu0 0.0
    %5546 = vmatprep.subr.mxu0 0.0
    %5547 = vmatpush1.msra.mxu0 0.0
    %5548 = vmatprep.subr.mxu0 0.0
    %5549 = vmatpush1.msra.mxu0 0.0
    %5550 = vmatprep.subr.mxu0 0.0
    %5551 = vmatpush1.msra.mxu0 0.0
    %5552 = vmatprep.subr.mxu0 0.0
    %5553 = vmatpush1.msra.mxu0 0.0
    %5554 = vmatprep.mubr.f32.mxu0 0.0
    %5555 = vmatmul.mubr.f32.gmra.mrb[0].mxu0 %v1465
    %v5556 = vpop.f32.mrb[0].mxu0
    %v5557 = vadd.f32 0.0, %v5556
    %v5558 = vpop.f32.mrb[0].mxu0
    %v5559 = vadd.f32 0.0, %v5558
    %5560 = vmatprep.mubr.f32.mxu0 0.0
    %5561 = vmatmul.mubr.f32.gmra.mrb[0].mxu0 %v1468
    %v5562 = vpop.f32.mrb[0].mxu0
    %v5563 = vadd.f32 0.0, %v5562
    %v5564 = vpop.f32.mrb[0].mxu0
    %v5565 = vadd.f32 0.0, %v5564
    %5566 = vmatprep.mubr.f32.mxu0 0.0
    %5567 = vmatmul.mubr.f32.gmra.mrb[0].mxu0 %v1471
    %v5568 = vpop.f32.mrb[0].mxu0
    %v5569 = vadd.f32 0.0, %v5568
    %v5570 = vpop.f32.mrb[0].mxu0
    %v5571 = vadd.f32 0.0, %v5570
    %5572 = vmatprep.mubr.f32.mxu0 0.0
    %5573 = vmatmul.mubr.f32.gmra.mrb[0].mxu0 %v1474
    %v5574 = vpop.f32.mrb[0].mxu0
    %v5575 = vadd.f32 0.0, %v5574
    %v5576 = vpop.f32.mrb[0].mxu0
    %v5577 = vadd.f32 0.0, %v5576
    %5578 = vdwg.mxu0
    %v5579 = vadd.f32 %v5357, %v5468
    %v5580 = vadd.f32 %v5358, %v5470
    %v5581 = vadd.f32 %v5359, %v5557
    %v5582 = vadd.f32 %v5360, %v5559
    %v5583 = vadd.f32 %v5361, %v5474
    %v5584 = vadd.f32 %v5362, %v5476
    %v5585 = vadd.f32 %v5363, %v5563
    %v5586 = vadd.f32 %v5364, %v5565
    %v5587 = vadd.f32 %v5365, %v5480
    %v5588 = vadd.f32 %v5366, %v5482
    %v5589 = vadd.f32 %v5367, %v5569
    %v5590 = vadd.f32 %v5368, %v5571
    %v5591 = vadd.f32 %v5369, %v5486
    %v5592 = vadd.f32 %v5370, %v5488
    %v5593 = vadd.f32 %v5371, %v5575
    %v5594 = vadd.f32 %v5372, %v5577
    %5595 = vrot.lane.b32.xlu0 %v4275, 113
    %v5596 = vpop.permute.xlu0 %5595
    %5597 = vrot.lane.b32.xlu0 %v4279, 113
    %v5598 = vpop.permute.xlu0 %5597
    %5599 = vrot.lane.b32.xlu0 %v4276, 113
    %v5600 = vpop.permute.xlu0 %5599
    %5601 = vrot.lane.b32.xlu0 %v4280, 113
    %v5602 = vpop.permute.xlu0 %5601
    %v5603 = vsel %vm1690, %v5600, %v5602
    %v5604 = vsel %vm1690, %v5598, %v5600
    %v5605 = vsel %vm1690, %v5596, %v5598
    %v5606 = vsel %vm1690, %v5602, %v5596
    %v5607 = vmul.f32 %v5605, %v236
    %v5608 = vmul.f32 %v5604, %v240
    %v5609 = vmul.f32 %v5603, %v244
    %v5610 = vmul.f32 %v5606, %v248
    %v5612 = vsel %vm321, %v5607, 0
    %v5615 = vsel %vm321, %v5608, 0
    %v5618 = vsel %vm321, %v5609, 0
    %v5621 = vsel %vm321, %v5610, 0
    %5623 = vmatprep.subr.mxu0 %v5615
    %5624 = vmatpush1.msra.mxu0 %v5612
    %5625 = vmatprep.subr.mxu0 0.0
    %5626 = vmatpush1.msra.mxu0 0.0
    %5627 = vmatprep.subr.mxu0 0.0
    %5628 = vmatpush1.msra.mxu0 0.0
    %5629 = vmatprep.subr.mxu0 0.0
    %5630 = vmatpush1.msra.mxu0 0.0
    %5631 = vmatprep.subr.mxu0 0.0
    %5632 = vmatpush1.msra.mxu0 0.0
    %5633 = vmatprep.subr.mxu0 0.0
    %5634 = vmatpush1.msra.mxu0 0.0
    %5635 = vmatprep.subr.mxu0 0.0
    %5636 = vmatpush1.msra.mxu0 0.0
    %5637 = vmatprep.subr.mxu0 0.0
    %5638 = vmatpush1.msra.mxu0 0.0
    %5639 = vmatprep.subr.mxu0 0.0
    %5640 = vmatpush1.msra.mxu0 0.0
    %5641 = vmatprep.subr.mxu0 0.0
    %5642 = vmatpush1.msra.mxu0 0.0
    %5643 = vmatprep.subr.mxu0 0.0
    %5644 = vmatpush1.msra.mxu0 0.0
    %5645 = vmatprep.subr.mxu0 0.0
    %5646 = vmatpush1.msra.mxu0 0.0
    %5647 = vmatprep.subr.mxu0 0.0
    %5648 = vmatpush1.msra.mxu0 0.0
    %5649 = vmatprep.subr.mxu0 0.0
    %5650 = vmatpush1.msra.mxu0 0.0
    %5651 = vmatprep.subr.mxu0 0.0
    %5652 = vmatpush1.msra.mxu0 0.0
    %5653 = vmatprep.subr.mxu0 0.0
    %5654 = vmatpush1.msra.mxu0 0.0
    %5655 = vmatprep.subr.mxu0 0.0
    %5656 = vmatpush1.msra.mxu0 0.0
    %5657 = vmatprep.subr.mxu0 0.0
    %5658 = vmatpush1.msra.mxu0 0.0
    %5659 = vmatprep.subr.mxu0 0.0
    %5660 = vmatpush1.msra.mxu0 0.0
    %5661 = vmatprep.subr.mxu0 0.0
    %5662 = vmatpush1.msra.mxu0 0.0
    %5663 = vmatprep.subr.mxu0 0.0
    %5664 = vmatpush1.msra.mxu0 0.0
    %5665 = vmatprep.subr.mxu0 0.0
    %5666 = vmatpush1.msra.mxu0 0.0
    %5667 = vmatprep.subr.mxu0 0.0
    %5668 = vmatpush1.msra.mxu0 0.0
    %5669 = vmatprep.subr.mxu0 0.0
    %5670 = vmatpush1.msra.mxu0 0.0
    %5671 = vmatprep.subr.mxu0 0.0
    %5672 = vmatpush1.msra.mxu0 0.0
    %5673 = vmatprep.subr.mxu0 0.0
    %5674 = vmatpush1.msra.mxu0 0.0
    %5675 = vmatprep.subr.mxu0 0.0
    %5676 = vmatpush1.msra.mxu0 0.0
    %5677 = vmatprep.subr.mxu0 0.0
    %5678 = vmatpush1.msra.mxu0 0.0
    %5679 = vmatprep.subr.mxu0 0.0
    %5680 = vmatpush1.msra.mxu0 0.0
    %5681 = vmatprep.subr.mxu0 0.0
    %5682 = vmatpush1.msra.mxu0 0.0
    %5683 = vmatprep.subr.mxu0 0.0
    %5684 = vmatpush1.msra.mxu0 0.0
    %5685 = vmatprep.subr.mxu0 0.0
    %5686 = vmatpush1.msra.mxu0 0.0
    %5687 = vmatprep.mubr.f32.mxu0 0.0
    %5688 = vmatmul.mubr.f32.gmra.mrb[0].mxu0 %v1700
    %v5689 = vpop.f32.mrb[0].mxu0
    %v5690 = vadd.f32 0.0, %v5689
    %v5691 = vpop.f32.mrb[0].mxu0
    %v5692 = vadd.f32 0.0, %v5691
    %5693 = vmatprep.mubr.f32.mxu0 0.0
    %5694 = vmatmul.mubr.f32.gmra.mrb[0].mxu0 %v1703
    %v5695 = vpop.f32.mrb[0].mxu0
    %v5696 = vadd.f32 0.0, %v5695
    %v5697 = vpop.f32.mrb[0].mxu0
    %v5698 = vadd.f32 0.0, %v5697
    %5699 = vmatprep.mubr.f32.mxu0 0.0
    %5700 = vmatmul.mubr.f32.gmra.mrb[0].mxu0 %v1706
    %v5701 = vpop.f32.mrb[0].mxu0
    %v5702 = vadd.f32 0.0, %v5701
    %v5703 = vpop.f32.mrb[0].mxu0
    %v5704 = vadd.f32 0.0, %v5703
    %5705 = vmatprep.mubr.f32.mxu0 0.0
    %5706 = vmatmul.mubr.f32.gmra.mrb[0].mxu0 %v1709
    %v5707 = vpop.f32.mrb[0].mxu0
    %v5708 = vadd.f32 0.0, %v5707
    %v5709 = vpop.f32.mrb[0].mxu0
    %v5710 = vadd.f32 0.0, %v5709
    %5711 = vdwg.mxu0
    %5712 = vmatprep.subr.mxu0 %v5621
    %5713 = vmatpush1.msra.mxu0 %v5618
    %5714 = vmatprep.subr.mxu0 0.0
    %5715 = vmatpush1.msra.mxu0 0.0
    %5716 = vmatprep.subr.mxu0 0.0
    %5717 = vmatpush1.msra.mxu0 0.0
    %5718 = vmatprep.subr.mxu0 0.0
    %5719 = vmatpush1.msra.mxu0 0.0
    %5720 = vmatprep.subr.mxu0 0.0
    %5721 = vmatpush1.msra.mxu0 0.0
    %5722 = vmatprep.subr.mxu0 0.0
    %5723 = vmatpush1.msra.mxu0 0.0
    %5724 = vmatprep.subr.mxu0 0.0
    %5725 = vmatpush1.msra.mxu0 0.0
    %5726 = vmatprep.subr.mxu0 0.0
    %5727 = vmatpush1.msra.mxu0 0.0
    %5728 = vmatprep.subr.mxu0 0.0
    %5729 = vmatpush1.msra.mxu0 0.0
    %5730 = vmatprep.subr.mxu0 0.0
    %5731 = vmatpush1.msra.mxu0 0.0
    %5732 = vmatprep.subr.mxu0 0.0
    %5733 = vmatpush1.msra.mxu0 0.0
    %5734 = vmatprep.subr.mxu0 0.0
    %5735 = vmatpush1.msra.mxu0 0.0
    %5736 = vmatprep.subr.mxu0 0.0
    %5737 = vmatpush1.msra.mxu0 0.0
    %5738 = vmatprep.subr.mxu0 0.0
    %5739 = vmatpush1.msra.mxu0 0.0
    %5740 = vmatprep.subr.mxu0 0.0
    %5741 = vmatpush1.msra.mxu0 0.0
    %5742 = vmatprep.subr.mxu0 0.0
    %5743 = vmatpush1.msra.mxu0 0.0
    %5744 = vmatprep.subr.mxu0 0.0
    %5745 = vmatpush1.msra.mxu0 0.0
    %5746 = vmatprep.subr.mxu0 0.0
    %5747 = vmatpush1.msra.mxu0 0.0
    %5748 = vmatprep.subr.mxu0 0.0
    %5749 = vmatpush1.msra.mxu0 0.0
    %5750 = vmatprep.subr.mxu0 0.0
    %5751 = vmatpush1.msra.mxu0 0.0
    %5752 = vmatprep.subr.mxu0 0.0
    %5753 = vmatpush1.msra.mxu0 0.0
    %5754 = vmatprep.subr.mxu0 0.0
    %5755 = vmatpush1.msra.mxu0 0.0
    %5756 = vmatprep.subr.mxu0 0.0
    %5757 = vmatpush1.msra.mxu0 0.0
    %5758 = vmatprep.subr.mxu0 0.0
    %5759 = vmatpush1.msra.mxu0 0.0
    %5760 = vmatprep.subr.mxu0 0.0
    %5761 = vmatpush1.msra.mxu0 0.0
    %5762 = vmatprep.subr.mxu0 0.0
    %5763 = vmatpush1.msra.mxu0 0.0
    %5764 = vmatprep.subr.mxu0 0.0
    %5765 = vmatpush1.msra.mxu0 0.0
    %5766 = vmatprep.subr.mxu0 0.0
    %5767 = vmatpush1.msra.mxu0 0.0
    %5768 = vmatprep.subr.mxu0 0.0
    %5769 = vmatpush1.msra.mxu0 0.0
    %5770 = vmatprep.subr.mxu0 0.0
    %5771 = vmatpush1.msra.mxu0 0.0
    %5772 = vmatprep.subr.mxu0 0.0
    %5773 = vmatpush1.msra.mxu0 0.0
    %5774 = vmatprep.subr.mxu0 0.0
    %5775 = vmatpush1.msra.mxu0 0.0
    %5776 = vmatprep.mubr.f32.mxu0 0.0
    %5777 = vmatmul.mubr.f32.gmra.mrb[0].mxu0 %v1700
    %v5778 = vpop.f32.mrb[0].mxu0
    %v5779 = vadd.f32 0.0, %v5778
    %v5780 = vpop.f32.mrb[0].mxu0
    %v5781 = vadd.f32 0.0, %v5780
    %5782 = vmatprep.mubr.f32.mxu0 0.0
    %5783 = vmatmul.mubr.f32.gmra.mrb[0].mxu0 %v1703
    %v5784 = vpop.f32.mrb[0].mxu0
    %v5785 = vadd.f32 0.0, %v5784
    %v5786 = vpop.f32.mrb[0].mxu0
    %v5787 = vadd.f32 0.0, %v5786
    %5788 = vmatprep.mubr.f32.mxu0 0.0
    %5789 = vmatmul.mubr.f32.gmra.mrb[0].mxu0 %v1706
    %v5790 = vpop.f32.mrb[0].mxu0
    %v5791 = vadd.f32 0.0, %v5790
    %v5792 = vpop.f32.mrb[0].mxu0
    %v5793 = vadd.f32 0.0, %v5792
    %5794 = vmatprep.mubr.f32.mxu0 0.0
    %5795 = vmatmul.mubr.f32.gmra.mrb[0].mxu0 %v1709
    %v5796 = vpop.f32.mrb[0].mxu0
    %v5797 = vadd.f32 0.0, %v5796
    %v5798 = vpop.f32.mrb[0].mxu0
    %v5799 = vadd.f32 0.0, %v5798
    %5800 = vdwg.mxu0
    %v5801 = vadd.f32 %v5579, %v5690
    %v5802 = vadd.f32 %v5580, %v5692
    %v5803 = vadd.f32 %v5581, %v5779
    %v5804 = vadd.f32 %v5582, %v5781
    %v5805 = vadd.f32 %v5583, %v5696
    %v5806 = vadd.f32 %v5584, %v5698
    %v5807 = vadd.f32 %v5585, %v5785
    %v5808 = vadd.f32 %v5586, %v5787
    %v5809 = vadd.f32 %v5587, %v5702
    %v5810 = vadd.f32 %v5588, %v5704
    %v5811 = vadd.f32 %v5589, %v5791
    %v5812 = vadd.f32 %v5590, %v5793
    %v5813 = vadd.f32 %v5591, %v5708
    %v5814 = vadd.f32 %v5592, %v5710
    %v5815 = vadd.f32 %v5593, %v5797
    %v5816 = vadd.f32 %v5594, %v5799
    %5817 = vrot.lane.b32.xlu0 %v4275, 112
    %v5818 = vpop.permute.xlu0 %5817
    %5819 = vrot.lane.b32.xlu0 %v4279, 112
    %v5820 = vpop.permute.xlu0 %5819
    %5821 = vrot.lane.b32.xlu0 %v4276, 112
    %v5822 = vpop.permute.xlu0 %5821
    %5823 = vrot.lane.b32.xlu0 %v4280, 112
    %v5824 = vpop.permute.xlu0 %5823
    %v5825 = vsel %vm1925, %v5822, %v5824
    %v5826 = vsel %vm1925, %v5820, %v5822
    %v5827 = vsel %vm1925, %v5818, %v5820
    %v5828 = vsel %vm1925, %v5824, %v5818
    %v5829 = vmul.f32 %v5827, %v252
    %v5830 = vmul.f32 %v5826, %v256
    %v5831 = vmul.f32 %v5825, %v260
    %v5832 = vmul.f32 %v5828, %v264
    %v5834 = vsel %vm321, %v5829, 0
    %v5837 = vsel %vm321, %v5830, 0
    %v5840 = vsel %vm321, %v5831, 0
    %v5843 = vsel %vm321, %v5832, 0
    %5845 = vmatprep.subr.mxu0 %v5837
    %5846 = vmatpush1.msra.mxu0 %v5834
    %5847 = vmatprep.subr.mxu0 0.0
    %5848 = vmatpush1.msra.mxu0 0.0
    %5849 = vmatprep.subr.mxu0 0.0
    %5850 = vmatpush1.msra.mxu0 0.0
    %5851 = vmatprep.subr.mxu0 0.0
    %5852 = vmatpush1.msra.mxu0 0.0
    %5853 = vmatprep.subr.mxu0 0.0
    %5854 = vmatpush1.msra.mxu0 0.0
    %5855 = vmatprep.subr.mxu0 0.0
    %5856 = vmatpush1.msra.mxu0 0.0
    %5857 = vmatprep.subr.mxu0 0.0
    %5858 = vmatpush1.msra.mxu0 0.0
    %5859 = vmatprep.subr.mxu0 0.0
    %5860 = vmatpush1.msra.mxu0 0.0
    %5861 = vmatprep.subr.mxu0 0.0
    %5862 = vmatpush1.msra.mxu0 0.0
    %5863 = vmatprep.subr.mxu0 0.0
    %5864 = vmatpush1.msra.mxu0 0.0
    %5865 = vmatprep.subr.mxu0 0.0
    %5866 = vmatpush1.msra.mxu0 0.0
    %5867 = vmatprep.subr.mxu0 0.0
    %5868 = vmatpush1.msra.mxu0 0.0
    %5869 = vmatprep.subr.mxu0 0.0
    %5870 = vmatpush1.msra.mxu0 0.0
    %5871 = vmatprep.subr.mxu0 0.0
    %5872 = vmatpush1.msra.mxu0 0.0
    %5873 = vmatprep.subr.mxu0 0.0
    %5874 = vmatpush1.msra.mxu0 0.0
    %5875 = vmatprep.subr.mxu0 0.0
    %5876 = vmatpush1.msra.mxu0 0.0
    %5877 = vmatprep.subr.mxu0 0.0
    %5878 = vmatpush1.msra.mxu0 0.0
    %5879 = vmatprep.subr.mxu0 0.0
    %5880 = vmatpush1.msra.mxu0 0.0
    %5881 = vmatprep.subr.mxu0 0.0
    %5882 = vmatpush1.msra.mxu0 0.0
    %5883 = vmatprep.subr.mxu0 0.0
    %5884 = vmatpush1.msra.mxu0 0.0
    %5885 = vmatprep.subr.mxu0 0.0
    %5886 = vmatpush1.msra.mxu0 0.0
    %5887 = vmatprep.subr.mxu0 0.0
    %5888 = vmatpush1.msra.mxu0 0.0
    %5889 = vmatprep.subr.mxu0 0.0
    %5890 = vmatpush1.msra.mxu0 0.0
    %5891 = vmatprep.subr.mxu0 0.0
    %5892 = vmatpush1.msra.mxu0 0.0
    %5893 = vmatprep.subr.mxu0 0.0
    %5894 = vmatpush1.msra.mxu0 0.0
    %5895 = vmatprep.subr.mxu0 0.0
    %5896 = vmatpush1.msra.mxu0 0.0
    %5897 = vmatprep.subr.mxu0 0.0
    %5898 = vmatpush1.msra.mxu0 0.0
    %5899 = vmatprep.subr.mxu0 0.0
    %5900 = vmatpush1.msra.mxu0 0.0
    %5901 = vmatprep.subr.mxu0 0.0
    %5902 = vmatpush1.msra.mxu0 0.0
    %5903 = vmatprep.subr.mxu0 0.0
    %5904 = vmatpush1.msra.mxu0 0.0
    %5905 = vmatprep.subr.mxu0 0.0
    %5906 = vmatpush1.msra.mxu0 0.0
    %5907 = vmatprep.subr.mxu0 0.0
    %5908 = vmatpush1.msra.mxu0 0.0
    %5909 = vmatprep.mubr.f32.mxu0 0.0
    %5910 = vmatmul.mubr.f32.gmra.mrb[0].mxu0 %v1935
    %v5911 = vpop.f32.mrb[0].mxu0
    %v5912 = vadd.f32 0.0, %v5911
    %v5913 = vpop.f32.mrb[0].mxu0
    %v5914 = vadd.f32 0.0, %v5913
    %5915 = vmatprep.mubr.f32.mxu0 0.0
    %5916 = vmatmul.mubr.f32.gmra.mrb[0].mxu0 %v1938
    %v5917 = vpop.f32.mrb[0].mxu0
    %v5918 = vadd.f32 0.0, %v5917
    %v5919 = vpop.f32.mrb[0].mxu0
    %v5920 = vadd.f32 0.0, %v5919
    %5921 = vmatprep.mubr.f32.mxu0 0.0
    %5922 = vmatmul.mubr.f32.gmra.mrb[0].mxu0 %v1941
    %v5923 = vpop.f32.mrb[0].mxu0
    %v5924 = vadd.f32 0.0, %v5923
    %v5925 = vpop.f32.mrb[0].mxu0
    %v5926 = vadd.f32 0.0, %v5925
    %5927 = vmatprep.mubr.f32.mxu0 0.0
    %5928 = vmatmul.mubr.f32.gmra.mrb[0].mxu0 %v1944
    %v5929 = vpop.f32.mrb[0].mxu0
    %v5930 = vadd.f32 0.0, %v5929
    %v5931 = vpop.f32.mrb[0].mxu0
    %v5932 = vadd.f32 0.0, %v5931
    %5933 = vdwg.mxu0
    %5934 = vmatprep.subr.mxu0 %v5843
    %5935 = vmatpush1.msra.mxu0 %v5840
    %5936 = vmatprep.subr.mxu0 0.0
    %5937 = vmatpush1.msra.mxu0 0.0
    %5938 = vmatprep.subr.mxu0 0.0
    %5939 = vmatpush1.msra.mxu0 0.0
    %5940 = vmatprep.subr.mxu0 0.0
    %5941 = vmatpush1.msra.mxu0 0.0
    %5942 = vmatprep.subr.mxu0 0.0
    %5943 = vmatpush1.msra.mxu0 0.0
    %5944 = vmatprep.subr.mxu0 0.0
    %5945 = vmatpush1.msra.mxu0 0.0
    %5946 = vmatprep.subr.mxu0 0.0
    %5947 = vmatpush1.msra.mxu0 0.0
    %5948 = vmatprep.subr.mxu0 0.0
    %5949 = vmatpush1.msra.mxu0 0.0
    %5950 = vmatprep.subr.mxu0 0.0
    %5951 = vmatpush1.msra.mxu0 0.0
    %5952 = vmatprep.subr.mxu0 0.0
    %5953 = vmatpush1.msra.mxu0 0.0
    %5954 = vmatprep.subr.mxu0 0.0
    %5955 = vmatpush1.msra.mxu0 0.0
    %5956 = vmatprep.subr.mxu0 0.0
    %5957 = vmatpush1.msra.mxu0 0.0
    %5958 = vmatprep.subr.mxu0 0.0
    %5959 = vmatpush1.msra.mxu0 0.0
    %5960 = vmatprep.subr.mxu0 0.0
    %5961 = vmatpush1.msra.mxu0 0.0
    %5962 = vmatprep.subr.mxu0 0.0
    %5963 = vmatpush1.msra.mxu0 0.0
    %5964 = vmatprep.subr.mxu0 0.0
    %5965 = vmatpush1.msra.mxu0 0.0
    %5966 = vmatprep.subr.mxu0 0.0
    %5967 = vmatpush1.msra.mxu0 0.0
    %5968 = vmatprep.subr.mxu0 0.0
    %5969 = vmatpush1.msra.mxu0 0.0
    %5970 = vmatprep.subr.mxu0 0.0
    %5971 = vmatpush1.msra.mxu0 0.0
    %5972 = vmatprep.subr.mxu0 0.0
    %5973 = vmatpush1.msra.mxu0 0.0
    %5974 = vmatprep.subr.mxu0 0.0
    %5975 = vmatpush1.msra.mxu0 0.0
    %5976 = vmatprep.subr.mxu0 0.0
    %5977 = vmatpush1.msra.mxu0 0.0
    %5978 = vmatprep.subr.mxu0 0.0
    %5979 = vmatpush1.msra.mxu0 0.0
    %5980 = vmatprep.subr.mxu0 0.0
    %5981 = vmatpush1.msra.mxu0 0.0
    %5982 = vmatprep.subr.mxu0 0.0
    %5983 = vmatpush1.msra.mxu0 0.0
    %5984 = vmatprep.subr.mxu0 0.0
    %5985 = vmatpush1.msra.mxu0 0.0
    %5986 = vmatprep.subr.mxu0 0.0
    %5987 = vmatpush1.msra.mxu0 0.0
    %5988 = vmatprep.subr.mxu0 0.0
    %5989 = vmatpush1.msra.mxu0 0.0
    %5990 = vmatprep.subr.mxu0 0.0
    %5991 = vmatpush1.msra.mxu0 0.0
    %5992 = vmatprep.subr.mxu0 0.0
    %5993 = vmatpush1.msra.mxu0 0.0
    %5994 = vmatprep.subr.mxu0 0.0
    %5995 = vmatpush1.msra.mxu0 0.0
    %5996 = vmatprep.subr.mxu0 0.0
    %5997 = vmatpush1.msra.mxu0 0.0
    %5998 = vmatprep.mubr.f32.mxu0 0.0
    %5999 = vmatmul.mubr.f32.gmra.mrb[0].mxu0 %v1935
    %v6000 = vpop.f32.mrb[0].mxu0
    %v6001 = vadd.f32 0.0, %v6000
    %v6002 = vpop.f32.mrb[0].mxu0
    %v6003 = vadd.f32 0.0, %v6002
    %6004 = vmatprep.mubr.f32.mxu0 0.0
    %6005 = vmatmul.mubr.f32.gmra.mrb[0].mxu0 %v1938
    %v6006 = vpop.f32.mrb[0].mxu0
    %v6007 = vadd.f32 0.0, %v6006
    %v6008 = vpop.f32.mrb[0].mxu0
    %v6009 = vadd.f32 0.0, %v6008
    %6010 = vmatprep.mubr.f32.mxu0 0.0
    %6011 = vmatmul.mubr.f32.gmra.mrb[0].mxu0 %v1941
    %v6012 = vpop.f32.mrb[0].mxu0
    %v6013 = vadd.f32 0.0, %v6012
    %v6014 = vpop.f32.mrb[0].mxu0
    %v6015 = vadd.f32 0.0, %v6014
    %6016 = vmatprep.mubr.f32.mxu0 0.0
    %6017 = vmatmul.mubr.f32.gmra.mrb[0].mxu0 %v1944
    %v6018 = vpop.f32.mrb[0].mxu0
    %v6019 = vadd.f32 0.0, %v6018
    %v6020 = vpop.f32.mrb[0].mxu0
    %v6021 = vadd.f32 0.0, %v6020
    %6022 = vdwg.mxu0
    %v6023 = vadd.f32 %v5801, %v5912
    %v6024 = vadd.f32 %v5802, %v5914
    %v6025 = vadd.f32 %v5803, %v6001
    %v6026 = vadd.f32 %v5804, %v6003
    %v6027 = vadd.f32 %v5805, %v5918
    %v6028 = vadd.f32 %v5806, %v5920
    %v6029 = vadd.f32 %v5807, %v6007
    %v6030 = vadd.f32 %v5808, %v6009
    %v6031 = vadd.f32 %v5809, %v5924
    %v6032 = vadd.f32 %v5810, %v5926
    %v6033 = vadd.f32 %v5811, %v6013
    %v6034 = vadd.f32 %v5812, %v6015
    %v6035 = vadd.f32 %v5813, %v5930
    %v6036 = vadd.f32 %v5814, %v5932
    %v6037 = vadd.f32 %v5815, %v6019
    %v6038 = vadd.f32 %v5816, %v6021
    %6039 = vrot.lane.b32.xlu0 %v4275, 111
    %v6040 = vpop.permute.xlu0 %6039
    %6041 = vrot.lane.b32.xlu0 %v4279, 111
    %v6042 = vpop.permute.xlu0 %6041
    %6043 = vrot.lane.b32.xlu0 %v4276, 111
    %v6044 = vpop.permute.xlu0 %6043
    %6045 = vrot.lane.b32.xlu0 %v4280, 111
    %v6046 = vpop.permute.xlu0 %6045
    %v6047 = vsel %vm2160, %v6044, %v6046
    %v6048 = vsel %vm2160, %v6042, %v6044
    %v6049 = vsel %vm2160, %v6040, %v6042
    %v6050 = vsel %vm2160, %v6046, %v6040
    %v6051 = vmul.f32 %v6049, %v268
    %v6052 = vmul.f32 %v6048, %v272
    %v6053 = vmul.f32 %v6047, %v276
    %v6054 = vmul.f32 %v6050, %v280
    %v6056 = vsel %vm321, %v6051, 0
    %v6059 = vsel %vm321, %v6052, 0
    %v6062 = vsel %vm321, %v6053, 0
    %v6065 = vsel %vm321, %v6054, 0
    %6067 = vmatprep.subr.mxu0 %v6059
    %6068 = vmatpush1.msra.mxu0 %v6056
    %6069 = vmatprep.subr.mxu0 0.0
    %6070 = vmatpush1.msra.mxu0 0.0
    %6071 = vmatprep.subr.mxu0 0.0
    %6072 = vmatpush1.msra.mxu0 0.0
    %6073 = vmatprep.subr.mxu0 0.0
    %6074 = vmatpush1.msra.mxu0 0.0
    %6075 = vmatprep.subr.mxu0 0.0
    %6076 = vmatpush1.msra.mxu0 0.0
    %6077 = vmatprep.subr.mxu0 0.0
    %6078 = vmatpush1.msra.mxu0 0.0
    %6079 = vmatprep.subr.mxu0 0.0
    %6080 = vmatpush1.msra.mxu0 0.0
    %6081 = vmatprep.subr.mxu0 0.0
    %6082 = vmatpush1.msra.mxu0 0.0
    %6083 = vmatprep.subr.mxu0 0.0
    %6084 = vmatpush1.msra.mxu0 0.0
    %6085 = vmatprep.subr.mxu0 0.0
    %6086 = vmatpush1.msra.mxu0 0.0
    %6087 = vmatprep.subr.mxu0 0.0
    %6088 = vmatpush1.msra.mxu0 0.0
    %6089 = vmatprep.subr.mxu0 0.0
    %6090 = vmatpush1.msra.mxu0 0.0
    %6091 = vmatprep.subr.mxu0 0.0
    %6092 = vmatpush1.msra.mxu0 0.0
    %6093 = vmatprep.subr.mxu0 0.0
    %6094 = vmatpush1.msra.mxu0 0.0
    %6095 = vmatprep.subr.mxu0 0.0
    %6096 = vmatpush1.msra.mxu0 0.0
    %6097 = vmatprep.subr.mxu0 0.0
    %6098 = vmatpush1.msra.mxu0 0.0
    %6099 = vmatprep.subr.mxu0 0.0
    %6100 = vmatpush1.msra.mxu0 0.0
    %6101 = vmatprep.subr.mxu0 0.0
    %6102 = vmatpush1.msra.mxu0 0.0
    %6103 = vmatprep.subr.mxu0 0.0
    %6104 = vmatpush1.msra.mxu0 0.0
    %6105 = vmatprep.subr.mxu0 0.0
    %6106 = vmatpush1.msra.mxu0 0.0
    %6107 = vmatprep.subr.mxu0 0.0
    %6108 = vmatpush1.msra.mxu0 0.0
    %6109 = vmatprep.subr.mxu0 0.0
    %6110 = vmatpush1.msra.mxu0 0.0
    %6111 = vmatprep.subr.mxu0 0.0
    %6112 = vmatpush1.msra.mxu0 0.0
    %6113 = vmatprep.subr.mxu0 0.0
    %6114 = vmatpush1.msra.mxu0 0.0
    %6115 = vmatprep.subr.mxu0 0.0
    %6116 = vmatpush1.msra.mxu0 0.0
    %6117 = vmatprep.subr.mxu0 0.0
    %6118 = vmatpush1.msra.mxu0 0.0
    %6119 = vmatprep.subr.mxu0 0.0
    %6120 = vmatpush1.msra.mxu0 0.0
    %6121 = vmatprep.subr.mxu0 0.0
    %6122 = vmatpush1.msra.mxu0 0.0
    %6123 = vmatprep.subr.mxu0 0.0
    %6124 = vmatpush1.msra.mxu0 0.0
    %6125 = vmatprep.subr.mxu0 0.0
    %6126 = vmatpush1.msra.mxu0 0.0
    %6127 = vmatprep.subr.mxu0 0.0
    %6128 = vmatpush1.msra.mxu0 0.0
    %6129 = vmatprep.subr.mxu0 0.0
    %6130 = vmatpush1.msra.mxu0 0.0
    %6131 = vmatprep.mubr.f32.mxu0 0.0
    %6132 = vmatmul.mubr.f32.gmra.mrb[0].mxu0 %v2170
    %v6133 = vpop.f32.mrb[0].mxu0
    %v6134 = vadd.f32 0.0, %v6133
    %v6135 = vpop.f32.mrb[0].mxu0
    %v6136 = vadd.f32 0.0, %v6135
    %6137 = vmatprep.mubr.f32.mxu0 0.0
    %6138 = vmatmul.mubr.f32.gmra.mrb[0].mxu0 %v2173
    %v6139 = vpop.f32.mrb[0].mxu0
    %v6140 = vadd.f32 0.0, %v6139
    %v6141 = vpop.f32.mrb[0].mxu0
    %v6142 = vadd.f32 0.0, %v6141
    %6143 = vmatprep.mubr.f32.mxu0 0.0
    %6144 = vmatmul.mubr.f32.gmra.mrb[0].mxu0 %v2176
    %v6145 = vpop.f32.mrb[0].mxu0
    %v6146 = vadd.f32 0.0, %v6145
    %v6147 = vpop.f32.mrb[0].mxu0
    %v6148 = vadd.f32 0.0, %v6147
    %6149 = vmatprep.mubr.f32.mxu0 0.0
    %6150 = vmatmul.mubr.f32.gmra.mrb[0].mxu0 %v2179
    %v6151 = vpop.f32.mrb[0].mxu0
    %v6152 = vadd.f32 0.0, %v6151
    %v6153 = vpop.f32.mrb[0].mxu0
    %v6154 = vadd.f32 0.0, %v6153
    %6155 = vdwg.mxu0
    %6156 = vmatprep.subr.mxu0 %v6065
    %6157 = vmatpush1.msra.mxu0 %v6062
    %6158 = vmatprep.subr.mxu0 0.0
    %6159 = vmatpush1.msra.mxu0 0.0
    %6160 = vmatprep.subr.mxu0 0.0
    %6161 = vmatpush1.msra.mxu0 0.0
    %6162 = vmatprep.subr.mxu0 0.0
    %6163 = vmatpush1.msra.mxu0 0.0
    %6164 = vmatprep.subr.mxu0 0.0
    %6165 = vmatpush1.msra.mxu0 0.0
    %6166 = vmatprep.subr.mxu0 0.0
    %6167 = vmatpush1.msra.mxu0 0.0
    %6168 = vmatprep.subr.mxu0 0.0
    %6169 = vmatpush1.msra.mxu0 0.0
    %6170 = vmatprep.subr.mxu0 0.0
    %6171 = vmatpush1.msra.mxu0 0.0
    %6172 = vmatprep.subr.mxu0 0.0
    %6173 = vmatpush1.msra.mxu0 0.0
    %6174 = vmatprep.subr.mxu0 0.0
    %6175 = vmatpush1.msra.mxu0 0.0
    %6176 = vmatprep.subr.mxu0 0.0
    %6177 = vmatpush1.msra.mxu0 0.0
    %6178 = vmatprep.subr.mxu0 0.0
    %6179 = vmatpush1.msra.mxu0 0.0
    %6180 = vmatprep.subr.mxu0 0.0
    %6181 = vmatpush1.msra.mxu0 0.0
    %6182 = vmatprep.subr.mxu0 0.0
    %6183 = vmatpush1.msra.mxu0 0.0
    %6184 = vmatprep.subr.mxu0 0.0
    %6185 = vmatpush1.msra.mxu0 0.0
    %6186 = vmatprep.subr.mxu0 0.0
    %6187 = vmatpush1.msra.mxu0 0.0
    %6188 = vmatprep.subr.mxu0 0.0
    %6189 = vmatpush1.msra.mxu0 0.0
    %6190 = vmatprep.subr.mxu0 0.0
    %6191 = vmatpush1.msra.mxu0 0.0
    %6192 = vmatprep.subr.mxu0 0.0
    %6193 = vmatpush1.msra.mxu0 0.0
    %6194 = vmatprep.subr.mxu0 0.0
    %6195 = vmatpush1.msra.mxu0 0.0
    %6196 = vmatprep.subr.mxu0 0.0
    %6197 = vmatpush1.msra.mxu0 0.0
    %6198 = vmatprep.subr.mxu0 0.0
    %6199 = vmatpush1.msra.mxu0 0.0
    %6200 = vmatprep.subr.mxu0 0.0
    %6201 = vmatpush1.msra.mxu0 0.0
    %6202 = vmatprep.subr.mxu0 0.0
    %6203 = vmatpush1.msra.mxu0 0.0
    %6204 = vmatprep.subr.mxu0 0.0
    %6205 = vmatpush1.msra.mxu0 0.0
    %6206 = vmatprep.subr.mxu0 0.0
    %6207 = vmatpush1.msra.mxu0 0.0
    %6208 = vmatprep.subr.mxu0 0.0
    %6209 = vmatpush1.msra.mxu0 0.0
    %6210 = vmatprep.subr.mxu0 0.0
    %6211 = vmatpush1.msra.mxu0 0.0
    %6212 = vmatprep.subr.mxu0 0.0
    %6213 = vmatpush1.msra.mxu0 0.0
    %6214 = vmatprep.subr.mxu0 0.0
    %6215 = vmatpush1.msra.mxu0 0.0
    %6216 = vmatprep.subr.mxu0 0.0
    %6217 = vmatpush1.msra.mxu0 0.0
    %6218 = vmatprep.subr.mxu0 0.0
    %6219 = vmatpush1.msra.mxu0 0.0
    %6220 = vmatprep.mubr.f32.mxu0 0.0
    %6221 = vmatmul.mubr.f32.gmra.mrb[0].mxu0 %v2170
    %v6222 = vpop.f32.mrb[0].mxu0
    %v6223 = vadd.f32 0.0, %v6222
    %v6224 = vpop.f32.mrb[0].mxu0
    %v6225 = vadd.f32 0.0, %v6224
    %6226 = vmatprep.mubr.f32.mxu0 0.0
    %6227 = vmatmul.mubr.f32.gmra.mrb[0].mxu0 %v2173
    %v6228 = vpop.f32.mrb[0].mxu0
    %v6229 = vadd.f32 0.0, %v6228
    %v6230 = vpop.f32.mrb[0].mxu0
    %v6231 = vadd.f32 0.0, %v6230
    %6232 = vmatprep.mubr.f32.mxu0 0.0
    %6233 = vmatmul.mubr.f32.gmra.mrb[0].mxu0 %v2176
    %v6234 = vpop.f32.mrb[0].mxu0
    %v6235 = vadd.f32 0.0, %v6234
    %v6236 = vpop.f32.mrb[0].mxu0
    %v6237 = vadd.f32 0.0, %v6236
    %6238 = vmatprep.mubr.f32.mxu0 0.0
    %6239 = vmatmul.mubr.f32.gmra.mrb[0].mxu0 %v2179
    %v6240 = vpop.f32.mrb[0].mxu0
    %v6241 = vadd.f32 0.0, %v6240
    %v6242 = vpop.f32.mrb[0].mxu0
    %v6243 = vadd.f32 0.0, %v6242
    %6244 = vdwg.mxu0
    %v6245 = vadd.f32 %v6023, %v6134
    %v6246 = vadd.f32 %v6024, %v6136
    %v6247 = vadd.f32 %v6025, %v6223
    %v6248 = vadd.f32 %v6026, %v6225
    %v6249 = vadd.f32 %v6027, %v6140
    %v6250 = vadd.f32 %v6028, %v6142
    %v6251 = vadd.f32 %v6029, %v6229
    %v6252 = vadd.f32 %v6030, %v6231
    %v6253 = vadd.f32 %v6031, %v6146
    %v6254 = vadd.f32 %v6032, %v6148
    %v6255 = vadd.f32 %v6033, %v6235
    %v6256 = vadd.f32 %v6034, %v6237
    %v6257 = vadd.f32 %v6035, %v6152
    %v6258 = vadd.f32 %v6036, %v6154
    %v6259 = vadd.f32 %v6037, %v6241
    %v6260 = vadd.f32 %v6038, %v6243
    %v6261 = vxor.u32 %v6245, 2147483648
    %v6262 = vxor.u32 %v6246, 2147483648
    %v6263 = vxor.u32 %v6247, 2147483648
    %v6264 = vxor.u32 %v6248, 2147483648
    %v6265 = vxor.u32 %v6249, 2147483648
    %v6266 = vxor.u32 %v6250, 2147483648
    %v6267 = vxor.u32 %v6251, 2147483648
    %v6268 = vxor.u32 %v6252, 2147483648
    %v6269 = vxor.u32 %v6253, 2147483648
    %v6270 = vxor.u32 %v6254, 2147483648
    %v6271 = vxor.u32 %v6255, 2147483648
    %v6272 = vxor.u32 %v6256, 2147483648
    %v6273 = vxor.u32 %v6257, 2147483648
    %v6274 = vxor.u32 %v6258, 2147483648
    %v6275 = vxor.u32 %v6259, 2147483648
    %v6276 = vxor.u32 %v6260, 2147483648
    %v6277 = vmul.f32 %v6261, 1.442695
    %v6278 = vpow.pop %v6277
    %v6279 = vmul.f32 %v6262, 1.442695
    %v6280 = vpow.pop %v6279
    %v6281 = vmul.f32 %v6263, 1.442695
    %v6282 = vpow.pop %v6281
    %v6283 = vmul.f32 %v6264, 1.442695
    %v6284 = vpow.pop %v6283
    %v6285 = vmul.f32 %v6265, 1.442695
    %v6286 = vpow.pop %v6285
    %v6287 = vmul.f32 %v6266, 1.442695
    %v6288 = vpow.pop %v6287
    %v6289 = vmul.f32 %v6267, 1.442695
    %v6290 = vpow.pop %v6289
    %v6291 = vmul.f32 %v6268, 1.442695
    %v6292 = vpow.pop %v6291
    %v6293 = vmul.f32 %v6269, 1.442695
    %v6294 = vpow.pop %v6293
    %v6295 = vmul.f32 %v6270, 1.442695
    %v6296 = vpow.pop %v6295
    %v6297 = vmul.f32 %v6271, 1.442695
    %v6298 = vpow.pop %v6297
    %v6299 = vmul.f32 %v6272, 1.442695
    %v6300 = vpow.pop %v6299
    %v6301 = vmul.f32 %v6273, 1.442695
    %v6302 = vpow.pop %v6301
    %v6303 = vmul.f32 %v6274, 1.442695
    %v6304 = vpow.pop %v6303
    %v6305 = vmul.f32 %v6275, 1.442695
    %v6306 = vpow.pop %v6305
    %v6307 = vmul.f32 %v6276, 1.442695
    %v6308 = vpow.pop %v6307
    %v6309 = vadd.f32 %v6278, 1.0
    %v6310 = vadd.f32 %v6280, 1.0
    %v6311 = vadd.f32 %v6282, 1.0
    %v6312 = vadd.f32 %v6284, 1.0
    %v6313 = vadd.f32 %v6286, 1.0
    %v6314 = vadd.f32 %v6288, 1.0
    %v6315 = vadd.f32 %v6290, 1.0
    %v6316 = vadd.f32 %v6292, 1.0
    %v6317 = vadd.f32 %v6294, 1.0
    %v6318 = vadd.f32 %v6296, 1.0
    %v6319 = vadd.f32 %v6298, 1.0
    %v6320 = vadd.f32 %v6300, 1.0
    %v6321 = vadd.f32 %v6302, 1.0
    %v6322 = vadd.f32 %v6304, 1.0
    %v6323 = vadd.f32 %v6306, 1.0
    %v6324 = vadd.f32 %v6308, 1.0
    %v6325 = vrcp.pop %v6309
    %v6326 = vmul.f32 1.0, %v6325
    %v6327 = vrcp.pop %v6310
    %v6328 = vmul.f32 1.0, %v6327
    %v6329 = vrcp.pop %v6311
    %v6330 = vmul.f32 1.0, %v6329
    %v6331 = vrcp.pop %v6312
    %v6332 = vmul.f32 1.0, %v6331
    %v6333 = vrcp.pop %v6313
    %v6334 = vmul.f32 1.0, %v6333
    %v6335 = vrcp.pop %v6314
    %v6336 = vmul.f32 1.0, %v6335
    %v6337 = vrcp.pop %v6315
    %v6338 = vmul.f32 1.0, %v6337
    %v6339 = vrcp.pop %v6316
    %v6340 = vmul.f32 1.0, %v6339
    %v6341 = vrcp.pop %v6317
    %v6342 = vmul.f32 1.0, %v6341
    %v6343 = vrcp.pop %v6318
    %v6344 = vmul.f32 1.0, %v6343
    %v6345 = vrcp.pop %v6319
    %v6346 = vmul.f32 1.0, %v6345
    %v6347 = vrcp.pop %v6320
    %v6348 = vmul.f32 1.0, %v6347
    %v6349 = vrcp.pop %v6321
    %v6350 = vmul.f32 1.0, %v6349
    %v6351 = vrcp.pop %v6322
    %v6352 = vmul.f32 1.0, %v6351
    %v6353 = vrcp.pop %v6323
    %v6354 = vmul.f32 1.0, %v6353
    %v6355 = vrcp.pop %v6324
    %v6356 = vmul.f32 1.0, %v6355
    %v6357 = vmul.f32 %v6245, %v6326
    %v6358 = vmul.f32 %v6246, %v6328
    %v6359 = vmul.f32 %v6247, %v6330
    %v6360 = vmul.f32 %v6248, %v6332
    %v6361 = vmul.f32 %v6249, %v6334
    %v6362 = vmul.f32 %v6250, %v6336
    %v6363 = vmul.f32 %v6251, %v6338
    %v6364 = vmul.f32 %v6252, %v6340
    %v6365 = vmul.f32 %v6253, %v6342
    %v6366 = vmul.f32 %v6254, %v6344
    %v6367 = vmul.f32 %v6255, %v6346
    %v6368 = vmul.f32 %v6256, %v6348
    %v6369 = vmul.f32 %v6257, %v6350
    %v6370 = vmul.f32 %v6258, %v6352
    %v6371 = vmul.f32 %v6259, %v6354
    %v6372 = vmul.f32 %v6260, %v6356
    %6373 = vrot.lane.b32.xlu0 %v6357, 17
    %v6374 = vpop.permute.xlu0 %6373
    %6375 = vrot.lane.b32.xlu0 %v6361, 17
    %v6376 = vpop.permute.xlu0 %6375
    %6377 = vrot.lane.b32.xlu0 %v6365, 17
    %v6378 = vpop.permute.xlu0 %6377
    %6379 = vrot.lane.b32.xlu0 %v6369, 17
    %v6380 = vpop.permute.xlu0 %6379
    %6381 = vrot.lane.b32.xlu0 %v6358, 17
    %v6382 = vpop.permute.xlu0 %6381
    %6383 = vrot.lane.b32.xlu0 %v6362, 17
    %v6384 = vpop.permute.xlu0 %6383
    %6385 = vrot.lane.b32.xlu0 %v6366, 17
    %v6386 = vpop.permute.xlu0 %6385
    %6387 = vrot.lane.b32.xlu0 %v6370, 17
    %v6388 = vpop.permute.xlu0 %6387
    %6389 = vrot.lane.b32.xlu0 %v6359, 17
    %v6390 = vpop.permute.xlu0 %6389
    %6391 = vrot.lane.b32.xlu0 %v6363, 17
    %v6392 = vpop.permute.xlu0 %6391
    %6393 = vrot.lane.b32.xlu0 %v6367, 17
    %v6394 = vpop.permute.xlu0 %6393
    %6395 = vrot.lane.b32.xlu0 %v6371, 17
    %v6396 = vpop.permute.xlu0 %6395
    %6397 = vrot.lane.b32.xlu0 %v6360, 17
    %v6398 = vpop.permute.xlu0 %6397
    %6399 = vrot.lane.b32.xlu0 %v6364, 17
    %v6400 = vpop.permute.xlu0 %6399
    %6401 = vrot.lane.b32.xlu0 %v6368, 17
    %v6402 = vpop.permute.xlu0 %6401
    %6403 = vrot.lane.b32.xlu0 %v6372, 17
    %v6404 = vpop.permute.xlu0 %6403
    %v6405 = vsel %vm299, %v6390, %v6398
    %v6406 = vsel %vm299, %v6392, %v6400
    %v6407 = vsel %vm299, %v6394, %v6402
    %v6408 = vsel %vm299, %v6396, %v6404
    %v6409 = vsel %vm299, %v6382, %v6390
    %v6410 = vsel %vm299, %v6384, %v6392
    %v6411 = vsel %vm299, %v6386, %v6394
    %v6412 = vsel %vm299, %v6388, %v6396
    %v6413 = vsel %vm299, %v6374, %v6382
    %v6414 = vsel %vm299, %v6376, %v6384
    %v6415 = vsel %vm299, %v6378, %v6386
    %v6416 = vsel %vm299, %v6380, %v6388
    %v6417 = vsel %vm299, %v6398, %v6374
    %v6418 = vsel %vm299, %v6400, %v6376
    %v6419 = vsel %vm299, %v6402, %v6378
    %v6420 = vsel %vm299, %v6404, %v6380
    %6421 = vmatprep.subr.mxu0 %v6413
    %6422 = vmatpush1.msra.mxu0 %v6417
    %6423 = vmatprep.subr.mxu0 %v6414
    %6424 = vmatpush1.msra.mxu0 %v6418
    %6425 = vmatprep.subr.mxu0 %v6415
    %6426 = vmatpush1.msra.mxu0 %v6419
    %6427 = vmatprep.subr.mxu0 %v6416
    %6428 = vmatpush1.msra.mxu0 %v6420
    %6429 = vmatprep.subr.mxu0 0.0
    %6430 = vmatpush1.msra.mxu0 0.0
    %6431 = vmatprep.subr.mxu0 0.0
    %6432 = vmatpush1.msra.mxu0 0.0
    %6433 = vmatprep.subr.mxu0 0.0
    %6434 = vmatpush1.msra.mxu0 0.0
    %6435 = vmatprep.subr.mxu0 0.0
    %6436 = vmatpush1.msra.mxu0 0.0
    %6437 = vmatprep.subr.mxu0 0.0
    %6438 = vmatpush1.msra.mxu0 0.0
    %6439 = vmatprep.subr.mxu0 0.0
    %6440 = vmatpush1.msra.mxu0 0.0
    %6441 = vmatprep.subr.mxu0 0.0
    %6442 = vmatpush1.msra.mxu0 0.0
    %6443 = vmatprep.subr.mxu0 0.0
    %6444 = vmatpush1.msra.mxu0 0.0
    %6445 = vmatprep.subr.mxu0 0.0
    %6446 = vmatpush1.msra.mxu0 0.0
    %6447 = vmatprep.subr.mxu0 0.0
    %6448 = vmatpush1.msra.mxu0 0.0
    %6449 = vmatprep.subr.mxu0 0.0
    %6450 = vmatpush1.msra.mxu0 0.0
    %6451 = vmatprep.subr.mxu0 0.0
    %6452 = vmatpush1.msra.mxu0 0.0
    %6453 = vmatprep.subr.mxu0 0.0
    %6454 = vmatpush1.msra.mxu0 0.0
    %6455 = vmatprep.subr.mxu0 0.0
    %6456 = vmatpush1.msra.mxu0 0.0
    %6457 = vmatprep.subr.mxu0 0.0
    %6458 = vmatpush1.msra.mxu0 0.0
    %6459 = vmatprep.subr.mxu0 0.0
    %6460 = vmatpush1.msra.mxu0 0.0
    %6461 = vmatprep.subr.mxu0 0.0
    %6462 = vmatpush1.msra.mxu0 0.0
    %6463 = vmatprep.subr.mxu0 0.0
    %6464 = vmatpush1.msra.mxu0 0.0
    %6465 = vmatprep.subr.mxu0 0.0
    %6466 = vmatpush1.msra.mxu0 0.0
    %6467 = vmatprep.subr.mxu0 0.0
    %6468 = vmatpush1.msra.mxu0 0.0
    %6469 = vmatprep.subr.mxu0 0.0
    %6470 = vmatpush1.msra.mxu0 0.0
    %6471 = vmatprep.subr.mxu0 0.0
    %6472 = vmatpush1.msra.mxu0 0.0
    %6473 = vmatprep.subr.mxu0 0.0
    %6474 = vmatpush1.msra.mxu0 0.0
    %6475 = vmatprep.subr.mxu0 0.0
    %6476 = vmatpush1.msra.mxu0 0.0
    %6477 = vmatprep.subr.mxu0 0.0
    %6478 = vmatpush1.msra.mxu0 0.0
    %6479 = vmatprep.subr.mxu0 0.0
    %6480 = vmatpush1.msra.mxu0 0.0
    %6481 = vmatprep.subr.mxu0 0.0
    %6482 = vmatpush1.msra.mxu0 0.0
    %6483 = vmatprep.subr.mxu0 0.0
    %6484 = vmatpush1.msra.mxu0 0.0
    %6485 = vmatprep.mubr.f32.mxu0 0.0
    %6486 = vmatmul.mubr.f32.gmra.mrb[0].mxu0 %v2549
    %v6487 = vpop.f32.mrb[0].mxu0
    %v6488 = vadd.f32 0.0, %v6487
    %v6489 = vpop.f32.mrb[0].mxu0
    %v6490 = vadd.f32 0.0, %v6489
    %6491 = vdwg.mxu0
    %6492 = vmatprep.subr.mxu0 %v6405
    %6493 = vmatpush1.msra.mxu0 %v6409
    %6494 = vmatprep.subr.mxu0 %v6406
    %6495 = vmatpush1.msra.mxu0 %v6410
    %6496 = vmatprep.subr.mxu0 %v6407
    %6497 = vmatpush1.msra.mxu0 %v6411
    %6498 = vmatprep.subr.mxu0 %v6408
    %6499 = vmatpush1.msra.mxu0 %v6412
    %6500 = vmatprep.subr.mxu0 0.0
    %6501 = vmatpush1.msra.mxu0 0.0
    %6502 = vmatprep.subr.mxu0 0.0
    %6503 = vmatpush1.msra.mxu0 0.0
    %6504 = vmatprep.subr.mxu0 0.0
    %6505 = vmatpush1.msra.mxu0 0.0
    %6506 = vmatprep.subr.mxu0 0.0
    %6507 = vmatpush1.msra.mxu0 0.0
    %6508 = vmatprep.subr.mxu0 0.0
    %6509 = vmatpush1.msra.mxu0 0.0
    %6510 = vmatprep.subr.mxu0 0.0
    %6511 = vmatpush1.msra.mxu0 0.0
    %6512 = vmatprep.subr.mxu0 0.0
    %6513 = vmatpush1.msra.mxu0 0.0
    %6514 = vmatprep.subr.mxu0 0.0
    %6515 = vmatpush1.msra.mxu0 0.0
    %6516 = vmatprep.subr.mxu0 0.0
    %6517 = vmatpush1.msra.mxu0 0.0
    %6518 = vmatprep.subr.mxu0 0.0
    %6519 = vmatpush1.msra.mxu0 0.0
    %6520 = vmatprep.subr.mxu0 0.0
    %6521 = vmatpush1.msra.mxu0 0.0
    %6522 = vmatprep.subr.mxu0 0.0
    %6523 = vmatpush1.msra.mxu0 0.0
    %6524 = vmatprep.subr.mxu0 0.0
    %6525 = vmatpush1.msra.mxu0 0.0
    %6526 = vmatprep.subr.mxu0 0.0
    %6527 = vmatpush1.msra.mxu0 0.0
    %6528 = vmatprep.subr.mxu0 0.0
    %6529 = vmatpush1.msra.mxu0 0.0
    %6530 = vmatprep.subr.mxu0 0.0
    %6531 = vmatpush1.msra.mxu0 0.0
    %6532 = vmatprep.subr.mxu0 0.0
    %6533 = vmatpush1.msra.mxu0 0.0
    %6534 = vmatprep.subr.mxu0 0.0
    %6535 = vmatpush1.msra.mxu0 0.0
    %6536 = vmatprep.subr.mxu0 0.0
    %6537 = vmatpush1.msra.mxu0 0.0
    %6538 = vmatprep.subr.mxu0 0.0
    %6539 = vmatpush1.msra.mxu0 0.0
    %6540 = vmatprep.subr.mxu0 0.0
    %6541 = vmatpush1.msra.mxu0 0.0
    %6542 = vmatprep.subr.mxu0 0.0
    %6543 = vmatpush1.msra.mxu0 0.0
    %6544 = vmatprep.subr.mxu0 0.0
    %6545 = vmatpush1.msra.mxu0 0.0
    %6546 = vmatprep.subr.mxu0 0.0
    %6547 = vmatpush1.msra.mxu0 0.0
    %6548 = vmatprep.subr.mxu0 0.0
    %6549 = vmatpush1.msra.mxu0 0.0
    %6550 = vmatprep.subr.mxu0 0.0
    %6551 = vmatpush1.msra.mxu0 0.0
    %6552 = vmatprep.subr.mxu0 0.0
    %6553 = vmatpush1.msra.mxu0 0.0
    %6554 = vmatprep.subr.mxu0 0.0
    %6555 = vmatpush1.msra.mxu0 0.0
    %6556 = vmatprep.mubr.f32.mxu0 0.0
    %6557 = vmatmul.mubr.f32.gmra.mrb[0].mxu0 %v2549
    %v6558 = vpop.f32.mrb[0].mxu0
    %v6559 = vadd.f32 0.0, %v6558
    %v6560 = vpop.f32.mrb[0].mxu0
    %v6561 = vadd.f32 0.0, %v6560
    %6562 = vdwg.mxu0
    %v6563 = vmul.f32 %v6488, %v156
    %v6564 = vmul.f32 %v6490, %v160
    %v6565 = vmul.f32 %v6559, %v164
    %v6566 = vmul.f32 %v6561, %v168
    %v6567 = vadd.f32 %v143, %v6563
    %v6568 = vadd.f32 %v143, %v6564
    %v6569 = vadd.f32 %v143, %v6565
    %v6570 = vadd.f32 %v143, %v6566
    %6571 = vrot.lane.b32.xlu0 %v6357, 16
    %v6572 = vpop.permute.xlu0 %6571
    %6573 = vrot.lane.b32.xlu0 %v6361, 16
    %v6574 = vpop.permute.xlu0 %6573
    %6575 = vrot.lane.b32.xlu0 %v6365, 16
    %v6576 = vpop.permute.xlu0 %6575
    %6577 = vrot.lane.b32.xlu0 %v6369, 16
    %v6578 = vpop.permute.xlu0 %6577
    %6579 = vrot.lane.b32.xlu0 %v6358, 16
    %v6580 = vpop.permute.xlu0 %6579
    %6581 = vrot.lane.b32.xlu0 %v6362, 16
    %v6582 = vpop.permute.xlu0 %6581
    %6583 = vrot.lane.b32.xlu0 %v6366, 16
    %v6584 = vpop.permute.xlu0 %6583
    %6585 = vrot.lane.b32.xlu0 %v6370, 16
    %v6586 = vpop.permute.xlu0 %6585
    %6587 = vrot.lane.b32.xlu0 %v6359, 16
    %v6588 = vpop.permute.xlu0 %6587
    %6589 = vrot.lane.b32.xlu0 %v6363, 16
    %v6590 = vpop.permute.xlu0 %6589
    %6591 = vrot.lane.b32.xlu0 %v6367, 16
    %v6592 = vpop.permute.xlu0 %6591
    %6593 = vrot.lane.b32.xlu0 %v6371, 16
    %v6594 = vpop.permute.xlu0 %6593
    %6595 = vrot.lane.b32.xlu0 %v6360, 16
    %v6596 = vpop.permute.xlu0 %6595
    %6597 = vrot.lane.b32.xlu0 %v6364, 16
    %v6598 = vpop.permute.xlu0 %6597
    %6599 = vrot.lane.b32.xlu0 %v6368, 16
    %v6600 = vpop.permute.xlu0 %6599
    %6601 = vrot.lane.b32.xlu0 %v6372, 16
    %v6602 = vpop.permute.xlu0 %6601
    %v6603 = vsel %vm536, %v6588, %v6596
    %v6604 = vsel %vm536, %v6590, %v6598
    %v6605 = vsel %vm536, %v6592, %v6600
    %v6606 = vsel %vm536, %v6594, %v6602
    %v6607 = vsel %vm536, %v6580, %v6588
    %v6608 = vsel %vm536, %v6582, %v6590
    %v6609 = vsel %vm536, %v6584, %v6592
    %v6610 = vsel %vm536, %v6586, %v6594
    %v6611 = vsel %vm536, %v6572, %v6580
    %v6612 = vsel %vm536, %v6574, %v6582
    %v6613 = vsel %vm536, %v6576, %v6584
    %v6614 = vsel %vm536, %v6578, %v6586
    %v6615 = vsel %vm536, %v6596, %v6572
    %v6616 = vsel %vm536, %v6598, %v6574
    %v6617 = vsel %vm536, %v6600, %v6576
    %v6618 = vsel %vm536, %v6602, %v6578
    %6619 = vmatprep.subr.mxu0 %v6611
    %6620 = vmatpush1.msra.mxu0 %v6615
    %6621 = vmatprep.subr.mxu0 %v6612
    %6622 = vmatpush1.msra.mxu0 %v6616
    %6623 = vmatprep.subr.mxu0 %v6613
    %6624 = vmatpush1.msra.mxu0 %v6617
    %6625 = vmatprep.subr.mxu0 %v6614
    %6626 = vmatpush1.msra.mxu0 %v6618
    %6627 = vmatprep.subr.mxu0 0.0
    %6628 = vmatpush1.msra.mxu0 0.0
    %6629 = vmatprep.subr.mxu0 0.0
    %6630 = vmatpush1.msra.mxu0 0.0
    %6631 = vmatprep.subr.mxu0 0.0
    %6632 = vmatpush1.msra.mxu0 0.0
    %6633 = vmatprep.subr.mxu0 0.0
    %6634 = vmatpush1.msra.mxu0 0.0
    %6635 = vmatprep.subr.mxu0 0.0
    %6636 = vmatpush1.msra.mxu0 0.0
    %6637 = vmatprep.subr.mxu0 0.0
    %6638 = vmatpush1.msra.mxu0 0.0
    %6639 = vmatprep.subr.mxu0 0.0
    %6640 = vmatpush1.msra.mxu0 0.0
    %6641 = vmatprep.subr.mxu0 0.0
    %6642 = vmatpush1.msra.mxu0 0.0
    %6643 = vmatprep.subr.mxu0 0.0
    %6644 = vmatpush1.msra.mxu0 0.0
    %6645 = vmatprep.subr.mxu0 0.0
    %6646 = vmatpush1.msra.mxu0 0.0
    %6647 = vmatprep.subr.mxu0 0.0
    %6648 = vmatpush1.msra.mxu0 0.0
    %6649 = vmatprep.subr.mxu0 0.0
    %6650 = vmatpush1.msra.mxu0 0.0
    %6651 = vmatprep.subr.mxu0 0.0
    %6652 = vmatpush1.msra.mxu0 0.0
    %6653 = vmatprep.subr.mxu0 0.0
    %6654 = vmatpush1.msra.mxu0 0.0
    %6655 = vmatprep.subr.mxu0 0.0
    %6656 = vmatpush1.msra.mxu0 0.0
    %6657 = vmatprep.subr.mxu0 0.0
    %6658 = vmatpush1.msra.mxu0 0.0
    %6659 = vmatprep.subr.mxu0 0.0
    %6660 = vmatpush1.msra.mxu0 0.0
    %6661 = vmatprep.subr.mxu0 0.0
    %6662 = vmatpush1.msra.mxu0 0.0
    %6663 = vmatprep.subr.mxu0 0.0
    %6664 = vmatpush1.msra.mxu0 0.0
    %6665 = vmatprep.subr.mxu0 0.0
    %6666 = vmatpush1.msra.mxu0 0.0
    %6667 = vmatprep.subr.mxu0 0.0
    %6668 = vmatpush1.msra.mxu0 0.0
    %6669 = vmatprep.subr.mxu0 0.0
    %6670 = vmatpush1.msra.mxu0 0.0
    %6671 = vmatprep.subr.mxu0 0.0
    %6672 = vmatpush1.msra.mxu0 0.0
    %6673 = vmatprep.subr.mxu0 0.0
    %6674 = vmatpush1.msra.mxu0 0.0
    %6675 = vmatprep.subr.mxu0 0.0
    %6676 = vmatpush1.msra.mxu0 0.0
    %6677 = vmatprep.subr.mxu0 0.0
    %6678 = vmatpush1.msra.mxu0 0.0
    %6679 = vmatprep.subr.mxu0 0.0
    %6680 = vmatpush1.msra.mxu0 0.0
    %6681 = vmatprep.subr.mxu0 0.0
    %6682 = vmatpush1.msra.mxu0 0.0
    %6683 = vmatprep.mubr.f32.mxu0 0.0
    %6684 = vmatmul.mubr.f32.gmra.mrb[0].mxu0 %v2750
    %v6685 = vpop.f32.mrb[0].mxu0
    %v6686 = vadd.f32 0.0, %v6685
    %v6687 = vpop.f32.mrb[0].mxu0
    %v6688 = vadd.f32 0.0, %v6687
    %6689 = vdwg.mxu0
    %6690 = vmatprep.subr.mxu0 %v6603
    %6691 = vmatpush1.msra.mxu0 %v6607
    %6692 = vmatprep.subr.mxu0 %v6604
    %6693 = vmatpush1.msra.mxu0 %v6608
    %6694 = vmatprep.subr.mxu0 %v6605
    %6695 = vmatpush1.msra.mxu0 %v6609
    %6696 = vmatprep.subr.mxu0 %v6606
    %6697 = vmatpush1.msra.mxu0 %v6610
    %6698 = vmatprep.subr.mxu0 0.0
    %6699 = vmatpush1.msra.mxu0 0.0
    %6700 = vmatprep.subr.mxu0 0.0
    %6701 = vmatpush1.msra.mxu0 0.0
    %6702 = vmatprep.subr.mxu0 0.0
    %6703 = vmatpush1.msra.mxu0 0.0
    %6704 = vmatprep.subr.mxu0 0.0
    %6705 = vmatpush1.msra.mxu0 0.0
    %6706 = vmatprep.subr.mxu0 0.0
    %6707 = vmatpush1.msra.mxu0 0.0
    %6708 = vmatprep.subr.mxu0 0.0
    %6709 = vmatpush1.msra.mxu0 0.0
    %6710 = vmatprep.subr.mxu0 0.0
    %6711 = vmatpush1.msra.mxu0 0.0
    %6712 = vmatprep.subr.mxu0 0.0
    %6713 = vmatpush1.msra.mxu0 0.0
    %6714 = vmatprep.subr.mxu0 0.0
    %6715 = vmatpush1.msra.mxu0 0.0
    %6716 = vmatprep.subr.mxu0 0.0
    %6717 = vmatpush1.msra.mxu0 0.0
    %6718 = vmatprep.subr.mxu0 0.0
    %6719 = vmatpush1.msra.mxu0 0.0
    %6720 = vmatprep.subr.mxu0 0.0
    %6721 = vmatpush1.msra.mxu0 0.0
    %6722 = vmatprep.subr.mxu0 0.0
    %6723 = vmatpush1.msra.mxu0 0.0
    %6724 = vmatprep.subr.mxu0 0.0
    %6725 = vmatpush1.msra.mxu0 0.0
    %6726 = vmatprep.subr.mxu0 0.0
    %6727 = vmatpush1.msra.mxu0 0.0
    %6728 = vmatprep.subr.mxu0 0.0
    %6729 = vmatpush1.msra.mxu0 0.0
    %6730 = vmatprep.subr.mxu0 0.0
    %6731 = vmatpush1.msra.mxu0 0.0
    %6732 = vmatprep.subr.mxu0 0.0
    %6733 = vmatpush1.msra.mxu0 0.0
    %6734 = vmatprep.subr.mxu0 0.0
    %6735 = vmatpush1.msra.mxu0 0.0
    %6736 = vmatprep.subr.mxu0 0.0
    %6737 = vmatpush1.msra.mxu0 0.0
    %6738 = vmatprep.subr.mxu0 0.0
    %6739 = vmatpush1.msra.mxu0 0.0
    %6740 = vmatprep.subr.mxu0 0.0
    %6741 = vmatpush1.msra.mxu0 0.0
    %6742 = vmatprep.subr.mxu0 0.0
    %6743 = vmatpush1.msra.mxu0 0.0
    %6744 = vmatprep.subr.mxu0 0.0
    %6745 = vmatpush1.msra.mxu0 0.0
    %6746 = vmatprep.subr.mxu0 0.0
    %6747 = vmatpush1.msra.mxu0 0.0
    %6748 = vmatprep.subr.mxu0 0.0
    %6749 = vmatpush1.msra.mxu0 0.0
    %6750 = vmatprep.subr.mxu0 0.0
    %6751 = vmatpush1.msra.mxu0 0.0
    %6752 = vmatprep.subr.mxu0 0.0
    %6753 = vmatpush1.msra.mxu0 0.0
    %6754 = vmatprep.mubr.f32.mxu0 0.0
    %6755 = vmatmul.mubr.f32.gmra.mrb[0].mxu0 %v2750
    %v6756 = vpop.f32.mrb[0].mxu0
    %v6757 = vadd.f32 0.0, %v6756
    %v6758 = vpop.f32.mrb[0].mxu0
    %v6759 = vadd.f32 0.0, %v6758
    %6760 = vdwg.mxu0
    %v6761 = vmul.f32 %v6686, %v172
    %v6762 = vmul.f32 %v6688, %v176
    %v6763 = vmul.f32 %v6757, %v180
    %v6764 = vmul.f32 %v6759, %v184
    %v6765 = vadd.f32 %v6567, %v6761
    %v6766 = vadd.f32 %v6568, %v6762
    %v6767 = vadd.f32 %v6569, %v6763
    %v6768 = vadd.f32 %v6570, %v6764
    %6769 = vrot.lane.b32.xlu0 %v6357, 15
    %v6770 = vpop.permute.xlu0 %6769
    %6771 = vrot.lane.b32.xlu0 %v6361, 15
    %v6772 = vpop.permute.xlu0 %6771
    %6773 = vrot.lane.b32.xlu0 %v6365, 15
    %v6774 = vpop.permute.xlu0 %6773
    %6775 = vrot.lane.b32.xlu0 %v6369, 15
    %v6776 = vpop.permute.xlu0 %6775
    %6777 = vrot.lane.b32.xlu0 %v6358, 15
    %v6778 = vpop.permute.xlu0 %6777
    %6779 = vrot.lane.b32.xlu0 %v6362, 15
    %v6780 = vpop.permute.xlu0 %6779
    %6781 = vrot.lane.b32.xlu0 %v6366, 15
    %v6782 = vpop.permute.xlu0 %6781
    %6783 = vrot.lane.b32.xlu0 %v6370, 15
    %v6784 = vpop.permute.xlu0 %6783
    %6785 = vrot.lane.b32.xlu0 %v6359, 15
    %v6786 = vpop.permute.xlu0 %6785
    %6787 = vrot.lane.b32.xlu0 %v6363, 15
    %v6788 = vpop.permute.xlu0 %6787
    %6789 = vrot.lane.b32.xlu0 %v6367, 15
    %v6790 = vpop.permute.xlu0 %6789
    %6791 = vrot.lane.b32.xlu0 %v6371, 15
    %v6792 = vpop.permute.xlu0 %6791
    %6793 = vrot.lane.b32.xlu0 %v6360, 15
    %v6794 = vpop.permute.xlu0 %6793
    %6795 = vrot.lane.b32.xlu0 %v6364, 15
    %v6796 = vpop.permute.xlu0 %6795
    %6797 = vrot.lane.b32.xlu0 %v6368, 15
    %v6798 = vpop.permute.xlu0 %6797
    %6799 = vrot.lane.b32.xlu0 %v6372, 15
    %v6800 = vpop.permute.xlu0 %6799
    %v6801 = vsel %vm771, %v6786, %v6794
    %v6802 = vsel %vm771, %v6788, %v6796
    %v6803 = vsel %vm771, %v6790, %v6798
    %v6804 = vsel %vm771, %v6792, %v6800
    %v6805 = vsel %vm771, %v6778, %v6786
    %v6806 = vsel %vm771, %v6780, %v6788
    %v6807 = vsel %vm771, %v6782, %v6790
    %v6808 = vsel %vm771, %v6784, %v6792
    %v6809 = vsel %vm771, %v6770, %v6778
    %v6810 = vsel %vm771, %v6772, %v6780
    %v6811 = vsel %vm771, %v6774, %v6782
    %v6812 = vsel %vm771, %v6776, %v6784
    %v6813 = vsel %vm771, %v6794, %v6770
    %v6814 = vsel %vm771, %v6796, %v6772
    %v6815 = vsel %vm771, %v6798, %v6774
    %v6816 = vsel %vm771, %v6800, %v6776
    %6817 = vmatprep.subr.mxu0 %v6809
    %6818 = vmatpush1.msra.mxu0 %v6813
    %6819 = vmatprep.subr.mxu0 %v6810
    %6820 = vmatpush1.msra.mxu0 %v6814
    %6821 = vmatprep.subr.mxu0 %v6811
    %6822 = vmatpush1.msra.mxu0 %v6815
    %6823 = vmatprep.subr.mxu0 %v6812
    %6824 = vmatpush1.msra.mxu0 %v6816
    %6825 = vmatprep.subr.mxu0 0.0
    %6826 = vmatpush1.msra.mxu0 0.0
    %6827 = vmatprep.subr.mxu0 0.0
    %6828 = vmatpush1.msra.mxu0 0.0
    %6829 = vmatprep.subr.mxu0 0.0
    %6830 = vmatpush1.msra.mxu0 0.0
    %6831 = vmatprep.subr.mxu0 0.0
    %6832 = vmatpush1.msra.mxu0 0.0
    %6833 = vmatprep.subr.mxu0 0.0
    %6834 = vmatpush1.msra.mxu0 0.0
    %6835 = vmatprep.subr.mxu0 0.0
    %6836 = vmatpush1.msra.mxu0 0.0
    %6837 = vmatprep.subr.mxu0 0.0
    %6838 = vmatpush1.msra.mxu0 0.0
    %6839 = vmatprep.subr.mxu0 0.0
    %6840 = vmatpush1.msra.mxu0 0.0
    %6841 = vmatprep.subr.mxu0 0.0
    %6842 = vmatpush1.msra.mxu0 0.0
    %6843 = vmatprep.subr.mxu0 0.0
    %6844 = vmatpush1.msra.mxu0 0.0
    %6845 = vmatprep.subr.mxu0 0.0
    %6846 = vmatpush1.msra.mxu0 0.0
    %6847 = vmatprep.subr.mxu0 0.0
    %6848 = vmatpush1.msra.mxu0 0.0
    %6849 = vmatprep.subr.mxu0 0.0
    %6850 = vmatpush1.msra.mxu0 0.0
    %6851 = vmatprep.subr.mxu0 0.0
    %6852 = vmatpush1.msra.mxu0 0.0
    %6853 = vmatprep.subr.mxu0 0.0
    %6854 = vmatpush1.msra.mxu0 0.0
    %6855 = vmatprep.subr.mxu0 0.0
    %6856 = vmatpush1.msra.mxu0 0.0
    %6857 = vmatprep.subr.mxu0 0.0
    %6858 = vmatpush1.msra.mxu0 0.0
    %6859 = vmatprep.subr.mxu0 0.0
    %6860 = vmatpush1.msra.mxu0 0.0
    %6861 = vmatprep.subr.mxu0 0.0
    %6862 = vmatpush1.msra.mxu0 0.0
    %6863 = vmatprep.subr.mxu0 0.0
    %6864 = vmatpush1.msra.mxu0 0.0
    %6865 = vmatprep.subr.mxu0 0.0
    %6866 = vmatpush1.msra.mxu0 0.0
    %6867 = vmatprep.subr.mxu0 0.0
    %6868 = vmatpush1.msra.mxu0 0.0
    %6869 = vmatprep.subr.mxu0 0.0
    %6870 = vmatpush1.msra.mxu0 0.0
    %6871 = vmatprep.subr.mxu0 0.0
    %6872 = vmatpush1.msra.mxu0 0.0
    %6873 = vmatprep.subr.mxu0 0.0
    %6874 = vmatpush1.msra.mxu0 0.0
    %6875 = vmatprep.subr.mxu0 0.0
    %6876 = vmatpush1.msra.mxu0 0.0
    %6877 = vmatprep.subr.mxu0 0.0
    %6878 = vmatpush1.msra.mxu0 0.0
    %6879 = vmatprep.subr.mxu0 0.0
    %6880 = vmatpush1.msra.mxu0 0.0
    %6881 = vmatprep.mubr.f32.mxu0 0.0
    %6882 = vmatmul.mubr.f32.gmra.mrb[0].mxu0 %v2951
    %v6883 = vpop.f32.mrb[0].mxu0
    %v6884 = vadd.f32 0.0, %v6883
    %v6885 = vpop.f32.mrb[0].mxu0
    %v6886 = vadd.f32 0.0, %v6885
    %6887 = vdwg.mxu0
    %6888 = vmatprep.subr.mxu0 %v6801
    %6889 = vmatpush1.msra.mxu0 %v6805
    %6890 = vmatprep.subr.mxu0 %v6802
    %6891 = vmatpush1.msra.mxu0 %v6806
    %6892 = vmatprep.subr.mxu0 %v6803
    %6893 = vmatpush1.msra.mxu0 %v6807
    %6894 = vmatprep.subr.mxu0 %v6804
    %6895 = vmatpush1.msra.mxu0 %v6808
    %6896 = vmatprep.subr.mxu0 0.0
    %6897 = vmatpush1.msra.mxu0 0.0
    %6898 = vmatprep.subr.mxu0 0.0
    %6899 = vmatpush1.msra.mxu0 0.0
    %6900 = vmatprep.subr.mxu0 0.0
    %6901 = vmatpush1.msra.mxu0 0.0
    %6902 = vmatprep.subr.mxu0 0.0
    %6903 = vmatpush1.msra.mxu0 0.0
    %6904 = vmatprep.subr.mxu0 0.0
    %6905 = vmatpush1.msra.mxu0 0.0
    %6906 = vmatprep.subr.mxu0 0.0
    %6907 = vmatpush1.msra.mxu0 0.0
    %6908 = vmatprep.subr.mxu0 0.0
    %6909 = vmatpush1.msra.mxu0 0.0
    %6910 = vmatprep.subr.mxu0 0.0
    %6911 = vmatpush1.msra.mxu0 0.0
    %6912 = vmatprep.subr.mxu0 0.0
    %6913 = vmatpush1.msra.mxu0 0.0
    %6914 = vmatprep.subr.mxu0 0.0
    %6915 = vmatpush1.msra.mxu0 0.0
    %6916 = vmatprep.subr.mxu0 0.0
    %6917 = vmatpush1.msra.mxu0 0.0
    %6918 = vmatprep.subr.mxu0 0.0
    %6919 = vmatpush1.msra.mxu0 0.0
    %6920 = vmatprep.subr.mxu0 0.0
    %6921 = vmatpush1.msra.mxu0 0.0
    %6922 = vmatprep.subr.mxu0 0.0
    %6923 = vmatpush1.msra.mxu0 0.0
    %6924 = vmatprep.subr.mxu0 0.0
    %6925 = vmatpush1.msra.mxu0 0.0
    %6926 = vmatprep.subr.mxu0 0.0
    %6927 = vmatpush1.msra.mxu0 0.0
    %6928 = vmatprep.subr.mxu0 0.0
    %6929 = vmatpush1.msra.mxu0 0.0
    %6930 = vmatprep.subr.mxu0 0.0
    %6931 = vmatpush1.msra.mxu0 0.0
    %6932 = vmatprep.subr.mxu0 0.0
    %6933 = vmatpush1.msra.mxu0 0.0
    %6934 = vmatprep.subr.mxu0 0.0
    %6935 = vmatpush1.msra.mxu0 0.0
    %6936 = vmatprep.subr.mxu0 0.0
    %6937 = vmatpush1.msra.mxu0 0.0
    %6938 = vmatprep.subr.mxu0 0.0
    %6939 = vmatpush1.msra.mxu0 0.0
    %6940 = vmatprep.subr.mxu0 0.0
    %6941 = vmatpush1.msra.mxu0 0.0
    %6942 = vmatprep.subr.mxu0 0.0
    %6943 = vmatpush1.msra.mxu0 0.0
    %6944 = vmatprep.subr.mxu0 0.0
    %6945 = vmatpush1.msra.mxu0 0.0
    %6946 = vmatprep.subr.mxu0 0.0
    %6947 = vmatpush1.msra.mxu0 0.0
    %6948 = vmatprep.subr.mxu0 0.0
    %6949 = vmatpush1.msra.mxu0 0.0
    %6950 = vmatprep.subr.mxu0 0.0
    %6951 = vmatpush1.msra.mxu0 0.0
    %6952 = vmatprep.mubr.f32.mxu0 0.0
    %6953 = vmatmul.mubr.f32.gmra.mrb[0].mxu0 %v2951
    %v6954 = vpop.f32.mrb[0].mxu0
    %v6955 = vadd.f32 0.0, %v6954
    %v6956 = vpop.f32.mrb[0].mxu0
    %v6957 = vadd.f32 0.0, %v6956
    %6958 = vdwg.mxu0
    %v6959 = vmul.f32 %v6884, %v188
    %v6960 = vmul.f32 %v6886, %v192
    %v6961 = vmul.f32 %v6955, %v196
    %v6962 = vmul.f32 %v6957, %v200
    %v6963 = vadd.f32 %v6765, %v6959
    %v6964 = vadd.f32 %v6766, %v6960
    %v6965 = vadd.f32 %v6767, %v6961
    %v6966 = vadd.f32 %v6768, %v6962
    %6967 = vrot.lane.b32.xlu0 %v6357, 1
    %v6968 = vpop.permute.xlu0 %6967
    %6969 = vrot.lane.b32.xlu0 %v6361, 1
    %v6970 = vpop.permute.xlu0 %6969
    %6971 = vrot.lane.b32.xlu0 %v6365, 1
    %v6972 = vpop.permute.xlu0 %6971
    %6973 = vrot.lane.b32.xlu0 %v6369, 1
    %v6974 = vpop.permute.xlu0 %6973
    %6975 = vrot.lane.b32.xlu0 %v6358, 1
    %v6976 = vpop.permute.xlu0 %6975
    %6977 = vrot.lane.b32.xlu0 %v6362, 1
    %v6978 = vpop.permute.xlu0 %6977
    %6979 = vrot.lane.b32.xlu0 %v6366, 1
    %v6980 = vpop.permute.xlu0 %6979
    %6981 = vrot.lane.b32.xlu0 %v6370, 1
    %v6982 = vpop.permute.xlu0 %6981
    %6983 = vrot.lane.b32.xlu0 %v6359, 1
    %v6984 = vpop.permute.xlu0 %6983
    %6985 = vrot.lane.b32.xlu0 %v6363, 1
    %v6986 = vpop.permute.xlu0 %6985
    %6987 = vrot.lane.b32.xlu0 %v6367, 1
    %v6988 = vpop.permute.xlu0 %6987
    %6989 = vrot.lane.b32.xlu0 %v6371, 1
    %v6990 = vpop.permute.xlu0 %6989
    %6991 = vrot.lane.b32.xlu0 %v6360, 1
    %v6992 = vpop.permute.xlu0 %6991
    %6993 = vrot.lane.b32.xlu0 %v6364, 1
    %v6994 = vpop.permute.xlu0 %6993
    %6995 = vrot.lane.b32.xlu0 %v6368, 1
    %v6996 = vpop.permute.xlu0 %6995
    %6997 = vrot.lane.b32.xlu0 %v6372, 1
    %v6998 = vpop.permute.xlu0 %6997
    %v6999 = vsel %vm1006, %v6984, %v6992
    %v7000 = vsel %vm1006, %v6986, %v6994
    %v7001 = vsel %vm1006, %v6988, %v6996
    %v7002 = vsel %vm1006, %v6990, %v6998
    %v7003 = vsel %vm1006, %v6976, %v6984
    %v7004 = vsel %vm1006, %v6978, %v6986
    %v7005 = vsel %vm1006, %v6980, %v6988
    %v7006 = vsel %vm1006, %v6982, %v6990
    %v7007 = vsel %vm1006, %v6968, %v6976
    %v7008 = vsel %vm1006, %v6970, %v6978
    %v7009 = vsel %vm1006, %v6972, %v6980
    %v7010 = vsel %vm1006, %v6974, %v6982
    %v7011 = vsel %vm1006, %v6992, %v6968
    %v7012 = vsel %vm1006, %v6994, %v6970
    %v7013 = vsel %vm1006, %v6996, %v6972
    %v7014 = vsel %vm1006, %v6998, %v6974
    %7015 = vmatprep.subr.mxu0 %v7007
    %7016 = vmatpush1.msra.mxu0 %v7011
    %7017 = vmatprep.subr.mxu0 %v7008
    %7018 = vmatpush1.msra.mxu0 %v7012
    %7019 = vmatprep.subr.mxu0 %v7009
    %7020 = vmatpush1.msra.mxu0 %v7013
    %7021 = vmatprep.subr.mxu0 %v7010
    %7022 = vmatpush1.msra.mxu0 %v7014
    %7023 = vmatprep.subr.mxu0 0.0
    %7024 = vmatpush1.msra.mxu0 0.0
    %7025 = vmatprep.subr.mxu0 0.0
    %7026 = vmatpush1.msra.mxu0 0.0
    %7027 = vmatprep.subr.mxu0 0.0
    %7028 = vmatpush1.msra.mxu0 0.0
    %7029 = vmatprep.subr.mxu0 0.0
    %7030 = vmatpush1.msra.mxu0 0.0
    %7031 = vmatprep.subr.mxu0 0.0
    %7032 = vmatpush1.msra.mxu0 0.0
    %7033 = vmatprep.subr.mxu0 0.0
    %7034 = vmatpush1.msra.mxu0 0.0
    %7035 = vmatprep.subr.mxu0 0.0
    %7036 = vmatpush1.msra.mxu0 0.0
    %7037 = vmatprep.subr.mxu0 0.0
    %7038 = vmatpush1.msra.mxu0 0.0
    %7039 = vmatprep.subr.mxu0 0.0
    %7040 = vmatpush1.msra.mxu0 0.0
    %7041 = vmatprep.subr.mxu0 0.0
    %7042 = vmatpush1.msra.mxu0 0.0
    %7043 = vmatprep.subr.mxu0 0.0
    %7044 = vmatpush1.msra.mxu0 0.0
    %7045 = vmatprep.subr.mxu0 0.0
    %7046 = vmatpush1.msra.mxu0 0.0
    %7047 = vmatprep.subr.mxu0 0.0
    %7048 = vmatpush1.msra.mxu0 0.0
    %7049 = vmatprep.subr.mxu0 0.0
    %7050 = vmatpush1.msra.mxu0 0.0
    %7051 = vmatprep.subr.mxu0 0.0
    %7052 = vmatpush1.msra.mxu0 0.0
    %7053 = vmatprep.subr.mxu0 0.0
    %7054 = vmatpush1.msra.mxu0 0.0
    %7055 = vmatprep.subr.mxu0 0.0
    %7056 = vmatpush1.msra.mxu0 0.0
    %7057 = vmatprep.subr.mxu0 0.0
    %7058 = vmatpush1.msra.mxu0 0.0
    %7059 = vmatprep.subr.mxu0 0.0
    %7060 = vmatpush1.msra.mxu0 0.0
    %7061 = vmatprep.subr.mxu0 0.0
    %7062 = vmatpush1.msra.mxu0 0.0
    %7063 = vmatprep.subr.mxu0 0.0
    %7064 = vmatpush1.msra.mxu0 0.0
    %7065 = vmatprep.subr.mxu0 0.0
    %7066 = vmatpush1.msra.mxu0 0.0
    %7067 = vmatprep.subr.mxu0 0.0
    %7068 = vmatpush1.msra.mxu0 0.0
    %7069 = vmatprep.subr.mxu0 0.0
    %7070 = vmatpush1.msra.mxu0 0.0
    %7071 = vmatprep.subr.mxu0 0.0
    %7072 = vmatpush1.msra.mxu0 0.0
    %7073 = vmatprep.subr.mxu0 0.0
    %7074 = vmatpush1.msra.mxu0 0.0
    %7075 = vmatprep.subr.mxu0 0.0
    %7076 = vmatpush1.msra.mxu0 0.0
    %7077 = vmatprep.subr.mxu0 0.0
    %7078 = vmatpush1.msra.mxu0 0.0
    %7079 = vmatprep.mubr.f32.mxu0 0.0
    %7080 = vmatmul.mubr.f32.gmra.mrb[0].mxu0 %v3152
    %v7081 = vpop.f32.mrb[0].mxu0
    %v7082 = vadd.f32 0.0, %v7081
    %v7083 = vpop.f32.mrb[0].mxu0
    %v7084 = vadd.f32 0.0, %v7083
    %7085 = vdwg.mxu0
    %7086 = vmatprep.subr.mxu0 %v6999
    %7087 = vmatpush1.msra.mxu0 %v7003
    %7088 = vmatprep.subr.mxu0 %v7000
    %7089 = vmatpush1.msra.mxu0 %v7004
    %7090 = vmatprep.subr.mxu0 %v7001
    %7091 = vmatpush1.msra.mxu0 %v7005
    %7092 = vmatprep.subr.mxu0 %v7002
    %7093 = vmatpush1.msra.mxu0 %v7006
    %7094 = vmatprep.subr.mxu0 0.0
    %7095 = vmatpush1.msra.mxu0 0.0
    %7096 = vmatprep.subr.mxu0 0.0
    %7097 = vmatpush1.msra.mxu0 0.0
    %7098 = vmatprep.subr.mxu0 0.0
    %7099 = vmatpush1.msra.mxu0 0.0
    %7100 = vmatprep.subr.mxu0 0.0
    %7101 = vmatpush1.msra.mxu0 0.0
    %7102 = vmatprep.subr.mxu0 0.0
    %7103 = vmatpush1.msra.mxu0 0.0
    %7104 = vmatprep.subr.mxu0 0.0
    %7105 = vmatpush1.msra.mxu0 0.0
    %7106 = vmatprep.subr.mxu0 0.0
    %7107 = vmatpush1.msra.mxu0 0.0
    %7108 = vmatprep.subr.mxu0 0.0
    %7109 = vmatpush1.msra.mxu0 0.0
    %7110 = vmatprep.subr.mxu0 0.0
    %7111 = vmatpush1.msra.mxu0 0.0
    %7112 = vmatprep.subr.mxu0 0.0
    %7113 = vmatpush1.msra.mxu0 0.0
    %7114 = vmatprep.subr.mxu0 0.0
    %7115 = vmatpush1.msra.mxu0 0.0
    %7116 = vmatprep.subr.mxu0 0.0
    %7117 = vmatpush1.msra.mxu0 0.0
    %7118 = vmatprep.subr.mxu0 0.0
    %7119 = vmatpush1.msra.mxu0 0.0
    %7120 = vmatprep.subr.mxu0 0.0
    %7121 = vmatpush1.msra.mxu0 0.0
    %7122 = vmatprep.subr.mxu0 0.0
    %7123 = vmatpush1.msra.mxu0 0.0
    %7124 = vmatprep.subr.mxu0 0.0
    %7125 = vmatpush1.msra.mxu0 0.0
    %7126 = vmatprep.subr.mxu0 0.0
    %7127 = vmatpush1.msra.mxu0 0.0
    %7128 = vmatprep.subr.mxu0 0.0
    %7129 = vmatpush1.msra.mxu0 0.0
    %7130 = vmatprep.subr.mxu0 0.0
    %7131 = vmatpush1.msra.mxu0 0.0
    %7132 = vmatprep.subr.mxu0 0.0
    %7133 = vmatpush1.msra.mxu0 0.0
    %7134 = vmatprep.subr.mxu0 0.0
    %7135 = vmatpush1.msra.mxu0 0.0
    %7136 = vmatprep.subr.mxu0 0.0
    %7137 = vmatpush1.msra.mxu0 0.0
    %7138 = vmatprep.subr.mxu0 0.0
    %7139 = vmatpush1.msra.mxu0 0.0
    %7140 = vmatprep.subr.mxu0 0.0
    %7141 = vmatpush1.msra.mxu0 0.0
    %7142 = vmatprep.subr.mxu0 0.0
    %7143 = vmatpush1.msra.mxu0 0.0
    %7144 = vmatprep.subr.mxu0 0.0
    %7145 = vmatpush1.msra.mxu0 0.0
    %7146 = vmatprep.subr.mxu0 0.0
    %7147 = vmatpush1.msra.mxu0 0.0
    %7148 = vmatprep.subr.mxu0 0.0
    %7149 = vmatpush1.msra.mxu0 0.0
    %7150 = vmatprep.mubr.f32.mxu0 0.0
    %7151 = vmatmul.mubr.f32.gmra.mrb[0].mxu0 %v3152
    %v7152 = vpop.f32.mrb[0].mxu0
    %v7153 = vadd.f32 0.0, %v7152
    %v7154 = vpop.f32.mrb[0].mxu0
    %v7155 = vadd.f32 0.0, %v7154
    %7156 = vdwg.mxu0
    %v7157 = vmul.f32 %v7082, %v204
    %v7158 = vmul.f32 %v7084, %v208
    %v7159 = vmul.f32 %v7153, %v212
    %v7160 = vmul.f32 %v7155, %v216
    %v7161 = vadd.f32 %v6963, %v7157
    %v7162 = vadd.f32 %v6964, %v7158
    %v7163 = vadd.f32 %v6965, %v7159
    %v7164 = vadd.f32 %v6966, %v7160
    %7165 = vmatprep.subr.mxu0 %v6358
    %7166 = vmatpush1.msra.mxu0 %v6357
    %7167 = vmatprep.subr.mxu0 %v6362
    %7168 = vmatpush1.msra.mxu0 %v6361
    %7169 = vmatprep.subr.mxu0 %v6366
    %7170 = vmatpush1.msra.mxu0 %v6365
    %7171 = vmatprep.subr.mxu0 %v6370
    %7172 = vmatpush1.msra.mxu0 %v6369
    %7173 = vmatprep.subr.mxu0 0.0
    %7174 = vmatpush1.msra.mxu0 0.0
    %7175 = vmatprep.subr.mxu0 0.0
    %7176 = vmatpush1.msra.mxu0 0.0
    %7177 = vmatprep.subr.mxu0 0.0
    %7178 = vmatpush1.msra.mxu0 0.0
    %7179 = vmatprep.subr.mxu0 0.0
    %7180 = vmatpush1.msra.mxu0 0.0
    %7181 = vmatprep.subr.mxu0 0.0
    %7182 = vmatpush1.msra.mxu0 0.0
    %7183 = vmatprep.subr.mxu0 0.0
    %7184 = vmatpush1.msra.mxu0 0.0
    %7185 = vmatprep.subr.mxu0 0.0
    %7186 = vmatpush1.msra.mxu0 0.0
    %7187 = vmatprep.subr.mxu0 0.0
    %7188 = vmatpush1.msra.mxu0 0.0
    %7189 = vmatprep.subr.mxu0 0.0
    %7190 = vmatpush1.msra.mxu0 0.0
    %7191 = vmatprep.subr.mxu0 0.0
    %7192 = vmatpush1.msra.mxu0 0.0
    %7193 = vmatprep.subr.mxu0 0.0
    %7194 = vmatpush1.msra.mxu0 0.0
    %7195 = vmatprep.subr.mxu0 0.0
    %7196 = vmatpush1.msra.mxu0 0.0
    %7197 = vmatprep.subr.mxu0 0.0
    %7198 = vmatpush1.msra.mxu0 0.0
    %7199 = vmatprep.subr.mxu0 0.0
    %7200 = vmatpush1.msra.mxu0 0.0
    %7201 = vmatprep.subr.mxu0 0.0
    %7202 = vmatpush1.msra.mxu0 0.0
    %7203 = vmatprep.subr.mxu0 0.0
    %7204 = vmatpush1.msra.mxu0 0.0
    %7205 = vmatprep.subr.mxu0 0.0
    %7206 = vmatpush1.msra.mxu0 0.0
    %7207 = vmatprep.subr.mxu0 0.0
    %7208 = vmatpush1.msra.mxu0 0.0
    %7209 = vmatprep.subr.mxu0 0.0
    %7210 = vmatpush1.msra.mxu0 0.0
    %7211 = vmatprep.subr.mxu0 0.0
    %7212 = vmatpush1.msra.mxu0 0.0
    %7213 = vmatprep.subr.mxu0 0.0
    %7214 = vmatpush1.msra.mxu0 0.0
    %7215 = vmatprep.subr.mxu0 0.0
    %7216 = vmatpush1.msra.mxu0 0.0
    %7217 = vmatprep.subr.mxu0 0.0
    %7218 = vmatpush1.msra.mxu0 0.0
    %7219 = vmatprep.subr.mxu0 0.0
    %7220 = vmatpush1.msra.mxu0 0.0
    %7221 = vmatprep.subr.mxu0 0.0
    %7222 = vmatpush1.msra.mxu0 0.0
    %7223 = vmatprep.subr.mxu0 0.0
    %7224 = vmatpush1.msra.mxu0 0.0
    %7225 = vmatprep.subr.mxu0 0.0
    %7226 = vmatpush1.msra.mxu0 0.0
    %7227 = vmatprep.subr.mxu0 0.0
    %7228 = vmatpush1.msra.mxu0 0.0
    %7229 = vmatprep.mubr.f32.mxu0 0.0
    %7230 = vmatmul.mubr.f32.gmra.mrb[0].mxu0 %v3305
    %v7231 = vpop.f32.mrb[0].mxu0
    %v7232 = vadd.f32 0.0, %v7231
    %v7233 = vpop.f32.mrb[0].mxu0
    %v7234 = vadd.f32 0.0, %v7233
    %7235 = vdwg.mxu0
    %7236 = vmatprep.subr.mxu0 %v6360
    %7237 = vmatpush1.msra.mxu0 %v6359
    %7238 = vmatprep.subr.mxu0 %v6364
    %7239 = vmatpush1.msra.mxu0 %v6363
    %7240 = vmatprep.subr.mxu0 %v6368
    %7241 = vmatpush1.msra.mxu0 %v6367
    %7242 = vmatprep.subr.mxu0 %v6372
    %7243 = vmatpush1.msra.mxu0 %v6371
    %7244 = vmatprep.subr.mxu0 0.0
    %7245 = vmatpush1.msra.mxu0 0.0
    %7246 = vmatprep.subr.mxu0 0.0
    %7247 = vmatpush1.msra.mxu0 0.0
    %7248 = vmatprep.subr.mxu0 0.0
    %7249 = vmatpush1.msra.mxu0 0.0
    %7250 = vmatprep.subr.mxu0 0.0
    %7251 = vmatpush1.msra.mxu0 0.0
    %7252 = vmatprep.subr.mxu0 0.0
    %7253 = vmatpush1.msra.mxu0 0.0
    %7254 = vmatprep.subr.mxu0 0.0
    %7255 = vmatpush1.msra.mxu0 0.0
    %7256 = vmatprep.subr.mxu0 0.0
    %7257 = vmatpush1.msra.mxu0 0.0
    %7258 = vmatprep.subr.mxu0 0.0
    %7259 = vmatpush1.msra.mxu0 0.0
    %7260 = vmatprep.subr.mxu0 0.0
    %7261 = vmatpush1.msra.mxu0 0.0
    %7262 = vmatprep.subr.mxu0 0.0
    %7263 = vmatpush1.msra.mxu0 0.0
    %7264 = vmatprep.subr.mxu0 0.0
    %7265 = vmatpush1.msra.mxu0 0.0
    %7266 = vmatprep.subr.mxu0 0.0
    %7267 = vmatpush1.msra.mxu0 0.0
    %7268 = vmatprep.subr.mxu0 0.0
    %7269 = vmatpush1.msra.mxu0 0.0
    %7270 = vmatprep.subr.mxu0 0.0
    %7271 = vmatpush1.msra.mxu0 0.0
    %7272 = vmatprep.subr.mxu0 0.0
    %7273 = vmatpush1.msra.mxu0 0.0
    %7274 = vmatprep.subr.mxu0 0.0
    %7275 = vmatpush1.msra.mxu0 0.0
    %7276 = vmatprep.subr.mxu0 0.0
    %7277 = vmatpush1.msra.mxu0 0.0
    %7278 = vmatprep.subr.mxu0 0.0
    %7279 = vmatpush1.msra.mxu0 0.0
    %7280 = vmatprep.subr.mxu0 0.0
    %7281 = vmatpush1.msra.mxu0 0.0
    %7282 = vmatprep.subr.mxu0 0.0
    %7283 = vmatpush1.msra.mxu0 0.0
    %7284 = vmatprep.subr.mxu0 0.0
    %7285 = vmatpush1.msra.mxu0 0.0
    %7286 = vmatprep.subr.mxu0 0.0
    %7287 = vmatpush1.msra.mxu0 0.0
    %7288 = vmatprep.subr.mxu0 0.0
    %7289 = vmatpush1.msra.mxu0 0.0
    %7290 = vmatprep.subr.mxu0 0.0
    %7291 = vmatpush1.msra.mxu0 0.0
    %7292 = vmatprep.subr.mxu0 0.0
    %7293 = vmatpush1.msra.mxu0 0.0
    %7294 = vmatprep.subr.mxu0 0.0
    %7295 = vmatpush1.msra.mxu0 0.0
    %7296 = vmatprep.subr.mxu0 0.0
    %7297 = vmatpush1.msra.mxu0 0.0
    %7298 = vmatprep.subr.mxu0 0.0
    %7299 = vmatpush1.msra.mxu0 0.0
    %7300 = vmatprep.mubr.f32.mxu0 0.0
    %7301 = vmatmul.mubr.f32.gmra.mrb[0].mxu0 %v3305
    %v7302 = vpop.f32.mrb[0].mxu0
    %v7303 = vadd.f32 0.0, %v7302
    %v7304 = vpop.f32.mrb[0].mxu0
    %v7305 = vadd.f32 0.0, %v7304
    %7306 = vdwg.mxu0
    %v7307 = vadd.f32 %v7161, %v7232
    %v7308 = vadd.f32 %v7162, %v7234
    %v7309 = vadd.f32 %v7163, %v7303
    %v7310 = vadd.f32 %v7164, %v7305
    %7311 = vrot.lane.b32.xlu0 %v6357, 127
    %v7312 = vpop.permute.xlu0 %7311
    %7313 = vrot.lane.b32.xlu0 %v6361, 127
    %v7314 = vpop.permute.xlu0 %7313
    %7315 = vrot.lane.b32.xlu0 %v6365, 127
    %v7316 = vpop.permute.xlu0 %7315
    %7317 = vrot.lane.b32.xlu0 %v6369, 127
    %v7318 = vpop.permute.xlu0 %7317
    %7319 = vrot.lane.b32.xlu0 %v6358, 127
    %v7320 = vpop.permute.xlu0 %7319
    %7321 = vrot.lane.b32.xlu0 %v6362, 127
    %v7322 = vpop.permute.xlu0 %7321
    %7323 = vrot.lane.b32.xlu0 %v6366, 127
    %v7324 = vpop.permute.xlu0 %7323
    %7325 = vrot.lane.b32.xlu0 %v6370, 127
    %v7326 = vpop.permute.xlu0 %7325
    %7327 = vrot.lane.b32.xlu0 %v6359, 127
    %v7328 = vpop.permute.xlu0 %7327
    %7329 = vrot.lane.b32.xlu0 %v6363, 127
    %v7330 = vpop.permute.xlu0 %7329
    %7331 = vrot.lane.b32.xlu0 %v6367, 127
    %v7332 = vpop.permute.xlu0 %7331
    %7333 = vrot.lane.b32.xlu0 %v6371, 127
    %v7334 = vpop.permute.xlu0 %7333
    %7335 = vrot.lane.b32.xlu0 %v6360, 127
    %v7336 = vpop.permute.xlu0 %7335
    %7337 = vrot.lane.b32.xlu0 %v6364, 127
    %v7338 = vpop.permute.xlu0 %7337
    %7339 = vrot.lane.b32.xlu0 %v6368, 127
    %v7340 = vpop.permute.xlu0 %7339
    %7341 = vrot.lane.b32.xlu0 %v6372, 127
    %v7342 = vpop.permute.xlu0 %7341
    %v7343 = vsel %vm1455, %v7328, %v7336
    %v7344 = vsel %vm1455, %v7330, %v7338
    %v7345 = vsel %vm1455, %v7332, %v7340
    %v7346 = vsel %vm1455, %v7334, %v7342
    %v7347 = vsel %vm1455, %v7320, %v7328
    %v7348 = vsel %vm1455, %v7322, %v7330
    %v7349 = vsel %vm1455, %v7324, %v7332
    %v7350 = vsel %vm1455, %v7326, %v7334
    %v7351 = vsel %vm1455, %v7312, %v7320
    %v7352 = vsel %vm1455, %v7314, %v7322
    %v7353 = vsel %vm1455, %v7316, %v7324
    %v7354 = vsel %vm1455, %v7318, %v7326
    %v7355 = vsel %vm1455, %v7336, %v7312
    %v7356 = vsel %vm1455, %v7338, %v7314
    %v7357 = vsel %vm1455, %v7340, %v7316
    %v7358 = vsel %vm1455, %v7342, %v7318
    %7359 = vmatprep.subr.mxu0 %v7347
    %7360 = vmatpush1.msra.mxu0 %v7351
    %7361 = vmatprep.subr.mxu0 %v7348
    %7362 = vmatpush1.msra.mxu0 %v7352
    %7363 = vmatprep.subr.mxu0 %v7349
    %7364 = vmatpush1.msra.mxu0 %v7353
    %7365 = vmatprep.subr.mxu0 %v7350
    %7366 = vmatpush1.msra.mxu0 %v7354
    %7367 = vmatprep.subr.mxu0 0.0
    %7368 = vmatpush1.msra.mxu0 0.0
    %7369 = vmatprep.subr.mxu0 0.0
    %7370 = vmatpush1.msra.mxu0 0.0
    %7371 = vmatprep.subr.mxu0 0.0
    %7372 = vmatpush1.msra.mxu0 0.0
    %7373 = vmatprep.subr.mxu0 0.0
    %7374 = vmatpush1.msra.mxu0 0.0
    %7375 = vmatprep.subr.mxu0 0.0
    %7376 = vmatpush1.msra.mxu0 0.0
    %7377 = vmatprep.subr.mxu0 0.0
    %7378 = vmatpush1.msra.mxu0 0.0
    %7379 = vmatprep.subr.mxu0 0.0
    %7380 = vmatpush1.msra.mxu0 0.0
    %7381 = vmatprep.subr.mxu0 0.0
    %7382 = vmatpush1.msra.mxu0 0.0
    %7383 = vmatprep.subr.mxu0 0.0
    %7384 = vmatpush1.msra.mxu0 0.0
    %7385 = vmatprep.subr.mxu0 0.0
    %7386 = vmatpush1.msra.mxu0 0.0
    %7387 = vmatprep.subr.mxu0 0.0
    %7388 = vmatpush1.msra.mxu0 0.0
    %7389 = vmatprep.subr.mxu0 0.0
    %7390 = vmatpush1.msra.mxu0 0.0
    %7391 = vmatprep.subr.mxu0 0.0
    %7392 = vmatpush1.msra.mxu0 0.0
    %7393 = vmatprep.subr.mxu0 0.0
    %7394 = vmatpush1.msra.mxu0 0.0
    %7395 = vmatprep.subr.mxu0 0.0
    %7396 = vmatpush1.msra.mxu0 0.0
    %7397 = vmatprep.subr.mxu0 0.0
    %7398 = vmatpush1.msra.mxu0 0.0
    %7399 = vmatprep.subr.mxu0 0.0
    %7400 = vmatpush1.msra.mxu0 0.0
    %7401 = vmatprep.subr.mxu0 0.0
    %7402 = vmatpush1.msra.mxu0 0.0
    %7403 = vmatprep.subr.mxu0 0.0
    %7404 = vmatpush1.msra.mxu0 0.0
    %7405 = vmatprep.subr.mxu0 0.0
    %7406 = vmatpush1.msra.mxu0 0.0
    %7407 = vmatprep.subr.mxu0 0.0
    %7408 = vmatpush1.msra.mxu0 0.0
    %7409 = vmatprep.subr.mxu0 0.0
    %7410 = vmatpush1.msra.mxu0 0.0
    %7411 = vmatprep.subr.mxu0 0.0
    %7412 = vmatpush1.msra.mxu0 0.0
    %7413 = vmatprep.subr.mxu0 0.0
    %7414 = vmatpush1.msra.mxu0 0.0
    %7415 = vmatprep.subr.mxu0 0.0
    %7416 = vmatpush1.msra.mxu0 0.0
    %7417 = vmatprep.subr.mxu0 0.0
    %7418 = vmatpush1.msra.mxu0 0.0
    %7419 = vmatprep.subr.mxu0 0.0
    %7420 = vmatpush1.msra.mxu0 0.0
    %7421 = vmatprep.subr.mxu0 0.0
    %7422 = vmatpush1.msra.mxu0 0.0
    %7423 = vmatprep.mubr.f32.mxu0 0.0
    %7424 = vmatmul.mubr.f32.gmra.mrb[0].mxu0 %v3502
    %v7425 = vpop.f32.mrb[0].mxu0
    %v7426 = vadd.f32 0.0, %v7425
    %v7427 = vpop.f32.mrb[0].mxu0
    %v7428 = vadd.f32 0.0, %v7427
    %7429 = vdwg.mxu0
    %7430 = vmatprep.subr.mxu0 %v7355
    %7431 = vmatpush1.msra.mxu0 %v7343
    %7432 = vmatprep.subr.mxu0 %v7356
    %7433 = vmatpush1.msra.mxu0 %v7344
    %7434 = vmatprep.subr.mxu0 %v7357
    %7435 = vmatpush1.msra.mxu0 %v7345
    %7436 = vmatprep.subr.mxu0 %v7358
    %7437 = vmatpush1.msra.mxu0 %v7346
    %7438 = vmatprep.subr.mxu0 0.0
    %7439 = vmatpush1.msra.mxu0 0.0
    %7440 = vmatprep.subr.mxu0 0.0
    %7441 = vmatpush1.msra.mxu0 0.0
    %7442 = vmatprep.subr.mxu0 0.0
    %7443 = vmatpush1.msra.mxu0 0.0
    %7444 = vmatprep.subr.mxu0 0.0
    %7445 = vmatpush1.msra.mxu0 0.0
    %7446 = vmatprep.subr.mxu0 0.0
    %7447 = vmatpush1.msra.mxu0 0.0
    %7448 = vmatprep.subr.mxu0 0.0
    %7449 = vmatpush1.msra.mxu0 0.0
    %7450 = vmatprep.subr.mxu0 0.0
    %7451 = vmatpush1.msra.mxu0 0.0
    %7452 = vmatprep.subr.mxu0 0.0
    %7453 = vmatpush1.msra.mxu0 0.0
    %7454 = vmatprep.subr.mxu0 0.0
    %7455 = vmatpush1.msra.mxu0 0.0
    %7456 = vmatprep.subr.mxu0 0.0
    %7457 = vmatpush1.msra.mxu0 0.0
    %7458 = vmatprep.subr.mxu0 0.0
    %7459 = vmatpush1.msra.mxu0 0.0
    %7460 = vmatprep.subr.mxu0 0.0
    %7461 = vmatpush1.msra.mxu0 0.0
    %7462 = vmatprep.subr.mxu0 0.0
    %7463 = vmatpush1.msra.mxu0 0.0
    %7464 = vmatprep.subr.mxu0 0.0
    %7465 = vmatpush1.msra.mxu0 0.0
    %7466 = vmatprep.subr.mxu0 0.0
    %7467 = vmatpush1.msra.mxu0 0.0
    %7468 = vmatprep.subr.mxu0 0.0
    %7469 = vmatpush1.msra.mxu0 0.0
    %7470 = vmatprep.subr.mxu0 0.0
    %7471 = vmatpush1.msra.mxu0 0.0
    %7472 = vmatprep.subr.mxu0 0.0
    %7473 = vmatpush1.msra.mxu0 0.0
    %7474 = vmatprep.subr.mxu0 0.0
    %7475 = vmatpush1.msra.mxu0 0.0
    %7476 = vmatprep.subr.mxu0 0.0
    %7477 = vmatpush1.msra.mxu0 0.0
    %7478 = vmatprep.subr.mxu0 0.0
    %7479 = vmatpush1.msra.mxu0 0.0
    %7480 = vmatprep.subr.mxu0 0.0
    %7481 = vmatpush1.msra.mxu0 0.0
    %7482 = vmatprep.subr.mxu0 0.0
    %7483 = vmatpush1.msra.mxu0 0.0
    %7484 = vmatprep.subr.mxu0 0.0
    %7485 = vmatpush1.msra.mxu0 0.0
    %7486 = vmatprep.subr.mxu0 0.0
    %7487 = vmatpush1.msra.mxu0 0.0
    %7488 = vmatprep.subr.mxu0 0.0
    %7489 = vmatpush1.msra.mxu0 0.0
    %7490 = vmatprep.subr.mxu0 0.0
    %7491 = vmatpush1.msra.mxu0 0.0
    %7492 = vmatprep.subr.mxu0 0.0
    %7493 = vmatpush1.msra.mxu0 0.0
    %7494 = vmatprep.mubr.f32.mxu0 0.0
    %7495 = vmatmul.mubr.f32.gmra.mrb[0].mxu0 %v3502
    %v7496 = vpop.f32.mrb[0].mxu0
    %v7497 = vadd.f32 0.0, %v7496
    %v7498 = vpop.f32.mrb[0].mxu0
    %v7499 = vadd.f32 0.0, %v7498
    %7500 = vdwg.mxu0
    %v7501 = vmul.f32 %v7426, %v220
    %v7502 = vmul.f32 %v7428, %v224
    %v7503 = vmul.f32 %v7497, %v228
    %v7504 = vmul.f32 %v7499, %v232
    %v7505 = vadd.f32 %v7307, %v7501
    %v7506 = vadd.f32 %v7308, %v7502
    %v7507 = vadd.f32 %v7309, %v7503
    %v7508 = vadd.f32 %v7310, %v7504
    %7509 = vrot.lane.b32.xlu0 %v6357, 113
    %v7510 = vpop.permute.xlu0 %7509
    %7511 = vrot.lane.b32.xlu0 %v6361, 113
    %v7512 = vpop.permute.xlu0 %7511
    %7513 = vrot.lane.b32.xlu0 %v6365, 113
    %v7514 = vpop.permute.xlu0 %7513
    %7515 = vrot.lane.b32.xlu0 %v6369, 113
    %v7516 = vpop.permute.xlu0 %7515
    %7517 = vrot.lane.b32.xlu0 %v6358, 113
    %v7518 = vpop.permute.xlu0 %7517
    %7519 = vrot.lane.b32.xlu0 %v6362, 113
    %v7520 = vpop.permute.xlu0 %7519
    %7521 = vrot.lane.b32.xlu0 %v6366, 113
    %v7522 = vpop.permute.xlu0 %7521
    %7523 = vrot.lane.b32.xlu0 %v6370, 113
    %v7524 = vpop.permute.xlu0 %7523
    %7525 = vrot.lane.b32.xlu0 %v6359, 113
    %v7526 = vpop.permute.xlu0 %7525
    %7527 = vrot.lane.b32.xlu0 %v6363, 113
    %v7528 = vpop.permute.xlu0 %7527
    %7529 = vrot.lane.b32.xlu0 %v6367, 113
    %v7530 = vpop.permute.xlu0 %7529
    %7531 = vrot.lane.b32.xlu0 %v6371, 113
    %v7532 = vpop.permute.xlu0 %7531
    %7533 = vrot.lane.b32.xlu0 %v6360, 113
    %v7534 = vpop.permute.xlu0 %7533
    %7535 = vrot.lane.b32.xlu0 %v6364, 113
    %v7536 = vpop.permute.xlu0 %7535
    %7537 = vrot.lane.b32.xlu0 %v6368, 113
    %v7538 = vpop.permute.xlu0 %7537
    %7539 = vrot.lane.b32.xlu0 %v6372, 113
    %v7540 = vpop.permute.xlu0 %7539
    %v7541 = vsel %vm1690, %v7526, %v7534
    %v7542 = vsel %vm1690, %v7528, %v7536
    %v7543 = vsel %vm1690, %v7530, %v7538
    %v7544 = vsel %vm1690, %v7532, %v7540
    %v7545 = vsel %vm1690, %v7518, %v7526
    %v7546 = vsel %vm1690, %v7520, %v7528
    %v7547 = vsel %vm1690, %v7522, %v7530
    %v7548 = vsel %vm1690, %v7524, %v7532
    %v7549 = vsel %vm1690, %v7510, %v7518
    %v7550 = vsel %vm1690, %v7512, %v7520
    %v7551 = vsel %vm1690, %v7514, %v7522
    %v7552 = vsel %vm1690, %v7516, %v7524
    %v7553 = vsel %vm1690, %v7534, %v7510
    %v7554 = vsel %vm1690, %v7536, %v7512
    %v7555 = vsel %vm1690, %v7538, %v7514
    %v7556 = vsel %vm1690, %v7540, %v7516
    %7557 = vmatprep.subr.mxu0 %v7545
    %7558 = vmatpush1.msra.mxu0 %v7549
    %7559 = vmatprep.subr.mxu0 %v7546
    %7560 = vmatpush1.msra.mxu0 %v7550
    %7561 = vmatprep.subr.mxu0 %v7547
    %7562 = vmatpush1.msra.mxu0 %v7551
    %7563 = vmatprep.subr.mxu0 %v7548
    %7564 = vmatpush1.msra.mxu0 %v7552
    %7565 = vmatprep.subr.mxu0 0.0
    %7566 = vmatpush1.msra.mxu0 0.0
    %7567 = vmatprep.subr.mxu0 0.0
    %7568 = vmatpush1.msra.mxu0 0.0
    %7569 = vmatprep.subr.mxu0 0.0
    %7570 = vmatpush1.msra.mxu0 0.0
    %7571 = vmatprep.subr.mxu0 0.0
    %7572 = vmatpush1.msra.mxu0 0.0
    %7573 = vmatprep.subr.mxu0 0.0
    %7574 = vmatpush1.msra.mxu0 0.0
    %7575 = vmatprep.subr.mxu0 0.0
    %7576 = vmatpush1.msra.mxu0 0.0
    %7577 = vmatprep.subr.mxu0 0.0
    %7578 = vmatpush1.msra.mxu0 0.0
    %7579 = vmatprep.subr.mxu0 0.0
    %7580 = vmatpush1.msra.mxu0 0.0
    %7581 = vmatprep.subr.mxu0 0.0
    %7582 = vmatpush1.msra.mxu0 0.0
    %7583 = vmatprep.subr.mxu0 0.0
    %7584 = vmatpush1.msra.mxu0 0.0
    %7585 = vmatprep.subr.mxu0 0.0
    %7586 = vmatpush1.msra.mxu0 0.0
    %7587 = vmatprep.subr.mxu0 0.0
    %7588 = vmatpush1.msra.mxu0 0.0
    %7589 = vmatprep.subr.mxu0 0.0
    %7590 = vmatpush1.msra.mxu0 0.0
    %7591 = vmatprep.subr.mxu0 0.0
    %7592 = vmatpush1.msra.mxu0 0.0
    %7593 = vmatprep.subr.mxu0 0.0
    %7594 = vmatpush1.msra.mxu0 0.0
    %7595 = vmatprep.subr.mxu0 0.0
    %7596 = vmatpush1.msra.mxu0 0.0
    %7597 = vmatprep.subr.mxu0 0.0
    %7598 = vmatpush1.msra.mxu0 0.0
    %7599 = vmatprep.subr.mxu0 0.0
    %7600 = vmatpush1.msra.mxu0 0.0
    %7601 = vmatprep.subr.mxu0 0.0
    %7602 = vmatpush1.msra.mxu0 0.0
    %7603 = vmatprep.subr.mxu0 0.0
    %7604 = vmatpush1.msra.mxu0 0.0
    %7605 = vmatprep.subr.mxu0 0.0
    %7606 = vmatpush1.msra.mxu0 0.0
    %7607 = vmatprep.subr.mxu0 0.0
    %7608 = vmatpush1.msra.mxu0 0.0
    %7609 = vmatprep.subr.mxu0 0.0
    %7610 = vmatpush1.msra.mxu0 0.0
    %7611 = vmatprep.subr.mxu0 0.0
    %7612 = vmatpush1.msra.mxu0 0.0
    %7613 = vmatprep.subr.mxu0 0.0
    %7614 = vmatpush1.msra.mxu0 0.0
    %7615 = vmatprep.subr.mxu0 0.0
    %7616 = vmatpush1.msra.mxu0 0.0
    %7617 = vmatprep.subr.mxu0 0.0
    %7618 = vmatpush1.msra.mxu0 0.0
    %7619 = vmatprep.subr.mxu0 0.0
    %7620 = vmatpush1.msra.mxu0 0.0
    %7621 = vmatprep.mubr.f32.mxu0 0.0
    %7622 = vmatmul.mubr.f32.gmra.mrb[0].mxu0 %v3703
    %v7623 = vpop.f32.mrb[0].mxu0
    %v7624 = vadd.f32 0.0, %v7623
    %v7625 = vpop.f32.mrb[0].mxu0
    %v7626 = vadd.f32 0.0, %v7625
    %7627 = vdwg.mxu0
    %7628 = vmatprep.subr.mxu0 %v7553
    %7629 = vmatpush1.msra.mxu0 %v7541
    %7630 = vmatprep.subr.mxu0 %v7554
    %7631 = vmatpush1.msra.mxu0 %v7542
    %7632 = vmatprep.subr.mxu0 %v7555
    %7633 = vmatpush1.msra.mxu0 %v7543
    %7634 = vmatprep.subr.mxu0 %v7556
    %7635 = vmatpush1.msra.mxu0 %v7544
    %7636 = vmatprep.subr.mxu0 0.0
    %7637 = vmatpush1.msra.mxu0 0.0
    %7638 = vmatprep.subr.mxu0 0.0
    %7639 = vmatpush1.msra.mxu0 0.0
    %7640 = vmatprep.subr.mxu0 0.0
    %7641 = vmatpush1.msra.mxu0 0.0
    %7642 = vmatprep.subr.mxu0 0.0
    %7643 = vmatpush1.msra.mxu0 0.0
    %7644 = vmatprep.subr.mxu0 0.0
    %7645 = vmatpush1.msra.mxu0 0.0
    %7646 = vmatprep.subr.mxu0 0.0
    %7647 = vmatpush1.msra.mxu0 0.0
    %7648 = vmatprep.subr.mxu0 0.0
    %7649 = vmatpush1.msra.mxu0 0.0
    %7650 = vmatprep.subr.mxu0 0.0
    %7651 = vmatpush1.msra.mxu0 0.0
    %7652 = vmatprep.subr.mxu0 0.0
    %7653 = vmatpush1.msra.mxu0 0.0
    %7654 = vmatprep.subr.mxu0 0.0
    %7655 = vmatpush1.msra.mxu0 0.0
    %7656 = vmatprep.subr.mxu0 0.0
    %7657 = vmatpush1.msra.mxu0 0.0
    %7658 = vmatprep.subr.mxu0 0.0
    %7659 = vmatpush1.msra.mxu0 0.0
    %7660 = vmatprep.subr.mxu0 0.0
    %7661 = vmatpush1.msra.mxu0 0.0
    %7662 = vmatprep.subr.mxu0 0.0
    %7663 = vmatpush1.msra.mxu0 0.0
    %7664 = vmatprep.subr.mxu0 0.0
    %7665 = vmatpush1.msra.mxu0 0.0
    %7666 = vmatprep.subr.mxu0 0.0
    %7667 = vmatpush1.msra.mxu0 0.0
    %7668 = vmatprep.subr.mxu0 0.0
    %7669 = vmatpush1.msra.mxu0 0.0
    %7670 = vmatprep.subr.mxu0 0.0
    %7671 = vmatpush1.msra.mxu0 0.0
    %7672 = vmatprep.subr.mxu0 0.0
    %7673 = vmatpush1.msra.mxu0 0.0
    %7674 = vmatprep.subr.mxu0 0.0
    %7675 = vmatpush1.msra.mxu0 0.0
    %7676 = vmatprep.subr.mxu0 0.0
    %7677 = vmatpush1.msra.mxu0 0.0
    %7678 = vmatprep.subr.mxu0 0.0
    %7679 = vmatpush1.msra.mxu0 0.0
    %7680 = vmatprep.subr.mxu0 0.0
    %7681 = vmatpush1.msra.mxu0 0.0
    %7682 = vmatprep.subr.mxu0 0.0
    %7683 = vmatpush1.msra.mxu0 0.0
    %7684 = vmatprep.subr.mxu0 0.0
    %7685 = vmatpush1.msra.mxu0 0.0
    %7686 = vmatprep.subr.mxu0 0.0
    %7687 = vmatpush1.msra.mxu0 0.0
    %7688 = vmatprep.subr.mxu0 0.0
    %7689 = vmatpush1.msra.mxu0 0.0
    %7690 = vmatprep.subr.mxu0 0.0
    %7691 = vmatpush1.msra.mxu0 0.0
    %7692 = vmatprep.mubr.f32.mxu0 0.0
    %7693 = vmatmul.mubr.f32.gmra.mrb[0].mxu0 %v3703
    %v7694 = vpop.f32.mrb[0].mxu0
    %v7695 = vadd.f32 0.0, %v7694
    %v7696 = vpop.f32.mrb[0].mxu0
    %v7697 = vadd.f32 0.0, %v7696
    %7698 = vdwg.mxu0
    %v7699 = vmul.f32 %v7624, %v236
    %v7700 = vmul.f32 %v7626, %v240
    %v7701 = vmul.f32 %v7695, %v244
    %v7702 = vmul.f32 %v7697, %v248
    %v7703 = vadd.f32 %v7505, %v7699
    %v7704 = vadd.f32 %v7506, %v7700
    %v7705 = vadd.f32 %v7507, %v7701
    %v7706 = vadd.f32 %v7508, %v7702
    %7707 = vrot.lane.b32.xlu0 %v6357, 112
    %v7708 = vpop.permute.xlu0 %7707
    %7709 = vrot.lane.b32.xlu0 %v6361, 112
    %v7710 = vpop.permute.xlu0 %7709
    %7711 = vrot.lane.b32.xlu0 %v6365, 112
    %v7712 = vpop.permute.xlu0 %7711
    %7713 = vrot.lane.b32.xlu0 %v6369, 112
    %v7714 = vpop.permute.xlu0 %7713
    %7715 = vrot.lane.b32.xlu0 %v6358, 112
    %v7716 = vpop.permute.xlu0 %7715
    %7717 = vrot.lane.b32.xlu0 %v6362, 112
    %v7718 = vpop.permute.xlu0 %7717
    %7719 = vrot.lane.b32.xlu0 %v6366, 112
    %v7720 = vpop.permute.xlu0 %7719
    %7721 = vrot.lane.b32.xlu0 %v6370, 112
    %v7722 = vpop.permute.xlu0 %7721
    %7723 = vrot.lane.b32.xlu0 %v6359, 112
    %v7724 = vpop.permute.xlu0 %7723
    %7725 = vrot.lane.b32.xlu0 %v6363, 112
    %v7726 = vpop.permute.xlu0 %7725
    %7727 = vrot.lane.b32.xlu0 %v6367, 112
    %v7728 = vpop.permute.xlu0 %7727
    %7729 = vrot.lane.b32.xlu0 %v6371, 112
    %v7730 = vpop.permute.xlu0 %7729
    %7731 = vrot.lane.b32.xlu0 %v6360, 112
    %v7732 = vpop.permute.xlu0 %7731
    %7733 = vrot.lane.b32.xlu0 %v6364, 112
    %v7734 = vpop.permute.xlu0 %7733
    %7735 = vrot.lane.b32.xlu0 %v6368, 112
    %v7736 = vpop.permute.xlu0 %7735
    %7737 = vrot.lane.b32.xlu0 %v6372, 112
    %v7738 = vpop.permute.xlu0 %7737
    %v7739 = vsel %vm1925, %v7724, %v7732
    %v7740 = vsel %vm1925, %v7726, %v7734
    %v7741 = vsel %vm1925, %v7728, %v7736
    %v7742 = vsel %vm1925, %v7730, %v7738
    %v7743 = vsel %vm1925, %v7716, %v7724
    %v7744 = vsel %vm1925, %v7718, %v7726
    %v7745 = vsel %vm1925, %v7720, %v7728
    %v7746 = vsel %vm1925, %v7722, %v7730
    %v7747 = vsel %vm1925, %v7708, %v7716
    %v7748 = vsel %vm1925, %v7710, %v7718
    %v7749 = vsel %vm1925, %v7712, %v7720
    %v7750 = vsel %vm1925, %v7714, %v7722
    %v7751 = vsel %vm1925, %v7732, %v7708
    %v7752 = vsel %vm1925, %v7734, %v7710
    %v7753 = vsel %vm1925, %v7736, %v7712
    %v7754 = vsel %vm1925, %v7738, %v7714
    %7755 = vmatprep.subr.mxu0 %v7743
    %7756 = vmatpush1.msra.mxu0 %v7747
    %7757 = vmatprep.subr.mxu0 %v7744
    %7758 = vmatpush1.msra.mxu0 %v7748
    %7759 = vmatprep.subr.mxu0 %v7745
    %7760 = vmatpush1.msra.mxu0 %v7749
    %7761 = vmatprep.subr.mxu0 %v7746
    %7762 = vmatpush1.msra.mxu0 %v7750
    %7763 = vmatprep.subr.mxu0 0.0
    %7764 = vmatpush1.msra.mxu0 0.0
    %7765 = vmatprep.subr.mxu0 0.0
    %7766 = vmatpush1.msra.mxu0 0.0
    %7767 = vmatprep.subr.mxu0 0.0
    %7768 = vmatpush1.msra.mxu0 0.0
    %7769 = vmatprep.subr.mxu0 0.0
    %7770 = vmatpush1.msra.mxu0 0.0
    %7771 = vmatprep.subr.mxu0 0.0
    %7772 = vmatpush1.msra.mxu0 0.0
    %7773 = vmatprep.subr.mxu0 0.0
    %7774 = vmatpush1.msra.mxu0 0.0
    %7775 = vmatprep.subr.mxu0 0.0
    %7776 = vmatpush1.msra.mxu0 0.0
    %7777 = vmatprep.subr.mxu0 0.0
    %7778 = vmatpush1.msra.mxu0 0.0
    %7779 = vmatprep.subr.mxu0 0.0
    %7780 = vmatpush1.msra.mxu0 0.0
    %7781 = vmatprep.subr.mxu0 0.0
    %7782 = vmatpush1.msra.mxu0 0.0
    %7783 = vmatprep.subr.mxu0 0.0
    %7784 = vmatpush1.msra.mxu0 0.0
    %7785 = vmatprep.subr.mxu0 0.0
    %7786 = vmatpush1.msra.mxu0 0.0
    %7787 = vmatprep.subr.mxu0 0.0
    %7788 = vmatpush1.msra.mxu0 0.0
    %7789 = vmatprep.subr.mxu0 0.0
    %7790 = vmatpush1.msra.mxu0 0.0
    %7791 = vmatprep.subr.mxu0 0.0
    %7792 = vmatpush1.msra.mxu0 0.0
    %7793 = vmatprep.subr.mxu0 0.0
    %7794 = vmatpush1.msra.mxu0 0.0
    %7795 = vmatprep.subr.mxu0 0.0
    %7796 = vmatpush1.msra.mxu0 0.0
    %7797 = vmatprep.subr.mxu0 0.0
    %7798 = vmatpush1.msra.mxu0 0.0
    %7799 = vmatprep.subr.mxu0 0.0
    %7800 = vmatpush1.msra.mxu0 0.0
    %7801 = vmatprep.subr.mxu0 0.0
    %7802 = vmatpush1.msra.mxu0 0.0
    %7803 = vmatprep.subr.mxu0 0.0
    %7804 = vmatpush1.msra.mxu0 0.0
    %7805 = vmatprep.subr.mxu0 0.0
    %7806 = vmatpush1.msra.mxu0 0.0
    %7807 = vmatprep.subr.mxu0 0.0
    %7808 = vmatpush1.msra.mxu0 0.0
    %7809 = vmatprep.subr.mxu0 0.0
    %7810 = vmatpush1.msra.mxu0 0.0
    %7811 = vmatprep.subr.mxu0 0.0
    %7812 = vmatpush1.msra.mxu0 0.0
    %7813 = vmatprep.subr.mxu0 0.0
    %7814 = vmatpush1.msra.mxu0 0.0
    %7815 = vmatprep.subr.mxu0 0.0
    %7816 = vmatpush1.msra.mxu0 0.0
    %7817 = vmatprep.subr.mxu0 0.0
    %7818 = vmatpush1.msra.mxu0 0.0
    %7819 = vmatprep.mubr.f32.mxu0 0.0
    %7820 = vmatmul.mubr.f32.gmra.mrb[0].mxu0 %v3904
    %v7821 = vpop.f32.mrb[0].mxu0
    %v7822 = vadd.f32 0.0, %v7821
    %v7823 = vpop.f32.mrb[0].mxu0
    %v7824 = vadd.f32 0.0, %v7823
    %7825 = vdwg.mxu0
    %7826 = vmatprep.subr.mxu0 %v7751
    %7827 = vmatpush1.msra.mxu0 %v7739
    %7828 = vmatprep.subr.mxu0 %v7752
    %7829 = vmatpush1.msra.mxu0 %v7740
    %7830 = vmatprep.subr.mxu0 %v7753
    %7831 = vmatpush1.msra.mxu0 %v7741
    %7832 = vmatprep.subr.mxu0 %v7754
    %7833 = vmatpush1.msra.mxu0 %v7742
    %7834 = vmatprep.subr.mxu0 0.0
    %7835 = vmatpush1.msra.mxu0 0.0
    %7836 = vmatprep.subr.mxu0 0.0
    %7837 = vmatpush1.msra.mxu0 0.0
    %7838 = vmatprep.subr.mxu0 0.0
    %7839 = vmatpush1.msra.mxu0 0.0
    %7840 = vmatprep.subr.mxu0 0.0
    %7841 = vmatpush1.msra.mxu0 0.0
    %7842 = vmatprep.subr.mxu0 0.0
    %7843 = vmatpush1.msra.mxu0 0.0
    %7844 = vmatprep.subr.mxu0 0.0
    %7845 = vmatpush1.msra.mxu0 0.0
    %7846 = vmatprep.subr.mxu0 0.0
    %7847 = vmatpush1.msra.mxu0 0.0
    %7848 = vmatprep.subr.mxu0 0.0
    %7849 = vmatpush1.msra.mxu0 0.0
    %7850 = vmatprep.subr.mxu0 0.0
    %7851 = vmatpush1.msra.mxu0 0.0
    %7852 = vmatprep.subr.mxu0 0.0
    %7853 = vmatpush1.msra.mxu0 0.0
    %7854 = vmatprep.subr.mxu0 0.0
    %7855 = vmatpush1.msra.mxu0 0.0
    %7856 = vmatprep.subr.mxu0 0.0
    %7857 = vmatpush1.msra.mxu0 0.0
    %7858 = vmatprep.subr.mxu0 0.0
    %7859 = vmatpush1.msra.mxu0 0.0
    %7860 = vmatprep.subr.mxu0 0.0
    %7861 = vmatpush1.msra.mxu0 0.0
    %7862 = vmatprep.subr.mxu0 0.0
    %7863 = vmatpush1.msra.mxu0 0.0
    %7864 = vmatprep.subr.mxu0 0.0
    %7865 = vmatpush1.msra.mxu0 0.0
    %7866 = vmatprep.subr.mxu0 0.0
    %7867 = vmatpush1.msra.mxu0 0.0
    %7868 = vmatprep.subr.mxu0 0.0
    %7869 = vmatpush1.msra.mxu0 0.0
    %7870 = vmatprep.subr.mxu0 0.0
    %7871 = vmatpush1.msra.mxu0 0.0
    %7872 = vmatprep.subr.mxu0 0.0
    %7873 = vmatpush1.msra.mxu0 0.0
    %7874 = vmatprep.subr.mxu0 0.0
    %7875 = vmatpush1.msra.mxu0 0.0
    %7876 = vmatprep.subr.mxu0 0.0
    %7877 = vmatpush1.msra.mxu0 0.0
    %7878 = vmatprep.subr.mxu0 0.0
    %7879 = vmatpush1.msra.mxu0 0.0
    %7880 = vmatprep.subr.mxu0 0.0
    %7881 = vmatpush1.msra.mxu0 0.0
    %7882 = vmatprep.subr.mxu0 0.0
    %7883 = vmatpush1.msra.mxu0 0.0
    %7884 = vmatprep.subr.mxu0 0.0
    %7885 = vmatpush1.msra.mxu0 0.0
    %7886 = vmatprep.subr.mxu0 0.0
    %7887 = vmatpush1.msra.mxu0 0.0
    %7888 = vmatprep.subr.mxu0 0.0
    %7889 = vmatpush1.msra.mxu0 0.0
    %7890 = vmatprep.mubr.f32.mxu0 0.0
    %7891 = vmatmul.mubr.f32.gmra.mrb[0].mxu0 %v3904
    %v7892 = vpop.f32.mrb[0].mxu0
    %v7893 = vadd.f32 0.0, %v7892
    %v7894 = vpop.f32.mrb[0].mxu0
    %v7895 = vadd.f32 0.0, %v7894
    %7896 = vdwg.mxu0
    %v7897 = vmul.f32 %v7822, %v252
    %v7898 = vmul.f32 %v7824, %v256
    %v7899 = vmul.f32 %v7893, %v260
    %v7900 = vmul.f32 %v7895, %v264
    %v7901 = vadd.f32 %v7703, %v7897
    %v7902 = vadd.f32 %v7704, %v7898
    %v7903 = vadd.f32 %v7705, %v7899
    %v7904 = vadd.f32 %v7706, %v7900
    %7905 = vrot.lane.b32.xlu0 %v6357, 111
    %v7906 = vpop.permute.xlu0 %7905
    %7907 = vrot.lane.b32.xlu0 %v6361, 111
    %v7908 = vpop.permute.xlu0 %7907
    %7909 = vrot.lane.b32.xlu0 %v6365, 111
    %v7910 = vpop.permute.xlu0 %7909
    %7911 = vrot.lane.b32.xlu0 %v6369, 111
    %v7912 = vpop.permute.xlu0 %7911
    %7913 = vrot.lane.b32.xlu0 %v6358, 111
    %v7914 = vpop.permute.xlu0 %7913
    %7915 = vrot.lane.b32.xlu0 %v6362, 111
    %v7916 = vpop.permute.xlu0 %7915
    %7917 = vrot.lane.b32.xlu0 %v6366, 111
    %v7918 = vpop.permute.xlu0 %7917
    %7919 = vrot.lane.b32.xlu0 %v6370, 111
    %v7920 = vpop.permute.xlu0 %7919
    %7921 = vrot.lane.b32.xlu0 %v6359, 111
    %v7922 = vpop.permute.xlu0 %7921
    %7923 = vrot.lane.b32.xlu0 %v6363, 111
    %v7924 = vpop.permute.xlu0 %7923
    %7925 = vrot.lane.b32.xlu0 %v6367, 111
    %v7926 = vpop.permute.xlu0 %7925
    %7927 = vrot.lane.b32.xlu0 %v6371, 111
    %v7928 = vpop.permute.xlu0 %7927
    %7929 = vrot.lane.b32.xlu0 %v6360, 111
    %v7930 = vpop.permute.xlu0 %7929
    %7931 = vrot.lane.b32.xlu0 %v6364, 111
    %v7932 = vpop.permute.xlu0 %7931
    %7933 = vrot.lane.b32.xlu0 %v6368, 111
    %v7934 = vpop.permute.xlu0 %7933
    %7935 = vrot.lane.b32.xlu0 %v6372, 111
    %v7936 = vpop.permute.xlu0 %7935
    %v7937 = vsel %vm2160, %v7922, %v7930
    %v7938 = vsel %vm2160, %v7924, %v7932
    %v7939 = vsel %vm2160, %v7926, %v7934
    %v7940 = vsel %vm2160, %v7928, %v7936
    %v7941 = vsel %vm2160, %v7914, %v7922
    %v7942 = vsel %vm2160, %v7916, %v7924
    %v7943 = vsel %vm2160, %v7918, %v7926
    %v7944 = vsel %vm2160, %v7920, %v7928
    %v7945 = vsel %vm2160, %v7906, %v7914
    %v7946 = vsel %vm2160, %v7908, %v7916
    %v7947 = vsel %vm2160, %v7910, %v7918
    %v7948 = vsel %vm2160, %v7912, %v7920
    %v7949 = vsel %vm2160, %v7930, %v7906
    %v7950 = vsel %vm2160, %v7932, %v7908
    %v7951 = vsel %vm2160, %v7934, %v7910
    %v7952 = vsel %vm2160, %v7936, %v7912
    %7953 = vmatprep.subr.mxu0 %v7941
    %7954 = vmatpush1.msra.mxu0 %v7945
    %7955 = vmatprep.subr.mxu0 %v7942
    %7956 = vmatpush1.msra.mxu0 %v7946
    %7957 = vmatprep.subr.mxu0 %v7943
    %7958 = vmatpush1.msra.mxu0 %v7947
    %7959 = vmatprep.subr.mxu0 %v7944
    %7960 = vmatpush1.msra.mxu0 %v7948
    %7961 = vmatprep.subr.mxu0 0.0
    %7962 = vmatpush1.msra.mxu0 0.0
    %7963 = vmatprep.subr.mxu0 0.0
    %7964 = vmatpush1.msra.mxu0 0.0
    %7965 = vmatprep.subr.mxu0 0.0
    %7966 = vmatpush1.msra.mxu0 0.0
    %7967 = vmatprep.subr.mxu0 0.0
    %7968 = vmatpush1.msra.mxu0 0.0
    %7969 = vmatprep.subr.mxu0 0.0
    %7970 = vmatpush1.msra.mxu0 0.0
    %7971 = vmatprep.subr.mxu0 0.0
    %7972 = vmatpush1.msra.mxu0 0.0
    %7973 = vmatprep.subr.mxu0 0.0
    %7974 = vmatpush1.msra.mxu0 0.0
    %7975 = vmatprep.subr.mxu0 0.0
    %7976 = vmatpush1.msra.mxu0 0.0
    %7977 = vmatprep.subr.mxu0 0.0
    %7978 = vmatpush1.msra.mxu0 0.0
    %7979 = vmatprep.subr.mxu0 0.0
    %7980 = vmatpush1.msra.mxu0 0.0
    %7981 = vmatprep.subr.mxu0 0.0
    %7982 = vmatpush1.msra.mxu0 0.0
    %7983 = vmatprep.subr.mxu0 0.0
    %7984 = vmatpush1.msra.mxu0 0.0
    %7985 = vmatprep.subr.mxu0 0.0
    %7986 = vmatpush1.msra.mxu0 0.0
    %7987 = vmatprep.subr.mxu0 0.0
    %7988 = vmatpush1.msra.mxu0 0.0
    %7989 = vmatprep.subr.mxu0 0.0
    %7990 = vmatpush1.msra.mxu0 0.0
    %7991 = vmatprep.subr.mxu0 0.0
    %7992 = vmatpush1.msra.mxu0 0.0
    %7993 = vmatprep.subr.mxu0 0.0
    %7994 = vmatpush1.msra.mxu0 0.0
    %7995 = vmatprep.subr.mxu0 0.0
    %7996 = vmatpush1.msra.mxu0 0.0
    %7997 = vmatprep.subr.mxu0 0.0
    %7998 = vmatpush1.msra.mxu0 0.0
    %7999 = vmatprep.subr.mxu0 0.0
    %8000 = vmatpush1.msra.mxu0 0.0
    %8001 = vmatprep.subr.mxu0 0.0
    %8002 = vmatpush1.msra.mxu0 0.0
    %8003 = vmatprep.subr.mxu0 0.0
    %8004 = vmatpush1.msra.mxu0 0.0
    %8005 = vmatprep.subr.mxu0 0.0
    %8006 = vmatpush1.msra.mxu0 0.0
    %8007 = vmatprep.subr.mxu0 0.0
    %8008 = vmatpush1.msra.mxu0 0.0
    %8009 = vmatprep.subr.mxu0 0.0
    %8010 = vmatpush1.msra.mxu0 0.0
    %8011 = vmatprep.subr.mxu0 0.0
    %8012 = vmatpush1.msra.mxu0 0.0
    %8013 = vmatprep.subr.mxu0 0.0
    %8014 = vmatpush1.msra.mxu0 0.0
    %8015 = vmatprep.subr.mxu0 0.0
    %8016 = vmatpush1.msra.mxu0 0.0
    %8017 = vmatprep.mubr.f32.mxu0 0.0
    %8018 = vmatmul.mubr.f32.gmra.mrb[0].mxu0 %v4105
    %v8019 = vpop.f32.mrb[0].mxu0
    %v8020 = vadd.f32 0.0, %v8019
    %v8021 = vpop.f32.mrb[0].mxu0
    %v8022 = vadd.f32 0.0, %v8021
    %8023 = vdwg.mxu0
    %8024 = vmatprep.subr.mxu0 %v7949
    %8025 = vmatpush1.msra.mxu0 %v7937
    %8026 = vmatprep.subr.mxu0 %v7950
    %8027 = vmatpush1.msra.mxu0 %v7938
    %8028 = vmatprep.subr.mxu0 %v7951
    %8029 = vmatpush1.msra.mxu0 %v7939
    %8030 = vmatprep.subr.mxu0 %v7952
    %8031 = vmatpush1.msra.mxu0 %v7940
    %8032 = vmatprep.subr.mxu0 0.0
    %8033 = vmatpush1.msra.mxu0 0.0
    %8034 = vmatprep.subr.mxu0 0.0
    %8035 = vmatpush1.msra.mxu0 0.0
    %8036 = vmatprep.subr.mxu0 0.0
    %8037 = vmatpush1.msra.mxu0 0.0
    %8038 = vmatprep.subr.mxu0 0.0
    %8039 = vmatpush1.msra.mxu0 0.0
    %8040 = vmatprep.subr.mxu0 0.0
    %8041 = vmatpush1.msra.mxu0 0.0
    %8042 = vmatprep.subr.mxu0 0.0
    %8043 = vmatpush1.msra.mxu0 0.0
    %8044 = vmatprep.subr.mxu0 0.0
    %8045 = vmatpush1.msra.mxu0 0.0
    %8046 = vmatprep.subr.mxu0 0.0
    %8047 = vmatpush1.msra.mxu0 0.0
    %8048 = vmatprep.subr.mxu0 0.0
    %8049 = vmatpush1.msra.mxu0 0.0
    %8050 = vmatprep.subr.mxu0 0.0
    %8051 = vmatpush1.msra.mxu0 0.0
    %8052 = vmatprep.subr.mxu0 0.0
    %8053 = vmatpush1.msra.mxu0 0.0
    %8054 = vmatprep.subr.mxu0 0.0
    %8055 = vmatpush1.msra.mxu0 0.0
    %8056 = vmatprep.subr.mxu0 0.0
    %8057 = vmatpush1.msra.mxu0 0.0
    %8058 = vmatprep.subr.mxu0 0.0
    %8059 = vmatpush1.msra.mxu0 0.0
    %8060 = vmatprep.subr.mxu0 0.0
    %8061 = vmatpush1.msra.mxu0 0.0
    %8062 = vmatprep.subr.mxu0 0.0
    %8063 = vmatpush1.msra.mxu0 0.0
    %8064 = vmatprep.subr.mxu0 0.0
    %8065 = vmatpush1.msra.mxu0 0.0
    %8066 = vmatprep.subr.mxu0 0.0
    %8067 = vmatpush1.msra.mxu0 0.0
    %8068 = vmatprep.subr.mxu0 0.0
    %8069 = vmatpush1.msra.mxu0 0.0
    %8070 = vmatprep.subr.mxu0 0.0
    %8071 = vmatpush1.msra.mxu0 0.0
    %8072 = vmatprep.subr.mxu0 0.0
    %8073 = vmatpush1.msra.mxu0 0.0
    %8074 = vmatprep.subr.mxu0 0.0
    %8075 = vmatpush1.msra.mxu0 0.0
    %8076 = vmatprep.subr.mxu0 0.0
    %8077 = vmatpush1.msra.mxu0 0.0
    %8078 = vmatprep.subr.mxu0 0.0
    %8079 = vmatpush1.msra.mxu0 0.0
    %8080 = vmatprep.subr.mxu0 0.0
    %8081 = vmatpush1.msra.mxu0 0.0
    %8082 = vmatprep.subr.mxu0 0.0
    %8083 = vmatpush1.msra.mxu0 0.0
    %8084 = vmatprep.subr.mxu0 0.0
    %8085 = vmatpush1.msra.mxu0 0.0
    %8086 = vmatprep.subr.mxu0 0.0
    %8087 = vmatpush1.msra.mxu0 0.0
    %8088 = vmatprep.mubr.f32.mxu0 0.0
    %8089 = vmatmul.mubr.f32.gmra.mrb[0].mxu0 %v4105
    %v8090 = vpop.f32.mrb[0].mxu0
    %v8091 = vadd.f32 0.0, %v8090
    %v8092 = vpop.f32.mrb[0].mxu0
    %v8093 = vadd.f32 0.0, %v8092
    %8094 = vdwg.mxu0
    %v8095 = vmul.f32 %v8020, %v268
    %v8096 = vmul.f32 %v8022, %v272
    %v8097 = vmul.f32 %v8091, %v276
    %v8098 = vmul.f32 %v8093, %v280
    %v8099 = vadd.f32 %v7901, %v8095
    %v8100 = vadd.f32 %v7902, %v8096
    %v8101 = vadd.f32 %v7903, %v8097
    %v8102 = vadd.f32 %v7904, %v8098
    %s8103 = sld [smem:[#allocation2 + $0x2]]
    %s8104 = sld [smem:[#allocation4 + $0x2]]
    %v8105 = vstv %s8104
    %v8106 = vmul.f32 %v8105, %v8099
    %v8107 = vmul.f32 %v8105, %v8100
    %v8108 = vmul.f32 %v8105, %v8101
    %v8109 = vmul.f32 %v8105, %v8102
    %v8114 = vcombine.low %v8106, %v8107
    %v8115 = vcombine.low %v8108, %v8109
    %v8118 = vsub.f32 %v4275, %v8114
    %v8119 = vsub.f32 %v4276, %v8115
    %v8120 = vstv %s8103
    %v8121 = vmul.f32 %v8120, %v8118
    %v8122 = vmul.f32 %v8120, %v8119
    %v8125 = vcombine.high %v8121, %v8121
    %v8126 = vcombine.high %v8122, %v8122
    %8129 = vrot.lane.b32.xlu0 %v8121, 17
    %v8130 = vpop.permute.xlu0 %8129
    %8131 = vrot.lane.b32.xlu0 %v8125, 17
    %v8132 = vpop.permute.xlu0 %8131
    %8133 = vrot.lane.b32.xlu0 %v8122, 17
    %v8134 = vpop.permute.xlu0 %8133
    %8135 = vrot.lane.b32.xlu0 %v8126, 17
    %v8136 = vpop.permute.xlu0 %8135
    %v8137 = vsel %vm299, %v8134, %v8136
    %v8138 = vsel %vm299, %v8132, %v8134
    %v8139 = vsel %vm299, %v8130, %v8132
    %v8140 = vsel %vm299, %v8136, %v8130
    %v8141 = vmul.f32 %v8140, %v156
    %v8142 = vmul.f32 %v8139, %v160
    %v8143 = vmul.f32 %v8138, %v164
    %v8144 = vmul.f32 %v8137, %v168
    %v8146 = vsel %vm321, %v8141, 0
    %v8149 = vsel %vm321, %v8142, 0
    %v8152 = vsel %vm321, %v8143, 0
    %v8155 = vsel %vm321, %v8144, 0
    %8157 = vmatprep.subr.mxu0 %v8149
    %8158 = vmatpush1.msra.mxu0 %v8146
    %8159 = vmatprep.subr.mxu0 0.0
    %8160 = vmatpush1.msra.mxu0 0.0
    %8161 = vmatprep.subr.mxu0 0.0
    %8162 = vmatpush1.msra.mxu0 0.0
    %8163 = vmatprep.subr.mxu0 0.0
    %8164 = vmatpush1.msra.mxu0 0.0
    %8165 = vmatprep.subr.mxu0 0.0
    %8166 = vmatpush1.msra.mxu0 0.0
    %8167 = vmatprep.subr.mxu0 0.0
    %8168 = vmatpush1.msra.mxu0 0.0
    %8169 = vmatprep.subr.mxu0 0.0
    %8170 = vmatpush1.msra.mxu0 0.0
    %8171 = vmatprep.subr.mxu0 0.0
    %8172 = vmatpush1.msra.mxu0 0.0
    %8173 = vmatprep.subr.mxu0 0.0
    %8174 = vmatpush1.msra.mxu0 0.0
    %8175 = vmatprep.subr.mxu0 0.0
    %8176 = vmatpush1.msra.mxu0 0.0
    %8177 = vmatprep.subr.mxu0 0.0
    %8178 = vmatpush1.msra.mxu0 0.0
    %8179 = vmatprep.subr.mxu0 0.0
    %8180 = vmatpush1.msra.mxu0 0.0
    %8181 = vmatprep.subr.mxu0 0.0
    %8182 = vmatpush1.msra.mxu0 0.0
    %8183 = vmatprep.subr.mxu0 0.0
    %8184 = vmatpush1.msra.mxu0 0.0
    %8185 = vmatprep.subr.mxu0 0.0
    %8186 = vmatpush1.msra.mxu0 0.0
    %8187 = vmatprep.subr.mxu0 0.0
    %8188 = vmatpush1.msra.mxu0 0.0
    %8189 = vmatprep.subr.mxu0 0.0
    %8190 = vmatpush1.msra.mxu0 0.0
    %8191 = vmatprep.subr.mxu0 0.0
    %8192 = vmatpush1.msra.mxu0 0.0
    %8193 = vmatprep.subr.mxu0 0.0
    %8194 = vmatpush1.msra.mxu0 0.0
    %8195 = vmatprep.subr.mxu0 0.0
    %8196 = vmatpush1.msra.mxu0 0.0
    %8197 = vmatprep.subr.mxu0 0.0
    %8198 = vmatpush1.msra.mxu0 0.0
    %8199 = vmatprep.subr.mxu0 0.0
    %8200 = vmatpush1.msra.mxu0 0.0
    %8201 = vmatprep.subr.mxu0 0.0
    %8202 = vmatpush1.msra.mxu0 0.0
    %8203 = vmatprep.subr.mxu0 0.0
    %8204 = vmatpush1.msra.mxu0 0.0
    %8205 = vmatprep.subr.mxu0 0.0
    %8206 = vmatpush1.msra.mxu0 0.0
    %8207 = vmatprep.subr.mxu0 0.0
    %8208 = vmatpush1.msra.mxu0 0.0
    %8209 = vmatprep.subr.mxu0 0.0
    %8210 = vmatpush1.msra.mxu0 0.0
    %8211 = vmatprep.subr.mxu0 0.0
    %8212 = vmatpush1.msra.mxu0 0.0
    %8213 = vmatprep.subr.mxu0 0.0
    %8214 = vmatpush1.msra.mxu0 0.0
    %8215 = vmatprep.subr.mxu0 0.0
    %8216 = vmatpush1.msra.mxu0 0.0
    %8217 = vmatprep.subr.mxu0 0.0
    %8218 = vmatpush1.msra.mxu0 0.0
    %8219 = vmatprep.subr.mxu0 0.0
    %8220 = vmatpush1.msra.mxu0 0.0
    %8221 = vmatprep.mubr.f32.mxu0 0.0
    %8222 = vmatmul.mubr.f32.gmra.mrb[0].mxu0 %v310
    %v8223 = vpop.f32.mrb[0].mxu0
    %v8224 = vadd.f32 0.0, %v8223
    %v8225 = vpop.f32.mrb[0].mxu0
    %v8226 = vadd.f32 0.0, %v8225
    %8227 = vmatprep.mubr.f32.mxu0 0.0
    %8228 = vmatmul.mubr.f32.gmra.mrb[0].mxu0 %v313
    %v8229 = vpop.f32.mrb[0].mxu0
    %v8230 = vadd.f32 0.0, %v8229
    %v8231 = vpop.f32.mrb[0].mxu0
    %v8232 = vadd.f32 0.0, %v8231
    %8233 = vmatprep.mubr.f32.mxu0 0.0
    %8234 = vmatmul.mubr.f32.gmra.mrb[0].mxu0 %v316
    %v8235 = vpop.f32.mrb[0].mxu0
    %v8236 = vadd.f32 0.0, %v8235
    %v8237 = vpop.f32.mrb[0].mxu0
    %v8238 = vadd.f32 0.0, %v8237
    %8239 = vmatprep.mubr.f32.mxu0 0.0
    %8240 = vmatmul.mubr.f32.gmra.mrb[0].mxu0 %v319
    %v8241 = vpop.f32.mrb[0].mxu0
    %v8242 = vadd.f32 0.0, %v8241
    %v8243 = vpop.f32.mrb[0].mxu0
    %v8244 = vadd.f32 0.0, %v8243
    %8245 = vdwg.mxu0
    %8246 = vmatprep.subr.mxu0 %v8155
    %8247 = vmatpush1.msra.mxu0 %v8152
    %8248 = vmatprep.subr.mxu0 0.0
    %8249 = vmatpush1.msra.mxu0 0.0
    %8250 = vmatprep.subr.mxu0 0.0
    %8251 = vmatpush1.msra.mxu0 0.0
    %8252 = vmatprep.subr.mxu0 0.0
    %8253 = vmatpush1.msra.mxu0 0.0
    %8254 = vmatprep.subr.mxu0 0.0
    %8255 = vmatpush1.msra.mxu0 0.0
    %8256 = vmatprep.subr.mxu0 0.0
    %8257 = vmatpush1.msra.mxu0 0.0
    %8258 = vmatprep.subr.mxu0 0.0
    %8259 = vmatpush1.msra.mxu0 0.0
    %8260 = vmatprep.subr.mxu0 0.0
    %8261 = vmatpush1.msra.mxu0 0.0
    %8262 = vmatprep.subr.mxu0 0.0
    %8263 = vmatpush1.msra.mxu0 0.0
    %8264 = vmatprep.subr.mxu0 0.0
    %8265 = vmatpush1.msra.mxu0 0.0
    %8266 = vmatprep.subr.mxu0 0.0
    %8267 = vmatpush1.msra.mxu0 0.0
    %8268 = vmatprep.subr.mxu0 0.0
    %8269 = vmatpush1.msra.mxu0 0.0
    %8270 = vmatprep.subr.mxu0 0.0
    %8271 = vmatpush1.msra.mxu0 0.0
    %8272 = vmatprep.subr.mxu0 0.0
    %8273 = vmatpush1.msra.mxu0 0.0
    %8274 = vmatprep.subr.mxu0 0.0
    %8275 = vmatpush1.msra.mxu0 0.0
    %8276 = vmatprep.subr.mxu0 0.0
    %8277 = vmatpush1.msra.mxu0 0.0
    %8278 = vmatprep.subr.mxu0 0.0
    %8279 = vmatpush1.msra.mxu0 0.0
    %8280 = vmatprep.subr.mxu0 0.0
    %8281 = vmatpush1.msra.mxu0 0.0
    %8282 = vmatprep.subr.mxu0 0.0
    %8283 = vmatpush1.msra.mxu0 0.0
    %8284 = vmatprep.subr.mxu0 0.0
    %8285 = vmatpush1.msra.mxu0 0.0
    %8286 = vmatprep.subr.mxu0 0.0
    %8287 = vmatpush1.msra.mxu0 0.0
    %8288 = vmatprep.subr.mxu0 0.0
    %8289 = vmatpush1.msra.mxu0 0.0
    %8290 = vmatprep.subr.mxu0 0.0
    %8291 = vmatpush1.msra.mxu0 0.0
    %8292 = vmatprep.subr.mxu0 0.0
    %8293 = vmatpush1.msra.mxu0 0.0
    %8294 = vmatprep.subr.mxu0 0.0
    %8295 = vmatpush1.msra.mxu0 0.0
    %8296 = vmatprep.subr.mxu0 0.0
    %8297 = vmatpush1.msra.mxu0 0.0
    %8298 = vmatprep.subr.mxu0 0.0
    %8299 = vmatpush1.msra.mxu0 0.0
    %8300 = vmatprep.subr.mxu0 0.0
    %8301 = vmatpush1.msra.mxu0 0.0
    %8302 = vmatprep.subr.mxu0 0.0
    %8303 = vmatpush1.msra.mxu0 0.0
    %8304 = vmatprep.subr.mxu0 0.0
    %8305 = vmatpush1.msra.mxu0 0.0
    %8306 = vmatprep.subr.mxu0 0.0
    %8307 = vmatpush1.msra.mxu0 0.0
    %8308 = vmatprep.subr.mxu0 0.0
    %8309 = vmatpush1.msra.mxu0 0.0
    %8310 = vmatprep.mubr.f32.mxu0 0.0
    %8311 = vmatmul.mubr.f32.gmra.mrb[0].mxu0 %v310
    %v8312 = vpop.f32.mrb[0].mxu0
    %v8313 = vadd.f32 0.0, %v8312
    %v8314 = vpop.f32.mrb[0].mxu0
    %v8315 = vadd.f32 0.0, %v8314
    %8316 = vmatprep.mubr.f32.mxu0 0.0
    %8317 = vmatmul.mubr.f32.gmra.mrb[0].mxu0 %v313
    %v8318 = vpop.f32.mrb[0].mxu0
    %v8319 = vadd.f32 0.0, %v8318
    %v8320 = vpop.f32.mrb[0].mxu0
    %v8321 = vadd.f32 0.0, %v8320
    %8322 = vmatprep.mubr.f32.mxu0 0.0
    %8323 = vmatmul.mubr.f32.gmra.mrb[0].mxu0 %v316
    %v8324 = vpop.f32.mrb[0].mxu0
    %v8325 = vadd.f32 0.0, %v8324
    %v8326 = vpop.f32.mrb[0].mxu0
    %v8327 = vadd.f32 0.0, %v8326
    %8328 = vmatprep.mubr.f32.mxu0 0.0
    %8329 = vmatmul.mubr.f32.gmra.mrb[0].mxu0 %v319
    %v8330 = vpop.f32.mrb[0].mxu0
    %v8331 = vadd.f32 0.0, %v8330
    %v8332 = vpop.f32.mrb[0].mxu0
    %v8333 = vadd.f32 0.0, %v8332
    %8334 = vdwg.mxu0
    %v8335 = vadd.f32 %v122, %v8224
    %v8336 = vadd.f32 %v122, %v8226
    %v8337 = vadd.f32 %v122, %v8313
    %v8338 = vadd.f32 %v122, %v8315
    %v8339 = vadd.f32 %v127, %v8230
    %v8340 = vadd.f32 %v127, %v8232
    %v8341 = vadd.f32 %v127, %v8319
    %v8342 = vadd.f32 %v127, %v8321
    %v8343 = vadd.f32 %v132, %v8236
    %v8344 = vadd.f32 %v132, %v8238
    %v8345 = vadd.f32 %v132, %v8325
    %v8346 = vadd.f32 %v132, %v8327
    %v8347 = vadd.f32 %v137, %v8242
    %v8348 = vadd.f32 %v137, %v8244
    %v8349 = vadd.f32 %v137, %v8331
    %v8350 = vadd.f32 %v137, %v8333
    %8351 = vrot.lane.b32.xlu0 %v8121, 16
    %v8352 = vpop.permute.xlu0 %8351
    %8353 = vrot.lane.b32.xlu0 %v8125, 16
    %v8354 = vpop.permute.xlu0 %8353
    %8355 = vrot.lane.b32.xlu0 %v8122, 16
    %v8356 = vpop.permute.xlu0 %8355
    %8357 = vrot.lane.b32.xlu0 %v8126, 16
    %v8358 = vpop.permute.xlu0 %8357
    %v8359 = vsel %vm536, %v8356, %v8358
    %v8360 = vsel %vm536, %v8354, %v8356
    %v8361 = vsel %vm536, %v8352, %v8354
    %v8362 = vsel %vm536, %v8358, %v8352
    %v8363 = vmul.f32 %v8362, %v172
    %v8364 = vmul.f32 %v8361, %v176
    %v8365 = vmul.f32 %v8360, %v180
    %v8366 = vmul.f32 %v8359, %v184
    %v8368 = vsel %vm321, %v8363, 0
    %v8371 = vsel %vm321, %v8364, 0
    %v8374 = vsel %vm321, %v8365, 0
    %v8377 = vsel %vm321, %v8366, 0
    %8379 = vmatprep.subr.mxu0 %v8371
    %8380 = vmatpush1.msra.mxu0 %v8368
    %8381 = vmatprep.subr.mxu0 0.0
    %8382 = vmatpush1.msra.mxu0 0.0
    %8383 = vmatprep.subr.mxu0 0.0
    %8384 = vmatpush1.msra.mxu0 0.0
    %8385 = vmatprep.subr.mxu0 0.0
    %8386 = vmatpush1.msra.mxu0 0.0
    %8387 = vmatprep.subr.mxu0 0.0
    %8388 = vmatpush1.msra.mxu0 0.0
    %8389 = vmatprep.subr.mxu0 0.0
    %8390 = vmatpush1.msra.mxu0 0.0
    %8391 = vmatprep.subr.mxu0 0.0
    %8392 = vmatpush1.msra.mxu0 0.0
    %8393 = vmatprep.subr.mxu0 0.0
    %8394 = vmatpush1.msra.mxu0 0.0
    %8395 = vmatprep.subr.mxu0 0.0
    %8396 = vmatpush1.msra.mxu0 0.0
    %8397 = vmatprep.subr.mxu0 0.0
    %8398 = vmatpush1.msra.mxu0 0.0
    %8399 = vmatprep.subr.mxu0 0.0
    %8400 = vmatpush1.msra.mxu0 0.0
    %8401 = vmatprep.subr.mxu0 0.0
    %8402 = vmatpush1.msra.mxu0 0.0
    %8403 = vmatprep.subr.mxu0 0.0
    %8404 = vmatpush1.msra.mxu0 0.0
    %8405 = vmatprep.subr.mxu0 0.0
    %8406 = vmatpush1.msra.mxu0 0.0
    %8407 = vmatprep.subr.mxu0 0.0
    %8408 = vmatpush1.msra.mxu0 0.0
    %8409 = vmatprep.subr.mxu0 0.0
    %8410 = vmatpush1.msra.mxu0 0.0
    %8411 = vmatprep.subr.mxu0 0.0
    %8412 = vmatpush1.msra.mxu0 0.0
    %8413 = vmatprep.subr.mxu0 0.0
    %8414 = vmatpush1.msra.mxu0 0.0
    %8415 = vmatprep.subr.mxu0 0.0
    %8416 = vmatpush1.msra.mxu0 0.0
    %8417 = vmatprep.subr.mxu0 0.0
    %8418 = vmatpush1.msra.mxu0 0.0
    %8419 = vmatprep.subr.mxu0 0.0
    %8420 = vmatpush1.msra.mxu0 0.0
    %8421 = vmatprep.subr.mxu0 0.0
    %8422 = vmatpush1.msra.mxu0 0.0
    %8423 = vmatprep.subr.mxu0 0.0
    %8424 = vmatpush1.msra.mxu0 0.0
    %8425 = vmatprep.subr.mxu0 0.0
    %8426 = vmatpush1.msra.mxu0 0.0
    %8427 = vmatprep.subr.mxu0 0.0
    %8428 = vmatpush1.msra.mxu0 0.0
    %8429 = vmatprep.subr.mxu0 0.0
    %8430 = vmatpush1.msra.mxu0 0.0
    %8431 = vmatprep.subr.mxu0 0.0
    %8432 = vmatpush1.msra.mxu0 0.0
    %8433 = vmatprep.subr.mxu0 0.0
    %8434 = vmatpush1.msra.mxu0 0.0
    %8435 = vmatprep.subr.mxu0 0.0
    %8436 = vmatpush1.msra.mxu0 0.0
    %8437 = vmatprep.subr.mxu0 0.0
    %8438 = vmatpush1.msra.mxu0 0.0
    %8439 = vmatprep.subr.mxu0 0.0
    %8440 = vmatpush1.msra.mxu0 0.0
    %8441 = vmatprep.subr.mxu0 0.0
    %8442 = vmatpush1.msra.mxu0 0.0
    %8443 = vmatprep.mubr.f32.mxu0 0.0
    %8444 = vmatmul.mubr.f32.gmra.mrb[0].mxu0 %v546
    %v8445 = vpop.f32.mrb[0].mxu0
    %v8446 = vadd.f32 0.0, %v8445
    %v8447 = vpop.f32.mrb[0].mxu0
    %v8448 = vadd.f32 0.0, %v8447
    %8449 = vmatprep.mubr.f32.mxu0 0.0
    %8450 = vmatmul.mubr.f32.gmra.mrb[0].mxu0 %v549
    %v8451 = vpop.f32.mrb[0].mxu0
    %v8452 = vadd.f32 0.0, %v8451
    %v8453 = vpop.f32.mrb[0].mxu0
    %v8454 = vadd.f32 0.0, %v8453
    %8455 = vmatprep.mubr.f32.mxu0 0.0
    %8456 = vmatmul.mubr.f32.gmra.mrb[0].mxu0 %v552
    %v8457 = vpop.f32.mrb[0].mxu0
    %v8458 = vadd.f32 0.0, %v8457
    %v8459 = vpop.f32.mrb[0].mxu0
    %v8460 = vadd.f32 0.0, %v8459
    %8461 = vmatprep.mubr.f32.mxu0 0.0
    %8462 = vmatmul.mubr.f32.gmra.mrb[0].mxu0 %v555
    %v8463 = vpop.f32.mrb[0].mxu0
    %v8464 = vadd.f32 0.0, %v8463
    %v8465 = vpop.f32.mrb[0].mxu0
    %v8466 = vadd.f32 0.0, %v8465
    %8467 = vdwg.mxu0
    %8468 = vmatprep.subr.mxu0 %v8377
    %8469 = vmatpush1.msra.mxu0 %v8374
    %8470 = vmatprep.subr.mxu0 0.0
    %8471 = vmatpush1.msra.mxu0 0.0
    %8472 = vmatprep.subr.mxu0 0.0
    %8473 = vmatpush1.msra.mxu0 0.0
    %8474 = vmatprep.subr.mxu0 0.0
    %8475 = vmatpush1.msra.mxu0 0.0
    %8476 = vmatprep.subr.mxu0 0.0
    %8477 = vmatpush1.msra.mxu0 0.0
    %8478 = vmatprep.subr.mxu0 0.0
    %8479 = vmatpush1.msra.mxu0 0.0
    %8480 = vmatprep.subr.mxu0 0.0
    %8481 = vmatpush1.msra.mxu0 0.0
    %8482 = vmatprep.subr.mxu0 0.0
    %8483 = vmatpush1.msra.mxu0 0.0
    %8484 = vmatprep.subr.mxu0 0.0
    %8485 = vmatpush1.msra.mxu0 0.0
    %8486 = vmatprep.subr.mxu0 0.0
    %8487 = vmatpush1.msra.mxu0 0.0
    %8488 = vmatprep.subr.mxu0 0.0
    %8489 = vmatpush1.msra.mxu0 0.0
    %8490 = vmatprep.subr.mxu0 0.0
    %8491 = vmatpush1.msra.mxu0 0.0
    %8492 = vmatprep.subr.mxu0 0.0
    %8493 = vmatpush1.msra.mxu0 0.0
    %8494 = vmatprep.subr.mxu0 0.0
    %8495 = vmatpush1.msra.mxu0 0.0
    %8496 = vmatprep.subr.mxu0 0.0
    %8497 = vmatpush1.msra.mxu0 0.0
    %8498 = vmatprep.subr.mxu0 0.0
    %8499 = vmatpush1.msra.mxu0 0.0
    %8500 = vmatprep.subr.mxu0 0.0
    %8501 = vmatpush1.msra.mxu0 0.0
    %8502 = vmatprep.subr.mxu0 0.0
    %8503 = vmatpush1.msra.mxu0 0.0
    %8504 = vmatprep.subr.mxu0 0.0
    %8505 = vmatpush1.msra.mxu0 0.0
    %8506 = vmatprep.subr.mxu0 0.0
    %8507 = vmatpush1.msra.mxu0 0.0
    %8508 = vmatprep.subr.mxu0 0.0
    %8509 = vmatpush1.msra.mxu0 0.0
    %8510 = vmatprep.subr.mxu0 0.0
    %8511 = vmatpush1.msra.mxu0 0.0
    %8512 = vmatprep.subr.mxu0 0.0
    %8513 = vmatpush1.msra.mxu0 0.0
    %8514 = vmatprep.subr.mxu0 0.0
    %8515 = vmatpush1.msra.mxu0 0.0
    %8516 = vmatprep.subr.mxu0 0.0
    %8517 = vmatpush1.msra.mxu0 0.0
    %8518 = vmatprep.subr.mxu0 0.0
    %8519 = vmatpush1.msra.mxu0 0.0
    %8520 = vmatprep.subr.mxu0 0.0
    %8521 = vmatpush1.msra.mxu0 0.0
    %8522 = vmatprep.subr.mxu0 0.0
    %8523 = vmatpush1.msra.mxu0 0.0
    %8524 = vmatprep.subr.mxu0 0.0
    %8525 = vmatpush1.msra.mxu0 0.0
    %8526 = vmatprep.subr.mxu0 0.0
    %8527 = vmatpush1.msra.mxu0 0.0
    %8528 = vmatprep.subr.mxu0 0.0
    %8529 = vmatpush1.msra.mxu0 0.0
    %8530 = vmatprep.subr.mxu0 0.0
    %8531 = vmatpush1.msra.mxu0 0.0
    %8532 = vmatprep.mubr.f32.mxu0 0.0
    %8533 = vmatmul.mubr.f32.gmra.mrb[0].mxu0 %v546
    %v8534 = vpop.f32.mrb[0].mxu0
    %v8535 = vadd.f32 0.0, %v8534
    %v8536 = vpop.f32.mrb[0].mxu0
    %v8537 = vadd.f32 0.0, %v8536
    %8538 = vmatprep.mubr.f32.mxu0 0.0
    %8539 = vmatmul.mubr.f32.gmra.mrb[0].mxu0 %v549
    %v8540 = vpop.f32.mrb[0].mxu0
    %v8541 = vadd.f32 0.0, %v8540
    %v8542 = vpop.f32.mrb[0].mxu0
    %v8543 = vadd.f32 0.0, %v8542
    %8544 = vmatprep.mubr.f32.mxu0 0.0
    %8545 = vmatmul.mubr.f32.gmra.mrb[0].mxu0 %v552
    %v8546 = vpop.f32.mrb[0].mxu0
    %v8547 = vadd.f32 0.0, %v8546
    %v8548 = vpop.f32.mrb[0].mxu0
    %v8549 = vadd.f32 0.0, %v8548
    %8550 = vmatprep.mubr.f32.mxu0 0.0
    %8551 = vmatmul.mubr.f32.gmra.mrb[0].mxu0 %v555
    %v8552 = vpop.f32.mrb[0].mxu0
    %v8553 = vadd.f32 0.0, %v8552
    %v8554 = vpop.f32.mrb[0].mxu0
    %v8555 = vadd.f32 0.0, %v8554
    %8556 = vdwg.mxu0
    %v8557 = vadd.f32 %v8335, %v8446
    %v8558 = vadd.f32 %v8336, %v8448
    %v8559 = vadd.f32 %v8337, %v8535
    %v8560 = vadd.f32 %v8338, %v8537
    %v8561 = vadd.f32 %v8339, %v8452
    %v8562 = vadd.f32 %v8340, %v8454
    %v8563 = vadd.f32 %v8341, %v8541
    %v8564 = vadd.f32 %v8342, %v8543
    %v8565 = vadd.f32 %v8343, %v8458
    %v8566 = vadd.f32 %v8344, %v8460
    %v8567 = vadd.f32 %v8345, %v8547
    %v8568 = vadd.f32 %v8346, %v8549
    %v8569 = vadd.f32 %v8347, %v8464
    %v8570 = vadd.f32 %v8348, %v8466
    %v8571 = vadd.f32 %v8349, %v8553
    %v8572 = vadd.f32 %v8350, %v8555
    %8573 = vrot.lane.b32.xlu0 %v8121, 15
    %v8574 = vpop.permute.xlu0 %8573
    %8575 = vrot.lane.b32.xlu0 %v8125, 15
    %v8576 = vpop.permute.xlu0 %8575
    %8577 = vrot.lane.b32.xlu0 %v8122, 15
    %v8578 = vpop.permute.xlu0 %8577
    %8579 = vrot.lane.b32.xlu0 %v8126, 15
    %v8580 = vpop.permute.xlu0 %8579
    %v8581 = vsel %vm771, %v8578, %v8580
    %v8582 = vsel %vm771, %v8576, %v8578
    %v8583 = vsel %vm771, %v8574, %v8576
    %v8584 = vsel %vm771, %v8580, %v8574
    %v8585 = vmul.f32 %v8584, %v188
    %v8586 = vmul.f32 %v8583, %v192
    %v8587 = vmul.f32 %v8582, %v196
    %v8588 = vmul.f32 %v8581, %v200
    %v8590 = vsel %vm321, %v8585, 0
    %v8593 = vsel %vm321, %v8586, 0
    %v8596 = vsel %vm321, %v8587, 0
    %v8599 = vsel %vm321, %v8588, 0
    %8601 = vmatprep.subr.mxu0 %v8593
    %8602 = vmatpush1.msra.mxu0 %v8590
    %8603 = vmatprep.subr.mxu0 0.0
    %8604 = vmatpush1.msra.mxu0 0.0
    %8605 = vmatprep.subr.mxu0 0.0
    %8606 = vmatpush1.msra.mxu0 0.0
    %8607 = vmatprep.subr.mxu0 0.0
    %8608 = vmatpush1.msra.mxu0 0.0
    %8609 = vmatprep.subr.mxu0 0.0
    %8610 = vmatpush1.msra.mxu0 0.0
    %8611 = vmatprep.subr.mxu0 0.0
    %8612 = vmatpush1.msra.mxu0 0.0
    %8613 = vmatprep.subr.mxu0 0.0
    %8614 = vmatpush1.msra.mxu0 0.0
    %8615 = vmatprep.subr.mxu0 0.0
    %8616 = vmatpush1.msra.mxu0 0.0
    %8617 = vmatprep.subr.mxu0 0.0
    %8618 = vmatpush1.msra.mxu0 0.0
    %8619 = vmatprep.subr.mxu0 0.0
    %8620 = vmatpush1.msra.mxu0 0.0
    %8621 = vmatprep.subr.mxu0 0.0
    %8622 = vmatpush1.msra.mxu0 0.0
    %8623 = vmatprep.subr.mxu0 0.0
    %8624 = vmatpush1.msra.mxu0 0.0
    %8625 = vmatprep.subr.mxu0 0.0
    %8626 = vmatpush1.msra.mxu0 0.0
    %8627 = vmatprep.subr.mxu0 0.0
    %8628 = vmatpush1.msra.mxu0 0.0
    %8629 = vmatprep.subr.mxu0 0.0
    %8630 = vmatpush1.msra.mxu0 0.0
    %8631 = vmatprep.subr.mxu0 0.0
    %8632 = vmatpush1.msra.mxu0 0.0
    %8633 = vmatprep.subr.mxu0 0.0
    %8634 = vmatpush1.msra.mxu0 0.0
    %8635 = vmatprep.subr.mxu0 0.0
    %8636 = vmatpush1.msra.mxu0 0.0
    %8637 = vmatprep.subr.mxu0 0.0
    %8638 = vmatpush1.msra.mxu0 0.0
    %8639 = vmatprep.subr.mxu0 0.0
    %8640 = vmatpush1.msra.mxu0 0.0
    %8641 = vmatprep.subr.mxu0 0.0
    %8642 = vmatpush1.msra.mxu0 0.0
    %8643 = vmatprep.subr.mxu0 0.0
    %8644 = vmatpush1.msra.mxu0 0.0
    %8645 = vmatprep.subr.mxu0 0.0
    %8646 = vmatpush1.msra.mxu0 0.0
    %8647 = vmatprep.subr.mxu0 0.0
    %8648 = vmatpush1.msra.mxu0 0.0
    %8649 = vmatprep.subr.mxu0 0.0
    %8650 = vmatpush1.msra.mxu0 0.0
    %8651 = vmatprep.subr.mxu0 0.0
    %8652 = vmatpush1.msra.mxu0 0.0
    %8653 = vmatprep.subr.mxu0 0.0
    %8654 = vmatpush1.msra.mxu0 0.0
    %8655 = vmatprep.subr.mxu0 0.0
    %8656 = vmatpush1.msra.mxu0 0.0
    %8657 = vmatprep.subr.mxu0 0.0
    %8658 = vmatpush1.msra.mxu0 0.0
    %8659 = vmatprep.subr.mxu0 0.0
    %8660 = vmatpush1.msra.mxu0 0.0
    %8661 = vmatprep.subr.mxu0 0.0
    %8662 = vmatpush1.msra.mxu0 0.0
    %8663 = vmatprep.subr.mxu0 0.0
    %8664 = vmatpush1.msra.mxu0 0.0
    %8665 = vmatprep.mubr.f32.mxu0 0.0
    %8666 = vmatmul.mubr.f32.gmra.mrb[0].mxu0 %v781
    %v8667 = vpop.f32.mrb[0].mxu0
    %v8668 = vadd.f32 0.0, %v8667
    %v8669 = vpop.f32.mrb[0].mxu0
    %v8670 = vadd.f32 0.0, %v8669
    %8671 = vmatprep.mubr.f32.mxu0 0.0
    %8672 = vmatmul.mubr.f32.gmra.mrb[0].mxu0 %v784
    %v8673 = vpop.f32.mrb[0].mxu0
    %v8674 = vadd.f32 0.0, %v8673
    %v8675 = vpop.f32.mrb[0].mxu0
    %v8676 = vadd.f32 0.0, %v8675
    %8677 = vmatprep.mubr.f32.mxu0 0.0
    %8678 = vmatmul.mubr.f32.gmra.mrb[0].mxu0 %v787
    %v8679 = vpop.f32.mrb[0].mxu0
    %v8680 = vadd.f32 0.0, %v8679
    %v8681 = vpop.f32.mrb[0].mxu0
    %v8682 = vadd.f32 0.0, %v8681
    %8683 = vmatprep.mubr.f32.mxu0 0.0
    %8684 = vmatmul.mubr.f32.gmra.mrb[0].mxu0 %v790
    %v8685 = vpop.f32.mrb[0].mxu0
    %v8686 = vadd.f32 0.0, %v8685
    %v8687 = vpop.f32.mrb[0].mxu0
    %v8688 = vadd.f32 0.0, %v8687
    %8689 = vdwg.mxu0
    %8690 = vmatprep.subr.mxu0 %v8599
    %8691 = vmatpush1.msra.mxu0 %v8596
    %8692 = vmatprep.subr.mxu0 0.0
    %8693 = vmatpush1.msra.mxu0 0.0
    %8694 = vmatprep.subr.mxu0 0.0
    %8695 = vmatpush1.msra.mxu0 0.0
    %8696 = vmatprep.subr.mxu0 0.0
    %8697 = vmatpush1.msra.mxu0 0.0
    %8698 = vmatprep.subr.mxu0 0.0
    %8699 = vmatpush1.msra.mxu0 0.0
    %8700 = vmatprep.subr.mxu0 0.0
    %8701 = vmatpush1.msra.mxu0 0.0
    %8702 = vmatprep.subr.mxu0 0.0
    %8703 = vmatpush1.msra.mxu0 0.0
    %8704 = vmatprep.subr.mxu0 0.0
    %8705 = vmatpush1.msra.mxu0 0.0
    %8706 = vmatprep.subr.mxu0 0.0
    %8707 = vmatpush1.msra.mxu0 0.0
    %8708 = vmatprep.subr.mxu0 0.0
    %8709 = vmatpush1.msra.mxu0 0.0
    %8710 = vmatprep.subr.mxu0 0.0
    %8711 = vmatpush1.msra.mxu0 0.0
    %8712 = vmatprep.subr.mxu0 0.0
    %8713 = vmatpush1.msra.mxu0 0.0
    %8714 = vmatprep.subr.mxu0 0.0
    %8715 = vmatpush1.msra.mxu0 0.0
    %8716 = vmatprep.subr.mxu0 0.0
    %8717 = vmatpush1.msra.mxu0 0.0
    %8718 = vmatprep.subr.mxu0 0.0
    %8719 = vmatpush1.msra.mxu0 0.0
    %8720 = vmatprep.subr.mxu0 0.0
    %8721 = vmatpush1.msra.mxu0 0.0
    %8722 = vmatprep.subr.mxu0 0.0
    %8723 = vmatpush1.msra.mxu0 0.0
    %8724 = vmatprep.subr.mxu0 0.0
    %8725 = vmatpush1.msra.mxu0 0.0
    %8726 = vmatprep.subr.mxu0 0.0
    %8727 = vmatpush1.msra.mxu0 0.0
    %8728 = vmatprep.subr.mxu0 0.0
    %8729 = vmatpush1.msra.mxu0 0.0
    %8730 = vmatprep.subr.mxu0 0.0
    %8731 = vmatpush1.msra.mxu0 0.0
    %8732 = vmatprep.subr.mxu0 0.0
    %8733 = vmatpush1.msra.mxu0 0.0
    %8734 = vmatprep.subr.mxu0 0.0
    %8735 = vmatpush1.msra.mxu0 0.0
    %8736 = vmatprep.subr.mxu0 0.0
    %8737 = vmatpush1.msra.mxu0 0.0
    %8738 = vmatprep.subr.mxu0 0.0
    %8739 = vmatpush1.msra.mxu0 0.0
    %8740 = vmatprep.subr.mxu0 0.0
    %8741 = vmatpush1.msra.mxu0 0.0
    %8742 = vmatprep.subr.mxu0 0.0
    %8743 = vmatpush1.msra.mxu0 0.0
    %8744 = vmatprep.subr.mxu0 0.0
    %8745 = vmatpush1.msra.mxu0 0.0
    %8746 = vmatprep.subr.mxu0 0.0
    %8747 = vmatpush1.msra.mxu0 0.0
    %8748 = vmatprep.subr.mxu0 0.0
    %8749 = vmatpush1.msra.mxu0 0.0
    %8750 = vmatprep.subr.mxu0 0.0
    %8751 = vmatpush1.msra.mxu0 0.0
    %8752 = vmatprep.subr.mxu0 0.0
    %8753 = vmatpush1.msra.mxu0 0.0
    %8754 = vmatprep.mubr.f32.mxu0 0.0
    %8755 = vmatmul.mubr.f32.gmra.mrb[0].mxu0 %v781
    %v8756 = vpop.f32.mrb[0].mxu0
    %v8757 = vadd.f32 0.0, %v8756
    %v8758 = vpop.f32.mrb[0].mxu0
    %v8759 = vadd.f32 0.0, %v8758
    %8760 = vmatprep.mubr.f32.mxu0 0.0
    %8761 = vmatmul.mubr.f32.gmra.mrb[0].mxu0 %v784
    %v8762 = vpop.f32.mrb[0].mxu0
    %v8763 = vadd.f32 0.0, %v8762
    %v8764 = vpop.f32.mrb[0].mxu0
    %v8765 = vadd.f32 0.0, %v8764
    %8766 = vmatprep.mubr.f32.mxu0 0.0
    %8767 = vmatmul.mubr.f32.gmra.mrb[0].mxu0 %v787
    %v8768 = vpop.f32.mrb[0].mxu0
    %v8769 = vadd.f32 0.0, %v8768
    %v8770 = vpop.f32.mrb[0].mxu0
    %v8771 = vadd.f32 0.0, %v8770
    %8772 = vmatprep.mubr.f32.mxu0 0.0
    %8773 = vmatmul.mubr.f32.gmra.mrb[0].mxu0 %v790
    %v8774 = vpop.f32.mrb[0].mxu0
    %v8775 = vadd.f32 0.0, %v8774
    %v8776 = vpop.f32.mrb[0].mxu0
    %v8777 = vadd.f32 0.0, %v8776
    %8778 = vdwg.mxu0
    %v8779 = vadd.f32 %v8557, %v8668
    %v8780 = vadd.f32 %v8558, %v8670
    %v8781 = vadd.f32 %v8559, %v8757
    %v8782 = vadd.f32 %v8560, %v8759
    %v8783 = vadd.f32 %v8561, %v8674
    %v8784 = vadd.f32 %v8562, %v8676
    %v8785 = vadd.f32 %v8563, %v8763
    %v8786 = vadd.f32 %v8564, %v8765
    %v8787 = vadd.f32 %v8565, %v8680
    %v8788 = vadd.f32 %v8566, %v8682
    %v8789 = vadd.f32 %v8567, %v8769
    %v8790 = vadd.f32 %v8568, %v8771
    %v8791 = vadd.f32 %v8569, %v8686
    %v8792 = vadd.f32 %v8570, %v8688
    %v8793 = vadd.f32 %v8571, %v8775
    %v8794 = vadd.f32 %v8572, %v8777
    %8795 = vrot.lane.b32.xlu0 %v8121, 1
    %v8796 = vpop.permute.xlu0 %8795
    %8797 = vrot.lane.b32.xlu0 %v8125, 1
    %v8798 = vpop.permute.xlu0 %8797
    %8799 = vrot.lane.b32.xlu0 %v8122, 1
    %v8800 = vpop.permute.xlu0 %8799
    %8801 = vrot.lane.b32.xlu0 %v8126, 1
    %v8802 = vpop.permute.xlu0 %8801
    %v8803 = vsel %vm1006, %v8800, %v8802
    %v8804 = vsel %vm1006, %v8798, %v8800
    %v8805 = vsel %vm1006, %v8796, %v8798
    %v8806 = vsel %vm1006, %v8802, %v8796
    %v8807 = vmul.f32 %v8806, %v204
    %v8808 = vmul.f32 %v8805, %v208
    %v8809 = vmul.f32 %v8804, %v212
    %v8810 = vmul.f32 %v8803, %v216
    %v8812 = vsel %vm321, %v8807, 0
    %v8815 = vsel %vm321, %v8808, 0
    %v8818 = vsel %vm321, %v8809, 0
    %v8821 = vsel %vm321, %v8810, 0
    %8823 = vmatprep.subr.mxu0 %v8815
    %8824 = vmatpush1.msra.mxu0 %v8812
    %8825 = vmatprep.subr.mxu0 0.0
    %8826 = vmatpush1.msra.mxu0 0.0
    %8827 = vmatprep.subr.mxu0 0.0
    %8828 = vmatpush1.msra.mxu0 0.0
    %8829 = vmatprep.subr.mxu0 0.0
    %8830 = vmatpush1.msra.mxu0 0.0
    %8831 = vmatprep.subr.mxu0 0.0
    %8832 = vmatpush1.msra.mxu0 0.0
    %8833 = vmatprep.subr.mxu0 0.0
    %8834 = vmatpush1.msra.mxu0 0.0
    %8835 = vmatprep.subr.mxu0 0.0
    %8836 = vmatpush1.msra.mxu0 0.0
    %8837 = vmatprep.subr.mxu0 0.0
    %8838 = vmatpush1.msra.mxu0 0.0
    %8839 = vmatprep.subr.mxu0 0.0
    %8840 = vmatpush1.msra.mxu0 0.0
    %8841 = vmatprep.subr.mxu0 0.0
    %8842 = vmatpush1.msra.mxu0 0.0
    %8843 = vmatprep.subr.mxu0 0.0
    %8844 = vmatpush1.msra.mxu0 0.0
    %8845 = vmatprep.subr.mxu0 0.0
    %8846 = vmatpush1.msra.mxu0 0.0
    %8847 = vmatprep.subr.mxu0 0.0
    %8848 = vmatpush1.msra.mxu0 0.0
    %8849 = vmatprep.subr.mxu0 0.0
    %8850 = vmatpush1.msra.mxu0 0.0
    %8851 = vmatprep.subr.mxu0 0.0
    %8852 = vmatpush1.msra.mxu0 0.0
    %8853 = vmatprep.subr.mxu0 0.0
    %8854 = vmatpush1.msra.mxu0 0.0
    %8855 = vmatprep.subr.mxu0 0.0
    %8856 = vmatpush1.msra.mxu0 0.0
    %8857 = vmatprep.subr.mxu0 0.0
    %8858 = vmatpush1.msra.mxu0 0.0
    %8859 = vmatprep.subr.mxu0 0.0
    %8860 = vmatpush1.msra.mxu0 0.0
    %8861 = vmatprep.subr.mxu0 0.0
    %8862 = vmatpush1.msra.mxu0 0.0
    %8863 = vmatprep.subr.mxu0 0.0
    %8864 = vmatpush1.msra.mxu0 0.0
    %8865 = vmatprep.subr.mxu0 0.0
    %8866 = vmatpush1.msra.mxu0 0.0
    %8867 = vmatprep.subr.mxu0 0.0
    %8868 = vmatpush1.msra.mxu0 0.0
    %8869 = vmatprep.subr.mxu0 0.0
    %8870 = vmatpush1.msra.mxu0 0.0
    %8871 = vmatprep.subr.mxu0 0.0
    %8872 = vmatpush1.msra.mxu0 0.0
    %8873 = vmatprep.subr.mxu0 0.0
    %8874 = vmatpush1.msra.mxu0 0.0
    %8875 = vmatprep.subr.mxu0 0.0
    %8876 = vmatpush1.msra.mxu0 0.0
    %8877 = vmatprep.subr.mxu0 0.0
    %8878 = vmatpush1.msra.mxu0 0.0
    %8879 = vmatprep.subr.mxu0 0.0
    %8880 = vmatpush1.msra.mxu0 0.0
    %8881 = vmatprep.subr.mxu0 0.0
    %8882 = vmatpush1.msra.mxu0 0.0
    %8883 = vmatprep.subr.mxu0 0.0
    %8884 = vmatpush1.msra.mxu0 0.0
    %8885 = vmatprep.subr.mxu0 0.0
    %8886 = vmatpush1.msra.mxu0 0.0
    %8887 = vmatprep.mubr.f32.mxu0 0.0
    %8888 = vmatmul.mubr.f32.gmra.mrb[0].mxu0 %v1016
    %v8889 = vpop.f32.mrb[0].mxu0
    %v8890 = vadd.f32 0.0, %v8889
    %v8891 = vpop.f32.mrb[0].mxu0
    %v8892 = vadd.f32 0.0, %v8891
    %8893 = vmatprep.mubr.f32.mxu0 0.0
    %8894 = vmatmul.mubr.f32.gmra.mrb[0].mxu0 %v1019
    %v8895 = vpop.f32.mrb[0].mxu0
    %v8896 = vadd.f32 0.0, %v8895
    %v8897 = vpop.f32.mrb[0].mxu0
    %v8898 = vadd.f32 0.0, %v8897
    %8899 = vmatprep.mubr.f32.mxu0 0.0
    %8900 = vmatmul.mubr.f32.gmra.mrb[0].mxu0 %v1022
    %v8901 = vpop.f32.mrb[0].mxu0
    %v8902 = vadd.f32 0.0, %v8901
    %v8903 = vpop.f32.mrb[0].mxu0
    %v8904 = vadd.f32 0.0, %v8903
    %8905 = vmatprep.mubr.f32.mxu0 0.0
    %8906 = vmatmul.mubr.f32.gmra.mrb[0].mxu0 %v1025
    %v8907 = vpop.f32.mrb[0].mxu0
    %v8908 = vadd.f32 0.0, %v8907
    %v8909 = vpop.f32.mrb[0].mxu0
    %v8910 = vadd.f32 0.0, %v8909
    %8911 = vdwg.mxu0
    %8912 = vmatprep.subr.mxu0 %v8821
    %8913 = vmatpush1.msra.mxu0 %v8818
    %8914 = vmatprep.subr.mxu0 0.0
    %8915 = vmatpush1.msra.mxu0 0.0
    %8916 = vmatprep.subr.mxu0 0.0
    %8917 = vmatpush1.msra.mxu0 0.0
    %8918 = vmatprep.subr.mxu0 0.0
    %8919 = vmatpush1.msra.mxu0 0.0
    %8920 = vmatprep.subr.mxu0 0.0
    %8921 = vmatpush1.msra.mxu0 0.0
    %8922 = vmatprep.subr.mxu0 0.0
    %8923 = vmatpush1.msra.mxu0 0.0
    %8924 = vmatprep.subr.mxu0 0.0
    %8925 = vmatpush1.msra.mxu0 0.0
    %8926 = vmatprep.subr.mxu0 0.0
    %8927 = vmatpush1.msra.mxu0 0.0
    %8928 = vmatprep.subr.mxu0 0.0
    %8929 = vmatpush1.msra.mxu0 0.0
    %8930 = vmatprep.subr.mxu0 0.0
    %8931 = vmatpush1.msra.mxu0 0.0
    %8932 = vmatprep.subr.mxu0 0.0
    %8933 = vmatpush1.msra.mxu0 0.0
    %8934 = vmatprep.subr.mxu0 0.0
    %8935 = vmatpush1.msra.mxu0 0.0
    %8936 = vmatprep.subr.mxu0 0.0
    %8937 = vmatpush1.msra.mxu0 0.0
    %8938 = vmatprep.subr.mxu0 0.0
    %8939 = vmatpush1.msra.mxu0 0.0
    %8940 = vmatprep.subr.mxu0 0.0
    %8941 = vmatpush1.msra.mxu0 0.0
    %8942 = vmatprep.subr.mxu0 0.0
    %8943 = vmatpush1.msra.mxu0 0.0
    %8944 = vmatprep.subr.mxu0 0.0
    %8945 = vmatpush1.msra.mxu0 0.0
    %8946 = vmatprep.subr.mxu0 0.0
    %8947 = vmatpush1.msra.mxu0 0.0
    %8948 = vmatprep.subr.mxu0 0.0
    %8949 = vmatpush1.msra.mxu0 0.0
    %8950 = vmatprep.subr.mxu0 0.0
    %8951 = vmatpush1.msra.mxu0 0.0
    %8952 = vmatprep.subr.mxu0 0.0
    %8953 = vmatpush1.msra.mxu0 0.0
    %8954 = vmatprep.subr.mxu0 0.0
    %8955 = vmatpush1.msra.mxu0 0.0
    %8956 = vmatprep.subr.mxu0 0.0
    %8957 = vmatpush1.msra.mxu0 0.0
    %8958 = vmatprep.subr.mxu0 0.0
    %8959 = vmatpush1.msra.mxu0 0.0
    %8960 = vmatprep.subr.mxu0 0.0
    %8961 = vmatpush1.msra.mxu0 0.0
    %8962 = vmatprep.subr.mxu0 0.0
    %8963 = vmatpush1.msra.mxu0 0.0
    %8964 = vmatprep.subr.mxu0 0.0
    %8965 = vmatpush1.msra.mxu0 0.0
    %8966 = vmatprep.subr.mxu0 0.0
    %8967 = vmatpush1.msra.mxu0 0.0
    %8968 = vmatprep.subr.mxu0 0.0
    %8969 = vmatpush1.msra.mxu0 0.0
    %8970 = vmatprep.subr.mxu0 0.0
    %8971 = vmatpush1.msra.mxu0 0.0
    %8972 = vmatprep.subr.mxu0 0.0
    %8973 = vmatpush1.msra.mxu0 0.0
    %8974 = vmatprep.subr.mxu0 0.0
    %8975 = vmatpush1.msra.mxu0 0.0
    %8976 = vmatprep.mubr.f32.mxu0 0.0
    %8977 = vmatmul.mubr.f32.gmra.mrb[0].mxu0 %v1016
    %v8978 = vpop.f32.mrb[0].mxu0
    %v8979 = vadd.f32 0.0, %v8978
    %v8980 = vpop.f32.mrb[0].mxu0
    %v8981 = vadd.f32 0.0, %v8980
    %8982 = vmatprep.mubr.f32.mxu0 0.0
    %8983 = vmatmul.mubr.f32.gmra.mrb[0].mxu0 %v1019
    %v8984 = vpop.f32.mrb[0].mxu0
    %v8985 = vadd.f32 0.0, %v8984
    %v8986 = vpop.f32.mrb[0].mxu0
    %v8987 = vadd.f32 0.0, %v8986
    %8988 = vmatprep.mubr.f32.mxu0 0.0
    %8989 = vmatmul.mubr.f32.gmra.mrb[0].mxu0 %v1022
    %v8990 = vpop.f32.mrb[0].mxu0
    %v8991 = vadd.f32 0.0, %v8990
    %v8992 = vpop.f32.mrb[0].mxu0
    %v8993 = vadd.f32 0.0, %v8992
    %8994 = vmatprep.mubr.f32.mxu0 0.0
    %8995 = vmatmul.mubr.f32.gmra.mrb[0].mxu0 %v1025
    %v8996 = vpop.f32.mrb[0].mxu0
    %v8997 = vadd.f32 0.0, %v8996
    %v8998 = vpop.f32.mrb[0].mxu0
    %v8999 = vadd.f32 0.0, %v8998
    %9000 = vdwg.mxu0
    %v9001 = vadd.f32 %v8779, %v8890
    %v9002 = vadd.f32 %v8780, %v8892
    %v9003 = vadd.f32 %v8781, %v8979
    %v9004 = vadd.f32 %v8782, %v8981
    %v9005 = vadd.f32 %v8783, %v8896
    %v9006 = vadd.f32 %v8784, %v8898
    %v9007 = vadd.f32 %v8785, %v8985
    %v9008 = vadd.f32 %v8786, %v8987
    %v9009 = vadd.f32 %v8787, %v8902
    %v9010 = vadd.f32 %v8788, %v8904
    %v9011 = vadd.f32 %v8789, %v8991
    %v9012 = vadd.f32 %v8790, %v8993
    %v9013 = vadd.f32 %v8791, %v8908
    %v9014 = vadd.f32 %v8792, %v8910
    %v9015 = vadd.f32 %v8793, %v8997
    %v9016 = vadd.f32 %v8794, %v8999
    %v9017 = vsel %vm321, %v8121, 0
    %v9019 = vsel %vm321, %v8125, 0
    %v9021 = vsel %vm321, %v8122, 0
    %v9023 = vsel %vm321, %v8126, 0
    %9025 = vmatprep.subr.mxu0 %v9019
    %9026 = vmatpush1.msra.mxu0 %v9017
    %9027 = vmatprep.subr.mxu0 0.0
    %9028 = vmatpush1.msra.mxu0 0.0
    %9029 = vmatprep.subr.mxu0 0.0
    %9030 = vmatpush1.msra.mxu0 0.0
    %9031 = vmatprep.subr.mxu0 0.0
    %9032 = vmatpush1.msra.mxu0 0.0
    %9033 = vmatprep.subr.mxu0 0.0
    %9034 = vmatpush1.msra.mxu0 0.0
    %9035 = vmatprep.subr.mxu0 0.0
    %9036 = vmatpush1.msra.mxu0 0.0
    %9037 = vmatprep.subr.mxu0 0.0
    %9038 = vmatpush1.msra.mxu0 0.0
    %9039 = vmatprep.subr.mxu0 0.0
    %9040 = vmatpush1.msra.mxu0 0.0
    %9041 = vmatprep.subr.mxu0 0.0
    %9042 = vmatpush1.msra.mxu0 0.0
    %9043 = vmatprep.subr.mxu0 0.0
    %9044 = vmatpush1.msra.mxu0 0.0
    %9045 = vmatprep.subr.mxu0 0.0
    %9046 = vmatpush1.msra.mxu0 0.0
    %9047 = vmatprep.subr.mxu0 0.0
    %9048 = vmatpush1.msra.mxu0 0.0
    %9049 = vmatprep.subr.mxu0 0.0
    %9050 = vmatpush1.msra.mxu0 0.0
    %9051 = vmatprep.subr.mxu0 0.0
    %9052 = vmatpush1.msra.mxu0 0.0
    %9053 = vmatprep.subr.mxu0 0.0
    %9054 = vmatpush1.msra.mxu0 0.0
    %9055 = vmatprep.subr.mxu0 0.0
    %9056 = vmatpush1.msra.mxu0 0.0
    %9057 = vmatprep.subr.mxu0 0.0
    %9058 = vmatpush1.msra.mxu0 0.0
    %9059 = vmatprep.subr.mxu0 0.0
    %9060 = vmatpush1.msra.mxu0 0.0
    %9061 = vmatprep.subr.mxu0 0.0
    %9062 = vmatpush1.msra.mxu0 0.0
    %9063 = vmatprep.subr.mxu0 0.0
    %9064 = vmatpush1.msra.mxu0 0.0
    %9065 = vmatprep.subr.mxu0 0.0
    %9066 = vmatpush1.msra.mxu0 0.0
    %9067 = vmatprep.subr.mxu0 0.0
    %9068 = vmatpush1.msra.mxu0 0.0
    %9069 = vmatprep.subr.mxu0 0.0
    %9070 = vmatpush1.msra.mxu0 0.0
    %9071 = vmatprep.subr.mxu0 0.0
    %9072 = vmatpush1.msra.mxu0 0.0
    %9073 = vmatprep.subr.mxu0 0.0
    %9074 = vmatpush1.msra.mxu0 0.0
    %9075 = vmatprep.subr.mxu0 0.0
    %9076 = vmatpush1.msra.mxu0 0.0
    %9077 = vmatprep.subr.mxu0 0.0
    %9078 = vmatpush1.msra.mxu0 0.0
    %9079 = vmatprep.subr.mxu0 0.0
    %9080 = vmatpush1.msra.mxu0 0.0
    %9081 = vmatprep.subr.mxu0 0.0
    %9082 = vmatpush1.msra.mxu0 0.0
    %9083 = vmatprep.subr.mxu0 0.0
    %9084 = vmatpush1.msra.mxu0 0.0
    %9085 = vmatprep.subr.mxu0 0.0
    %9086 = vmatpush1.msra.mxu0 0.0
    %9087 = vmatprep.subr.mxu0 0.0
    %9088 = vmatpush1.msra.mxu0 0.0
    %9089 = vmatprep.mubr.f32.mxu0 0.0
    %9090 = vmatmul.mubr.f32.gmra.mrb[0].mxu0 %v1234
    %v9091 = vpop.f32.mrb[0].mxu0
    %v9092 = vadd.f32 0.0, %v9091
    %v9093 = vpop.f32.mrb[0].mxu0
    %v9094 = vadd.f32 0.0, %v9093
    %9095 = vmatprep.mubr.f32.mxu0 0.0
    %9096 = vmatmul.mubr.f32.gmra.mrb[0].mxu0 %v1237
    %v9097 = vpop.f32.mrb[0].mxu0
    %v9098 = vadd.f32 0.0, %v9097
    %v9099 = vpop.f32.mrb[0].mxu0
    %v9100 = vadd.f32 0.0, %v9099
    %9101 = vmatprep.mubr.f32.mxu0 0.0
    %9102 = vmatmul.mubr.f32.gmra.mrb[0].mxu0 %v1240
    %v9103 = vpop.f32.mrb[0].mxu0
    %v9104 = vadd.f32 0.0, %v9103
    %v9105 = vpop.f32.mrb[0].mxu0
    %v9106 = vadd.f32 0.0, %v9105
    %9107 = vmatprep.mubr.f32.mxu0 0.0
    %9108 = vmatmul.mubr.f32.gmra.mrb[0].mxu0 %v1243
    %v9109 = vpop.f32.mrb[0].mxu0
    %v9110 = vadd.f32 0.0, %v9109
    %v9111 = vpop.f32.mrb[0].mxu0
    %v9112 = vadd.f32 0.0, %v9111
    %9113 = vdwg.mxu0
    %9114 = vmatprep.subr.mxu0 %v9023
    %9115 = vmatpush1.msra.mxu0 %v9021
    %9116 = vmatprep.subr.mxu0 0.0
    %9117 = vmatpush1.msra.mxu0 0.0
    %9118 = vmatprep.subr.mxu0 0.0
    %9119 = vmatpush1.msra.mxu0 0.0
    %9120 = vmatprep.subr.mxu0 0.0
    %9121 = vmatpush1.msra.mxu0 0.0
    %9122 = vmatprep.subr.mxu0 0.0
    %9123 = vmatpush1.msra.mxu0 0.0
    %9124 = vmatprep.subr.mxu0 0.0
    %9125 = vmatpush1.msra.mxu0 0.0
    %9126 = vmatprep.subr.mxu0 0.0
    %9127 = vmatpush1.msra.mxu0 0.0
    %9128 = vmatprep.subr.mxu0 0.0
    %9129 = vmatpush1.msra.mxu0 0.0
    %9130 = vmatprep.subr.mxu0 0.0
    %9131 = vmatpush1.msra.mxu0 0.0
    %9132 = vmatprep.subr.mxu0 0.0
    %9133 = vmatpush1.msra.mxu0 0.0
    %9134 = vmatprep.subr.mxu0 0.0
    %9135 = vmatpush1.msra.mxu0 0.0
    %9136 = vmatprep.subr.mxu0 0.0
    %9137 = vmatpush1.msra.mxu0 0.0
    %9138 = vmatprep.subr.mxu0 0.0
    %9139 = vmatpush1.msra.mxu0 0.0
    %9140 = vmatprep.subr.mxu0 0.0
    %9141 = vmatpush1.msra.mxu0 0.0
    %9142 = vmatprep.subr.mxu0 0.0
    %9143 = vmatpush1.msra.mxu0 0.0
    %9144 = vmatprep.subr.mxu0 0.0
    %9145 = vmatpush1.msra.mxu0 0.0
    %9146 = vmatprep.subr.mxu0 0.0
    %9147 = vmatpush1.msra.mxu0 0.0
    %9148 = vmatprep.subr.mxu0 0.0
    %9149 = vmatpush1.msra.mxu0 0.0
    %9150 = vmatprep.subr.mxu0 0.0
    %9151 = vmatpush1.msra.mxu0 0.0
    %9152 = vmatprep.subr.mxu0 0.0
    %9153 = vmatpush1.msra.mxu0 0.0
    %9154 = vmatprep.subr.mxu0 0.0
    %9155 = vmatpush1.msra.mxu0 0.0
    %9156 = vmatprep.subr.mxu0 0.0
    %9157 = vmatpush1.msra.mxu0 0.0
    %9158 = vmatprep.subr.mxu0 0.0
    %9159 = vmatpush1.msra.mxu0 0.0
    %9160 = vmatprep.subr.mxu0 0.0
    %9161 = vmatpush1.msra.mxu0 0.0
    %9162 = vmatprep.subr.mxu0 0.0
    %9163 = vmatpush1.msra.mxu0 0.0
    %9164 = vmatprep.subr.mxu0 0.0
    %9165 = vmatpush1.msra.mxu0 0.0
    %9166 = vmatprep.subr.mxu0 0.0
    %9167 = vmatpush1.msra.mxu0 0.0
    %9168 = vmatprep.subr.mxu0 0.0
    %9169 = vmatpush1.msra.mxu0 0.0
    %9170 = vmatprep.subr.mxu0 0.0
    %9171 = vmatpush1.msra.mxu0 0.0
    %9172 = vmatprep.subr.mxu0 0.0
    %9173 = vmatpush1.msra.mxu0 0.0
    %9174 = vmatprep.subr.mxu0 0.0
    %9175 = vmatpush1.msra.mxu0 0.0
    %9176 = vmatprep.subr.mxu0 0.0
    %9177 = vmatpush1.msra.mxu0 0.0
    %9178 = vmatprep.mubr.f32.mxu0 0.0
    %9179 = vmatmul.mubr.f32.gmra.mrb[0].mxu0 %v1234
    %v9180 = vpop.f32.mrb[0].mxu0
    %v9181 = vadd.f32 0.0, %v9180
    %v9182 = vpop.f32.mrb[0].mxu0
    %v9183 = vadd.f32 0.0, %v9182
    %9184 = vmatprep.mubr.f32.mxu0 0.0
    %9185 = vmatmul.mubr.f32.gmra.mrb[0].mxu0 %v1237
    %v9186 = vpop.f32.mrb[0].mxu0
    %v9187 = vadd.f32 0.0, %v9186
    %v9188 = vpop.f32.mrb[0].mxu0
    %v9189 = vadd.f32 0.0, %v9188
    %9190 = vmatprep.mubr.f32.mxu0 0.0
    %9191 = vmatmul.mubr.f32.gmra.mrb[0].mxu0 %v1240
    %v9192 = vpop.f32.mrb[0].mxu0
    %v9193 = vadd.f32 0.0, %v9192
    %v9194 = vpop.f32.mrb[0].mxu0
    %v9195 = vadd.f32 0.0, %v9194
    %9196 = vmatprep.mubr.f32.mxu0 0.0
    %9197 = vmatmul.mubr.f32.gmra.mrb[0].mxu0 %v1243
    %v9198 = vpop.f32.mrb[0].mxu0
    %v9199 = vadd.f32 0.0, %v9198
    %v9200 = vpop.f32.mrb[0].mxu0
    %v9201 = vadd.f32 0.0, %v9200
    %9202 = vdwg.mxu0
    %v9203 = vadd.f32 %v9001, %v9092
    %v9204 = vadd.f32 %v9002, %v9094
    %v9205 = vadd.f32 %v9003, %v9181
    %v9206 = vadd.f32 %v9004, %v9183
    %v9207 = vadd.f32 %v9005, %v9098
    %v9208 = vadd.f32 %v9006, %v9100
    %v9209 = vadd.f32 %v9007, %v9187
    %v9210 = vadd.f32 %v9008, %v9189
    %v9211 = vadd.f32 %v9009, %v9104
    %v9212 = vadd.f32 %v9010, %v9106
    %v9213 = vadd.f32 %v9011, %v9193
    %v9214 = vadd.f32 %v9012, %v9195
    %v9215 = vadd.f32 %v9013, %v9110
    %v9216 = vadd.f32 %v9014, %v9112
    %v9217 = vadd.f32 %v9015, %v9199
    %v9218 = vadd.f32 %v9016, %v9201
    %9219 = vrot.lane.b32.xlu0 %v8121, 127
    %v9220 = vpop.permute.xlu0 %9219
    %9221 = vrot.lane.b32.xlu0 %v8125, 127
    %v9222 = vpop.permute.xlu0 %9221
    %9223 = vrot.lane.b32.xlu0 %v8122, 127
    %v9224 = vpop.permute.xlu0 %9223
    %9225 = vrot.lane.b32.xlu0 %v8126, 127
    %v9226 = vpop.permute.xlu0 %9225
    %v9227 = vsel %vm1455, %v9224, %v9226
    %v9228 = vsel %vm1455, %v9222, %v9224
    %v9229 = vsel %vm1455, %v9220, %v9222
    %v9230 = vsel %vm1455, %v9226, %v9220
    %v9231 = vmul.f32 %v9229, %v220
    %v9232 = vmul.f32 %v9228, %v224
    %v9233 = vmul.f32 %v9227, %v228
    %v9234 = vmul.f32 %v9230, %v232
    %v9236 = vsel %vm321, %v9231, 0
    %v9239 = vsel %vm321, %v9232, 0
    %v9242 = vsel %vm321, %v9233, 0
    %v9245 = vsel %vm321, %v9234, 0
    %9247 = vmatprep.subr.mxu0 %v9239
    %9248 = vmatpush1.msra.mxu0 %v9236
    %9249 = vmatprep.subr.mxu0 0.0
    %9250 = vmatpush1.msra.mxu0 0.0
    %9251 = vmatprep.subr.mxu0 0.0
    %9252 = vmatpush1.msra.mxu0 0.0
    %9253 = vmatprep.subr.mxu0 0.0
    %9254 = vmatpush1.msra.mxu0 0.0
    %9255 = vmatprep.subr.mxu0 0.0
    %9256 = vmatpush1.msra.mxu0 0.0
    %9257 = vmatprep.subr.mxu0 0.0
    %9258 = vmatpush1.msra.mxu0 0.0
    %9259 = vmatprep.subr.mxu0 0.0
    %9260 = vmatpush1.msra.mxu0 0.0
    %9261 = vmatprep.subr.mxu0 0.0
    %9262 = vmatpush1.msra.mxu0 0.0
    %9263 = vmatprep.subr.mxu0 0.0
    %9264 = vmatpush1.msra.mxu0 0.0
    %9265 = vmatprep.subr.mxu0 0.0
    %9266 = vmatpush1.msra.mxu0 0.0
    %9267 = vmatprep.subr.mxu0 0.0
    %9268 = vmatpush1.msra.mxu0 0.0
    %9269 = vmatprep.subr.mxu0 0.0
    %9270 = vmatpush1.msra.mxu0 0.0
    %9271 = vmatprep.subr.mxu0 0.0
    %9272 = vmatpush1.msra.mxu0 0.0
    %9273 = vmatprep.subr.mxu0 0.0
    %9274 = vmatpush1.msra.mxu0 0.0
    %9275 = vmatprep.subr.mxu0 0.0
    %9276 = vmatpush1.msra.mxu0 0.0
    %9277 = vmatprep.subr.mxu0 0.0
    %9278 = vmatpush1.msra.mxu0 0.0
    %9279 = vmatprep.subr.mxu0 0.0
    %9280 = vmatpush1.msra.mxu0 0.0
    %9281 = vmatprep.subr.mxu0 0.0
    %9282 = vmatpush1.msra.mxu0 0.0
    %9283 = vmatprep.subr.mxu0 0.0
    %9284 = vmatpush1.msra.mxu0 0.0
    %9285 = vmatprep.subr.mxu0 0.0
    %9286 = vmatpush1.msra.mxu0 0.0
    %9287 = vmatprep.subr.mxu0 0.0
    %9288 = vmatpush1.msra.mxu0 0.0
    %9289 = vmatprep.subr.mxu0 0.0
    %9290 = vmatpush1.msra.mxu0 0.0
    %9291 = vmatprep.subr.mxu0 0.0
    %9292 = vmatpush1.msra.mxu0 0.0
    %9293 = vmatprep.subr.mxu0 0.0
    %9294 = vmatpush1.msra.mxu0 0.0
    %9295 = vmatprep.subr.mxu0 0.0
    %9296 = vmatpush1.msra.mxu0 0.0
    %9297 = vmatprep.subr.mxu0 0.0
    %9298 = vmatpush1.msra.mxu0 0.0
    %9299 = vmatprep.subr.mxu0 0.0
    %9300 = vmatpush1.msra.mxu0 0.0
    %9301 = vmatprep.subr.mxu0 0.0
    %9302 = vmatpush1.msra.mxu0 0.0
    %9303 = vmatprep.subr.mxu0 0.0
    %9304 = vmatpush1.msra.mxu0 0.0
    %9305 = vmatprep.subr.mxu0 0.0
    %9306 = vmatpush1.msra.mxu0 0.0
    %9307 = vmatprep.subr.mxu0 0.0
    %9308 = vmatpush1.msra.mxu0 0.0
    %9309 = vmatprep.subr.mxu0 0.0
    %9310 = vmatpush1.msra.mxu0 0.0
    %9311 = vmatprep.mubr.f32.mxu0 0.0
    %9312 = vmatmul.mubr.f32.gmra.mrb[0].mxu0 %v1465
    %v9313 = vpop.f32.mrb[0].mxu0
    %v9314 = vadd.f32 0.0, %v9313
    %v9315 = vpop.f32.mrb[0].mxu0
    %v9316 = vadd.f32 0.0, %v9315
    %9317 = vmatprep.mubr.f32.mxu0 0.0
    %9318 = vmatmul.mubr.f32.gmra.mrb[0].mxu0 %v1468
    %v9319 = vpop.f32.mrb[0].mxu0
    %v9320 = vadd.f32 0.0, %v9319
    %v9321 = vpop.f32.mrb[0].mxu0
    %v9322 = vadd.f32 0.0, %v9321
    %9323 = vmatprep.mubr.f32.mxu0 0.0
    %9324 = vmatmul.mubr.f32.gmra.mrb[0].mxu0 %v1471
    %v9325 = vpop.f32.mrb[0].mxu0
    %v9326 = vadd.f32 0.0, %v9325
    %v9327 = vpop.f32.mrb[0].mxu0
    %v9328 = vadd.f32 0.0, %v9327
    %9329 = vmatprep.mubr.f32.mxu0 0.0
    %9330 = vmatmul.mubr.f32.gmra.mrb[0].mxu0 %v1474
    %v9331 = vpop.f32.mrb[0].mxu0
    %v9332 = vadd.f32 0.0, %v9331
    %v9333 = vpop.f32.mrb[0].mxu0
    %v9334 = vadd.f32 0.0, %v9333
    %9335 = vdwg.mxu0
    %9336 = vmatprep.subr.mxu0 %v9245
    %9337 = vmatpush1.msra.mxu0 %v9242
    %9338 = vmatprep.subr.mxu0 0.0
    %9339 = vmatpush1.msra.mxu0 0.0
    %9340 = vmatprep.subr.mxu0 0.0
    %9341 = vmatpush1.msra.mxu0 0.0
    %9342 = vmatprep.subr.mxu0 0.0
    %9343 = vmatpush1.msra.mxu0 0.0
    %9344 = vmatprep.subr.mxu0 0.0
    %9345 = vmatpush1.msra.mxu0 0.0
    %9346 = vmatprep.subr.mxu0 0.0
    %9347 = vmatpush1.msra.mxu0 0.0
    %9348 = vmatprep.subr.mxu0 0.0
    %9349 = vmatpush1.msra.mxu0 0.0
    %9350 = vmatprep.subr.mxu0 0.0
    %9351 = vmatpush1.msra.mxu0 0.0
    %9352 = vmatprep.subr.mxu0 0.0
    %9353 = vmatpush1.msra.mxu0 0.0
    %9354 = vmatprep.subr.mxu0 0.0
    %9355 = vmatpush1.msra.mxu0 0.0
    %9356 = vmatprep.subr.mxu0 0.0
    %9357 = vmatpush1.msra.mxu0 0.0
    %9358 = vmatprep.subr.mxu0 0.0
    %9359 = vmatpush1.msra.mxu0 0.0
    %9360 = vmatprep.subr.mxu0 0.0
    %9361 = vmatpush1.msra.mxu0 0.0
    %9362 = vmatprep.subr.mxu0 0.0
    %9363 = vmatpush1.msra.mxu0 0.0
    %9364 = vmatprep.subr.mxu0 0.0
    %9365 = vmatpush1.msra.mxu0 0.0
    %9366 = vmatprep.subr.mxu0 0.0
    %9367 = vmatpush1.msra.mxu0 0.0
    %9368 = vmatprep.subr.mxu0 0.0
    %9369 = vmatpush1.msra.mxu0 0.0
    %9370 = vmatprep.subr.mxu0 0.0
    %9371 = vmatpush1.msra.mxu0 0.0
    %9372 = vmatprep.subr.mxu0 0.0
    %9373 = vmatpush1.msra.mxu0 0.0
    %9374 = vmatprep.subr.mxu0 0.0
    %9375 = vmatpush1.msra.mxu0 0.0
    %9376 = vmatprep.subr.mxu0 0.0
    %9377 = vmatpush1.msra.mxu0 0.0
    %9378 = vmatprep.subr.mxu0 0.0
    %9379 = vmatpush1.msra.mxu0 0.0
    %9380 = vmatprep.subr.mxu0 0.0
    %9381 = vmatpush1.msra.mxu0 0.0
    %9382 = vmatprep.subr.mxu0 0.0
    %9383 = vmatpush1.msra.mxu0 0.0
    %9384 = vmatprep.subr.mxu0 0.0
    %9385 = vmatpush1.msra.mxu0 0.0
    %9386 = vmatprep.subr.mxu0 0.0
    %9387 = vmatpush1.msra.mxu0 0.0
    %9388 = vmatprep.subr.mxu0 0.0
    %9389 = vmatpush1.msra.mxu0 0.0
    %9390 = vmatprep.subr.mxu0 0.0
    %9391 = vmatpush1.msra.mxu0 0.0
    %9392 = vmatprep.subr.mxu0 0.0
    %9393 = vmatpush1.msra.mxu0 0.0
    %9394 = vmatprep.subr.mxu0 0.0
    %9395 = vmatpush1.msra.mxu0 0.0
    %9396 = vmatprep.subr.mxu0 0.0
    %9397 = vmatpush1.msra.mxu0 0.0
    %9398 = vmatprep.subr.mxu0 0.0
    %9399 = vmatpush1.msra.mxu0 0.0
    %9400 = vmatprep.mubr.f32.mxu0 0.0
    %9401 = vmatmul.mubr.f32.gmra.mrb[0].mxu0 %v1465
    %v9402 = vpop.f32.mrb[0].mxu0
    %v9403 = vadd.f32 0.0, %v9402
    %v9404 = vpop.f32.mrb[0].mxu0
    %v9405 = vadd.f32 0.0, %v9404
    %9406 = vmatprep.mubr.f32.mxu0 0.0
    %9407 = vmatmul.mubr.f32.gmra.mrb[0].mxu0 %v1468
    %v9408 = vpop.f32.mrb[0].mxu0
    %v9409 = vadd.f32 0.0, %v9408
    %v9410 = vpop.f32.mrb[0].mxu0
    %v9411 = vadd.f32 0.0, %v9410
    %9412 = vmatprep.mubr.f32.mxu0 0.0
    %9413 = vmatmul.mubr.f32.gmra.mrb[0].mxu0 %v1471
    %v9414 = vpop.f32.mrb[0].mxu0
    %v9415 = vadd.f32 0.0, %v9414
    %v9416 = vpop.f32.mrb[0].mxu0
    %v9417 = vadd.f32 0.0, %v9416
    %9418 = vmatprep.mubr.f32.mxu0 0.0
    %9419 = vmatmul.mubr.f32.gmra.mrb[0].mxu0 %v1474
    %v9420 = vpop.f32.mrb[0].mxu0
    %v9421 = vadd.f32 0.0, %v9420
    %v9422 = vpop.f32.mrb[0].mxu0
    %v9423 = vadd.f32 0.0, %v9422
    %9424 = vdwg.mxu0
    %v9425 = vadd.f32 %v9203, %v9314
    %v9426 = vadd.f32 %v9204, %v9316
    %v9427 = vadd.f32 %v9205, %v9403
    %v9428 = vadd.f32 %v9206, %v9405
    %v9429 = vadd.f32 %v9207, %v9320
    %v9430 = vadd.f32 %v9208, %v9322
    %v9431 = vadd.f32 %v9209, %v9409
    %v9432 = vadd.f32 %v9210, %v9411
    %v9433 = vadd.f32 %v9211, %v9326
    %v9434 = vadd.f32 %v9212, %v9328
    %v9435 = vadd.f32 %v9213, %v9415
    %v9436 = vadd.f32 %v9214, %v9417
    %v9437 = vadd.f32 %v9215, %v9332
    %v9438 = vadd.f32 %v9216, %v9334
    %v9439 = vadd.f32 %v9217, %v9421
    %v9440 = vadd.f32 %v9218, %v9423
    %9441 = vrot.lane.b32.xlu0 %v8121, 113
    %v9442 = vpop.permute.xlu0 %9441
    %9443 = vrot.lane.b32.xlu0 %v8125, 113
    %v9444 = vpop.permute.xlu0 %9443
    %9445 = vrot.lane.b32.xlu0 %v8122, 113
    %v9446 = vpop.permute.xlu0 %9445
    %9447 = vrot.lane.b32.xlu0 %v8126, 113
    %v9448 = vpop.permute.xlu0 %9447
    %v9449 = vsel %vm1690, %v9446, %v9448
    %v9450 = vsel %vm1690, %v9444, %v9446
    %v9451 = vsel %vm1690, %v9442, %v9444
    %v9452 = vsel %vm1690, %v9448, %v9442
    %v9453 = vmul.f32 %v9451, %v236
    %v9454 = vmul.f32 %v9450, %v240
    %v9455 = vmul.f32 %v9449, %v244
    %v9456 = vmul.f32 %v9452, %v248
    %v9458 = vsel %vm321, %v9453, 0
    %v9461 = vsel %vm321, %v9454, 0
    %v9464 = vsel %vm321, %v9455, 0
    %v9467 = vsel %vm321, %v9456, 0
    %9469 = vmatprep.subr.mxu0 %v9461
    %9470 = vmatpush1.msra.mxu0 %v9458
    %9471 = vmatprep.subr.mxu0 0.0
    %9472 = vmatpush1.msra.mxu0 0.0
    %9473 = vmatprep.subr.mxu0 0.0
    %9474 = vmatpush1.msra.mxu0 0.0
    %9475 = vmatprep.subr.mxu0 0.0
    %9476 = vmatpush1.msra.mxu0 0.0
    %9477 = vmatprep.subr.mxu0 0.0
    %9478 = vmatpush1.msra.mxu0 0.0
    %9479 = vmatprep.subr.mxu0 0.0
    %9480 = vmatpush1.msra.mxu0 0.0
    %9481 = vmatprep.subr.mxu0 0.0
    %9482 = vmatpush1.msra.mxu0 0.0
    %9483 = vmatprep.subr.mxu0 0.0
    %9484 = vmatpush1.msra.mxu0 0.0
    %9485 = vmatprep.subr.mxu0 0.0
    %9486 = vmatpush1.msra.mxu0 0.0
    %9487 = vmatprep.subr.mxu0 0.0
    %9488 = vmatpush1.msra.mxu0 0.0
    %9489 = vmatprep.subr.mxu0 0.0
    %9490 = vmatpush1.msra.mxu0 0.0
    %9491 = vmatprep.subr.mxu0 0.0
    %9492 = vmatpush1.msra.mxu0 0.0
    %9493 = vmatprep.subr.mxu0 0.0
    %9494 = vmatpush1.msra.mxu0 0.0
    %9495 = vmatprep.subr.mxu0 0.0
    %9496 = vmatpush1.msra.mxu0 0.0
    %9497 = vmatprep.subr.mxu0 0.0
    %9498 = vmatpush1.msra.mxu0 0.0
    %9499 = vmatprep.subr.mxu0 0.0
    %9500 = vmatpush1.msra.mxu0 0.0
    %9501 = vmatprep.subr.mxu0 0.0
    %9502 = vmatpush1.msra.mxu0 0.0
    %9503 = vmatprep.subr.mxu0 0.0
    %9504 = vmatpush1.msra.mxu0 0.0
    %9505 = vmatprep.subr.mxu0 0.0
    %9506 = vmatpush1.msra.mxu0 0.0
    %9507 = vmatprep.subr.mxu0 0.0
    %9508 = vmatpush1.msra.mxu0 0.0
    %9509 = vmatprep.subr.mxu0 0.0
    %9510 = vmatpush1.msra.mxu0 0.0
    %9511 = vmatprep.subr.mxu0 0.0
    %9512 = vmatpush1.msra.mxu0 0.0
    %9513 = vmatprep.subr.mxu0 0.0
    %9514 = vmatpush1.msra.mxu0 0.0
    %9515 = vmatprep.subr.mxu0 0.0
    %9516 = vmatpush1.msra.mxu0 0.0
    %9517 = vmatprep.subr.mxu0 0.0
    %9518 = vmatpush1.msra.mxu0 0.0
    %9519 = vmatprep.subr.mxu0 0.0
    %9520 = vmatpush1.msra.mxu0 0.0
    %9521 = vmatprep.subr.mxu0 0.0
    %9522 = vmatpush1.msra.mxu0 0.0
    %9523 = vmatprep.subr.mxu0 0.0
    %9524 = vmatpush1.msra.mxu0 0.0
    %9525 = vmatprep.subr.mxu0 0.0
    %9526 = vmatpush1.msra.mxu0 0.0
    %9527 = vmatprep.subr.mxu0 0.0
    %9528 = vmatpush1.msra.mxu0 0.0
    %9529 = vmatprep.subr.mxu0 0.0
    %9530 = vmatpush1.msra.mxu0 0.0
    %9531 = vmatprep.subr.mxu0 0.0
    %9532 = vmatpush1.msra.mxu0 0.0
    %9533 = vmatprep.mubr.f32.mxu0 0.0
    %9534 = vmatmul.mubr.f32.gmra.mrb[0].mxu0 %v1700
    %v9535 = vpop.f32.mrb[0].mxu0
    %v9536 = vadd.f32 0.0, %v9535
    %v9537 = vpop.f32.mrb[0].mxu0
    %v9538 = vadd.f32 0.0, %v9537
    %9539 = vmatprep.mubr.f32.mxu0 0.0
    %9540 = vmatmul.mubr.f32.gmra.mrb[0].mxu0 %v1703
    %v9541 = vpop.f32.mrb[0].mxu0
    %v9542 = vadd.f32 0.0, %v9541
    %v9543 = vpop.f32.mrb[0].mxu0
    %v9544 = vadd.f32 0.0, %v9543
    %9545 = vmatprep.mubr.f32.mxu0 0.0
    %9546 = vmatmul.mubr.f32.gmra.mrb[0].mxu0 %v1706
    %v9547 = vpop.f32.mrb[0].mxu0
    %v9548 = vadd.f32 0.0, %v9547
    %v9549 = vpop.f32.mrb[0].mxu0
    %v9550 = vadd.f32 0.0, %v9549
    %9551 = vmatprep.mubr.f32.mxu0 0.0
    %9552 = vmatmul.mubr.f32.gmra.mrb[0].mxu0 %v1709
    %v9553 = vpop.f32.mrb[0].mxu0
    %v9554 = vadd.f32 0.0, %v9553
    %v9555 = vpop.f32.mrb[0].mxu0
    %v9556 = vadd.f32 0.0, %v9555
    %9557 = vdwg.mxu0
    %9558 = vmatprep.subr.mxu0 %v9467
    %9559 = vmatpush1.msra.mxu0 %v9464
    %9560 = vmatprep.subr.mxu0 0.0
    %9561 = vmatpush1.msra.mxu0 0.0
    %9562 = vmatprep.subr.mxu0 0.0
    %9563 = vmatpush1.msra.mxu0 0.0
    %9564 = vmatprep.subr.mxu0 0.0
    %9565 = vmatpush1.msra.mxu0 0.0
    %9566 = vmatprep.subr.mxu0 0.0
    %9567 = vmatpush1.msra.mxu0 0.0
    %9568 = vmatprep.subr.mxu0 0.0
    %9569 = vmatpush1.msra.mxu0 0.0
    %9570 = vmatprep.subr.mxu0 0.0
    %9571 = vmatpush1.msra.mxu0 0.0
    %9572 = vmatprep.subr.mxu0 0.0
    %9573 = vmatpush1.msra.mxu0 0.0
    %9574 = vmatprep.subr.mxu0 0.0
    %9575 = vmatpush1.msra.mxu0 0.0
    %9576 = vmatprep.subr.mxu0 0.0
    %9577 = vmatpush1.msra.mxu0 0.0
    %9578 = vmatprep.subr.mxu0 0.0
    %9579 = vmatpush1.msra.mxu0 0.0
    %9580 = vmatprep.subr.mxu0 0.0
    %9581 = vmatpush1.msra.mxu0 0.0
    %9582 = vmatprep.subr.mxu0 0.0
    %9583 = vmatpush1.msra.mxu0 0.0
    %9584 = vmatprep.subr.mxu0 0.0
    %9585 = vmatpush1.msra.mxu0 0.0
    %9586 = vmatprep.subr.mxu0 0.0
    %9587 = vmatpush1.msra.mxu0 0.0
    %9588 = vmatprep.subr.mxu0 0.0
    %9589 = vmatpush1.msra.mxu0 0.0
    %9590 = vmatprep.subr.mxu0 0.0
    %9591 = vmatpush1.msra.mxu0 0.0
    %9592 = vmatprep.subr.mxu0 0.0
    %9593 = vmatpush1.msra.mxu0 0.0
    %9594 = vmatprep.subr.mxu0 0.0
    %9595 = vmatpush1.msra.mxu0 0.0
    %9596 = vmatprep.subr.mxu0 0.0
    %9597 = vmatpush1.msra.mxu0 0.0
    %9598 = vmatprep.subr.mxu0 0.0
    %9599 = vmatpush1.msra.mxu0 0.0
    %9600 = vmatprep.subr.mxu0 0.0
    %9601 = vmatpush1.msra.mxu0 0.0
    %9602 = vmatprep.subr.mxu0 0.0
    %9603 = vmatpush1.msra.mxu0 0.0
    %9604 = vmatprep.subr.mxu0 0.0
    %9605 = vmatpush1.msra.mxu0 0.0
    %9606 = vmatprep.subr.mxu0 0.0
    %9607 = vmatpush1.msra.mxu0 0.0
    %9608 = vmatprep.subr.mxu0 0.0
    %9609 = vmatpush1.msra.mxu0 0.0
    %9610 = vmatprep.subr.mxu0 0.0
    %9611 = vmatpush1.msra.mxu0 0.0
    %9612 = vmatprep.subr.mxu0 0.0
    %9613 = vmatpush1.msra.mxu0 0.0
    %9614 = vmatprep.subr.mxu0 0.0
    %9615 = vmatpush1.msra.mxu0 0.0
    %9616 = vmatprep.subr.mxu0 0.0
    %9617 = vmatpush1.msra.mxu0 0.0
    %9618 = vmatprep.subr.mxu0 0.0
    %9619 = vmatpush1.msra.mxu0 0.0
    %9620 = vmatprep.subr.mxu0 0.0
    %9621 = vmatpush1.msra.mxu0 0.0
    %9622 = vmatprep.mubr.f32.mxu0 0.0
    %9623 = vmatmul.mubr.f32.gmra.mrb[0].mxu0 %v1700
    %v9624 = vpop.f32.mrb[0].mxu0
    %v9625 = vadd.f32 0.0, %v9624
    %v9626 = vpop.f32.mrb[0].mxu0
    %v9627 = vadd.f32 0.0, %v9626
    %9628 = vmatprep.mubr.f32.mxu0 0.0
    %9629 = vmatmul.mubr.f32.gmra.mrb[0].mxu0 %v1703
    %v9630 = vpop.f32.mrb[0].mxu0
    %v9631 = vadd.f32 0.0, %v9630
    %v9632 = vpop.f32.mrb[0].mxu0
    %v9633 = vadd.f32 0.0, %v9632
    %9634 = vmatprep.mubr.f32.mxu0 0.0
    %9635 = vmatmul.mubr.f32.gmra.mrb[0].mxu0 %v1706
    %v9636 = vpop.f32.mrb[0].mxu0
    %v9637 = vadd.f32 0.0, %v9636
    %v9638 = vpop.f32.mrb[0].mxu0
    %v9639 = vadd.f32 0.0, %v9638
    %9640 = vmatprep.mubr.f32.mxu0 0.0
    %9641 = vmatmul.mubr.f32.gmra.mrb[0].mxu0 %v1709
    %v9642 = vpop.f32.mrb[0].mxu0
    %v9643 = vadd.f32 0.0, %v9642
    %v9644 = vpop.f32.mrb[0].mxu0
    %v9645 = vadd.f32 0.0, %v9644
    %9646 = vdwg.mxu0
    %v9647 = vadd.f32 %v9425, %v9536
    %v9648 = vadd.f32 %v9426, %v9538
    %v9649 = vadd.f32 %v9427, %v9625
    %v9650 = vadd.f32 %v9428, %v9627
    %v9651 = vadd.f32 %v9429, %v9542
    %v9652 = vadd.f32 %v9430, %v9544
    %v9653 = vadd.f32 %v9431, %v9631
    %v9654 = vadd.f32 %v9432, %v9633
    %v9655 = vadd.f32 %v9433, %v9548
    %v9656 = vadd.f32 %v9434, %v9550
    %v9657 = vadd.f32 %v9435, %v9637
    %v9658 = vadd.f32 %v9436, %v9639
    %v9659 = vadd.f32 %v9437, %v9554
    %v9660 = vadd.f32 %v9438, %v9556
    %v9661 = vadd.f32 %v9439, %v9643
    %v9662 = vadd.f32 %v9440, %v9645
    %9663 = vrot.lane.b32.xlu0 %v8121, 112
    %v9664 = vpop.permute.xlu0 %9663
    %9665 = vrot.lane.b32.xlu0 %v8125, 112
    %v9666 = vpop.permute.xlu0 %9665
    %9667 = vrot.lane.b32.xlu0 %v8122, 112
    %v9668 = vpop.permute.xlu0 %9667
    %9669 = vrot.lane.b32.xlu0 %v8126, 112
    %v9670 = vpop.permute.xlu0 %9669
    %v9671 = vsel %vm1925, %v9668, %v9670
    %v9672 = vsel %vm1925, %v9666, %v9668
    %v9673 = vsel %vm1925, %v9664, %v9666
    %v9674 = vsel %vm1925, %v9670, %v9664
    %v9675 = vmul.f32 %v9673, %v252
    %v9676 = vmul.f32 %v9672, %v256
    %v9677 = vmul.f32 %v9671, %v260
    %v9678 = vmul.f32 %v9674, %v264
    %v9680 = vsel %vm321, %v9675, 0
    %v9683 = vsel %vm321, %v9676, 0
    %v9686 = vsel %vm321, %v9677, 0
    %v9689 = vsel %vm321, %v9678, 0
    %9691 = vmatprep.subr.mxu0 %v9683
    %9692 = vmatpush1.msra.mxu0 %v9680
    %9693 = vmatprep.subr.mxu0 0.0
    %9694 = vmatpush1.msra.mxu0 0.0
    %9695 = vmatprep.subr.mxu0 0.0
    %9696 = vmatpush1.msra.mxu0 0.0
    %9697 = vmatprep.subr.mxu0 0.0
    %9698 = vmatpush1.msra.mxu0 0.0
    %9699 = vmatprep.subr.mxu0 0.0
    %9700 = vmatpush1.msra.mxu0 0.0
    %9701 = vmatprep.subr.mxu0 0.0
    %9702 = vmatpush1.msra.mxu0 0.0
    %9703 = vmatprep.subr.mxu0 0.0
    %9704 = vmatpush1.msra.mxu0 0.0
    %9705 = vmatprep.subr.mxu0 0.0
    %9706 = vmatpush1.msra.mxu0 0.0
    %9707 = vmatprep.subr.mxu0 0.0
    %9708 = vmatpush1.msra.mxu0 0.0
    %9709 = vmatprep.subr.mxu0 0.0
    %9710 = vmatpush1.msra.mxu0 0.0
    %9711 = vmatprep.subr.mxu0 0.0
    %9712 = vmatpush1.msra.mxu0 0.0
    %9713 = vmatprep.subr.mxu0 0.0
    %9714 = vmatpush1.msra.mxu0 0.0
    %9715 = vmatprep.subr.mxu0 0.0
    %9716 = vmatpush1.msra.mxu0 0.0
    %9717 = vmatprep.subr.mxu0 0.0
    %9718 = vmatpush1.msra.mxu0 0.0
    %9719 = vmatprep.subr.mxu0 0.0
    %9720 = vmatpush1.msra.mxu0 0.0
    %9721 = vmatprep.subr.mxu0 0.0
    %9722 = vmatpush1.msra.mxu0 0.0
    %9723 = vmatprep.subr.mxu0 0.0
    %9724 = vmatpush1.msra.mxu0 0.0
    %9725 = vmatprep.subr.mxu0 0.0
    %9726 = vmatpush1.msra.mxu0 0.0
    %9727 = vmatprep.subr.mxu0 0.0
    %9728 = vmatpush1.msra.mxu0 0.0
    %9729 = vmatprep.subr.mxu0 0.0
    %9730 = vmatpush1.msra.mxu0 0.0
    %9731 = vmatprep.subr.mxu0 0.0
    %9732 = vmatpush1.msra.mxu0 0.0
    %9733 = vmatprep.subr.mxu0 0.0
    %9734 = vmatpush1.msra.mxu0 0.0
    %9735 = vmatprep.subr.mxu0 0.0
    %9736 = vmatpush1.msra.mxu0 0.0
    %9737 = vmatprep.subr.mxu0 0.0
    %9738 = vmatpush1.msra.mxu0 0.0
    %9739 = vmatprep.subr.mxu0 0.0
    %9740 = vmatpush1.msra.mxu0 0.0
    %9741 = vmatprep.subr.mxu0 0.0
    %9742 = vmatpush1.msra.mxu0 0.0
    %9743 = vmatprep.subr.mxu0 0.0
    %9744 = vmatpush1.msra.mxu0 0.0
    %9745 = vmatprep.subr.mxu0 0.0
    %9746 = vmatpush1.msra.mxu0 0.0
    %9747 = vmatprep.subr.mxu0 0.0
    %9748 = vmatpush1.msra.mxu0 0.0
    %9749 = vmatprep.subr.mxu0 0.0
    %9750 = vmatpush1.msra.mxu0 0.0
    %9751 = vmatprep.subr.mxu0 0.0
    %9752 = vmatpush1.msra.mxu0 0.0
    %9753 = vmatprep.subr.mxu0 0.0
    %9754 = vmatpush1.msra.mxu0 0.0
    %9755 = vmatprep.mubr.f32.mxu0 0.0
    %9756 = vmatmul.mubr.f32.gmra.mrb[0].mxu0 %v1935
    %v9757 = vpop.f32.mrb[0].mxu0
    %v9758 = vadd.f32 0.0, %v9757
    %v9759 = vpop.f32.mrb[0].mxu0
    %v9760 = vadd.f32 0.0, %v9759
    %9761 = vmatprep.mubr.f32.mxu0 0.0
    %9762 = vmatmul.mubr.f32.gmra.mrb[0].mxu0 %v1938
    %v9763 = vpop.f32.mrb[0].mxu0
    %v9764 = vadd.f32 0.0, %v9763
    %v9765 = vpop.f32.mrb[0].mxu0
    %v9766 = vadd.f32 0.0, %v9765
    %9767 = vmatprep.mubr.f32.mxu0 0.0
    %9768 = vmatmul.mubr.f32.gmra.mrb[0].mxu0 %v1941
    %v9769 = vpop.f32.mrb[0].mxu0
    %v9770 = vadd.f32 0.0, %v9769
    %v9771 = vpop.f32.mrb[0].mxu0
    %v9772 = vadd.f32 0.0, %v9771
    %9773 = vmatprep.mubr.f32.mxu0 0.0
    %9774 = vmatmul.mubr.f32.gmra.mrb[0].mxu0 %v1944
    %v9775 = vpop.f32.mrb[0].mxu0
    %v9776 = vadd.f32 0.0, %v9775
    %v9777 = vpop.f32.mrb[0].mxu0
    %v9778 = vadd.f32 0.0, %v9777
    %9779 = vdwg.mxu0
    %9780 = vmatprep.subr.mxu0 %v9689
    %9781 = vmatpush1.msra.mxu0 %v9686
    %9782 = vmatprep.subr.mxu0 0.0
    %9783 = vmatpush1.msra.mxu0 0.0
    %9784 = vmatprep.subr.mxu0 0.0
    %9785 = vmatpush1.msra.mxu0 0.0
    %9786 = vmatprep.subr.mxu0 0.0
    %9787 = vmatpush1.msra.mxu0 0.0
    %9788 = vmatprep.subr.mxu0 0.0
    %9789 = vmatpush1.msra.mxu0 0.0
    %9790 = vmatprep.subr.mxu0 0.0
    %9791 = vmatpush1.msra.mxu0 0.0
    %9792 = vmatprep.subr.mxu0 0.0
    %9793 = vmatpush1.msra.mxu0 0.0
    %9794 = vmatprep.subr.mxu0 0.0
    %9795 = vmatpush1.msra.mxu0 0.0
    %9796 = vmatprep.subr.mxu0 0.0
    %9797 = vmatpush1.msra.mxu0 0.0
    %9798 = vmatprep.subr.mxu0 0.0
    %9799 = vmatpush1.msra.mxu0 0.0
    %9800 = vmatprep.subr.mxu0 0.0
    %9801 = vmatpush1.msra.mxu0 0.0
    %9802 = vmatprep.subr.mxu0 0.0
    %9803 = vmatpush1.msra.mxu0 0.0
    %9804 = vmatprep.subr.mxu0 0.0
    %9805 = vmatpush1.msra.mxu0 0.0
    %9806 = vmatprep.subr.mxu0 0.0
    %9807 = vmatpush1.msra.mxu0 0.0
    %9808 = vmatprep.subr.mxu0 0.0
    %9809 = vmatpush1.msra.mxu0 0.0
    %9810 = vmatprep.subr.mxu0 0.0
    %9811 = vmatpush1.msra.mxu0 0.0
    %9812 = vmatprep.subr.mxu0 0.0
    %9813 = vmatpush1.msra.mxu0 0.0
    %9814 = vmatprep.subr.mxu0 0.0
    %9815 = vmatpush1.msra.mxu0 0.0
    %9816 = vmatprep.subr.mxu0 0.0
    %9817 = vmatpush1.msra.mxu0 0.0
    %9818 = vmatprep.subr.mxu0 0.0
    %9819 = vmatpush1.msra.mxu0 0.0
    %9820 = vmatprep.subr.mxu0 0.0
    %9821 = vmatpush1.msra.mxu0 0.0
    %9822 = vmatprep.subr.mxu0 0.0
    %9823 = vmatpush1.msra.mxu0 0.0
    %9824 = vmatprep.subr.mxu0 0.0
    %9825 = vmatpush1.msra.mxu0 0.0
    %9826 = vmatprep.subr.mxu0 0.0
    %9827 = vmatpush1.msra.mxu0 0.0
    %9828 = vmatprep.subr.mxu0 0.0
    %9829 = vmatpush1.msra.mxu0 0.0
    %9830 = vmatprep.subr.mxu0 0.0
    %9831 = vmatpush1.msra.mxu0 0.0
    %9832 = vmatprep.subr.mxu0 0.0
    %9833 = vmatpush1.msra.mxu0 0.0
    %9834 = vmatprep.subr.mxu0 0.0
    %9835 = vmatpush1.msra.mxu0 0.0
    %9836 = vmatprep.subr.mxu0 0.0
    %9837 = vmatpush1.msra.mxu0 0.0
    %9838 = vmatprep.subr.mxu0 0.0
    %9839 = vmatpush1.msra.mxu0 0.0
    %9840 = vmatprep.subr.mxu0 0.0
    %9841 = vmatpush1.msra.mxu0 0.0
    %9842 = vmatprep.subr.mxu0 0.0
    %9843 = vmatpush1.msra.mxu0 0.0
    %9844 = vmatprep.mubr.f32.mxu0 0.0
    %9845 = vmatmul.mubr.f32.gmra.mrb[0].mxu0 %v1935
    %v9846 = vpop.f32.mrb[0].mxu0
    %v9847 = vadd.f32 0.0, %v9846
    %v9848 = vpop.f32.mrb[0].mxu0
    %v9849 = vadd.f32 0.0, %v9848
    %9850 = vmatprep.mubr.f32.mxu0 0.0
    %9851 = vmatmul.mubr.f32.gmra.mrb[0].mxu0 %v1938
    %v9852 = vpop.f32.mrb[0].mxu0
    %v9853 = vadd.f32 0.0, %v9852
    %v9854 = vpop.f32.mrb[0].mxu0
    %v9855 = vadd.f32 0.0, %v9854
    %9856 = vmatprep.mubr.f32.mxu0 0.0
    %9857 = vmatmul.mubr.f32.gmra.mrb[0].mxu0 %v1941
    %v9858 = vpop.f32.mrb[0].mxu0
    %v9859 = vadd.f32 0.0, %v9858
    %v9860 = vpop.f32.mrb[0].mxu0
    %v9861 = vadd.f32 0.0, %v9860
    %9862 = vmatprep.mubr.f32.mxu0 0.0
    %9863 = vmatmul.mubr.f32.gmra.mrb[0].mxu0 %v1944
    %v9864 = vpop.f32.mrb[0].mxu0
    %v9865 = vadd.f32 0.0, %v9864
    %v9866 = vpop.f32.mrb[0].mxu0
    %v9867 = vadd.f32 0.0, %v9866
    %9868 = vdwg.mxu0
    %v9869 = vadd.f32 %v9647, %v9758
    %v9870 = vadd.f32 %v9648, %v9760
    %v9871 = vadd.f32 %v9649, %v9847
    %v9872 = vadd.f32 %v9650, %v9849
    %v9873 = vadd.f32 %v9651, %v9764
    %v9874 = vadd.f32 %v9652, %v9766
    %v9875 = vadd.f32 %v9653, %v9853
    %v9876 = vadd.f32 %v9654, %v9855
    %v9877 = vadd.f32 %v9655, %v9770
    %v9878 = vadd.f32 %v9656, %v9772
    %v9879 = vadd.f32 %v9657, %v9859
    %v9880 = vadd.f32 %v9658, %v9861
    %v9881 = vadd.f32 %v9659, %v9776
    %v9882 = vadd.f32 %v9660, %v9778
    %v9883 = vadd.f32 %v9661, %v9865
    %v9884 = vadd.f32 %v9662, %v9867
    %9885 = vrot.lane.b32.xlu0 %v8121, 111
    %v9886 = vpop.permute.xlu0 %9885
    %9887 = vrot.lane.b32.xlu0 %v8125, 111
    %v9888 = vpop.permute.xlu0 %9887
    %9889 = vrot.lane.b32.xlu0 %v8122, 111
    %v9890 = vpop.permute.xlu0 %9889
    %9891 = vrot.lane.b32.xlu0 %v8126, 111
    %v9892 = vpop.permute.xlu0 %9891
    %v9893 = vsel %vm2160, %v9890, %v9892
    %v9894 = vsel %vm2160, %v9888, %v9890
    %v9895 = vsel %vm2160, %v9886, %v9888
    %v9896 = vsel %vm2160, %v9892, %v9886
    %v9897 = vmul.f32 %v9895, %v268
    %v9898 = vmul.f32 %v9894, %v272
    %v9899 = vmul.f32 %v9893, %v276
    %v9900 = vmul.f32 %v9896, %v280
    %v9902 = vsel %vm321, %v9897, 0
    %v9905 = vsel %vm321, %v9898, 0
    %v9908 = vsel %vm321, %v9899, 0
    %v9911 = vsel %vm321, %v9900, 0
    %9913 = vmatprep.subr.mxu0 %v9905
    %9914 = vmatpush1.msra.mxu0 %v9902
    %9915 = vmatprep.subr.mxu0 0.0
    %9916 = vmatpush1.msra.mxu0 0.0
    %9917 = vmatprep.subr.mxu0 0.0
    %9918 = vmatpush1.msra.mxu0 0.0
    %9919 = vmatprep.subr.mxu0 0.0
    %9920 = vmatpush1.msra.mxu0 0.0
    %9921 = vmatprep.subr.mxu0 0.0
    %9922 = vmatpush1.msra.mxu0 0.0
    %9923 = vmatprep.subr.mxu0 0.0
    %9924 = vmatpush1.msra.mxu0 0.0
    %9925 = vmatprep.subr.mxu0 0.0
    %9926 = vmatpush1.msra.mxu0 0.0
    %9927 = vmatprep.subr.mxu0 0.0
    %9928 = vmatpush1.msra.mxu0 0.0
    %9929 = vmatprep.subr.mxu0 0.0
    %9930 = vmatpush1.msra.mxu0 0.0
    %9931 = vmatprep.subr.mxu0 0.0
    %9932 = vmatpush1.msra.mxu0 0.0
    %9933 = vmatprep.subr.mxu0 0.0
    %9934 = vmatpush1.msra.mxu0 0.0
    %9935 = vmatprep.subr.mxu0 0.0
    %9936 = vmatpush1.msra.mxu0 0.0
    %9937 = vmatprep.subr.mxu0 0.0
    %9938 = vmatpush1.msra.mxu0 0.0
    %9939 = vmatprep.subr.mxu0 0.0
    %9940 = vmatpush1.msra.mxu0 0.0
    %9941 = vmatprep.subr.mxu0 0.0
    %9942 = vmatpush1.msra.mxu0 0.0
    %9943 = vmatprep.subr.mxu0 0.0
    %9944 = vmatpush1.msra.mxu0 0.0
    %9945 = vmatprep.subr.mxu0 0.0
    %9946 = vmatpush1.msra.mxu0 0.0
    %9947 = vmatprep.subr.mxu0 0.0
    %9948 = vmatpush1.msra.mxu0 0.0
    %9949 = vmatprep.subr.mxu0 0.0
    %9950 = vmatpush1.msra.mxu0 0.0
    %9951 = vmatprep.subr.mxu0 0.0
    %9952 = vmatpush1.msra.mxu0 0.0
    %9953 = vmatprep.subr.mxu0 0.0
    %9954 = vmatpush1.msra.mxu0 0.0
    %9955 = vmatprep.subr.mxu0 0.0
    %9956 = vmatpush1.msra.mxu0 0.0
    %9957 = vmatprep.subr.mxu0 0.0
    %9958 = vmatpush1.msra.mxu0 0.0
    %9959 = vmatprep.subr.mxu0 0.0
    %9960 = vmatpush1.msra.mxu0 0.0
    %9961 = vmatprep.subr.mxu0 0.0
    %9962 = vmatpush1.msra.mxu0 0.0
    %9963 = vmatprep.subr.mxu0 0.0
    %9964 = vmatpush1.msra.mxu0 0.0
    %9965 = vmatprep.subr.mxu0 0.0
    %9966 = vmatpush1.msra.mxu0 0.0
    %9967 = vmatprep.subr.mxu0 0.0
    %9968 = vmatpush1.msra.mxu0 0.0
    %9969 = vmatprep.subr.mxu0 0.0
    %9970 = vmatpush1.msra.mxu0 0.0
    %9971 = vmatprep.subr.mxu0 0.0
    %9972 = vmatpush1.msra.mxu0 0.0
    %9973 = vmatprep.subr.mxu0 0.0
    %9974 = vmatpush1.msra.mxu0 0.0
    %9975 = vmatprep.subr.mxu0 0.0
    %9976 = vmatpush1.msra.mxu0 0.0
    %9977 = vmatprep.mubr.f32.mxu0 0.0
    %9978 = vmatmul.mubr.f32.gmra.mrb[0].mxu0 %v2170
    %v9979 = vpop.f32.mrb[0].mxu0
    %v9980 = vadd.f32 0.0, %v9979
    %v9981 = vpop.f32.mrb[0].mxu0
    %v9982 = vadd.f32 0.0, %v9981
    %9983 = vmatprep.mubr.f32.mxu0 0.0
    %9984 = vmatmul.mubr.f32.gmra.mrb[0].mxu0 %v2173
    %v9985 = vpop.f32.mrb[0].mxu0
    %v9986 = vadd.f32 0.0, %v9985
    %v9987 = vpop.f32.mrb[0].mxu0
    %v9988 = vadd.f32 0.0, %v9987
    %9989 = vmatprep.mubr.f32.mxu0 0.0
    %9990 = vmatmul.mubr.f32.gmra.mrb[0].mxu0 %v2176
    %v9991 = vpop.f32.mrb[0].mxu0
    %v9992 = vadd.f32 0.0, %v9991
    %v9993 = vpop.f32.mrb[0].mxu0
    %v9994 = vadd.f32 0.0, %v9993
    %9995 = vmatprep.mubr.f32.mxu0 0.0
    %9996 = vmatmul.mubr.f32.gmra.mrb[0].mxu0 %v2179
    %v9997 = vpop.f32.mrb[0].mxu0
    %v9998 = vadd.f32 0.0, %v9997
    %v9999 = vpop.f32.mrb[0].mxu0
    %v10000 = vadd.f32 0.0, %v9999
    %10001 = vdwg.mxu0
    %10002 = vmatprep.subr.mxu0 %v9911
    %10003 = vmatpush1.msra.mxu0 %v9908
    %10004 = vmatprep.subr.mxu0 0.0
    %10005 = vmatpush1.msra.mxu0 0.0
    %10006 = vmatprep.subr.mxu0 0.0
    %10007 = vmatpush1.msra.mxu0 0.0
    %10008 = vmatprep.subr.mxu0 0.0
    %10009 = vmatpush1.msra.mxu0 0.0
    %10010 = vmatprep.subr.mxu0 0.0
    %10011 = vmatpush1.msra.mxu0 0.0
    %10012 = vmatprep.subr.mxu0 0.0
    %10013 = vmatpush1.msra.mxu0 0.0
    %10014 = vmatprep.subr.mxu0 0.0
    %10015 = vmatpush1.msra.mxu0 0.0
    %10016 = vmatprep.subr.mxu0 0.0
    %10017 = vmatpush1.msra.mxu0 0.0
    %10018 = vmatprep.subr.mxu0 0.0
    %10019 = vmatpush1.msra.mxu0 0.0
    %10020 = vmatprep.subr.mxu0 0.0
    %10021 = vmatpush1.msra.mxu0 0.0
    %10022 = vmatprep.subr.mxu0 0.0
    %10023 = vmatpush1.msra.mxu0 0.0
    %10024 = vmatprep.subr.mxu0 0.0
    %10025 = vmatpush1.msra.mxu0 0.0
    %10026 = vmatprep.subr.mxu0 0.0
    %10027 = vmatpush1.msra.mxu0 0.0
    %10028 = vmatprep.subr.mxu0 0.0
    %10029 = vmatpush1.msra.mxu0 0.0
    %10030 = vmatprep.subr.mxu0 0.0
    %10031 = vmatpush1.msra.mxu0 0.0
    %10032 = vmatprep.subr.mxu0 0.0
    %10033 = vmatpush1.msra.mxu0 0.0
    %10034 = vmatprep.subr.mxu0 0.0
    %10035 = vmatpush1.msra.mxu0 0.0
    %10036 = vmatprep.subr.mxu0 0.0
    %10037 = vmatpush1.msra.mxu0 0.0
    %10038 = vmatprep.subr.mxu0 0.0
    %10039 = vmatpush1.msra.mxu0 0.0
    %10040 = vmatprep.subr.mxu0 0.0
    %10041 = vmatpush1.msra.mxu0 0.0
    %10042 = vmatprep.subr.mxu0 0.0
    %10043 = vmatpush1.msra.mxu0 0.0
    %10044 = vmatprep.subr.mxu0 0.0
    %10045 = vmatpush1.msra.mxu0 0.0
    %10046 = vmatprep.subr.mxu0 0.0
    %10047 = vmatpush1.msra.mxu0 0.0
    %10048 = vmatprep.subr.mxu0 0.0
    %10049 = vmatpush1.msra.mxu0 0.0
    %10050 = vmatprep.subr.mxu0 0.0
    %10051 = vmatpush1.msra.mxu0 0.0
    %10052 = vmatprep.subr.mxu0 0.0
    %10053 = vmatpush1.msra.mxu0 0.0
    %10054 = vmatprep.subr.mxu0 0.0
    %10055 = vmatpush1.msra.mxu0 0.0
    %10056 = vmatprep.subr.mxu0 0.0
    %10057 = vmatpush1.msra.mxu0 0.0
    %10058 = vmatprep.subr.mxu0 0.0
    %10059 = vmatpush1.msra.mxu0 0.0
    %10060 = vmatprep.subr.mxu0 0.0
    %10061 = vmatpush1.msra.mxu0 0.0
    %10062 = vmatprep.subr.mxu0 0.0
    %10063 = vmatpush1.msra.mxu0 0.0
    %10064 = vmatprep.subr.mxu0 0.0
    %10065 = vmatpush1.msra.mxu0 0.0
    %10066 = vmatprep.mubr.f32.mxu0 0.0
    %10067 = vmatmul.mubr.f32.gmra.mrb[0].mxu0 %v2170
    %v10068 = vpop.f32.mrb[0].mxu0
    %v10069 = vadd.f32 0.0, %v10068
    %v10070 = vpop.f32.mrb[0].mxu0
    %v10071 = vadd.f32 0.0, %v10070
    %10072 = vmatprep.mubr.f32.mxu0 0.0
    %10073 = vmatmul.mubr.f32.gmra.mrb[0].mxu0 %v2173
    %v10074 = vpop.f32.mrb[0].mxu0
    %v10075 = vadd.f32 0.0, %v10074
    %v10076 = vpop.f32.mrb[0].mxu0
    %v10077 = vadd.f32 0.0, %v10076
    %10078 = vmatprep.mubr.f32.mxu0 0.0
    %10079 = vmatmul.mubr.f32.gmra.mrb[0].mxu0 %v2176
    %v10080 = vpop.f32.mrb[0].mxu0
    %v10081 = vadd.f32 0.0, %v10080
    %v10082 = vpop.f32.mrb[0].mxu0
    %v10083 = vadd.f32 0.0, %v10082
    %10084 = vmatprep.mubr.f32.mxu0 0.0
    %10085 = vmatmul.mubr.f32.gmra.mrb[0].mxu0 %v2179
    %v10086 = vpop.f32.mrb[0].mxu0
    %v10087 = vadd.f32 0.0, %v10086
    %v10088 = vpop.f32.mrb[0].mxu0
    %v10089 = vadd.f32 0.0, %v10088
    %10090 = vdwg.mxu0
    %v10091 = vadd.f32 %v9869, %v9980
    %v10092 = vadd.f32 %v9870, %v9982
    %v10093 = vadd.f32 %v9871, %v10069
    %v10094 = vadd.f32 %v9872, %v10071
    %v10095 = vadd.f32 %v9873, %v9986
    %v10096 = vadd.f32 %v9874, %v9988
    %v10097 = vadd.f32 %v9875, %v10075
    %v10098 = vadd.f32 %v9876, %v10077
    %v10099 = vadd.f32 %v9877, %v9992
    %v10100 = vadd.f32 %v9878, %v9994
    %v10101 = vadd.f32 %v9879, %v10081
    %v10102 = vadd.f32 %v9880, %v10083
    %v10103 = vadd.f32 %v9881, %v9998
    %v10104 = vadd.f32 %v9882, %v10000
    %v10105 = vadd.f32 %v9883, %v10087
    %v10106 = vadd.f32 %v9884, %v10089
    %v10107 = vxor.u32 %v10091, 2147483648
    %v10108 = vxor.u32 %v10092, 2147483648
    %v10109 = vxor.u32 %v10093, 2147483648
    %v10110 = vxor.u32 %v10094, 2147483648
    %v10111 = vxor.u32 %v10095, 2147483648
    %v10112 = vxor.u32 %v10096, 2147483648
    %v10113 = vxor.u32 %v10097, 2147483648
    %v10114 = vxor.u32 %v10098, 2147483648
    %v10115 = vxor.u32 %v10099, 2147483648
    %v10116 = vxor.u32 %v10100, 2147483648
    %v10117 = vxor.u32 %v10101, 2147483648
    %v10118 = vxor.u32 %v10102, 2147483648
    %v10119 = vxor.u32 %v10103, 2147483648
    %v10120 = vxor.u32 %v10104, 2147483648
    %v10121 = vxor.u32 %v10105, 2147483648
    %v10122 = vxor.u32 %v10106, 2147483648
    %v10123 = vmul.f32 %v10107, 1.442695
    %v10124 = vpow.pop %v10123
    %v10125 = vmul.f32 %v10108, 1.442695
    %v10126 = vpow.pop %v10125
    %v10127 = vmul.f32 %v10109, 1.442695
    %v10128 = vpow.pop %v10127
    %v10129 = vmul.f32 %v10110, 1.442695
    %v10130 = vpow.pop %v10129
    %v10131 = vmul.f32 %v10111, 1.442695
    %v10132 = vpow.pop %v10131
    %v10133 = vmul.f32 %v10112, 1.442695
    %v10134 = vpow.pop %v10133
    %v10135 = vmul.f32 %v10113, 1.442695
    %v10136 = vpow.pop %v10135
    %v10137 = vmul.f32 %v10114, 1.442695
    %v10138 = vpow.pop %v10137
    %v10139 = vmul.f32 %v10115, 1.442695
    %v10140 = vpow.pop %v10139
    %v10141 = vmul.f32 %v10116, 1.442695
    %v10142 = vpow.pop %v10141
    %v10143 = vmul.f32 %v10117, 1.442695
    %v10144 = vpow.pop %v10143
    %v10145 = vmul.f32 %v10118, 1.442695
    %v10146 = vpow.pop %v10145
    %v10147 = vmul.f32 %v10119, 1.442695
    %v10148 = vpow.pop %v10147
    %v10149 = vmul.f32 %v10120, 1.442695
    %v10150 = vpow.pop %v10149
    %v10151 = vmul.f32 %v10121, 1.442695
    %v10152 = vpow.pop %v10151
    %v10153 = vmul.f32 %v10122, 1.442695
    %v10154 = vpow.pop %v10153
    %v10155 = vadd.f32 %v10124, 1.0
    %v10156 = vadd.f32 %v10126, 1.0
    %v10157 = vadd.f32 %v10128, 1.0
    %v10158 = vadd.f32 %v10130, 1.0
    %v10159 = vadd.f32 %v10132, 1.0
    %v10160 = vadd.f32 %v10134, 1.0
    %v10161 = vadd.f32 %v10136, 1.0
    %v10162 = vadd.f32 %v10138, 1.0
    %v10163 = vadd.f32 %v10140, 1.0
    %v10164 = vadd.f32 %v10142, 1.0
    %v10165 = vadd.f32 %v10144, 1.0
    %v10166 = vadd.f32 %v10146, 1.0
    %v10167 = vadd.f32 %v10148, 1.0
    %v10168 = vadd.f32 %v10150, 1.0
    %v10169 = vadd.f32 %v10152, 1.0
    %v10170 = vadd.f32 %v10154, 1.0
    %v10171 = vrcp.pop %v10155
    %v10172 = vmul.f32 1.0, %v10171
    %v10173 = vrcp.pop %v10156
    %v10174 = vmul.f32 1.0, %v10173
    %v10175 = vrcp.pop %v10157
    %v10176 = vmul.f32 1.0, %v10175
    %v10177 = vrcp.pop %v10158
    %v10178 = vmul.f32 1.0, %v10177
    %v10179 = vrcp.pop %v10159
    %v10180 = vmul.f32 1.0, %v10179
    %v10181 = vrcp.pop %v10160
    %v10182 = vmul.f32 1.0, %v10181
    %v10183 = vrcp.pop %v10161
    %v10184 = vmul.f32 1.0, %v10183
    %v10185 = vrcp.pop %v10162
    %v10186 = vmul.f32 1.0, %v10185
    %v10187 = vrcp.pop %v10163
    %v10188 = vmul.f32 1.0, %v10187
    %v10189 = vrcp.pop %v10164
    %v10190 = vmul.f32 1.0, %v10189
    %v10191 = vrcp.pop %v10165
    %v10192 = vmul.f32 1.0, %v10191
    %v10193 = vrcp.pop %v10166
    %v10194 = vmul.f32 1.0, %v10193
    %v10195 = vrcp.pop %v10167
    %v10196 = vmul.f32 1.0, %v10195
    %v10197 = vrcp.pop %v10168
    %v10198 = vmul.f32 1.0, %v10197
    %v10199 = vrcp.pop %v10169
    %v10200 = vmul.f32 1.0, %v10199
    %v10201 = vrcp.pop %v10170
    %v10202 = vmul.f32 1.0, %v10201
    %v10203 = vmul.f32 %v10091, %v10172
    %v10204 = vmul.f32 %v10092, %v10174
    %v10205 = vmul.f32 %v10093, %v10176
    %v10206 = vmul.f32 %v10094, %v10178
    %v10207 = vmul.f32 %v10095, %v10180
    %v10208 = vmul.f32 %v10096, %v10182
    %v10209 = vmul.f32 %v10097, %v10184
    %v10210 = vmul.f32 %v10098, %v10186
    %v10211 = vmul.f32 %v10099, %v10188
    %v10212 = vmul.f32 %v10100, %v10190
    %v10213 = vmul.f32 %v10101, %v10192
    %v10214 = vmul.f32 %v10102, %v10194
    %v10215 = vmul.f32 %v10103, %v10196
    %v10216 = vmul.f32 %v10104, %v10198
    %v10217 = vmul.f32 %v10105, %v10200
    %v10218 = vmul.f32 %v10106, %v10202
    %10219 = vrot.lane.b32.xlu0 %v10203, 17
    %v10220 = vpop.permute.xlu0 %10219
    %10221 = vrot.lane.b32.xlu0 %v10207, 17
    %v10222 = vpop.permute.xlu0 %10221
    %10223 = vrot.lane.b32.xlu0 %v10211, 17
    %v10224 = vpop.permute.xlu0 %10223
    %10225 = vrot.lane.b32.xlu0 %v10215, 17
    %v10226 = vpop.permute.xlu0 %10225
    %10227 = vrot.lane.b32.xlu0 %v10204, 17
    %v10228 = vpop.permute.xlu0 %10227
    %10229 = vrot.lane.b32.xlu0 %v10208, 17
    %v10230 = vpop.permute.xlu0 %10229
    %10231 = vrot.lane.b32.xlu0 %v10212, 17
    %v10232 = vpop.permute.xlu0 %10231
    %10233 = vrot.lane.b32.xlu0 %v10216, 17
    %v10234 = vpop.permute.xlu0 %10233
    %10235 = vrot.lane.b32.xlu0 %v10205, 17
    %v10236 = vpop.permute.xlu0 %10235
    %10237 = vrot.lane.b32.xlu0 %v10209, 17
    %v10238 = vpop.permute.xlu0 %10237
    %10239 = vrot.lane.b32.xlu0 %v10213, 17
    %v10240 = vpop.permute.xlu0 %10239
    %10241 = vrot.lane.b32.xlu0 %v10217, 17
    %v10242 = vpop.permute.xlu0 %10241
    %10243 = vrot.lane.b32.xlu0 %v10206, 17
    %v10244 = vpop.permute.xlu0 %10243
    %10245 = vrot.lane.b32.xlu0 %v10210, 17
    %v10246 = vpop.permute.xlu0 %10245
    %10247 = vrot.lane.b32.xlu0 %v10214, 17
    %v10248 = vpop.permute.xlu0 %10247
    %10249 = vrot.lane.b32.xlu0 %v10218, 17
    %v10250 = vpop.permute.xlu0 %10249
    %v10251 = vsel %vm299, %v10236, %v10244
    %v10252 = vsel %vm299, %v10238, %v10246
    %v10253 = vsel %vm299, %v10240, %v10248
    %v10254 = vsel %vm299, %v10242, %v10250
    %v10255 = vsel %vm299, %v10228, %v10236
    %v10256 = vsel %vm299, %v10230, %v10238
    %v10257 = vsel %vm299, %v10232, %v10240
    %v10258 = vsel %vm299, %v10234, %v10242
    %v10259 = vsel %vm299, %v10220, %v10228
    %v10260 = vsel %vm299, %v10222, %v10230
    %v10261 = vsel %vm299, %v10224, %v10232
    %v10262 = vsel %vm299, %v10226, %v10234
    %v10263 = vsel %vm299, %v10244, %v10220
    %v10264 = vsel %vm299, %v10246, %v10222
    %v10265 = vsel %vm299, %v10248, %v10224
    %v10266 = vsel %vm299, %v10250, %v10226
    %10267 = vmatprep.subr.mxu0 %v10259
    %10268 = vmatpush1.msra.mxu0 %v10263
    %10269 = vmatprep.subr.mxu0 %v10260
    %10270 = vmatpush1.msra.mxu0 %v10264
    %10271 = vmatprep.subr.mxu0 %v10261
    %10272 = vmatpush1.msra.mxu0 %v10265
    %10273 = vmatprep.subr.mxu0 %v10262
    %10274 = vmatpush1.msra.mxu0 %v10266
    %10275 = vmatprep.subr.mxu0 0.0
    %10276 = vmatpush1.msra.mxu0 0.0
    %10277 = vmatprep.subr.mxu0 0.0
    %10278 = vmatpush1.msra.mxu0 0.0
    %10279 = vmatprep.subr.mxu0 0.0
    %10280 = vmatpush1.msra.mxu0 0.0
    %10281 = vmatprep.subr.mxu0 0.0
    %10282 = vmatpush1.msra.mxu0 0.0
    %10283 = vmatprep.subr.mxu0 0.0
    %10284 = vmatpush1.msra.mxu0 0.0
    %10285 = vmatprep.subr.mxu0 0.0
    %10286 = vmatpush1.msra.mxu0 0.0
    %10287 = vmatprep.subr.mxu0 0.0
    %10288 = vmatpush1.msra.mxu0 0.0
    %10289 = vmatprep.subr.mxu0 0.0
    %10290 = vmatpush1.msra.mxu0 0.0
    %10291 = vmatprep.subr.mxu0 0.0
    %10292 = vmatpush1.msra.mxu0 0.0
    %10293 = vmatprep.subr.mxu0 0.0
    %10294 = vmatpush1.msra.mxu0 0.0
    %10295 = vmatprep.subr.mxu0 0.0
    %10296 = vmatpush1.msra.mxu0 0.0
    %10297 = vmatprep.subr.mxu0 0.0
    %10298 = vmatpush1.msra.mxu0 0.0
    %10299 = vmatprep.subr.mxu0 0.0
    %10300 = vmatpush1.msra.mxu0 0.0
    %10301 = vmatprep.subr.mxu0 0.0
    %10302 = vmatpush1.msra.mxu0 0.0
    %10303 = vmatprep.subr.mxu0 0.0
    %10304 = vmatpush1.msra.mxu0 0.0
    %10305 = vmatprep.subr.mxu0 0.0
    %10306 = vmatpush1.msra.mxu0 0.0
    %10307 = vmatprep.subr.mxu0 0.0
    %10308 = vmatpush1.msra.mxu0 0.0
    %10309 = vmatprep.subr.mxu0 0.0
    %10310 = vmatpush1.msra.mxu0 0.0
    %10311 = vmatprep.subr.mxu0 0.0
    %10312 = vmatpush1.msra.mxu0 0.0
    %10313 = vmatprep.subr.mxu0 0.0
    %10314 = vmatpush1.msra.mxu0 0.0
    %10315 = vmatprep.subr.mxu0 0.0
    %10316 = vmatpush1.msra.mxu0 0.0
    %10317 = vmatprep.subr.mxu0 0.0
    %10318 = vmatpush1.msra.mxu0 0.0
    %10319 = vmatprep.subr.mxu0 0.0
    %10320 = vmatpush1.msra.mxu0 0.0
    %10321 = vmatprep.subr.mxu0 0.0
    %10322 = vmatpush1.msra.mxu0 0.0
    %10323 = vmatprep.subr.mxu0 0.0
    %10324 = vmatpush1.msra.mxu0 0.0
    %10325 = vmatprep.subr.mxu0 0.0
    %10326 = vmatpush1.msra.mxu0 0.0
    %10327 = vmatprep.subr.mxu0 0.0
    %10328 = vmatpush1.msra.mxu0 0.0
    %10329 = vmatprep.subr.mxu0 0.0
    %10330 = vmatpush1.msra.mxu0 0.0
    %10331 = vmatprep.mubr.f32.mxu0 0.0
    %10332 = vmatmul.mubr.f32.gmra.mrb[0].mxu0 %v2549
    %v10333 = vpop.f32.mrb[0].mxu0
    %v10334 = vadd.f32 0.0, %v10333
    %v10335 = vpop.f32.mrb[0].mxu0
    %v10336 = vadd.f32 0.0, %v10335
    %10337 = vdwg.mxu0
    %10338 = vmatprep.subr.mxu0 %v10251
    %10339 = vmatpush1.msra.mxu0 %v10255
    %10340 = vmatprep.subr.mxu0 %v10252
    %10341 = vmatpush1.msra.mxu0 %v10256
    %10342 = vmatprep.subr.mxu0 %v10253
    %10343 = vmatpush1.msra.mxu0 %v10257
    %10344 = vmatprep.subr.mxu0 %v10254
    %10345 = vmatpush1.msra.mxu0 %v10258
    %10346 = vmatprep.subr.mxu0 0.0
    %10347 = vmatpush1.msra.mxu0 0.0
    %10348 = vmatprep.subr.mxu0 0.0
    %10349 = vmatpush1.msra.mxu0 0.0
    %10350 = vmatprep.subr.mxu0 0.0
    %10351 = vmatpush1.msra.mxu0 0.0
    %10352 = vmatprep.subr.mxu0 0.0
    %10353 = vmatpush1.msra.mxu0 0.0
    %10354 = vmatprep.subr.mxu0 0.0
    %10355 = vmatpush1.msra.mxu0 0.0
    %10356 = vmatprep.subr.mxu0 0.0
    %10357 = vmatpush1.msra.mxu0 0.0
    %10358 = vmatprep.subr.mxu0 0.0
    %10359 = vmatpush1.msra.mxu0 0.0
    %10360 = vmatprep.subr.mxu0 0.0
    %10361 = vmatpush1.msra.mxu0 0.0
    %10362 = vmatprep.subr.mxu0 0.0
    %10363 = vmatpush1.msra.mxu0 0.0
    %10364 = vmatprep.subr.mxu0 0.0
    %10365 = vmatpush1.msra.mxu0 0.0
    %10366 = vmatprep.subr.mxu0 0.0
    %10367 = vmatpush1.msra.mxu0 0.0
    %10368 = vmatprep.subr.mxu0 0.0
    %10369 = vmatpush1.msra.mxu0 0.0
    %10370 = vmatprep.subr.mxu0 0.0
    %10371 = vmatpush1.msra.mxu0 0.0
    %10372 = vmatprep.subr.mxu0 0.0
    %10373 = vmatpush1.msra.mxu0 0.0
    %10374 = vmatprep.subr.mxu0 0.0
    %10375 = vmatpush1.msra.mxu0 0.0
    %10376 = vmatprep.subr.mxu0 0.0
    %10377 = vmatpush1.msra.mxu0 0.0
    %10378 = vmatprep.subr.mxu0 0.0
    %10379 = vmatpush1.msra.mxu0 0.0
    %10380 = vmatprep.subr.mxu0 0.0
    %10381 = vmatpush1.msra.mxu0 0.0
    %10382 = vmatprep.subr.mxu0 0.0
    %10383 = vmatpush1.msra.mxu0 0.0
    %10384 = vmatprep.subr.mxu0 0.0
    %10385 = vmatpush1.msra.mxu0 0.0
    %10386 = vmatprep.subr.mxu0 0.0
    %10387 = vmatpush1.msra.mxu0 0.0
    %10388 = vmatprep.subr.mxu0 0.0
    %10389 = vmatpush1.msra.mxu0 0.0
    %10390 = vmatprep.subr.mxu0 0.0
    %10391 = vmatpush1.msra.mxu0 0.0
    %10392 = vmatprep.subr.mxu0 0.0
    %10393 = vmatpush1.msra.mxu0 0.0
    %10394 = vmatprep.subr.mxu0 0.0
    %10395 = vmatpush1.msra.mxu0 0.0
    %10396 = vmatprep.subr.mxu0 0.0
    %10397 = vmatpush1.msra.mxu0 0.0
    %10398 = vmatprep.subr.mxu0 0.0
    %10399 = vmatpush1.msra.mxu0 0.0
    %10400 = vmatprep.subr.mxu0 0.0
    %10401 = vmatpush1.msra.mxu0 0.0
    %10402 = vmatprep.mubr.f32.mxu0 0.0
    %10403 = vmatmul.mubr.f32.gmra.mrb[0].mxu0 %v2549
    %v10404 = vpop.f32.mrb[0].mxu0
    %v10405 = vadd.f32 0.0, %v10404
    %v10406 = vpop.f32.mrb[0].mxu0
    %v10407 = vadd.f32 0.0, %v10406
    %10408 = vdwg.mxu0
    %v10409 = vmul.f32 %v10334, %v156
    %v10410 = vmul.f32 %v10336, %v160
    %v10411 = vmul.f32 %v10405, %v164
    %v10412 = vmul.f32 %v10407, %v168
    %v10413 = vadd.f32 %v143, %v10409
    %v10414 = vadd.f32 %v143, %v10410
    %v10415 = vadd.f32 %v143, %v10411
    %v10416 = vadd.f32 %v143, %v10412
    %10417 = vrot.lane.b32.xlu0 %v10203, 16
    %v10418 = vpop.permute.xlu0 %10417
    %10419 = vrot.lane.b32.xlu0 %v10207, 16
    %v10420 = vpop.permute.xlu0 %10419
    %10421 = vrot.lane.b32.xlu0 %v10211, 16
    %v10422 = vpop.permute.xlu0 %10421
    %10423 = vrot.lane.b32.xlu0 %v10215, 16
    %v10424 = vpop.permute.xlu0 %10423
    %10425 = vrot.lane.b32.xlu0 %v10204, 16
    %v10426 = vpop.permute.xlu0 %10425
    %10427 = vrot.lane.b32.xlu0 %v10208, 16
    %v10428 = vpop.permute.xlu0 %10427
    %10429 = vrot.lane.b32.xlu0 %v10212, 16
    %v10430 = vpop.permute.xlu0 %10429
    %10431 = vrot.lane.b32.xlu0 %v10216, 16
    %v10432 = vpop.permute.xlu0 %10431
    %10433 = vrot.lane.b32.xlu0 %v10205, 16
    %v10434 = vpop.permute.xlu0 %10433
    %10435 = vrot.lane.b32.xlu0 %v10209, 16
    %v10436 = vpop.permute.xlu0 %10435
    %10437 = vrot.lane.b32.xlu0 %v10213, 16
    %v10438 = vpop.permute.xlu0 %10437
    %10439 = vrot.lane.b32.xlu0 %v10217, 16
    %v10440 = vpop.permute.xlu0 %10439
    %10441 = vrot.lane.b32.xlu0 %v10206, 16
    %v10442 = vpop.permute.xlu0 %10441
    %10443 = vrot.lane.b32.xlu0 %v10210, 16
    %v10444 = vpop.permute.xlu0 %10443
    %10445 = vrot.lane.b32.xlu0 %v10214, 16
    %v10446 = vpop.permute.xlu0 %10445
    %10447 = vrot.lane.b32.xlu0 %v10218, 16
    %v10448 = vpop.permute.xlu0 %10447
    %v10449 = vsel %vm536, %v10434, %v10442
    %v10450 = vsel %vm536, %v10436, %v10444
    %v10451 = vsel %vm536, %v10438, %v10446
    %v10452 = vsel %vm536, %v10440, %v10448
    %v10453 = vsel %vm536, %v10426, %v10434
    %v10454 = vsel %vm536, %v10428, %v10436
    %v10455 = vsel %vm536, %v10430, %v10438
    %v10456 = vsel %vm536, %v10432, %v10440
    %v10457 = vsel %vm536, %v10418, %v10426
    %v10458 = vsel %vm536, %v10420, %v10428
    %v10459 = vsel %vm536, %v10422, %v10430
    %v10460 = vsel %vm536, %v10424, %v10432
    %v10461 = vsel %vm536, %v10442, %v10418
    %v10462 = vsel %vm536, %v10444, %v10420
    %v10463 = vsel %vm536, %v10446, %v10422
    %v10464 = vsel %vm536, %v10448, %v10424
    %10465 = vmatprep.subr.mxu0 %v10457
    %10466 = vmatpush1.msra.mxu0 %v10461
    %10467 = vmatprep.subr.mxu0 %v10458
    %10468 = vmatpush1.msra.mxu0 %v10462
    %10469 = vmatprep.subr.mxu0 %v10459
    %10470 = vmatpush1.msra.mxu0 %v10463
    %10471 = vmatprep.subr.mxu0 %v10460
    %10472 = vmatpush1.msra.mxu0 %v10464
    %10473 = vmatprep.subr.mxu0 0.0
    %10474 = vmatpush1.msra.mxu0 0.0
    %10475 = vmatprep.subr.mxu0 0.0
    %10476 = vmatpush1.msra.mxu0 0.0
    %10477 = vmatprep.subr.mxu0 0.0
    %10478 = vmatpush1.msra.mxu0 0.0
    %10479 = vmatprep.subr.mxu0 0.0
    %10480 = vmatpush1.msra.mxu0 0.0
    %10481 = vmatprep.subr.mxu0 0.0
    %10482 = vmatpush1.msra.mxu0 0.0
    %10483 = vmatprep.subr.mxu0 0.0
    %10484 = vmatpush1.msra.mxu0 0.0
    %10485 = vmatprep.subr.mxu0 0.0
    %10486 = vmatpush1.msra.mxu0 0.0
    %10487 = vmatprep.subr.mxu0 0.0
    %10488 = vmatpush1.msra.mxu0 0.0
    %10489 = vmatprep.subr.mxu0 0.0
    %10490 = vmatpush1.msra.mxu0 0.0
    %10491 = vmatprep.subr.mxu0 0.0
    %10492 = vmatpush1.msra.mxu0 0.0
    %10493 = vmatprep.subr.mxu0 0.0
    %10494 = vmatpush1.msra.mxu0 0.0
    %10495 = vmatprep.subr.mxu0 0.0
    %10496 = vmatpush1.msra.mxu0 0.0
    %10497 = vmatprep.subr.mxu0 0.0
    %10498 = vmatpush1.msra.mxu0 0.0
    %10499 = vmatprep.subr.mxu0 0.0
    %10500 = vmatpush1.msra.mxu0 0.0
    %10501 = vmatprep.subr.mxu0 0.0
    %10502 = vmatpush1.msra.mxu0 0.0
    %10503 = vmatprep.subr.mxu0 0.0
    %10504 = vmatpush1.msra.mxu0 0.0
    %10505 = vmatprep.subr.mxu0 0.0
    %10506 = vmatpush1.msra.mxu0 0.0
    %10507 = vmatprep.subr.mxu0 0.0
    %10508 = vmatpush1.msra.mxu0 0.0
    %10509 = vmatprep.subr.mxu0 0.0
    %10510 = vmatpush1.msra.mxu0 0.0
    %10511 = vmatprep.subr.mxu0 0.0
    %10512 = vmatpush1.msra.mxu0 0.0
    %10513 = vmatprep.subr.mxu0 0.0
    %10514 = vmatpush1.msra.mxu0 0.0
    %10515 = vmatprep.subr.mxu0 0.0
    %10516 = vmatpush1.msra.mxu0 0.0
    %10517 = vmatprep.subr.mxu0 0.0
    %10518 = vmatpush1.msra.mxu0 0.0
    %10519 = vmatprep.subr.mxu0 0.0
    %10520 = vmatpush1.msra.mxu0 0.0
    %10521 = vmatprep.subr.mxu0 0.0
    %10522 = vmatpush1.msra.mxu0 0.0
    %10523 = vmatprep.subr.mxu0 0.0
    %10524 = vmatpush1.msra.mxu0 0.0
    %10525 = vmatprep.subr.mxu0 0.0
    %10526 = vmatpush1.msra.mxu0 0.0
    %10527 = vmatprep.subr.mxu0 0.0
    %10528 = vmatpush1.msra.mxu0 0.0
    %10529 = vmatprep.mubr.f32.mxu0 0.0
    %10530 = vmatmul.mubr.f32.gmra.mrb[0].mxu0 %v2750
    %v10531 = vpop.f32.mrb[0].mxu0
    %v10532 = vadd.f32 0.0, %v10531
    %v10533 = vpop.f32.mrb[0].mxu0
    %v10534 = vadd.f32 0.0, %v10533
    %10535 = vdwg.mxu0
    %10536 = vmatprep.subr.mxu0 %v10449
    %10537 = vmatpush1.msra.mxu0 %v10453
    %10538 = vmatprep.subr.mxu0 %v10450
    %10539 = vmatpush1.msra.mxu0 %v10454
    %10540 = vmatprep.subr.mxu0 %v10451
    %10541 = vmatpush1.msra.mxu0 %v10455
    %10542 = vmatprep.subr.mxu0 %v10452
    %10543 = vmatpush1.msra.mxu0 %v10456
    %10544 = vmatprep.subr.mxu0 0.0
    %10545 = vmatpush1.msra.mxu0 0.0
    %10546 = vmatprep.subr.mxu0 0.0
    %10547 = vmatpush1.msra.mxu0 0.0
    %10548 = vmatprep.subr.mxu0 0.0
    %10549 = vmatpush1.msra.mxu0 0.0
    %10550 = vmatprep.subr.mxu0 0.0
    %10551 = vmatpush1.msra.mxu0 0.0
    %10552 = vmatprep.subr.mxu0 0.0
    %10553 = vmatpush1.msra.mxu0 0.0
    %10554 = vmatprep.subr.mxu0 0.0
    %10555 = vmatpush1.msra.mxu0 0.0
    %10556 = vmatprep.subr.mxu0 0.0
    %10557 = vmatpush1.msra.mxu0 0.0
    %10558 = vmatprep.subr.mxu0 0.0
    %10559 = vmatpush1.msra.mxu0 0.0
    %10560 = vmatprep.subr.mxu0 0.0
    %10561 = vmatpush1.msra.mxu0 0.0
    %10562 = vmatprep.subr.mxu0 0.0
    %10563 = vmatpush1.msra.mxu0 0.0
    %10564 = vmatprep.subr.mxu0 0.0
    %10565 = vmatpush1.msra.mxu0 0.0
    %10566 = vmatprep.subr.mxu0 0.0
    %10567 = vmatpush1.msra.mxu0 0.0
    %10568 = vmatprep.subr.mxu0 0.0
    %10569 = vmatpush1.msra.mxu0 0.0
    %10570 = vmatprep.subr.mxu0 0.0
    %10571 = vmatpush1.msra.mxu0 0.0
    %10572 = vmatprep.subr.mxu0 0.0
    %10573 = vmatpush1.msra.mxu0 0.0
    %10574 = vmatprep.subr.mxu0 0.0
    %10575 = vmatpush1.msra.mxu0 0.0
    %10576 = vmatprep.subr.mxu0 0.0
    %10577 = vmatpush1.msra.mxu0 0.0
    %10578 = vmatprep.subr.mxu0 0.0
    %10579 = vmatpush1.msra.mxu0 0.0
    %10580 = vmatprep.subr.mxu0 0.0
    %10581 = vmatpush1.msra.mxu0 0.0
    %10582 = vmatprep.subr.mxu0 0.0
    %10583 = vmatpush1.msra.mxu0 0.0
    %10584 = vmatprep.subr.mxu0 0.0
    %10585 = vmatpush1.msra.mxu0 0.0
    %10586 = vmatprep.subr.mxu0 0.0
    %10587 = vmatpush1.msra.mxu0 0.0
    %10588 = vmatprep.subr.mxu0 0.0
    %10589 = vmatpush1.msra.mxu0 0.0
    %10590 = vmatprep.subr.mxu0 0.0
    %10591 = vmatpush1.msra.mxu0 0.0
    %10592 = vmatprep.subr.mxu0 0.0
    %10593 = vmatpush1.msra.mxu0 0.0
    %10594 = vmatprep.subr.mxu0 0.0
    %10595 = vmatpush1.msra.mxu0 0.0
    %10596 = vmatprep.subr.mxu0 0.0
    %10597 = vmatpush1.msra.mxu0 0.0
    %10598 = vmatprep.subr.mxu0 0.0
    %10599 = vmatpush1.msra.mxu0 0.0
    %10600 = vmatprep.mubr.f32.mxu0 0.0
    %10601 = vmatmul.mubr.f32.gmra.mrb[0].mxu0 %v2750
    %v10602 = vpop.f32.mrb[0].mxu0
    %v10603 = vadd.f32 0.0, %v10602
    %v10604 = vpop.f32.mrb[0].mxu0
    %v10605 = vadd.f32 0.0, %v10604
    %10606 = vdwg.mxu0
    %v10607 = vmul.f32 %v10532, %v172
    %v10608 = vmul.f32 %v10534, %v176
    %v10609 = vmul.f32 %v10603, %v180
    %v10610 = vmul.f32 %v10605, %v184
    %v10611 = vadd.f32 %v10413, %v10607
    %v10612 = vadd.f32 %v10414, %v10608
    %v10613 = vadd.f32 %v10415, %v10609
    %v10614 = vadd.f32 %v10416, %v10610
    %10615 = vrot.lane.b32.xlu0 %v10203, 15
    %v10616 = vpop.permute.xlu0 %10615
    %10617 = vrot.lane.b32.xlu0 %v10207, 15
    %v10618 = vpop.permute.xlu0 %10617
    %10619 = vrot.lane.b32.xlu0 %v10211, 15
    %v10620 = vpop.permute.xlu0 %10619
    %10621 = vrot.lane.b32.xlu0 %v10215, 15
    %v10622 = vpop.permute.xlu0 %10621
    %10623 = vrot.lane.b32.xlu0 %v10204, 15
    %v10624 = vpop.permute.xlu0 %10623
    %10625 = vrot.lane.b32.xlu0 %v10208, 15
    %v10626 = vpop.permute.xlu0 %10625
    %10627 = vrot.lane.b32.xlu0 %v10212, 15
    %v10628 = vpop.permute.xlu0 %10627
    %10629 = vrot.lane.b32.xlu0 %v10216, 15
    %v10630 = vpop.permute.xlu0 %10629
    %10631 = vrot.lane.b32.xlu0 %v10205, 15
    %v10632 = vpop.permute.xlu0 %10631
    %10633 = vrot.lane.b32.xlu0 %v10209, 15
    %v10634 = vpop.permute.xlu0 %10633
    %10635 = vrot.lane.b32.xlu0 %v10213, 15
    %v10636 = vpop.permute.xlu0 %10635
    %10637 = vrot.lane.b32.xlu0 %v10217, 15
    %v10638 = vpop.permute.xlu0 %10637
    %10639 = vrot.lane.b32.xlu0 %v10206, 15
    %v10640 = vpop.permute.xlu0 %10639
    %10641 = vrot.lane.b32.xlu0 %v10210, 15
    %v10642 = vpop.permute.xlu0 %10641
    %10643 = vrot.lane.b32.xlu0 %v10214, 15
    %v10644 = vpop.permute.xlu0 %10643
    %10645 = vrot.lane.b32.xlu0 %v10218, 15
    %v10646 = vpop.permute.xlu0 %10645
    %v10647 = vsel %vm771, %v10632, %v10640
    %v10648 = vsel %vm771, %v10634, %v10642
    %v10649 = vsel %vm771, %v10636, %v10644
    %v10650 = vsel %vm771, %v10638, %v10646
    %v10651 = vsel %vm771, %v10624, %v10632
    %v10652 = vsel %vm771, %v10626, %v10634
    %v10653 = vsel %vm771, %v10628, %v10636
    %v10654 = vsel %vm771, %v10630, %v10638
    %v10655 = vsel %vm771, %v10616, %v10624
    %v10656 = vsel %vm771, %v10618, %v10626
    %v10657 = vsel %vm771, %v10620, %v10628
    %v10658 = vsel %vm771, %v10622, %v10630
    %v10659 = vsel %vm771, %v10640, %v10616
    %v10660 = vsel %vm771, %v10642, %v10618
    %v10661 = vsel %vm771, %v10644, %v10620
    %v10662 = vsel %vm771, %v10646, %v10622
    %10663 = vmatprep.subr.mxu0 %v10655
    %10664 = vmatpush1.msra.mxu0 %v10659
    %10665 = vmatprep.subr.mxu0 %v10656
    %10666 = vmatpush1.msra.mxu0 %v10660
    %10667 = vmatprep.subr.mxu0 %v10657
    %10668 = vmatpush1.msra.mxu0 %v10661
    %10669 = vmatprep.subr.mxu0 %v10658
    %10670 = vmatpush1.msra.mxu0 %v10662
    %10671 = vmatprep.subr.mxu0 0.0
    %10672 = vmatpush1.msra.mxu0 0.0
    %10673 = vmatprep.subr.mxu0 0.0
    %10674 = vmatpush1.msra.mxu0 0.0
    %10675 = vmatprep.subr.mxu0 0.0
    %10676 = vmatpush1.msra.mxu0 0.0
    %10677 = vmatprep.subr.mxu0 0.0
    %10678 = vmatpush1.msra.mxu0 0.0
    %10679 = vmatprep.subr.mxu0 0.0
    %10680 = vmatpush1.msra.mxu0 0.0
    %10681 = vmatprep.subr.mxu0 0.0
    %10682 = vmatpush1.msra.mxu0 0.0
    %10683 = vmatprep.subr.mxu0 0.0
    %10684 = vmatpush1.msra.mxu0 0.0
    %10685 = vmatprep.subr.mxu0 0.0
    %10686 = vmatpush1.msra.mxu0 0.0
    %10687 = vmatprep.subr.mxu0 0.0
    %10688 = vmatpush1.msra.mxu0 0.0
    %10689 = vmatprep.subr.mxu0 0.0
    %10690 = vmatpush1.msra.mxu0 0.0
    %10691 = vmatprep.subr.mxu0 0.0
    %10692 = vmatpush1.msra.mxu0 0.0
    %10693 = vmatprep.subr.mxu0 0.0
    %10694 = vmatpush1.msra.mxu0 0.0
    %10695 = vmatprep.subr.mxu0 0.0
    %10696 = vmatpush1.msra.mxu0 0.0
    %10697 = vmatprep.subr.mxu0 0.0
    %10698 = vmatpush1.msra.mxu0 0.0
    %10699 = vmatprep.subr.mxu0 0.0
    %10700 = vmatpush1.msra.mxu0 0.0
    %10701 = vmatprep.subr.mxu0 0.0
    %10702 = vmatpush1.msra.mxu0 0.0
    %10703 = vmatprep.subr.mxu0 0.0
    %10704 = vmatpush1.msra.mxu0 0.0
    %10705 = vmatprep.subr.mxu0 0.0
    %10706 = vmatpush1.msra.mxu0 0.0
    %10707 = vmatprep.subr.mxu0 0.0
    %10708 = vmatpush1.msra.mxu0 0.0
    %10709 = vmatprep.subr.mxu0 0.0
    %10710 = vmatpush1.msra.mxu0 0.0
    %10711 = vmatprep.subr.mxu0 0.0
    %10712 = vmatpush1.msra.mxu0 0.0
    %10713 = vmatprep.subr.mxu0 0.0
    %10714 = vmatpush1.msra.mxu0 0.0
    %10715 = vmatprep.subr.mxu0 0.0
    %10716 = vmatpush1.msra.mxu0 0.0
    %10717 = vmatprep.subr.mxu0 0.0
    %10718 = vmatpush1.msra.mxu0 0.0
    %10719 = vmatprep.subr.mxu0 0.0
    %10720 = vmatpush1.msra.mxu0 0.0
    %10721 = vmatprep.subr.mxu0 0.0
    %10722 = vmatpush1.msra.mxu0 0.0
    %10723 = vmatprep.subr.mxu0 0.0
    %10724 = vmatpush1.msra.mxu0 0.0
    %10725 = vmatprep.subr.mxu0 0.0
    %10726 = vmatpush1.msra.mxu0 0.0
    %10727 = vmatprep.mubr.f32.mxu0 0.0
    %10728 = vmatmul.mubr.f32.gmra.mrb[0].mxu0 %v2951
    %v10729 = vpop.f32.mrb[0].mxu0
    %v10730 = vadd.f32 0.0, %v10729
    %v10731 = vpop.f32.mrb[0].mxu0
    %v10732 = vadd.f32 0.0, %v10731
    %10733 = vdwg.mxu0
    %10734 = vmatprep.subr.mxu0 %v10647
    %10735 = vmatpush1.msra.mxu0 %v10651
    %10736 = vmatprep.subr.mxu0 %v10648
    %10737 = vmatpush1.msra.mxu0 %v10652
    %10738 = vmatprep.subr.mxu0 %v10649
    %10739 = vmatpush1.msra.mxu0 %v10653
    %10740 = vmatprep.subr.mxu0 %v10650
    %10741 = vmatpush1.msra.mxu0 %v10654
    %10742 = vmatprep.subr.mxu0 0.0
    %10743 = vmatpush1.msra.mxu0 0.0
    %10744 = vmatprep.subr.mxu0 0.0
    %10745 = vmatpush1.msra.mxu0 0.0
    %10746 = vmatprep.subr.mxu0 0.0
    %10747 = vmatpush1.msra.mxu0 0.0
    %10748 = vmatprep.subr.mxu0 0.0
    %10749 = vmatpush1.msra.mxu0 0.0
    %10750 = vmatprep.subr.mxu0 0.0
    %10751 = vmatpush1.msra.mxu0 0.0
    %10752 = vmatprep.subr.mxu0 0.0
    %10753 = vmatpush1.msra.mxu0 0.0
    %10754 = vmatprep.subr.mxu0 0.0
    %10755 = vmatpush1.msra.mxu0 0.0
    %10756 = vmatprep.subr.mxu0 0.0
    %10757 = vmatpush1.msra.mxu0 0.0
    %10758 = vmatprep.subr.mxu0 0.0
    %10759 = vmatpush1.msra.mxu0 0.0
    %10760 = vmatprep.subr.mxu0 0.0
    %10761 = vmatpush1.msra.mxu0 0.0
    %10762 = vmatprep.subr.mxu0 0.0
    %10763 = vmatpush1.msra.mxu0 0.0
    %10764 = vmatprep.subr.mxu0 0.0
    %10765 = vmatpush1.msra.mxu0 0.0
    %10766 = vmatprep.subr.mxu0 0.0
    %10767 = vmatpush1.msra.mxu0 0.0
    %10768 = vmatprep.subr.mxu0 0.0
    %10769 = vmatpush1.msra.mxu0 0.0
    %10770 = vmatprep.subr.mxu0 0.0
    %10771 = vmatpush1.msra.mxu0 0.0
    %10772 = vmatprep.subr.mxu0 0.0
    %10773 = vmatpush1.msra.mxu0 0.0
    %10774 = vmatprep.subr.mxu0 0.0
    %10775 = vmatpush1.msra.mxu0 0.0
    %10776 = vmatprep.subr.mxu0 0.0
    %10777 = vmatpush1.msra.mxu0 0.0
    %10778 = vmatprep.subr.mxu0 0.0
    %10779 = vmatpush1.msra.mxu0 0.0
    %10780 = vmatprep.subr.mxu0 0.0
    %10781 = vmatpush1.msra.mxu0 0.0
    %10782 = vmatprep.subr.mxu0 0.0
    %10783 = vmatpush1.msra.mxu0 0.0
    %10784 = vmatprep.subr.mxu0 0.0
    %10785 = vmatpush1.msra.mxu0 0.0
    %10786 = vmatprep.subr.mxu0 0.0
    %10787 = vmatpush1.msra.mxu0 0.0
    %10788 = vmatprep.subr.mxu0 0.0
    %10789 = vmatpush1.msra.mxu0 0.0
    %10790 = vmatprep.subr.mxu0 0.0
    %10791 = vmatpush1.msra.mxu0 0.0
    %10792 = vmatprep.subr.mxu0 0.0
    %10793 = vmatpush1.msra.mxu0 0.0
    %10794 = vmatprep.subr.mxu0 0.0
    %10795 = vmatpush1.msra.mxu0 0.0
    %10796 = vmatprep.subr.mxu0 0.0
    %10797 = vmatpush1.msra.mxu0 0.0
    %10798 = vmatprep.mubr.f32.mxu0 0.0
    %10799 = vmatmul.mubr.f32.gmra.mrb[0].mxu0 %v2951
    %v10800 = vpop.f32.mrb[0].mxu0
    %v10801 = vadd.f32 0.0, %v10800
    %v10802 = vpop.f32.mrb[0].mxu0
    %v10803 = vadd.f32 0.0, %v10802
    %10804 = vdwg.mxu0
    %v10805 = vmul.f32 %v10730, %v188
    %v10806 = vmul.f32 %v10732, %v192
    %v10807 = vmul.f32 %v10801, %v196
    %v10808 = vmul.f32 %v10803, %v200
    %v10809 = vadd.f32 %v10611, %v10805
    %v10810 = vadd.f32 %v10612, %v10806
    %v10811 = vadd.f32 %v10613, %v10807
    %v10812 = vadd.f32 %v10614, %v10808
    %10813 = vrot.lane.b32.xlu0 %v10203, 1
    %v10814 = vpop.permute.xlu0 %10813
    %10815 = vrot.lane.b32.xlu0 %v10207, 1
    %v10816 = vpop.permute.xlu0 %10815
    %10817 = vrot.lane.b32.xlu0 %v10211, 1
    %v10818 = vpop.permute.xlu0 %10817
    %10819 = vrot.lane.b32.xlu0 %v10215, 1
    %v10820 = vpop.permute.xlu0 %10819
    %10821 = vrot.lane.b32.xlu0 %v10204, 1
    %v10822 = vpop.permute.xlu0 %10821
    %10823 = vrot.lane.b32.xlu0 %v10208, 1
    %v10824 = vpop.permute.xlu0 %10823
    %10825 = vrot.lane.b32.xlu0 %v10212, 1
    %v10826 = vpop.permute.xlu0 %10825
    %10827 = vrot.lane.b32.xlu0 %v10216, 1
    %v10828 = vpop.permute.xlu0 %10827
    %10829 = vrot.lane.b32.xlu0 %v10205, 1
    %v10830 = vpop.permute.xlu0 %10829
    %10831 = vrot.lane.b32.xlu0 %v10209, 1
    %v10832 = vpop.permute.xlu0 %10831
    %10833 = vrot.lane.b32.xlu0 %v10213, 1
    %v10834 = vpop.permute.xlu0 %10833
    %10835 = vrot.lane.b32.xlu0 %v10217, 1
    %v10836 = vpop.permute.xlu0 %10835
    %10837 = vrot.lane.b32.xlu0 %v10206, 1
    %v10838 = vpop.permute.xlu0 %10837
    %10839 = vrot.lane.b32.xlu0 %v10210, 1
    %v10840 = vpop.permute.xlu0 %10839
    %10841 = vrot.lane.b32.xlu0 %v10214, 1
    %v10842 = vpop.permute.xlu0 %10841
    %10843 = vrot.lane.b32.xlu0 %v10218, 1
    %v10844 = vpop.permute.xlu0 %10843
    %v10845 = vsel %vm1006, %v10830, %v10838
    %v10846 = vsel %vm1006, %v10832, %v10840
    %v10847 = vsel %vm1006, %v10834, %v10842
    %v10848 = vsel %vm1006, %v10836, %v10844
    %v10849 = vsel %vm1006, %v10822, %v10830
    %v10850 = vsel %vm1006, %v10824, %v10832
    %v10851 = vsel %vm1006, %v10826, %v10834
    %v10852 = vsel %vm1006, %v10828, %v10836
    %v10853 = vsel %vm1006, %v10814, %v10822
    %v10854 = vsel %vm1006, %v10816, %v10824
    %v10855 = vsel %vm1006, %v10818, %v10826
    %v10856 = vsel %vm1006, %v10820, %v10828
    %v10857 = vsel %vm1006, %v10838, %v10814
    %v10858 = vsel %vm1006, %v10840, %v10816
    %v10859 = vsel %vm1006, %v10842, %v10818
    %v10860 = vsel %vm1006, %v10844, %v10820
    %10861 = vmatprep.subr.mxu0 %v10853
    %10862 = vmatpush1.msra.mxu0 %v10857
    %10863 = vmatprep.subr.mxu0 %v10854
    %10864 = vmatpush1.msra.mxu0 %v10858
    %10865 = vmatprep.subr.mxu0 %v10855
    %10866 = vmatpush1.msra.mxu0 %v10859
    %10867 = vmatprep.subr.mxu0 %v10856
    %10868 = vmatpush1.msra.mxu0 %v10860
    %10869 = vmatprep.subr.mxu0 0.0
    %10870 = vmatpush1.msra.mxu0 0.0
    %10871 = vmatprep.subr.mxu0 0.0
    %10872 = vmatpush1.msra.mxu0 0.0
    %10873 = vmatprep.subr.mxu0 0.0
    %10874 = vmatpush1.msra.mxu0 0.0
    %10875 = vmatprep.subr.mxu0 0.0
    %10876 = vmatpush1.msra.mxu0 0.0
    %10877 = vmatprep.subr.mxu0 0.0
    %10878 = vmatpush1.msra.mxu0 0.0
    %10879 = vmatprep.subr.mxu0 0.0
    %10880 = vmatpush1.msra.mxu0 0.0
    %10881 = vmatprep.subr.mxu0 0.0
    %10882 = vmatpush1.msra.mxu0 0.0
    %10883 = vmatprep.subr.mxu0 0.0
    %10884 = vmatpush1.msra.mxu0 0.0
    %10885 = vmatprep.subr.mxu0 0.0
    %10886 = vmatpush1.msra.mxu0 0.0
    %10887 = vmatprep.subr.mxu0 0.0
    %10888 = vmatpush1.msra.mxu0 0.0
    %10889 = vmatprep.subr.mxu0 0.0
    %10890 = vmatpush1.msra.mxu0 0.0
    %10891 = vmatprep.subr.mxu0 0.0
    %10892 = vmatpush1.msra.mxu0 0.0
    %10893 = vmatprep.subr.mxu0 0.0
    %10894 = vmatpush1.msra.mxu0 0.0
    %10895 = vmatprep.subr.mxu0 0.0
    %10896 = vmatpush1.msra.mxu0 0.0
    %10897 = vmatprep.subr.mxu0 0.0
    %10898 = vmatpush1.msra.mxu0 0.0
    %10899 = vmatprep.subr.mxu0 0.0
    %10900 = vmatpush1.msra.mxu0 0.0
    %10901 = vmatprep.subr.mxu0 0.0
    %10902 = vmatpush1.msra.mxu0 0.0
    %10903 = vmatprep.subr.mxu0 0.0
    %10904 = vmatpush1.msra.mxu0 0.0
    %10905 = vmatprep.subr.mxu0 0.0
    %10906 = vmatpush1.msra.mxu0 0.0
    %10907 = vmatprep.subr.mxu0 0.0
    %10908 = vmatpush1.msra.mxu0 0.0
    %10909 = vmatprep.subr.mxu0 0.0
    %10910 = vmatpush1.msra.mxu0 0.0
    %10911 = vmatprep.subr.mxu0 0.0
    %10912 = vmatpush1.msra.mxu0 0.0
    %10913 = vmatprep.subr.mxu0 0.0
    %10914 = vmatpush1.msra.mxu0 0.0
    %10915 = vmatprep.subr.mxu0 0.0
    %10916 = vmatpush1.msra.mxu0 0.0
    %10917 = vmatprep.subr.mxu0 0.0
    %10918 = vmatpush1.msra.mxu0 0.0
    %10919 = vmatprep.subr.mxu0 0.0
    %10920 = vmatpush1.msra.mxu0 0.0
    %10921 = vmatprep.subr.mxu0 0.0
    %10922 = vmatpush1.msra.mxu0 0.0
    %10923 = vmatprep.subr.mxu0 0.0
    %10924 = vmatpush1.msra.mxu0 0.0
    %10925 = vmatprep.mubr.f32.mxu0 0.0
    %10926 = vmatmul.mubr.f32.gmra.mrb[0].mxu0 %v3152
    %v10927 = vpop.f32.mrb[0].mxu0
    %v10928 = vadd.f32 0.0, %v10927
    %v10929 = vpop.f32.mrb[0].mxu0
    %v10930 = vadd.f32 0.0, %v10929
    %10931 = vdwg.mxu0
    %10932 = vmatprep.subr.mxu0 %v10845
    %10933 = vmatpush1.msra.mxu0 %v10849
    %10934 = vmatprep.subr.mxu0 %v10846
    %10935 = vmatpush1.msra.mxu0 %v10850
    %10936 = vmatprep.subr.mxu0 %v10847
    %10937 = vmatpush1.msra.mxu0 %v10851
    %10938 = vmatprep.subr.mxu0 %v10848
    %10939 = vmatpush1.msra.mxu0 %v10852
    %10940 = vmatprep.subr.mxu0 0.0
    %10941 = vmatpush1.msra.mxu0 0.0
    %10942 = vmatprep.subr.mxu0 0.0
    %10943 = vmatpush1.msra.mxu0 0.0
    %10944 = vmatprep.subr.mxu0 0.0
    %10945 = vmatpush1.msra.mxu0 0.0
    %10946 = vmatprep.subr.mxu0 0.0
    %10947 = vmatpush1.msra.mxu0 0.0
    %10948 = vmatprep.subr.mxu0 0.0
    %10949 = vmatpush1.msra.mxu0 0.0
    %10950 = vmatprep.subr.mxu0 0.0
    %10951 = vmatpush1.msra.mxu0 0.0
    %10952 = vmatprep.subr.mxu0 0.0
    %10953 = vmatpush1.msra.mxu0 0.0
    %10954 = vmatprep.subr.mxu0 0.0
    %10955 = vmatpush1.msra.mxu0 0.0
    %10956 = vmatprep.subr.mxu0 0.0
    %10957 = vmatpush1.msra.mxu0 0.0
    %10958 = vmatprep.subr.mxu0 0.0
    %10959 = vmatpush1.msra.mxu0 0.0
    %10960 = vmatprep.subr.mxu0 0.0
    %10961 = vmatpush1.msra.mxu0 0.0
    %10962 = vmatprep.subr.mxu0 0.0
    %10963 = vmatpush1.msra.mxu0 0.0
    %10964 = vmatprep.subr.mxu0 0.0
    %10965 = vmatpush1.msra.mxu0 0.0
    %10966 = vmatprep.subr.mxu0 0.0
    %10967 = vmatpush1.msra.mxu0 0.0
    %10968 = vmatprep.subr.mxu0 0.0
    %10969 = vmatpush1.msra.mxu0 0.0
    %10970 = vmatprep.subr.mxu0 0.0
    %10971 = vmatpush1.msra.mxu0 0.0
    %10972 = vmatprep.subr.mxu0 0.0
    %10973 = vmatpush1.msra.mxu0 0.0
    %10974 = vmatprep.subr.mxu0 0.0
    %10975 = vmatpush1.msra.mxu0 0.0
    %10976 = vmatprep.subr.mxu0 0.0
    %10977 = vmatpush1.msra.mxu0 0.0
    %10978 = vmatprep.subr.mxu0 0.0
    %10979 = vmatpush1.msra.mxu0 0.0
    %10980 = vmatprep.subr.mxu0 0.0
    %10981 = vmatpush1.msra.mxu0 0.0
    %10982 = vmatprep.subr.mxu0 0.0
    %10983 = vmatpush1.msra.mxu0 0.0
    %10984 = vmatprep.subr.mxu0 0.0
    %10985 = vmatpush1.msra.mxu0 0.0
    %10986 = vmatprep.subr.mxu0 0.0
    %10987 = vmatpush1.msra.mxu0 0.0
    %10988 = vmatprep.subr.mxu0 0.0
    %10989 = vmatpush1.msra.mxu0 0.0
    %10990 = vmatprep.subr.mxu0 0.0
    %10991 = vmatpush1.msra.mxu0 0.0
    %10992 = vmatprep.subr.mxu0 0.0
    %10993 = vmatpush1.msra.mxu0 0.0
    %10994 = vmatprep.subr.mxu0 0.0
    %10995 = vmatpush1.msra.mxu0 0.0
    %10996 = vmatprep.mubr.f32.mxu0 0.0
    %10997 = vmatmul.mubr.f32.gmra.mrb[0].mxu0 %v3152
    %v10998 = vpop.f32.mrb[0].mxu0
    %v10999 = vadd.f32 0.0, %v10998
    %v11000 = vpop.f32.mrb[0].mxu0
    %v11001 = vadd.f32 0.0, %v11000
    %11002 = vdwg.mxu0
    %v11003 = vmul.f32 %v10928, %v204
    %v11004 = vmul.f32 %v10930, %v208
    %v11005 = vmul.f32 %v10999, %v212
    %v11006 = vmul.f32 %v11001, %v216
    %v11007 = vadd.f32 %v10809, %v11003
    %v11008 = vadd.f32 %v10810, %v11004
    %v11009 = vadd.f32 %v10811, %v11005
    %v11010 = vadd.f32 %v10812, %v11006
    %11011 = vmatprep.subr.mxu0 %v10204
    %11012 = vmatpush1.msra.mxu0 %v10203
    %11013 = vmatprep.subr.mxu0 %v10208
    %11014 = vmatpush1.msra.mxu0 %v10207
    %11015 = vmatprep.subr.mxu0 %v10212
    %11016 = vmatpush1.msra.mxu0 %v10211
    %11017 = vmatprep.subr.mxu0 %v10216
    %11018 = vmatpush1.msra.mxu0 %v10215
    %11019 = vmatprep.subr.mxu0 0.0
    %11020 = vmatpush1.msra.mxu0 0.0
    %11021 = vmatprep.subr.mxu0 0.0
    %11022 = vmatpush1.msra.mxu0 0.0
    %11023 = vmatprep.subr.mxu0 0.0
    %11024 = vmatpush1.msra.mxu0 0.0
    %11025 = vmatprep.subr.mxu0 0.0
    %11026 = vmatpush1.msra.mxu0 0.0
    %11027 = vmatprep.subr.mxu0 0.0
    %11028 = vmatpush1.msra.mxu0 0.0
    %11029 = vmatprep.subr.mxu0 0.0
    %11030 = vmatpush1.msra.mxu0 0.0
    %11031 = vmatprep.subr.mxu0 0.0
    %11032 = vmatpush1.msra.mxu0 0.0
    %11033 = vmatprep.subr.mxu0 0.0
    %11034 = vmatpush1.msra.mxu0 0.0
    %11035 = vmatprep.subr.mxu0 0.0
    %11036 = vmatpush1.msra.mxu0 0.0
    %11037 = vmatprep.subr.mxu0 0.0
    %11038 = vmatpush1.msra.mxu0 0.0
    %11039 = vmatprep.subr.mxu0 0.0
    %11040 = vmatpush1.msra.mxu0 0.0
    %11041 = vmatprep.subr.mxu0 0.0
    %11042 = vmatpush1.msra.mxu0 0.0
    %11043 = vmatprep.subr.mxu0 0.0
    %11044 = vmatpush1.msra.mxu0 0.0
    %11045 = vmatprep.subr.mxu0 0.0
    %11046 = vmatpush1.msra.mxu0 0.0
    %11047 = vmatprep.subr.mxu0 0.0
    %11048 = vmatpush1.msra.mxu0 0.0
    %11049 = vmatprep.subr.mxu0 0.0
    %11050 = vmatpush1.msra.mxu0 0.0
    %11051 = vmatprep.subr.mxu0 0.0
    %11052 = vmatpush1.msra.mxu0 0.0
    %11053 = vmatprep.subr.mxu0 0.0
    %11054 = vmatpush1.msra.mxu0 0.0
    %11055 = vmatprep.subr.mxu0 0.0
    %11056 = vmatpush1.msra.mxu0 0.0
    %11057 = vmatprep.subr.mxu0 0.0
    %11058 = vmatpush1.msra.mxu0 0.0
    %11059 = vmatprep.subr.mxu0 0.0
    %11060 = vmatpush1.msra.mxu0 0.0
    %11061 = vmatprep.subr.mxu0 0.0
    %11062 = vmatpush1.msra.mxu0 0.0
    %11063 = vmatprep.subr.mxu0 0.0
    %11064 = vmatpush1.msra.mxu0 0.0
    %11065 = vmatprep.subr.mxu0 0.0
    %11066 = vmatpush1.msra.mxu0 0.0
    %11067 = vmatprep.subr.mxu0 0.0
    %11068 = vmatpush1.msra.mxu0 0.0
    %11069 = vmatprep.subr.mxu0 0.0
    %11070 = vmatpush1.msra.mxu0 0.0
    %11071 = vmatprep.subr.mxu0 0.0
    %11072 = vmatpush1.msra.mxu0 0.0
    %11073 = vmatprep.subr.mxu0 0.0
    %11074 = vmatpush1.msra.mxu0 0.0
    %11075 = vmatprep.mubr.f32.mxu0 0.0
    %11076 = vmatmul.mubr.f32.gmra.mrb[0].mxu0 %v3305
    %v11077 = vpop.f32.mrb[0].mxu0
    %v11078 = vadd.f32 0.0, %v11077
    %v11079 = vpop.f32.mrb[0].mxu0
    %v11080 = vadd.f32 0.0, %v11079
    %11081 = vdwg.mxu0
    %11082 = vmatprep.subr.mxu0 %v10206
    %11083 = vmatpush1.msra.mxu0 %v10205
    %11084 = vmatprep.subr.mxu0 %v10210
    %11085 = vmatpush1.msra.mxu0 %v10209
    %11086 = vmatprep.subr.mxu0 %v10214
    %11087 = vmatpush1.msra.mxu0 %v10213
    %11088 = vmatprep.subr.mxu0 %v10218
    %11089 = vmatpush1.msra.mxu0 %v10217
    %11090 = vmatprep.subr.mxu0 0.0
    %11091 = vmatpush1.msra.mxu0 0.0
    %11092 = vmatprep.subr.mxu0 0.0
    %11093 = vmatpush1.msra.mxu0 0.0
    %11094 = vmatprep.subr.mxu0 0.0
    %11095 = vmatpush1.msra.mxu0 0.0
    %11096 = vmatprep.subr.mxu0 0.0
    %11097 = vmatpush1.msra.mxu0 0.0
    %11098 = vmatprep.subr.mxu0 0.0
    %11099 = vmatpush1.msra.mxu0 0.0
    %11100 = vmatprep.subr.mxu0 0.0
    %11101 = vmatpush1.msra.mxu0 0.0
    %11102 = vmatprep.subr.mxu0 0.0
    %11103 = vmatpush1.msra.mxu0 0.0
    %11104 = vmatprep.subr.mxu0 0.0
    %11105 = vmatpush1.msra.mxu0 0.0
    %11106 = vmatprep.subr.mxu0 0.0
    %11107 = vmatpush1.msra.mxu0 0.0
    %11108 = vmatprep.subr.mxu0 0.0
    %11109 = vmatpush1.msra.mxu0 0.0
    %11110 = vmatprep.subr.mxu0 0.0
    %11111 = vmatpush1.msra.mxu0 0.0
    %11112 = vmatprep.subr.mxu0 0.0
    %11113 = vmatpush1.msra.mxu0 0.0
    %11114 = vmatprep.subr.mxu0 0.0
    %11115 = vmatpush1.msra.mxu0 0.0
    %11116 = vmatprep.subr.mxu0 0.0
    %11117 = vmatpush1.msra.mxu0 0.0
    %11118 = vmatprep.subr.mxu0 0.0
    %11119 = vmatpush1.msra.mxu0 0.0
    %11120 = vmatprep.subr.mxu0 0.0
    %11121 = vmatpush1.msra.mxu0 0.0
    %11122 = vmatprep.subr.mxu0 0.0
    %11123 = vmatpush1.msra.mxu0 0.0
    %11124 = vmatprep.subr.mxu0 0.0
    %11125 = vmatpush1.msra.mxu0 0.0
    %11126 = vmatprep.subr.mxu0 0.0
    %11127 = vmatpush1.msra.mxu0 0.0
    %11128 = vmatprep.subr.mxu0 0.0
    %11129 = vmatpush1.msra.mxu0 0.0
    %11130 = vmatprep.subr.mxu0 0.0
    %11131 = vmatpush1.msra.mxu0 0.0
    %11132 = vmatprep.subr.mxu0 0.0
    %11133 = vmatpush1.msra.mxu0 0.0
    %11134 = vmatprep.subr.mxu0 0.0
    %11135 = vmatpush1.msra.mxu0 0.0
    %11136 = vmatprep.subr.mxu0 0.0
    %11137 = vmatpush1.msra.mxu0 0.0
    %11138 = vmatprep.subr.mxu0 0.0
    %11139 = vmatpush1.msra.mxu0 0.0
    %11140 = vmatprep.subr.mxu0 0.0
    %11141 = vmatpush1.msra.mxu0 0.0
    %11142 = vmatprep.subr.mxu0 0.0
    %11143 = vmatpush1.msra.mxu0 0.0
    %11144 = vmatprep.subr.mxu0 0.0
    %11145 = vmatpush1.msra.mxu0 0.0
    %11146 = vmatprep.mubr.f32.mxu0 0.0
    %11147 = vmatmul.mubr.f32.gmra.mrb[0].mxu0 %v3305
    %v11148 = vpop.f32.mrb[0].mxu0
    %v11149 = vadd.f32 0.0, %v11148
    %v11150 = vpop.f32.mrb[0].mxu0
    %v11151 = vadd.f32 0.0, %v11150
    %11152 = vdwg.mxu0
    %v11153 = vadd.f32 %v11007, %v11078
    %v11154 = vadd.f32 %v11008, %v11080
    %v11155 = vadd.f32 %v11009, %v11149
    %v11156 = vadd.f32 %v11010, %v11151
    %11157 = vrot.lane.b32.xlu0 %v10203, 127
    %v11158 = vpop.permute.xlu0 %11157
    %11159 = vrot.lane.b32.xlu0 %v10207, 127
    %v11160 = vpop.permute.xlu0 %11159
    %11161 = vrot.lane.b32.xlu0 %v10211, 127
    %v11162 = vpop.permute.xlu0 %11161
    %11163 = vrot.lane.b32.xlu0 %v10215, 127
    %v11164 = vpop.permute.xlu0 %11163
    %11165 = vrot.lane.b32.xlu0 %v10204, 127
    %v11166 = vpop.permute.xlu0 %11165
    %11167 = vrot.lane.b32.xlu0 %v10208, 127
    %v11168 = vpop.permute.xlu0 %11167
    %11169 = vrot.lane.b32.xlu0 %v10212, 127
    %v11170 = vpop.permute.xlu0 %11169
    %11171 = vrot.lane.b32.xlu0 %v10216, 127
    %v11172 = vpop.permute.xlu0 %11171
    %11173 = vrot.lane.b32.xlu0 %v10205, 127
    %v11174 = vpop.permute.xlu0 %11173
    %11175 = vrot.lane.b32.xlu0 %v10209, 127
    %v11176 = vpop.permute.xlu0 %11175
    %11177 = vrot.lane.b32.xlu0 %v10213, 127
    %v11178 = vpop.permute.xlu0 %11177
    %11179 = vrot.lane.b32.xlu0 %v10217, 127
    %v11180 = vpop.permute.xlu0 %11179
    %11181 = vrot.lane.b32.xlu0 %v10206, 127
    %v11182 = vpop.permute.xlu0 %11181
    %11183 = vrot.lane.b32.xlu0 %v10210, 127
    %v11184 = vpop.permute.xlu0 %11183
    %11185 = vrot.lane.b32.xlu0 %v10214, 127
    %v11186 = vpop.permute.xlu0 %11185
    %11187 = vrot.lane.b32.xlu0 %v10218, 127
    %v11188 = vpop.permute.xlu0 %11187
    %v11189 = vsel %vm1455, %v11174, %v11182
    %v11190 = vsel %vm1455, %v11176, %v11184
    %v11191 = vsel %vm1455, %v11178, %v11186
    %v11192 = vsel %vm1455, %v11180, %v11188
    %v11193 = vsel %vm1455, %v11166, %v11174
    %v11194 = vsel %vm1455, %v11168, %v11176
    %v11195 = vsel %vm1455, %v11170, %v11178
    %v11196 = vsel %vm1455, %v11172, %v11180
    %v11197 = vsel %vm1455, %v11158, %v11166
    %v11198 = vsel %vm1455, %v11160, %v11168
    %v11199 = vsel %vm1455, %v11162, %v11170
    %v11200 = vsel %vm1455, %v11164, %v11172
    %v11201 = vsel %vm1455, %v11182, %v11158
    %v11202 = vsel %vm1455, %v11184, %v11160
    %v11203 = vsel %vm1455, %v11186, %v11162
    %v11204 = vsel %vm1455, %v11188, %v11164
    %11205 = vmatprep.subr.mxu0 %v11193
    %11206 = vmatpush1.msra.mxu0 %v11197
    %11207 = vmatprep.subr.mxu0 %v11194
    %11208 = vmatpush1.msra.mxu0 %v11198
    %11209 = vmatprep.subr.mxu0 %v11195
    %11210 = vmatpush1.msra.mxu0 %v11199
    %11211 = vmatprep.subr.mxu0 %v11196
    %11212 = vmatpush1.msra.mxu0 %v11200
    %11213 = vmatprep.subr.mxu0 0.0
    %11214 = vmatpush1.msra.mxu0 0.0
    %11215 = vmatprep.subr.mxu0 0.0
    %11216 = vmatpush1.msra.mxu0 0.0
    %11217 = vmatprep.subr.mxu0 0.0
    %11218 = vmatpush1.msra.mxu0 0.0
    %11219 = vmatprep.subr.mxu0 0.0
    %11220 = vmatpush1.msra.mxu0 0.0
    %11221 = vmatprep.subr.mxu0 0.0
    %11222 = vmatpush1.msra.mxu0 0.0
    %11223 = vmatprep.subr.mxu0 0.0
    %11224 = vmatpush1.msra.mxu0 0.0
    %11225 = vmatprep.subr.mxu0 0.0
    %11226 = vmatpush1.msra.mxu0 0.0
    %11227 = vmatprep.subr.mxu0 0.0
    %11228 = vmatpush1.msra.mxu0 0.0
    %11229 = vmatprep.subr.mxu0 0.0
    %11230 = vmatpush1.msra.mxu0 0.0
    %11231 = vmatprep.subr.mxu0 0.0
    %11232 = vmatpush1.msra.mxu0 0.0
    %11233 = vmatprep.subr.mxu0 0.0
    %11234 = vmatpush1.msra.mxu0 0.0
    %11235 = vmatprep.subr.mxu0 0.0
    %11236 = vmatpush1.msra.mxu0 0.0
    %11237 = vmatprep.subr.mxu0 0.0
    %11238 = vmatpush1.msra.mxu0 0.0
    %11239 = vmatprep.subr.mxu0 0.0
    %11240 = vmatpush1.msra.mxu0 0.0
    %11241 = vmatprep.subr.mxu0 0.0
    %11242 = vmatpush1.msra.mxu0 0.0
    %11243 = vmatprep.subr.mxu0 0.0
    %11244 = vmatpush1.msra.mxu0 0.0
    %11245 = vmatprep.subr.mxu0 0.0
    %11246 = vmatpush1.msra.mxu0 0.0
    %11247 = vmatprep.subr.mxu0 0.0
    %11248 = vmatpush1.msra.mxu0 0.0
    %11249 = vmatprep.subr.mxu0 0.0
    %11250 = vmatpush1.msra.mxu0 0.0
    %11251 = vmatprep.subr.mxu0 0.0
    %11252 = vmatpush1.msra.mxu0 0.0
    %11253 = vmatprep.subr.mxu0 0.0
    %11254 = vmatpush1.msra.mxu0 0.0
    %11255 = vmatprep.subr.mxu0 0.0
    %11256 = vmatpush1.msra.mxu0 0.0
    %11257 = vmatprep.subr.mxu0 0.0
    %11258 = vmatpush1.msra.mxu0 0.0
    %11259 = vmatprep.subr.mxu0 0.0
    %11260 = vmatpush1.msra.mxu0 0.0
    %11261 = vmatprep.subr.mxu0 0.0
    %11262 = vmatpush1.msra.mxu0 0.0
    %11263 = vmatprep.subr.mxu0 0.0
    %11264 = vmatpush1.msra.mxu0 0.0
    %11265 = vmatprep.subr.mxu0 0.0
    %11266 = vmatpush1.msra.mxu0 0.0
    %11267 = vmatprep.subr.mxu0 0.0
    %11268 = vmatpush1.msra.mxu0 0.0
    %11269 = vmatprep.mubr.f32.mxu0 0.0
    %11270 = vmatmul.mubr.f32.gmra.mrb[0].mxu0 %v3502
    %v11271 = vpop.f32.mrb[0].mxu0
    %v11272 = vadd.f32 0.0, %v11271
    %v11273 = vpop.f32.mrb[0].mxu0
    %v11274 = vadd.f32 0.0, %v11273
    %11275 = vdwg.mxu0
    %11276 = vmatprep.subr.mxu0 %v11201
    %11277 = vmatpush1.msra.mxu0 %v11189
    %11278 = vmatprep.subr.mxu0 %v11202
    %11279 = vmatpush1.msra.mxu0 %v11190
    %11280 = vmatprep.subr.mxu0 %v11203
    %11281 = vmatpush1.msra.mxu0 %v11191
    %11282 = vmatprep.subr.mxu0 %v11204
    %11283 = vmatpush1.msra.mxu0 %v11192
    %11284 = vmatprep.subr.mxu0 0.0
    %11285 = vmatpush1.msra.mxu0 0.0
    %11286 = vmatprep.subr.mxu0 0.0
    %11287 = vmatpush1.msra.mxu0 0.0
    %11288 = vmatprep.subr.mxu0 0.0
    %11289 = vmatpush1.msra.mxu0 0.0
    %11290 = vmatprep.subr.mxu0 0.0
    %11291 = vmatpush1.msra.mxu0 0.0
    %11292 = vmatprep.subr.mxu0 0.0
    %11293 = vmatpush1.msra.mxu0 0.0
    %11294 = vmatprep.subr.mxu0 0.0
    %11295 = vmatpush1.msra.mxu0 0.0
    %11296 = vmatprep.subr.mxu0 0.0
    %11297 = vmatpush1.msra.mxu0 0.0
    %11298 = vmatprep.subr.mxu0 0.0
    %11299 = vmatpush1.msra.mxu0 0.0
    %11300 = vmatprep.subr.mxu0 0.0
    %11301 = vmatpush1.msra.mxu0 0.0
    %11302 = vmatprep.subr.mxu0 0.0
    %11303 = vmatpush1.msra.mxu0 0.0
    %11304 = vmatprep.subr.mxu0 0.0
    %11305 = vmatpush1.msra.mxu0 0.0
    %11306 = vmatprep.subr.mxu0 0.0
    %11307 = vmatpush1.msra.mxu0 0.0
    %11308 = vmatprep.subr.mxu0 0.0
    %11309 = vmatpush1.msra.mxu0 0.0
    %11310 = vmatprep.subr.mxu0 0.0
    %11311 = vmatpush1.msra.mxu0 0.0
    %11312 = vmatprep.subr.mxu0 0.0
    %11313 = vmatpush1.msra.mxu0 0.0
    %11314 = vmatprep.subr.mxu0 0.0
    %11315 = vmatpush1.msra.mxu0 0.0
    %11316 = vmatprep.subr.mxu0 0.0
    %11317 = vmatpush1.msra.mxu0 0.0
    %11318 = vmatprep.subr.mxu0 0.0
    %11319 = vmatpush1.msra.mxu0 0.0
    %11320 = vmatprep.subr.mxu0 0.0
    %11321 = vmatpush1.msra.mxu0 0.0
    %11322 = vmatprep.subr.mxu0 0.0
    %11323 = vmatpush1.msra.mxu0 0.0
    %11324 = vmatprep.subr.mxu0 0.0
    %11325 = vmatpush1.msra.mxu0 0.0
    %11326 = vmatprep.subr.mxu0 0.0
    %11327 = vmatpush1.msra.mxu0 0.0
    %11328 = vmatprep.subr.mxu0 0.0
    %11329 = vmatpush1.msra.mxu0 0.0
    %11330 = vmatprep.subr.mxu0 0.0
    %11331 = vmatpush1.msra.mxu0 0.0
    %11332 = vmatprep.subr.mxu0 0.0
    %11333 = vmatpush1.msra.mxu0 0.0
    %11334 = vmatprep.subr.mxu0 0.0
    %11335 = vmatpush1.msra.mxu0 0.0
    %11336 = vmatprep.subr.mxu0 0.0
    %11337 = vmatpush1.msra.mxu0 0.0
    %11338 = vmatprep.subr.mxu0 0.0
    %11339 = vmatpush1.msra.mxu0 0.0
    %11340 = vmatprep.mubr.f32.mxu0 0.0
    %11341 = vmatmul.mubr.f32.gmra.mrb[0].mxu0 %v3502
    %v11342 = vpop.f32.mrb[0].mxu0
    %v11343 = vadd.f32 0.0, %v11342
    %v11344 = vpop.f32.mrb[0].mxu0
    %v11345 = vadd.f32 0.0, %v11344
    %11346 = vdwg.mxu0
    %v11347 = vmul.f32 %v11272, %v220
    %v11348 = vmul.f32 %v11274, %v224
    %v11349 = vmul.f32 %v11343, %v228
    %v11350 = vmul.f32 %v11345, %v232
    %v11351 = vadd.f32 %v11153, %v11347
    %v11352 = vadd.f32 %v11154, %v11348
    %v11353 = vadd.f32 %v11155, %v11349
    %v11354 = vadd.f32 %v11156, %v11350
    %11355 = vrot.lane.b32.xlu0 %v10203, 113
    %v11356 = vpop.permute.xlu0 %11355
    %11357 = vrot.lane.b32.xlu0 %v10207, 113
    %v11358 = vpop.permute.xlu0 %11357
    %11359 = vrot.lane.b32.xlu0 %v10211, 113
    %v11360 = vpop.permute.xlu0 %11359
    %11361 = vrot.lane.b32.xlu0 %v10215, 113
    %v11362 = vpop.permute.xlu0 %11361
    %11363 = vrot.lane.b32.xlu0 %v10204, 113
    %v11364 = vpop.permute.xlu0 %11363
    %11365 = vrot.lane.b32.xlu0 %v10208, 113
    %v11366 = vpop.permute.xlu0 %11365
    %11367 = vrot.lane.b32.xlu0 %v10212, 113
    %v11368 = vpop.permute.xlu0 %11367
    %11369 = vrot.lane.b32.xlu0 %v10216, 113
    %v11370 = vpop.permute.xlu0 %11369
    %11371 = vrot.lane.b32.xlu0 %v10205, 113
    %v11372 = vpop.permute.xlu0 %11371
    %11373 = vrot.lane.b32.xlu0 %v10209, 113
    %v11374 = vpop.permute.xlu0 %11373
    %11375 = vrot.lane.b32.xlu0 %v10213, 113
    %v11376 = vpop.permute.xlu0 %11375
    %11377 = vrot.lane.b32.xlu0 %v10217, 113
    %v11378 = vpop.permute.xlu0 %11377
    %11379 = vrot.lane.b32.xlu0 %v10206, 113
    %v11380 = vpop.permute.xlu0 %11379
    %11381 = vrot.lane.b32.xlu0 %v10210, 113
    %v11382 = vpop.permute.xlu0 %11381
    %11383 = vrot.lane.b32.xlu0 %v10214, 113
    %v11384 = vpop.permute.xlu0 %11383
    %11385 = vrot.lane.b32.xlu0 %v10218, 113
    %v11386 = vpop.permute.xlu0 %11385
    %v11387 = vsel %vm1690, %v11372, %v11380
    %v11388 = vsel %vm1690, %v11374, %v11382
    %v11389 = vsel %vm1690, %v11376, %v11384
    %v11390 = vsel %vm1690, %v11378, %v11386
    %v11391 = vsel %vm1690, %v11364, %v11372
    %v11392 = vsel %vm1690, %v11366, %v11374
    %v11393 = vsel %vm1690, %v11368, %v11376
    %v11394 = vsel %vm1690, %v11370, %v11378
    %v11395 = vsel %vm1690, %v11356, %v11364
    %v11396 = vsel %vm1690, %v11358, %v11366
    %v11397 = vsel %vm1690, %v11360, %v11368
    %v11398 = vsel %vm1690, %v11362, %v11370
    %v11399 = vsel %vm1690, %v11380, %v11356
    %v11400 = vsel %vm1690, %v11382, %v11358
    %v11401 = vsel %vm1690, %v11384, %v11360
    %v11402 = vsel %vm1690, %v11386, %v11362
    %11403 = vmatprep.subr.mxu0 %v11391
    %11404 = vmatpush1.msra.mxu0 %v11395
    %11405 = vmatprep.subr.mxu0 %v11392
    %11406 = vmatpush1.msra.mxu0 %v11396
    %11407 = vmatprep.subr.mxu0 %v11393
    %11408 = vmatpush1.msra.mxu0 %v11397
    %11409 = vmatprep.subr.mxu0 %v11394
    %11410 = vmatpush1.msra.mxu0 %v11398
    %11411 = vmatprep.subr.mxu0 0.0
    %11412 = vmatpush1.msra.mxu0 0.0
    %11413 = vmatprep.subr.mxu0 0.0
    %11414 = vmatpush1.msra.mxu0 0.0
    %11415 = vmatprep.subr.mxu0 0.0
    %11416 = vmatpush1.msra.mxu0 0.0
    %11417 = vmatprep.subr.mxu0 0.0
    %11418 = vmatpush1.msra.mxu0 0.0
    %11419 = vmatprep.subr.mxu0 0.0
    %11420 = vmatpush1.msra.mxu0 0.0
    %11421 = vmatprep.subr.mxu0 0.0
    %11422 = vmatpush1.msra.mxu0 0.0
    %11423 = vmatprep.subr.mxu0 0.0
    %11424 = vmatpush1.msra.mxu0 0.0
    %11425 = vmatprep.subr.mxu0 0.0
    %11426 = vmatpush1.msra.mxu0 0.0
    %11427 = vmatprep.subr.mxu0 0.0
    %11428 = vmatpush1.msra.mxu0 0.0
    %11429 = vmatprep.subr.mxu0 0.0
    %11430 = vmatpush1.msra.mxu0 0.0
    %11431 = vmatprep.subr.mxu0 0.0
    %11432 = vmatpush1.msra.mxu0 0.0
    %11433 = vmatprep.subr.mxu0 0.0
    %11434 = vmatpush1.msra.mxu0 0.0
    %11435 = vmatprep.subr.mxu0 0.0
    %11436 = vmatpush1.msra.mxu0 0.0
    %11437 = vmatprep.subr.mxu0 0.0
    %11438 = vmatpush1.msra.mxu0 0.0
    %11439 = vmatprep.subr.mxu0 0.0
    %11440 = vmatpush1.msra.mxu0 0.0
    %11441 = vmatprep.subr.mxu0 0.0
    %11442 = vmatpush1.msra.mxu0 0.0
    %11443 = vmatprep.subr.mxu0 0.0
    %11444 = vmatpush1.msra.mxu0 0.0
    %11445 = vmatprep.subr.mxu0 0.0
    %11446 = vmatpush1.msra.mxu0 0.0
    %11447 = vmatprep.subr.mxu0 0.0
    %11448 = vmatpush1.msra.mxu0 0.0
    %11449 = vmatprep.subr.mxu0 0.0
    %11450 = vmatpush1.msra.mxu0 0.0
    %11451 = vmatprep.subr.mxu0 0.0
    %11452 = vmatpush1.msra.mxu0 0.0
    %11453 = vmatprep.subr.mxu0 0.0
    %11454 = vmatpush1.msra.mxu0 0.0
    %11455 = vmatprep.subr.mxu0 0.0
    %11456 = vmatpush1.msra.mxu0 0.0
    %11457 = vmatprep.subr.mxu0 0.0
    %11458 = vmatpush1.msra.mxu0 0.0
    %11459 = vmatprep.subr.mxu0 0.0
    %11460 = vmatpush1.msra.mxu0 0.0
    %11461 = vmatprep.subr.mxu0 0.0
    %11462 = vmatpush1.msra.mxu0 0.0
    %11463 = vmatprep.subr.mxu0 0.0
    %11464 = vmatpush1.msra.mxu0 0.0
    %11465 = vmatprep.subr.mxu0 0.0
    %11466 = vmatpush1.msra.mxu0 0.0
    %11467 = vmatprep.mubr.f32.mxu0 0.0
    %11468 = vmatmul.mubr.f32.gmra.mrb[0].mxu0 %v3703
    %v11469 = vpop.f32.mrb[0].mxu0
    %v11470 = vadd.f32 0.0, %v11469
    %v11471 = vpop.f32.mrb[0].mxu0
    %v11472 = vadd.f32 0.0, %v11471
    %11473 = vdwg.mxu0
    %11474 = vmatprep.subr.mxu0 %v11399
    %11475 = vmatpush1.msra.mxu0 %v11387
    %11476 = vmatprep.subr.mxu0 %v11400
    %11477 = vmatpush1.msra.mxu0 %v11388
    %11478 = vmatprep.subr.mxu0 %v11401
    %11479 = vmatpush1.msra.mxu0 %v11389
    %11480 = vmatprep.subr.mxu0 %v11402
    %11481 = vmatpush1.msra.mxu0 %v11390
    %11482 = vmatprep.subr.mxu0 0.0
    %11483 = vmatpush1.msra.mxu0 0.0
    %11484 = vmatprep.subr.mxu0 0.0
    %11485 = vmatpush1.msra.mxu0 0.0
    %11486 = vmatprep.subr.mxu0 0.0
    %11487 = vmatpush1.msra.mxu0 0.0
    %11488 = vmatprep.subr.mxu0 0.0
    %11489 = vmatpush1.msra.mxu0 0.0
    %11490 = vmatprep.subr.mxu0 0.0
    %11491 = vmatpush1.msra.mxu0 0.0
    %11492 = vmatprep.subr.mxu0 0.0
    %11493 = vmatpush1.msra.mxu0 0.0
    %11494 = vmatprep.subr.mxu0 0.0
    %11495 = vmatpush1.msra.mxu0 0.0
    %11496 = vmatprep.subr.mxu0 0.0
    %11497 = vmatpush1.msra.mxu0 0.0
    %11498 = vmatprep.subr.mxu0 0.0
    %11499 = vmatpush1.msra.mxu0 0.0
    %11500 = vmatprep.subr.mxu0 0.0
    %11501 = vmatpush1.msra.mxu0 0.0
    %11502 = vmatprep.subr.mxu0 0.0
    %11503 = vmatpush1.msra.mxu0 0.0
    %11504 = vmatprep.subr.mxu0 0.0
    %11505 = vmatpush1.msra.mxu0 0.0
    %11506 = vmatprep.subr.mxu0 0.0
    %11507 = vmatpush1.msra.mxu0 0.0
    %11508 = vmatprep.subr.mxu0 0.0
    %11509 = vmatpush1.msra.mxu0 0.0
    %11510 = vmatprep.subr.mxu0 0.0
    %11511 = vmatpush1.msra.mxu0 0.0
    %11512 = vmatprep.subr.mxu0 0.0
    %11513 = vmatpush1.msra.mxu0 0.0
    %11514 = vmatprep.subr.mxu0 0.0
    %11515 = vmatpush1.msra.mxu0 0.0
    %11516 = vmatprep.subr.mxu0 0.0
    %11517 = vmatpush1.msra.mxu0 0.0
    %11518 = vmatprep.subr.mxu0 0.0
    %11519 = vmatpush1.msra.mxu0 0.0
    %11520 = vmatprep.subr.mxu0 0.0
    %11521 = vmatpush1.msra.mxu0 0.0
    %11522 = vmatprep.subr.mxu0 0.0
    %11523 = vmatpush1.msra.mxu0 0.0
    %11524 = vmatprep.subr.mxu0 0.0
    %11525 = vmatpush1.msra.mxu0 0.0
    %11526 = vmatprep.subr.mxu0 0.0
    %11527 = vmatpush1.msra.mxu0 0.0
    %11528 = vmatprep.subr.mxu0 0.0
    %11529 = vmatpush1.msra.mxu0 0.0
    %11530 = vmatprep.subr.mxu0 0.0
    %11531 = vmatpush1.msra.mxu0 0.0
    %11532 = vmatprep.subr.mxu0 0.0
    %11533 = vmatpush1.msra.mxu0 0.0
    %11534 = vmatprep.subr.mxu0 0.0
    %11535 = vmatpush1.msra.mxu0 0.0
    %11536 = vmatprep.subr.mxu0 0.0
    %11537 = vmatpush1.msra.mxu0 0.0
    %11538 = vmatprep.mubr.f32.mxu0 0.0
    %11539 = vmatmul.mubr.f32.gmra.mrb[0].mxu0 %v3703
    %v11540 = vpop.f32.mrb[0].mxu0
    %v11541 = vadd.f32 0.0, %v11540
    %v11542 = vpop.f32.mrb[0].mxu0
    %v11543 = vadd.f32 0.0, %v11542
    %11544 = vdwg.mxu0
    %v11545 = vmul.f32 %v11470, %v236
    %v11546 = vmul.f32 %v11472, %v240
    %v11547 = vmul.f32 %v11541, %v244
    %v11548 = vmul.f32 %v11543, %v248
    %v11549 = vadd.f32 %v11351, %v11545
    %v11550 = vadd.f32 %v11352, %v11546
    %v11551 = vadd.f32 %v11353, %v11547
    %v11552 = vadd.f32 %v11354, %v11548
    %11553 = vrot.lane.b32.xlu0 %v10203, 112
    %v11554 = vpop.permute.xlu0 %11553
    %11555 = vrot.lane.b32.xlu0 %v10207, 112
    %v11556 = vpop.permute.xlu0 %11555
    %11557 = vrot.lane.b32.xlu0 %v10211, 112
    %v11558 = vpop.permute.xlu0 %11557
    %11559 = vrot.lane.b32.xlu0 %v10215, 112
    %v11560 = vpop.permute.xlu0 %11559
    %11561 = vrot.lane.b32.xlu0 %v10204, 112
    %v11562 = vpop.permute.xlu0 %11561
    %11563 = vrot.lane.b32.xlu0 %v10208, 112
    %v11564 = vpop.permute.xlu0 %11563
    %11565 = vrot.lane.b32.xlu0 %v10212, 112
    %v11566 = vpop.permute.xlu0 %11565
    %11567 = vrot.lane.b32.xlu0 %v10216, 112
    %v11568 = vpop.permute.xlu0 %11567
    %11569 = vrot.lane.b32.xlu0 %v10205, 112
    %v11570 = vpop.permute.xlu0 %11569
    %11571 = vrot.lane.b32.xlu0 %v10209, 112
    %v11572 = vpop.permute.xlu0 %11571
    %11573 = vrot.lane.b32.xlu0 %v10213, 112
    %v11574 = vpop.permute.xlu0 %11573
    %11575 = vrot.lane.b32.xlu0 %v10217, 112
    %v11576 = vpop.permute.xlu0 %11575
    %11577 = vrot.lane.b32.xlu0 %v10206, 112
    %v11578 = vpop.permute.xlu0 %11577
    %11579 = vrot.lane.b32.xlu0 %v10210, 112
    %v11580 = vpop.permute.xlu0 %11579
    %11581 = vrot.lane.b32.xlu0 %v10214, 112
    %v11582 = vpop.permute.xlu0 %11581
    %11583 = vrot.lane.b32.xlu0 %v10218, 112
    %v11584 = vpop.permute.xlu0 %11583
    %v11585 = vsel %vm1925, %v11570, %v11578
    %v11586 = vsel %vm1925, %v11572, %v11580
    %v11587 = vsel %vm1925, %v11574, %v11582
    %v11588 = vsel %vm1925, %v11576, %v11584
    %v11589 = vsel %vm1925, %v11562, %v11570
    %v11590 = vsel %vm1925, %v11564, %v11572
    %v11591 = vsel %vm1925, %v11566, %v11574
    %v11592 = vsel %vm1925, %v11568, %v11576
    %v11593 = vsel %vm1925, %v11554, %v11562
    %v11594 = vsel %vm1925, %v11556, %v11564
    %v11595 = vsel %vm1925, %v11558, %v11566
    %v11596 = vsel %vm1925, %v11560, %v11568
    %v11597 = vsel %vm1925, %v11578, %v11554
    %v11598 = vsel %vm1925, %v11580, %v11556
    %v11599 = vsel %vm1925, %v11582, %v11558
    %v11600 = vsel %vm1925, %v11584, %v11560
    %11601 = vmatprep.subr.mxu0 %v11589
    %11602 = vmatpush1.msra.mxu0 %v11593
    %11603 = vmatprep.subr.mxu0 %v11590
    %11604 = vmatpush1.msra.mxu0 %v11594
    %11605 = vmatprep.subr.mxu0 %v11591
    %11606 = vmatpush1.msra.mxu0 %v11595
    %11607 = vmatprep.subr.mxu0 %v11592
    %11608 = vmatpush1.msra.mxu0 %v11596
    %11609 = vmatprep.subr.mxu0 0.0
    %11610 = vmatpush1.msra.mxu0 0.0
    %11611 = vmatprep.subr.mxu0 0.0
    %11612 = vmatpush1.msra.mxu0 0.0
    %11613 = vmatprep.subr.mxu0 0.0
    %11614 = vmatpush1.msra.mxu0 0.0
    %11615 = vmatprep.subr.mxu0 0.0
    %11616 = vmatpush1.msra.mxu0 0.0
    %11617 = vmatprep.subr.mxu0 0.0
    %11618 = vmatpush1.msra.mxu0 0.0
    %11619 = vmatprep.subr.mxu0 0.0
    %11620 = vmatpush1.msra.mxu0 0.0
    %11621 = vmatprep.subr.mxu0 0.0
    %11622 = vmatpush1.msra.mxu0 0.0
    %11623 = vmatprep.subr.mxu0 0.0
    %11624 = vmatpush1.msra.mxu0 0.0
    %11625 = vmatprep.subr.mxu0 0.0
    %11626 = vmatpush1.msra.mxu0 0.0
    %11627 = vmatprep.subr.mxu0 0.0
    %11628 = vmatpush1.msra.mxu0 0.0
    %11629 = vmatprep.subr.mxu0 0.0
    %11630 = vmatpush1.msra.mxu0 0.0
    %11631 = vmatprep.subr.mxu0 0.0
    %11632 = vmatpush1.msra.mxu0 0.0
    %11633 = vmatprep.subr.mxu0 0.0
    %11634 = vmatpush1.msra.mxu0 0.0
    %11635 = vmatprep.subr.mxu0 0.0
    %11636 = vmatpush1.msra.mxu0 0.0
    %11637 = vmatprep.subr.mxu0 0.0
    %11638 = vmatpush1.msra.mxu0 0.0
    %11639 = vmatprep.subr.mxu0 0.0
    %11640 = vmatpush1.msra.mxu0 0.0
    %11641 = vmatprep.subr.mxu0 0.0
    %11642 = vmatpush1.msra.mxu0 0.0
    %11643 = vmatprep.subr.mxu0 0.0
    %11644 = vmatpush1.msra.mxu0 0.0
    %11645 = vmatprep.subr.mxu0 0.0
    %11646 = vmatpush1.msra.mxu0 0.0
    %11647 = vmatprep.subr.mxu0 0.0
    %11648 = vmatpush1.msra.mxu0 0.0
    %11649 = vmatprep.subr.mxu0 0.0
    %11650 = vmatpush1.msra.mxu0 0.0
    %11651 = vmatprep.subr.mxu0 0.0
    %11652 = vmatpush1.msra.mxu0 0.0
    %11653 = vmatprep.subr.mxu0 0.0
    %11654 = vmatpush1.msra.mxu0 0.0
    %11655 = vmatprep.subr.mxu0 0.0
    %11656 = vmatpush1.msra.mxu0 0.0
    %11657 = vmatprep.subr.mxu0 0.0
    %11658 = vmatpush1.msra.mxu0 0.0
    %11659 = vmatprep.subr.mxu0 0.0
    %11660 = vmatpush1.msra.mxu0 0.0
    %11661 = vmatprep.subr.mxu0 0.0
    %11662 = vmatpush1.msra.mxu0 0.0
    %11663 = vmatprep.subr.mxu0 0.0
    %11664 = vmatpush1.msra.mxu0 0.0
    %11665 = vmatprep.mubr.f32.mxu0 0.0
    %11666 = vmatmul.mubr.f32.gmra.mrb[0].mxu0 %v3904
    %v11667 = vpop.f32.mrb[0].mxu0
    %v11668 = vadd.f32 0.0, %v11667
    %v11669 = vpop.f32.mrb[0].mxu0
    %v11670 = vadd.f32 0.0, %v11669
    %11671 = vdwg.mxu0
    %11672 = vmatprep.subr.mxu0 %v11597
    %11673 = vmatpush1.msra.mxu0 %v11585
    %11674 = vmatprep.subr.mxu0 %v11598
    %11675 = vmatpush1.msra.mxu0 %v11586
    %11676 = vmatprep.subr.mxu0 %v11599
    %11677 = vmatpush1.msra.mxu0 %v11587
    %11678 = vmatprep.subr.mxu0 %v11600
    %11679 = vmatpush1.msra.mxu0 %v11588
    %11680 = vmatprep.subr.mxu0 0.0
    %11681 = vmatpush1.msra.mxu0 0.0
    %11682 = vmatprep.subr.mxu0 0.0
    %11683 = vmatpush1.msra.mxu0 0.0
    %11684 = vmatprep.subr.mxu0 0.0
    %11685 = vmatpush1.msra.mxu0 0.0
    %11686 = vmatprep.subr.mxu0 0.0
    %11687 = vmatpush1.msra.mxu0 0.0
    %11688 = vmatprep.subr.mxu0 0.0
    %11689 = vmatpush1.msra.mxu0 0.0
    %11690 = vmatprep.subr.mxu0 0.0
    %11691 = vmatpush1.msra.mxu0 0.0
    %11692 = vmatprep.subr.mxu0 0.0
    %11693 = vmatpush1.msra.mxu0 0.0
    %11694 = vmatprep.subr.mxu0 0.0
    %11695 = vmatpush1.msra.mxu0 0.0
    %11696 = vmatprep.subr.mxu0 0.0
    %11697 = vmatpush1.msra.mxu0 0.0
    %11698 = vmatprep.subr.mxu0 0.0
    %11699 = vmatpush1.msra.mxu0 0.0
    %11700 = vmatprep.subr.mxu0 0.0
    %11701 = vmatpush1.msra.mxu0 0.0
    %11702 = vmatprep.subr.mxu0 0.0
    %11703 = vmatpush1.msra.mxu0 0.0
    %11704 = vmatprep.subr.mxu0 0.0
    %11705 = vmatpush1.msra.mxu0 0.0
    %11706 = vmatprep.subr.mxu0 0.0
    %11707 = vmatpush1.msra.mxu0 0.0
    %11708 = vmatprep.subr.mxu0 0.0
    %11709 = vmatpush1.msra.mxu0 0.0
    %11710 = vmatprep.subr.mxu0 0.0
    %11711 = vmatpush1.msra.mxu0 0.0
    %11712 = vmatprep.subr.mxu0 0.0
    %11713 = vmatpush1.msra.mxu0 0.0
    %11714 = vmatprep.subr.mxu0 0.0
    %11715 = vmatpush1.msra.mxu0 0.0
    %11716 = vmatprep.subr.mxu0 0.0
    %11717 = vmatpush1.msra.mxu0 0.0
    %11718 = vmatprep.subr.mxu0 0.0
    %11719 = vmatpush1.msra.mxu0 0.0
    %11720 = vmatprep.subr.mxu0 0.0
    %11721 = vmatpush1.msra.mxu0 0.0
    %11722 = vmatprep.subr.mxu0 0.0
    %11723 = vmatpush1.msra.mxu0 0.0
    %11724 = vmatprep.subr.mxu0 0.0
    %11725 = vmatpush1.msra.mxu0 0.0
    %11726 = vmatprep.subr.mxu0 0.0
    %11727 = vmatpush1.msra.mxu0 0.0
    %11728 = vmatprep.subr.mxu0 0.0
    %11729 = vmatpush1.msra.mxu0 0.0
    %11730 = vmatprep.subr.mxu0 0.0
    %11731 = vmatpush1.msra.mxu0 0.0
    %11732 = vmatprep.subr.mxu0 0.0
    %11733 = vmatpush1.msra.mxu0 0.0
    %11734 = vmatprep.subr.mxu0 0.0
    %11735 = vmatpush1.msra.mxu0 0.0
    %11736 = vmatprep.mubr.f32.mxu0 0.0
    %11737 = vmatmul.mubr.f32.gmra.mrb[0].mxu0 %v3904
    %v11738 = vpop.f32.mrb[0].mxu0
    %v11739 = vadd.f32 0.0, %v11738
    %v11740 = vpop.f32.mrb[0].mxu0
    %v11741 = vadd.f32 0.0, %v11740
    %11742 = vdwg.mxu0
    %v11743 = vmul.f32 %v11668, %v252
    %v11744 = vmul.f32 %v11670, %v256
    %v11745 = vmul.f32 %v11739, %v260
    %v11746 = vmul.f32 %v11741, %v264
    %v11747 = vadd.f32 %v11549, %v11743
    %v11748 = vadd.f32 %v11550, %v11744
    %v11749 = vadd.f32 %v11551, %v11745
    %v11750 = vadd.f32 %v11552, %v11746
    %11751 = vrot.lane.b32.xlu0 %v10203, 111
    %v11752 = vpop.permute.xlu0 %11751
    %11753 = vrot.lane.b32.xlu0 %v10207, 111
    %v11754 = vpop.permute.xlu0 %11753
    %11755 = vrot.lane.b32.xlu0 %v10211, 111
    %v11756 = vpop.permute.xlu0 %11755
    %11757 = vrot.lane.b32.xlu0 %v10215, 111
    %v11758 = vpop.permute.xlu0 %11757
    %11759 = vrot.lane.b32.xlu0 %v10204, 111
    %v11760 = vpop.permute.xlu0 %11759
    %11761 = vrot.lane.b32.xlu0 %v10208, 111
    %v11762 = vpop.permute.xlu0 %11761
    %11763 = vrot.lane.b32.xlu0 %v10212, 111
    %v11764 = vpop.permute.xlu0 %11763
    %11765 = vrot.lane.b32.xlu0 %v10216, 111
    %v11766 = vpop.permute.xlu0 %11765
    %11767 = vrot.lane.b32.xlu0 %v10205, 111
    %v11768 = vpop.permute.xlu0 %11767
    %11769 = vrot.lane.b32.xlu0 %v10209, 111
    %v11770 = vpop.permute.xlu0 %11769
    %11771 = vrot.lane.b32.xlu0 %v10213, 111
    %v11772 = vpop.permute.xlu0 %11771
    %11773 = vrot.lane.b32.xlu0 %v10217, 111
    %v11774 = vpop.permute.xlu0 %11773
    %11775 = vrot.lane.b32.xlu0 %v10206, 111
    %v11776 = vpop.permute.xlu0 %11775
    %11777 = vrot.lane.b32.xlu0 %v10210, 111
    %v11778 = vpop.permute.xlu0 %11777
    %11779 = vrot.lane.b32.xlu0 %v10214, 111
    %v11780 = vpop.permute.xlu0 %11779
    %11781 = vrot.lane.b32.xlu0 %v10218, 111
    %v11782 = vpop.permute.xlu0 %11781
    %v11783 = vsel %vm2160, %v11768, %v11776
    %v11784 = vsel %vm2160, %v11770, %v11778
    %v11785 = vsel %vm2160, %v11772, %v11780
    %v11786 = vsel %vm2160, %v11774, %v11782
    %v11787 = vsel %vm2160, %v11760, %v11768
    %v11788 = vsel %vm2160, %v11762, %v11770
    %v11789 = vsel %vm2160, %v11764, %v11772
    %v11790 = vsel %vm2160, %v11766, %v11774
    %v11791 = vsel %vm2160, %v11752, %v11760
    %v11792 = vsel %vm2160, %v11754, %v11762
    %v11793 = vsel %vm2160, %v11756, %v11764
    %v11794 = vsel %vm2160, %v11758, %v11766
    %v11795 = vsel %vm2160, %v11776, %v11752
    %v11796 = vsel %vm2160, %v11778, %v11754
    %v11797 = vsel %vm2160, %v11780, %v11756
    %v11798 = vsel %vm2160, %v11782, %v11758
    %11799 = vmatprep.subr.mxu0 %v11787
    %11800 = vmatpush1.msra.mxu0 %v11791
    %11801 = vmatprep.subr.mxu0 %v11788
    %11802 = vmatpush1.msra.mxu0 %v11792
    %11803 = vmatprep.subr.mxu0 %v11789
    %11804 = vmatpush1.msra.mxu0 %v11793
    %11805 = vmatprep.subr.mxu0 %v11790
    %11806 = vmatpush1.msra.mxu0 %v11794
    %11807 = vmatprep.subr.mxu0 0.0
    %11808 = vmatpush1.msra.mxu0 0.0
    %11809 = vmatprep.subr.mxu0 0.0
    %11810 = vmatpush1.msra.mxu0 0.0
    %11811 = vmatprep.subr.mxu0 0.0
    %11812 = vmatpush1.msra.mxu0 0.0
    %11813 = vmatprep.subr.mxu0 0.0
    %11814 = vmatpush1.msra.mxu0 0.0
    %11815 = vmatprep.subr.mxu0 0.0
    %11816 = vmatpush1.msra.mxu0 0.0
    %11817 = vmatprep.subr.mxu0 0.0
    %11818 = vmatpush1.msra.mxu0 0.0
    %11819 = vmatprep.subr.mxu0 0.0
    %11820 = vmatpush1.msra.mxu0 0.0
    %11821 = vmatprep.subr.mxu0 0.0
    %11822 = vmatpush1.msra.mxu0 0.0
    %11823 = vmatprep.subr.mxu0 0.0
    %11824 = vmatpush1.msra.mxu0 0.0
    %11825 = vmatprep.subr.mxu0 0.0
    %11826 = vmatpush1.msra.mxu0 0.0
    %11827 = vmatprep.subr.mxu0 0.0
    %11828 = vmatpush1.msra.mxu0 0.0
    %11829 = vmatprep.subr.mxu0 0.0
    %11830 = vmatpush1.msra.mxu0 0.0
    %11831 = vmatprep.subr.mxu0 0.0
    %11832 = vmatpush1.msra.mxu0 0.0
    %11833 = vmatprep.subr.mxu0 0.0
    %11834 = vmatpush1.msra.mxu0 0.0
    %11835 = vmatprep.subr.mxu0 0.0
    %11836 = vmatpush1.msra.mxu0 0.0
    %11837 = vmatprep.subr.mxu0 0.0
    %11838 = vmatpush1.msra.mxu0 0.0
    %11839 = vmatprep.subr.mxu0 0.0
    %11840 = vmatpush1.msra.mxu0 0.0
    %11841 = vmatprep.subr.mxu0 0.0
    %11842 = vmatpush1.msra.mxu0 0.0
    %11843 = vmatprep.subr.mxu0 0.0
    %11844 = vmatpush1.msra.mxu0 0.0
    %11845 = vmatprep.subr.mxu0 0.0
    %11846 = vmatpush1.msra.mxu0 0.0
    %11847 = vmatprep.subr.mxu0 0.0
    %11848 = vmatpush1.msra.mxu0 0.0
    %11849 = vmatprep.subr.mxu0 0.0
    %11850 = vmatpush1.msra.mxu0 0.0
    %11851 = vmatprep.subr.mxu0 0.0
    %11852 = vmatpush1.msra.mxu0 0.0
    %11853 = vmatprep.subr.mxu0 0.0
    %11854 = vmatpush1.msra.mxu0 0.0
    %11855 = vmatprep.subr.mxu0 0.0
    %11856 = vmatpush1.msra.mxu0 0.0
    %11857 = vmatprep.subr.mxu0 0.0
    %11858 = vmatpush1.msra.mxu0 0.0
    %11859 = vmatprep.subr.mxu0 0.0
    %11860 = vmatpush1.msra.mxu0 0.0
    %11861 = vmatprep.subr.mxu0 0.0
    %11862 = vmatpush1.msra.mxu0 0.0
    %11863 = vmatprep.mubr.f32.mxu0 0.0
    %11864 = vmatmul.mubr.f32.gmra.mrb[0].mxu0 %v4105
    %v11865 = vpop.f32.mrb[0].mxu0
    %v11866 = vadd.f32 0.0, %v11865
    %v11867 = vpop.f32.mrb[0].mxu0
    %v11868 = vadd.f32 0.0, %v11867
    %11869 = vdwg.mxu0
    %11870 = vmatprep.subr.mxu0 %v11795
    %11871 = vmatpush1.msra.mxu0 %v11783
    %11872 = vmatprep.subr.mxu0 %v11796
    %11873 = vmatpush1.msra.mxu0 %v11784
    %11874 = vmatprep.subr.mxu0 %v11797
    %11875 = vmatpush1.msra.mxu0 %v11785
    %11876 = vmatprep.subr.mxu0 %v11798
    %11877 = vmatpush1.msra.mxu0 %v11786
    %11878 = vmatprep.subr.mxu0 0.0
    %11879 = vmatpush1.msra.mxu0 0.0
    %11880 = vmatprep.subr.mxu0 0.0
    %11881 = vmatpush1.msra.mxu0 0.0
    %11882 = vmatprep.subr.mxu0 0.0
    %11883 = vmatpush1.msra.mxu0 0.0
    %11884 = vmatprep.subr.mxu0 0.0
    %11885 = vmatpush1.msra.mxu0 0.0
    %11886 = vmatprep.subr.mxu0 0.0
    %11887 = vmatpush1.msra.mxu0 0.0
    %11888 = vmatprep.subr.mxu0 0.0
    %11889 = vmatpush1.msra.mxu0 0.0
    %11890 = vmatprep.subr.mxu0 0.0
    %11891 = vmatpush1.msra.mxu0 0.0
    %11892 = vmatprep.subr.mxu0 0.0
    %11893 = vmatpush1.msra.mxu0 0.0
    %11894 = vmatprep.subr.mxu0 0.0
    %11895 = vmatpush1.msra.mxu0 0.0
    %11896 = vmatprep.subr.mxu0 0.0
    %11897 = vmatpush1.msra.mxu0 0.0
    %11898 = vmatprep.subr.mxu0 0.0
    %11899 = vmatpush1.msra.mxu0 0.0
    %11900 = vmatprep.subr.mxu0 0.0
    %11901 = vmatpush1.msra.mxu0 0.0
    %11902 = vmatprep.subr.mxu0 0.0
    %11903 = vmatpush1.msra.mxu0 0.0
    %11904 = vmatprep.subr.mxu0 0.0
    %11905 = vmatpush1.msra.mxu0 0.0
    %11906 = vmatprep.subr.mxu0 0.0
    %11907 = vmatpush1.msra.mxu0 0.0
    %11908 = vmatprep.subr.mxu0 0.0
    %11909 = vmatpush1.msra.mxu0 0.0
    %11910 = vmatprep.subr.mxu0 0.0
    %11911 = vmatpush1.msra.mxu0 0.0
    %11912 = vmatprep.subr.mxu0 0.0
    %11913 = vmatpush1.msra.mxu0 0.0
    %11914 = vmatprep.subr.mxu0 0.0
    %11915 = vmatpush1.msra.mxu0 0.0
    %11916 = vmatprep.subr.mxu0 0.0
    %11917 = vmatpush1.msra.mxu0 0.0
    %11918 = vmatprep.subr.mxu0 0.0
    %11919 = vmatpush1.msra.mxu0 0.0
    %11920 = vmatprep.subr.mxu0 0.0
    %11921 = vmatpush1.msra.mxu0 0.0
    %11922 = vmatprep.subr.mxu0 0.0
    %11923 = vmatpush1.msra.mxu0 0.0
    %11924 = vmatprep.subr.mxu0 0.0
    %11925 = vmatpush1.msra.mxu0 0.0
    %11926 = vmatprep.subr.mxu0 0.0
    %11927 = vmatpush1.msra.mxu0 0.0
    %11928 = vmatprep.subr.mxu0 0.0
    %11929 = vmatpush1.msra.mxu0 0.0
    %11930 = vmatprep.subr.mxu0 0.0
    %11931 = vmatpush1.msra.mxu0 0.0
    %11932 = vmatprep.subr.mxu0 0.0
    %11933 = vmatpush1.msra.mxu0 0.0
    %11934 = vmatprep.mubr.f32.mxu0 0.0
    %11935 = vmatmul.mubr.f32.gmra.mrb[0].mxu0 %v4105
    %v11936 = vpop.f32.mrb[0].mxu0
    %v11937 = vadd.f32 0.0, %v11936
    %v11938 = vpop.f32.mrb[0].mxu0
    %v11939 = vadd.f32 0.0, %v11938
    %11940 = vdwg.mxu0
    %v11941 = vmul.f32 %v11866, %v268
    %v11942 = vmul.f32 %v11868, %v272
    %v11943 = vmul.f32 %v11937, %v276
    %v11944 = vmul.f32 %v11939, %v280
    %v11945 = vadd.f32 %v11747, %v11941
    %v11946 = vadd.f32 %v11748, %v11942
    %v11947 = vadd.f32 %v11749, %v11943
    %v11948 = vadd.f32 %v11750, %v11944
    %s11949 = sld [smem:[#allocation2 + $0x1]]
    %s11950 = sld [smem:[#allocation4 + $0x1]]
    %v11951 = vstv %s11950
    %v11952 = vmul.f32 %v11951, %v11945
    %v11953 = vmul.f32 %v11951, %v11946
    %v11954 = vmul.f32 %v11951, %v11947
    %v11955 = vmul.f32 %v11951, %v11948
    %v11960 = vcombine.low %v11952, %v11953
    %v11961 = vcombine.low %v11954, %v11955
    %v11964 = vsub.f32 %v8121, %v11960
    %v11965 = vsub.f32 %v8122, %v11961
    %v11966 = vstv %s11949
    %v11967 = vmul.f32 %v11966, %v11964
    %v11968 = vmul.f32 %v11966, %v11965
    %11969 = vst [vmem:[%s8] sm:$0xff] %v11967
    %11970 = vst [vmem:[%s8 + $0x8] sm:$0xff] %v11968
    // Predicated region
    $region42: #{diffusion_forward.1} parent=1 // pred_check
      _
    $region43: #{diffusion_forward.1} parent=1 // pred_check_branch
      %11972 = sbr.rel (0) target = $region45
    $region44: #{diffusion_forward.1} parent=1 // pred_region
      _
    $region45: #{diffusion_forward.1} parent=1 // pred_fallthru
      _
    // Predicated region
    $region46: #{diffusion_forward.1} parent=1 // pred_check
      _
    $region47: #{diffusion_forward.1} parent=1 // pred_check_branch
      %11974 = sbr.rel (0) target = $region49
    $region48: #{diffusion_forward.1} parent=1 // pred_region
      _
    $region49: #{diffusion_forward.1} parent=1 // pred_fallthru
      _
    %11975 = vsyncpa [#allocation3], 1
    %11976 = vsyncpa [#allocation5], 1

</llo_original>
